<compile_context>
chip_gen: v7x
topology: tpu7x:2x2x1
jax: 0.10.0
libtpu: 0.0.40
codegen_flags: <defaults>
</compile_context>

<pallas_src>
import math

import jax
import jax.numpy as jnp
import numpy as np
from jax.experimental import pallas as pl
from jax.experimental.pallas import tpu as pltpu


# ---------------------------------------------------------------------------
# Small config consistent with MLP_PLR (scaled-down MNIST-like input)
# ---------------------------------------------------------------------------
INPUT_HW = 8                       # x: [N, 1, 8, 8]  -> input_size = 64
INPUT_SIZE = INPUT_HW * INPUT_HW   # F
NUM_CLASSES = 10                   # C
HIDDEN_DIM = 128                   # H
NUM_LAYERS = 2                     # hidden->hidden blocks in make_mlp (kernel hard-wires 2)
D_EMBEDDING = 32                   # D
N_FREQUENCIES = 16                 # K
FREQ_INIT_SCALE = 1.0
# TODO(synk): nn.Dropout(p=0.0) is identity at inference and is not emitted.


# ---------------------------------------------------------------------------
# Pallas kernels
# ---------------------------------------------------------------------------
def periodic_embed_kernel(x_ref, freq_ref, shift_ref, w_ref, b_ref, o_ref):
    """Fused PeriodicEmbeddings(lite=True): phase -> cos -> Linear(2K,D) -> +b -> ReLU.

    x_ref     : [tn, F, 1]   flattened input features (lane-1 column per feature)
    freq_ref  : [F, 2K]      2*pi*c duplicated for the cos/sin halves
    shift_ref : [1, 2K]      0 for cos half, pi/2 for sin half (cos(t - pi/2) == sin(t))
    w_ref     : [2K, D]      shared "lite" linear weight
    b_ref     : [1, D]
    o_ref     : [tn, F, D]
    """
    tn, f, _ = x_ref.shape
    two_k = freq_ref.shape[1]
    d = w_ref.shape[1]

    # [tn,F,1] * [1,F,2K] - [1,1,2K] -> [tn,F,2K]; one cos() covers both halves.
    phase = x_ref[...] * freq_ref[...][None, :, :] - shift_ref[...][None, :, :]
    emb = jnp.cos(phase)

    # Layout-preserving reshape (F % 8 == 0): merge (tn, F) rows, keep 2K lanes.
    emb2d = emb.reshape(tn * f, two_k)
    y = jnp.dot(emb2d, w_ref[...], preferred_element_type=jnp.float32) + b_ref[...]
    y = jnp.maximum(y, 0.0)
    o_ref[...] = y.reshape(tn, f, d)


def mlp_fused_kernel(x_ref, w0_ref, b0_ref, w1_ref, b1_ref,
                     w2_ref, b2_ref, w3_ref, b3_ref, o_ref):
    """make_mlp with num_layers=2: 4 fused Linear layers, ReLU between them."""
    h = jnp.dot(x_ref[...], w0_ref[...], preferred_element_type=jnp.float32) + b0_ref[...]
    h = jnp.maximum(h, 0.0)
    h = jnp.dot(h, w1_ref[...], preferred_element_type=jnp.float32) + b1_ref[...]
    h = jnp.maximum(h, 0.0)
    h = jnp.dot(h, w2_ref[...], preferred_element_type=jnp.float32) + b2_ref[...]
    h = jnp.maximum(h, 0.0)
    o_ref[...] = jnp.dot(h, w3_ref[...], preferred_element_type=jnp.float32) + b3_ref[...]


# ---------------------------------------------------------------------------
# Forward pass
# ---------------------------------------------------------------------------
def mlp_plr_forward(x, params, *, block_n=8):
    N = x.shape[0]
    xf = x.reshape(N, -1)                     # x.view(N, -1)
    F = xf.shape[1]

    freq2, shift = params["freq2"], params["shift"]
    w_emb, b_emb = params["w_emb"], params["b_emb"]
    two_k = freq2.shape[1]
    D = w_emb.shape[1]

    tn = N if N <= block_n else block_n       # batch tile (8-aligned when tiling)
    assert N % tn == 0, "demo assumes batch divisible by the batch tile"
    grid = (N // tn,)

    x3 = xf.reshape(N, F, 1)                  # free contiguous reshape

    # --- kernel 1: periodic embedding + lite linear + ReLU ------------------
    emb = pl.pallas_call(
        periodic_embed_kernel,
        out_shape=jax.ShapeDtypeStruct((N, F, D), jnp.float32),
        grid_spec=pltpu.PrefetchScalarGridSpec(
            num_scalar_prefetch=0,
            grid=grid,
            in_specs=[
                pl.BlockSpec((tn, F, 1), lambda i: (i, 0, 0)),
                pl.BlockSpec((F, two_k), lambda i: (0, 0)),     # resident
                pl.BlockSpec((1, two_k), lambda i: (0, 0)),     # resident
                pl.BlockSpec((two_k, D), lambda i: (0, 0)),     # resident
                pl.BlockSpec((1, D), lambda i: (0, 0)),         # resident
            ],
            out_specs=pl.BlockSpec((tn, F, D), lambda i: (i, 0, 0)),
        ),
        compiler_params=pltpu.CompilerParams(dimension_semantics=("parallel",)),
    )(x3, freq2, shift, w_emb, b_emb)

    # Flatten [N, F, D] -> [N, F*D]: contiguous row-major reshape (no data movement),
    # and it matches PyTorch's x.view(N, -1) flatten order (feature-major, embedding-minor).
    feat = emb.reshape(N, F * D)

    w0, b0 = params["w0"], params["b0"]
    w1, b1 = params["w1"], params["b1"]
    w2, b2 = params["w2"], params["b2"]
    w3, b3 = params["w3"], params["b3"]
    FD = F * D
    H = w0.shape[1]
    C = w3.shape[1]

    # --- kernel 2: fused 4-layer MLP ----------------------------------------
    out = pl.pallas_call(
        mlp_fused_kernel,
        out_shape=jax.ShapeDtypeStruct((N, C), jnp.float32),
        grid_spec=pltpu.PrefetchScalarGridSpec(
            num_scalar_prefetch=0,
            grid=grid,
            in_specs=[
                pl.BlockSpec((tn, FD), lambda i: (i, 0)),       # streamed activations
                pl.BlockSpec((FD, H), lambda i: (0, 0)),        # weights stay resident
                pl.BlockSpec((1, H), lambda i: (0, 0)),
                pl.BlockSpec((H, H), lambda i: (0, 0)),
                pl.BlockSpec((1, H), lambda i: (0, 0)),
                pl.BlockSpec((H, H), lambda i: (0, 0)),
                pl.BlockSpec((1, H), lambda i: (0, 0)),
                pl.BlockSpec((H, C), lambda i: (0, 0)),
                pl.BlockSpec((1, C), lambda i: (0, 0)),
            ],
            out_specs=pl.BlockSpec((tn, C), lambda i: (i, 0)),
        ),
        compiler_params=pltpu.CompilerParams(dimension_semantics=("parallel",)),
    )(feat, w0, b0, w1, b1, w2, b2, w3, b3)
    return out


# ---------------------------------------------------------------------------
# Deterministic parameter init (kernel-ready layouts prepared ONCE, outside jit)
# ---------------------------------------------------------------------------
def init_params(seed=42):
    keys = jax.random.split(jax.random.PRNGKey(seed), 12)
    F, K, D, H, C = INPUT_SIZE, N_FREQUENCIES, D_EMBEDDING, HIDDEN_DIM, NUM_CLASSES

    def uni(key, shape, fan_in):
        bound = 1.0 / math.sqrt(fan_in)
        return jax.random.uniform(key, shape, jnp.float32, -bound, bound)

    # PeriodicEmbeddings frequencies (normal init with frequency_init_scale).
    freq = FREQ_INIT_SCALE * jax.random.normal(keys[0], (F, K), jnp.float32)
    # Kernel-ready forms: frequencies duplicated for cos/sin halves and pre-scaled by 2*pi;
    # shift vector turns the sin half into cos(t - pi/2).
    freq2 = 2.0 * math.pi * jnp.concatenate([freq, freq], axis=-1)              # [F, 2K]
    shift = jnp.concatenate([jnp.zeros((1, K), jnp.float32),
                             jnp.full((1, K), 0.5 * math.pi, jnp.float32)], -1)  # [1, 2K]

    params = {
        "freq": freq, "freq2": freq2, "shift": shift,
        # lite linear of PeriodicEmbeddings, stored [in, out]; biases stored [1, out]
        "w_emb": uni(keys[1], (2 * K, D), 2 * K),
        "b_emb": uni(keys[2], (1, D), 2 * K),
        # make_mlp(in_dim=F*D, out_dim=C, hidden_dim=H, num_layers=2)
        "w0": uni(keys[3], (F * D, H), F * D), "b0": uni(keys[4], (1, H), F * D),
        "w1": uni(keys[5], (H, H), H),         "b1": uni(keys[6], (1, H), H),
        "w2": uni(keys[7], (H, H), H),         "b2": uni(keys[8], (1, H), H),
        "w3": uni(keys[9], (H, C), H),         "b3": uni(keys[10], (1, C), H),
    }
    return params


# ---------------------------------------------------------------------------
# Pure-JAX reference (correctness check only)
# ---------------------------------------------------------------------------
def reference_forward(x, params):
    N = x.shape[0]
    xf = x.reshape(N, -1)
    t = 2.0 * math.pi * xf[:, :, None] * params["freq"][None, :, :]       # [N, F, K]
    emb = jnp.concatenate([jnp.cos(t), jnp.sin(t)], axis=-1)              # [N, F, 2K]
    y = jnp.einsum("nfj,jd->nfd", emb, params["w_emb"]) + params["b_emb"]
    y = jnp.maximum(y, 0.0)
    feat = y.reshape(N, -1)
    h = jnp.maximum(feat @ params["w0"] + params["b0"], 0.0)
    h = jnp.maximum(h @ params["w1"] + params["b1"], 0.0)
    h = jnp.maximum(h @ params["w2"] + params["b2"], 0.0)
    return h @ params["w3"] + params["b3"]


# ---------------------------------------------------------------------------
if __name__ == "__main__":
    params = init_params()
    x = jax.random.normal(jax.random.PRNGKey(0), (8, 1, INPUT_HW, INPUT_HW), jnp.float32)

    fwd = jax.jit(mlp_plr_forward)
    out = jax.block_until_ready(fwd(x, params))

    ref = reference_forward(x, params)
    np.testing.assert_allclose(np.asarray(out), np.asarray(ref), rtol=2e-3, atol=2e-3)
    assert out.shape == (8, NUM_CLASSES) and out.dtype == jnp.float32

    print("KERNEL_OK")
</pallas_src>

<mosaic_0001>
module attributes {stable_mosaic.version = 11 : i64} {
  func.func @periodic_embed_kernel(%arg0: i32, %arg1: memref<8x64x1xf32, #tpu.memory_space<vmem>>, %arg2: memref<64x32xf32, #tpu.memory_space<vmem>>, %arg3: memref<1x32xf32, #tpu.memory_space<vmem>>, %arg4: memref<32x32xf32, #tpu.memory_space<vmem>>, %arg5: memref<1x32xf32, #tpu.memory_space<vmem>>, %arg6: memref<8x64x32xf32, #tpu.memory_space<vmem>>) attributes {dimension_semantics = [#tpu.dimension_semantics<parallel>], iteration_bounds = array<i64: 1>, scalar_prefetch = 0 : i64, scratch_operands = 0 : i64, tpu.core_type = #tpu.core_type<tc>, window_params = [{transform_indices = @transform_0, window_bounds = array<i64: 8, 64, 1>}, {pipeline_mode = #tpu.pipeline_mode<synchronous>, transform_indices = @transform_1, window_bounds = array<i64: 64, 32>}, {pipeline_mode = #tpu.pipeline_mode<synchronous>, transform_indices = @transform_2, window_bounds = array<i64: 1, 32>}, {pipeline_mode = #tpu.pipeline_mode<synchronous>, transform_indices = @transform_3, window_bounds = array<i64: 32, 32>}, {pipeline_mode = #tpu.pipeline_mode<synchronous>, transform_indices = @transform_4, window_bounds = array<i64: 1, 32>}, {transform_indices = @transform_5, window_bounds = array<i64: 8, 64, 32>}]} {
    %c0 = arith.constant 0 : index
    %c0_0 = arith.constant 0 : index
    %c0_1 = arith.constant 0 : index
    %0 = vector.load %arg1[%c0, %c0_0, %c0_1] : memref<8x64x1xf32, #tpu.memory_space<vmem>>, vector<8x64x1xf32>
    %c0_2 = arith.constant 0 : index
    %c0_3 = arith.constant 0 : index
    %1 = vector.load %arg2[%c0_2, %c0_3] : memref<64x32xf32, #tpu.memory_space<vmem>>, vector<64x32xf32>
    %2 = vector.shape_cast %1 : vector<64x32xf32> to vector<1x64x32xf32>
    %3 = vector.broadcast %0 : vector<8x64x1xf32> to vector<8x64x32xf32>
    %4 = vector.broadcast %2 : vector<1x64x32xf32> to vector<8x64x32xf32>
    %5 = arith.mulf %3, %4 : vector<8x64x32xf32>
    %c0_4 = arith.constant 0 : index
    %c0_5 = arith.constant 0 : index
    %6 = vector.load %arg3[%c0_4, %c0_5] : memref<1x32xf32, #tpu.memory_space<vmem>>, vector<1x32xf32>
    %7 = vector.shape_cast %6 : vector<1x32xf32> to vector<1x1x32xf32>
    %8 = vector.broadcast %7 : vector<1x1x32xf32> to vector<8x64x32xf32>
    %9 = arith.subf %5, %8 : vector<8x64x32xf32>
    %10 = math.cos %9 : vector<8x64x32xf32>
    %11 = vector.shape_cast %10 : vector<8x64x32xf32> to vector<512x32xf32>
    %c0_6 = arith.constant 0 : index
    %c0_7 = arith.constant 0 : index
    %12 = vector.load %arg4[%c0_6, %c0_7] : memref<32x32xf32, #tpu.memory_space<vmem>>, vector<32x32xf32>
    %cst = arith.constant dense<0.000000e+00> : vector<512x32xf32>
    %13 = tpu.matmul %11, %12, %cst {dimension_numbers = #tpu.dot_dimension_numbers<[1], [0], [0], [1], [0, 0, 1, 1], [], []>} : vector<512x32xf32>, vector<32x32xf32>, vector<512x32xf32> -> vector<512x32xf32>
    %c0_8 = arith.constant 0 : index
    %c0_9 = arith.constant 0 : index
    %14 = vector.load %arg5[%c0_8, %c0_9] : memref<1x32xf32, #tpu.memory_space<vmem>>, vector<1x32xf32>
    %15 = vector.broadcast %14 : vector<1x32xf32> to vector<512x32xf32>
    %16 = arith.addf %13, %15 : vector<512x32xf32>
    %cst_10 = arith.constant 0.000000e+00 : f32
    %17 = vector.broadcast %cst_10 : f32 to vector<512x32xf32>
    %18 = arith.maximumf %16, %17 : vector<512x32xf32>
    %19 = vector.shape_cast %18 : vector<512x32xf32> to vector<8x64x32xf32>
    %c0_11 = arith.constant 0 : index
    %c0_12 = arith.constant 0 : index
    %c0_13 = arith.constant 0 : index
    %20 = vector.load %arg6[%c0_11, %c0_12, %c0_13] : memref<8x64x32xf32, #tpu.memory_space<vmem>>, vector<8x64x32xf32>
    tpu.vector_store %arg6[%c0_11, %c0_12, %c0_13], %19 {strides = array<i32>} : memref<8x64x32xf32, #tpu.memory_space<vmem>>, vector<8x64x32xf32>,
    return
  }
  func.func @transform_0(%arg0: i32) -> (i32, i32, i32) {
    %c0_i32 = arith.constant 0 : i32
    %c0_i32_0 = arith.constant 0 : i32
    %c0_i32_1 = arith.constant 0 : i32
    return %arg0, %c0_i32, %c0_i32_0 : i32, i32, i32
  }
  func.func @transform_1(%arg0: i32) -> (i32, i32) {
    %c0_i32 = arith.constant 0 : i32
    %c0_i32_0 = arith.constant 0 : i32
    %c0_i32_1 = arith.constant 0 : i32
    return %c0_i32, %c0_i32_0 : i32, i32
  }
  func.func @transform_2(%arg0: i32) -> (i32, i32) {
    %c0_i32 = arith.constant 0 : i32
    %c0_i32_0 = arith.constant 0 : i32
    %c0_i32_1 = arith.constant 0 : i32
    return %c0_i32, %c0_i32_0 : i32, i32
  }
  func.func @transform_3(%arg0: i32) -> (i32, i32) {
    %c0_i32 = arith.constant 0 : i32
    %c0_i32_0 = arith.constant 0 : i32
    %c0_i32_1 = arith.constant 0 : i32
    return %c0_i32, %c0_i32_0 : i32, i32
  }
  func.func @transform_4(%arg0: i32) -> (i32, i32) {
    %c0_i32 = arith.constant 0 : i32
    %c0_i32_0 = arith.constant 0 : i32
    %c0_i32_1 = arith.constant 0 : i32
    return %c0_i32, %c0_i32_0 : i32, i32
  }
  func.func @transform_5(%arg0: i32) -> (i32, i32, i32) {
    %c0_i32 = arith.constant 0 : i32
    %c0_i32_0 = arith.constant 0 : i32
    %c0_i32_1 = arith.constant 0 : i32
    return %arg0, %c0_i32, %c0_i32_0 : i32, i32, i32
  }
}

module attributes {stable_mosaic.version = 11 : i64} {
  func.func @mlp_fused_kernel(%arg0: i32, %arg1: memref<8x2048xf32, #tpu.memory_space<vmem>>, %arg2: memref<2048x128xf32, #tpu.memory_space<vmem>>, %arg3: memref<1x128xf32, #tpu.memory_space<vmem>>, %arg4: memref<128x128xf32, #tpu.memory_space<vmem>>, %arg5: memref<1x128xf32, #tpu.memory_space<vmem>>, %arg6: memref<128x128xf32, #tpu.memory_space<vmem>>, %arg7: memref<1x128xf32, #tpu.memory_space<vmem>>, %arg8: memref<128x10xf32, #tpu.memory_space<vmem>>, %arg9: memref<1x10xf32, #tpu.memory_space<vmem>>, %arg10: memref<8x10xf32, #tpu.memory_space<vmem>>) attributes {dimension_semantics = [#tpu.dimension_semantics<parallel>], iteration_bounds = array<i64: 1>, scalar_prefetch = 0 : i64, scratch_operands = 0 : i64, tpu.core_type = #tpu.core_type<tc>, window_params = [{transform_indices = @transform_0, window_bounds = array<i64: 8, 2048>}, {pipeline_mode = #tpu.pipeline_mode<synchronous>, transform_indices = @transform_1, window_bounds = array<i64: 2048, 128>}, {pipeline_mode = #tpu.pipeline_mode<synchronous>, transform_indices = @transform_2, window_bounds = array<i64: 1, 128>}, {pipeline_mode = #tpu.pipeline_mode<synchronous>, transform_indices = @transform_3, window_bounds = array<i64: 128, 128>}, {pipeline_mode = #tpu.pipeline_mode<synchronous>, transform_indices = @transform_4, window_bounds = array<i64: 1, 128>}, {pipeline_mode = #tpu.pipeline_mode<synchronous>, transform_indices = @transform_5, window_bounds = array<i64: 128, 128>}, {pipeline_mode = #tpu.pipeline_mode<synchronous>, transform_indices = @transform_6, window_bounds = array<i64: 1, 128>}, {pipeline_mode = #tpu.pipeline_mode<synchronous>, transform_indices = @transform_7, window_bounds = array<i64: 128, 10>}, {pipeline_mode = #tpu.pipeline_mode<synchronous>, transform_indices = @transform_8, window_bounds = array<i64: 1, 10>}, {transform_indices = @transform_9, window_bounds = array<i64: 8, 10>}]} {
    %c0 = arith.constant 0 : index
    %c0_0 = arith.constant 0 : index
    %0 = vector.load %arg1[%c0, %c0_0] : memref<8x2048xf32, #tpu.memory_space<vmem>>, vector<8x2048xf32>
    %c0_1 = arith.constant 0 : index
    %c0_2 = arith.constant 0 : index
    %1 = vector.load %arg2[%c0_1, %c0_2] : memref<2048x128xf32, #tpu.memory_space<vmem>>, vector<2048x128xf32>
    %cst = arith.constant dense<0.000000e+00> : vector<8x128xf32>
    %2 = tpu.matmul %0, %1, %cst {dimension_numbers = #tpu.dot_dimension_numbers<[1], [0], [0], [1], [0, 0, 1, 1], [], []>} : vector<8x2048xf32>, vector<2048x128xf32>, vector<8x128xf32> -> vector<8x128xf32>
    %c0_3 = arith.constant 0 : index
    %c0_4 = arith.constant 0 : index
    %3 = vector.load %arg3[%c0_3, %c0_4] : memref<1x128xf32, #tpu.memory_space<vmem>>, vector<1x128xf32>
    %4 = vector.broadcast %3 : vector<1x128xf32> to vector<8x128xf32>
    %5 = arith.addf %2, %4 : vector<8x128xf32>
    %cst_5 = arith.constant 0.000000e+00 : f32
    %6 = vector.broadcast %cst_5 : f32 to vector<8x128xf32>
    %7 = arith.maximumf %5, %6 : vector<8x128xf32>
    %c0_6 = arith.constant 0 : index
    %c0_7 = arith.constant 0 : index
    %8 = vector.load %arg4[%c0_6, %c0_7] : memref<128x128xf32, #tpu.memory_space<vmem>>, vector<128x128xf32>
    %cst_8 = arith.constant dense<0.000000e+00> : vector<8x128xf32>
    %9 = tpu.matmul %7, %8, %cst_8 {dimension_numbers = #tpu.dot_dimension_numbers<[1], [0], [0], [1], [0, 0, 1, 1], [], []>} : vector<8x128xf32>, vector<128x128xf32>, vector<8x128xf32> -> vector<8x128xf32>
    %c0_9 = arith.constant 0 : index
    %c0_10 = arith.constant 0 : index
    %10 = vector.load %arg5[%c0_9, %c0_10] : memref<1x128xf32, #tpu.memory_space<vmem>>, vector<1x128xf32>
    %11 = vector.broadcast %10 : vector<1x128xf32> to vector<8x128xf32>
    %12 = arith.addf %9, %11 : vector<8x128xf32>
    %cst_11 = arith.constant 0.000000e+00 : f32
    %13 = vector.broadcast %cst_11 : f32 to vector<8x128xf32>
    %14 = arith.maximumf %12, %13 : vector<8x128xf32>
    %c0_12 = arith.constant 0 : index
    %c0_13 = arith.constant 0 : index
    %15 = vector.load %arg6[%c0_12, %c0_13] : memref<128x128xf32, #tpu.memory_space<vmem>>, vector<128x128xf32>
    %cst_14 = arith.constant dense<0.000000e+00> : vector<8x128xf32>
    %16 = tpu.matmul %14, %15, %cst_14 {dimension_numbers = #tpu.dot_dimension_numbers<[1], [0], [0], [1], [0, 0, 1, 1], [], []>} : vector<8x128xf32>, vector<128x128xf32>, vector<8x128xf32> -> vector<8x128xf32>
    %c0_15 = arith.constant 0 : index
    %c0_16 = arith.constant 0 : index
    %17 = vector.load %arg7[%c0_15, %c0_16] : memref<1x128xf32, #tpu.memory_space<vmem>>, vector<1x128xf32>
    %18 = vector.broadcast %17 : vector<1x128xf32> to vector<8x128xf32>
    %19 = arith.addf %16, %18 : vector<8x128xf32>
    %cst_17 = arith.constant 0.000000e+00 : f32
    %20 = vector.broadcast %cst_17 : f32 to vector<8x128xf32>
    %21 = arith.maximumf %19, %20 : vector<8x128xf32>
    %c0_18 = arith.constant 0 : index
    %c0_19 = arith.constant 0 : index
    %22 = vector.load %arg8[%c0_18, %c0_19] : memref<128x10xf32, #tpu.memory_space<vmem>>, vector<128x10xf32>
    %cst_20 = arith.constant dense<0.000000e+00> : vector<8x10xf32>
    %23 = tpu.matmul %21, %22, %cst_20 {dimension_numbers = #tpu.dot_dimension_numbers<[1], [0], [0], [1], [0, 0, 1, 1], [], []>} : vector<8x128xf32>, vector<128x10xf32>, vector<8x10xf32> -> vector<8x10xf32>
    %c0_21 = arith.constant 0 : index
    %c0_22 = arith.constant 0 : index
    %24 = vector.load %arg9[%c0_21, %c0_22] : memref<1x10xf32, #tpu.memory_space<vmem>>, vector<1x10xf32>
    %25 = vector.broadcast %24 : vector<1x10xf32> to vector<8x10xf32>
    %26 = arith.addf %23, %25 : vector<8x10xf32>
    %c0_23 = arith.constant 0 : index
    %c0_24 = arith.constant 0 : index
    %27 = vector.load %arg10[%c0_23, %c0_24] : memref<8x10xf32, #tpu.memory_space<vmem>>, vector<8x10xf32>
    tpu.vector_store %arg10[%c0_23, %c0_24], %26 {strides = array<i32>} : memref<8x10xf32, #tpu.memory_space<vmem>>, vector<8x10xf32>,
    return
  }
  func.func @transform_0(%arg0: i32) -> (i32, i32) {
    %c0_i32 = arith.constant 0 : i32
    %c0_i32_0 = arith.constant 0 : i32
    return %arg0, %c0_i32 : i32, i32
  }
  func.func @transform_1(%arg0: i32) -> (i32, i32) {
    %c0_i32 = arith.constant 0 : i32
    %c0_i32_0 = arith.constant 0 : i32
    %c0_i32_1 = arith.constant 0 : i32
    return %c0_i32, %c0_i32_0 : i32, i32
  }
  func.func @transform_2(%arg0: i32) -> (i32, i32) {
    %c0_i32 = arith.constant 0 : i32
    %c0_i32_0 = arith.constant 0 : i32
    %c0_i32_1 = arith.constant 0 : i32
    return %c0_i32, %c0_i32_0 : i32, i32
  }
  func.func @transform_3(%arg0: i32) -> (i32, i32) {
    %c0_i32 = arith.constant 0 : i32
    %c0_i32_0 = arith.constant 0 : i32
    %c0_i32_1 = arith.constant 0 : i32
    return %c0_i32, %c0_i32_0 : i32, i32
  }
  func.func @transform_4(%arg0: i32) -> (i32, i32) {
    %c0_i32 = arith.constant 0 : i32
    %c0_i32_0 = arith.constant 0 : i32
    %c0_i32_1 = arith.constant 0 : i32
    return %c0_i32, %c0_i32_0 : i32, i32
  }
  func.func @transform_5(%arg0: i32) -> (i32, i32) {
    %c0_i32 = arith.constant 0 : i32
    %c0_i32_0 = arith.constant 0 : i32
    %c0_i32_1 = arith.constant 0 : i32
    return %c0_i32, %c0_i32_0 : i32, i32
  }
  func.func @transform_6(%arg0: i32) -> (i32, i32) {
    %c0_i32 = arith.constant 0 : i32
    %c0_i32_0 = arith.constant 0 : i32
    %c0_i32_1 = arith.constant 0 : i32
    return %c0_i32, %c0_i32_0 : i32, i32
  }
  func.func @transform_7(%arg0: i32) -> (i32, i32) {
    %c0_i32 = arith.constant 0 : i32
    %c0_i32_0 = arith.constant 0 : i32
    %c0_i32_1 = arith.constant 0 : i32
    return %c0_i32, %c0_i32_0 : i32, i32
  }
  func.func @transform_8(%arg0: i32) -> (i32, i32) {
    %c0_i32 = arith.constant 0 : i32
    %c0_i32_0 = arith.constant 0 : i32
    %c0_i32_1 = arith.constant 0 : i32
    return %c0_i32, %c0_i32_0 : i32, i32
  }
  func.func @transform_9(%arg0: i32) -> (i32, i32) {
    %c0_i32 = arith.constant 0 : i32
    %c0_i32_0 = arith.constant 0 : i32
    return %arg0, %c0_i32 : i32, i32
  }
}

</mosaic_0001>

<llo_original>
// kernel: mlp_plr_forward.2
$region0: #{mlp_plr_forward.2}
  #allocation0 [shape = 'u32[]', space=smem, size = 0x4, offset = 0x4, fixed_abs, tag = 'smem constant byte address 0x4 - core index']
  #allocation1 [shape = 'u32[144,128]{1,0:T(1,128)}', space=vmem, size = 0x12000, scoped, tag = 'internal scratch']
  %s0 = inlined_call_operand.vmem [shape: f32[8,64,1], index: 0, kind: input, shape index: {}]
  %s1 = inlined_call_operand.vmem [shape: f32[64,32], index: 1, kind: input, shape index: {}]
  %s2 = inlined_call_operand.vmem [shape: f32[1,32], index: 2, kind: input, shape index: {}]
  %s3 = inlined_call_operand.vmem [shape: f32[32,32], index: 3, kind: input, shape index: {}]
  %s4 = inlined_call_operand.vmem [shape: f32[1,32], index: 4, kind: input, shape index: {}]
  %s5 = inlined_call_operand.vmem [shape: f32[8,64,32], index: 5, kind: output, shape index: {}]
  %s6 = sld [smem:[#allocation0]]
  $region30: #{mlp_plr_forward.2} parent=0
    _
  %s8 = ssub.s32 1, %s6
  %s9 = scalar_select 0, %s8, %s6
  // Predicated region
  $region2: #{mlp_plr_forward.2} parent=0 // pred_check
    _
  $region3: #{mlp_plr_forward.2} parent=0 // pred_check_branch
    %11 = sbr.rel (0) target = $region5
  $region4: #{mlp_plr_forward.2} parent=0 // pred_region
    _
  $region5: #{mlp_plr_forward.2} parent=0 // pred_fallthru
    _
  // Predicated region
  $region6: #{mlp_plr_forward.2} parent=0 // pred_check
    _
  $region7: #{mlp_plr_forward.2} parent=0 // pred_check_branch
    %13 = sbr.rel (0) target = $region9
  $region8: #{mlp_plr_forward.2} parent=0 // pred_region
    _
  $region9: #{mlp_plr_forward.2} parent=0 // pred_fallthru
    _
  // Predicated region
  $region10: #{mlp_plr_forward.2} parent=0 // pred_check
    _
  $region11: #{mlp_plr_forward.2} parent=0 // pred_check_branch
    %15 = sbr.rel (0) target = $region13
  $region12: #{mlp_plr_forward.2} parent=0 // pred_region
    _
  $region13: #{mlp_plr_forward.2} parent=0 // pred_fallthru
    _
  // Predicated region
  $region14: #{mlp_plr_forward.2} parent=0 // pred_check
    _
  $region15: #{mlp_plr_forward.2} parent=0 // pred_check_branch
    %17 = sbr.rel (0) target = $region17
  $region16: #{mlp_plr_forward.2} parent=0 // pred_region
    _
  $region17: #{mlp_plr_forward.2} parent=0 // pred_fallthru
    _
  // Predicated region
  $region18: #{mlp_plr_forward.2} parent=0 // pred_check
    _
  $region19: #{mlp_plr_forward.2} parent=0 // pred_check_branch
    %19 = sbr.rel (0) target = $region21
  $region20: #{mlp_plr_forward.2} parent=0 // pred_region
    _
  $region21: #{mlp_plr_forward.2} parent=0 // pred_fallthru
    _
  %v20 = vld [vmem:[%s0] sm:$0xff]
  %v21 = vld [vmem:[%s0 + $0x8] sm:$0xff]
  %v22 = vld [vmem:[%s0 + $0x10] sm:$0xff]
  %v23 = vld [vmem:[%s0 + $0x18] sm:$0xff]
  %v24 = vld [vmem:[%s0 + $0x20] sm:$0xff]
  %v25 = vld [vmem:[%s0 + $0x28] sm:$0xff]
  %v26 = vld [vmem:[%s0 + $0x30] sm:$0xff]
  %v27 = vld [vmem:[%s0 + $0x38] sm:$0xff]
  %v28 = vld [vmem:[%s0 + $0x40] sm:$0xff]
  %v29 = vld [vmem:[%s0 + $0x48] sm:$0xff]
  %v30 = vld [vmem:[%s0 + $0x50] sm:$0xff]
  %v31 = vld [vmem:[%s0 + $0x58] sm:$0xff]
  %v32 = vld [vmem:[%s0 + $0x60] sm:$0xff]
  %v33 = vld [vmem:[%s0 + $0x68] sm:$0xff]
  %v34 = vld [vmem:[%s0 + $0x70] sm:$0xff]
  %v35 = vld [vmem:[%s0 + $0x78] sm:$0xff]
  %v36 = vld [vmem:[%s0 + $0x80] sm:$0xff]
  %v37 = vld [vmem:[%s0 + $0x88] sm:$0xff]
  %v38 = vld [vmem:[%s0 + $0x90] sm:$0xff]
  %v39 = vld [vmem:[%s0 + $0x98] sm:$0xff]
  %v40 = vld [vmem:[%s0 + $0xa0] sm:$0xff]
  %v41 = vld [vmem:[%s0 + $0xa8] sm:$0xff]
  %v42 = vld [vmem:[%s0 + $0xb0] sm:$0xff]
  %v43 = vld [vmem:[%s0 + $0xb8] sm:$0xff]
  %v44 = vld [vmem:[%s0 + $0xc0] sm:$0xff]
  %v45 = vld [vmem:[%s0 + $0xc8] sm:$0xff]
  %v46 = vld [vmem:[%s0 + $0xd0] sm:$0xff]
  %v47 = vld [vmem:[%s0 + $0xd8] sm:$0xff]
  %v48 = vld [vmem:[%s0 + $0xe0] sm:$0xff]
  %v49 = vld [vmem:[%s0 + $0xe8] sm:$0xff]
  %v50 = vld [vmem:[%s0 + $0xf0] sm:$0xff]
  %v51 = vld [vmem:[%s0 + $0xf8] sm:$0xff]
  %v52 = vld [vmem:[%s0 + $0x100] sm:$0xff]
  %v53 = vld [vmem:[%s0 + $0x108] sm:$0xff]
  %v54 = vld [vmem:[%s0 + $0x110] sm:$0xff]
  %v55 = vld [vmem:[%s0 + $0x118] sm:$0xff]
  %v56 = vld [vmem:[%s0 + $0x120] sm:$0xff]
  %v57 = vld [vmem:[%s0 + $0x128] sm:$0xff]
  %v58 = vld [vmem:[%s0 + $0x130] sm:$0xff]
  %v59 = vld [vmem:[%s0 + $0x138] sm:$0xff]
  %v60 = vld [vmem:[%s0 + $0x140] sm:$0xff]
  %v61 = vld [vmem:[%s0 + $0x148] sm:$0xff]
  %v62 = vld [vmem:[%s0 + $0x150] sm:$0xff]
  %v63 = vld [vmem:[%s0 + $0x158] sm:$0xff]
  %v64 = vld [vmem:[%s0 + $0x160] sm:$0xff]
  %v65 = vld [vmem:[%s0 + $0x168] sm:$0xff]
  %v66 = vld [vmem:[%s0 + $0x170] sm:$0xff]
  %v67 = vld [vmem:[%s0 + $0x178] sm:$0xff]
  %v68 = vld [vmem:[%s0 + $0x180] sm:$0xff]
  %v69 = vld [vmem:[%s0 + $0x188] sm:$0xff]
  %v70 = vld [vmem:[%s0 + $0x190] sm:$0xff]
  %v71 = vld [vmem:[%s0 + $0x198] sm:$0xff]
  %v72 = vld [vmem:[%s0 + $0x1a0] sm:$0xff]
  %v73 = vld [vmem:[%s0 + $0x1a8] sm:$0xff]
  %v74 = vld [vmem:[%s0 + $0x1b0] sm:$0xff]
  %v75 = vld [vmem:[%s0 + $0x1b8] sm:$0xff]
  %v76 = vld [vmem:[%s0 + $0x1c0] sm:$0xff]
  %v77 = vld [vmem:[%s0 + $0x1c8] sm:$0xff]
  %v78 = vld [vmem:[%s0 + $0x1d0] sm:$0xff]
  %v79 = vld [vmem:[%s0 + $0x1d8] sm:$0xff]
  %v80 = vld [vmem:[%s0 + $0x1e0] sm:$0xff]
  %v81 = vld [vmem:[%s0 + $0x1e8] sm:$0xff]
  %v82 = vld [vmem:[%s0 + $0x1f0] sm:$0xff]
  %v83 = vld [vmem:[%s0 + $0x1f8] sm:$0xff]
  %v84 = vld [vmem:[%s1] sm:$0xff]
  %v85 = vld [vmem:[%s1 + $0x8] sm:$0xff]
  %v86 = vld [vmem:[%s1 + $0x10] sm:$0xff]
  %v87 = vld [vmem:[%s1 + $0x18] sm:$0xff]
  %v88 = vld [vmem:[%s1 + $0x20] sm:$0xff]
  %v89 = vld [vmem:[%s1 + $0x28] sm:$0xff]
  %v90 = vld [vmem:[%s1 + $0x30] sm:$0xff]
  %v91 = vld [vmem:[%s1 + $0x38] sm:$0xff]
  %93 = vset.pattern.permute.xlu0 0
  %94 = vperm.xlu0 %93, %v20
  %v95 = vpop.permute.xlu0 %94
  %98 = vset.pattern.permute.xlu0 0
  %99 = vperm.xlu0 %98, %v21
  %v100 = vpop.permute.xlu0 %99
  %103 = vset.pattern.permute.xlu0 0
  %104 = vperm.xlu0 %103, %v22
  %v105 = vpop.permute.xlu0 %104
  %108 = vset.pattern.permute.xlu0 0
  %109 = vperm.xlu0 %108, %v23
  %v110 = vpop.permute.xlu0 %109
  %113 = vset.pattern.permute.xlu0 0
  %114 = vperm.xlu0 %113, %v24
  %v115 = vpop.permute.xlu0 %114
  %118 = vset.pattern.permute.xlu0 0
  %119 = vperm.xlu0 %118, %v25
  %v120 = vpop.permute.xlu0 %119
  %123 = vset.pattern.permute.xlu0 0
  %124 = vperm.xlu0 %123, %v26
  %v125 = vpop.permute.xlu0 %124
  %128 = vset.pattern.permute.xlu0 0
  %129 = vperm.xlu0 %128, %v27
  %v130 = vpop.permute.xlu0 %129
  %133 = vset.pattern.permute.xlu0 0
  %134 = vperm.xlu0 %133, %v28
  %v135 = vpop.permute.xlu0 %134
  %138 = vset.pattern.permute.xlu0 0
  %139 = vperm.xlu0 %138, %v29
  %v140 = vpop.permute.xlu0 %139
  %143 = vset.pattern.permute.xlu0 0
  %144 = vperm.xlu0 %143, %v30
  %v145 = vpop.permute.xlu0 %144
  %148 = vset.pattern.permute.xlu0 0
  %149 = vperm.xlu0 %148, %v31
  %v150 = vpop.permute.xlu0 %149
  %153 = vset.pattern.permute.xlu0 0
  %154 = vperm.xlu0 %153, %v32
  %v155 = vpop.permute.xlu0 %154
  %158 = vset.pattern.permute.xlu0 0
  %159 = vperm.xlu0 %158, %v33
  %v160 = vpop.permute.xlu0 %159
  %163 = vset.pattern.permute.xlu0 0
  %164 = vperm.xlu0 %163, %v34
  %v165 = vpop.permute.xlu0 %164
  %168 = vset.pattern.permute.xlu0 0
  %169 = vperm.xlu0 %168, %v35
  %v170 = vpop.permute.xlu0 %169
  %173 = vset.pattern.permute.xlu0 0
  %174 = vperm.xlu0 %173, %v36
  %v175 = vpop.permute.xlu0 %174
  %178 = vset.pattern.permute.xlu0 0
  %179 = vperm.xlu0 %178, %v37
  %v180 = vpop.permute.xlu0 %179
  %183 = vset.pattern.permute.xlu0 0
  %184 = vperm.xlu0 %183, %v38
  %v185 = vpop.permute.xlu0 %184
  %188 = vset.pattern.permute.xlu0 0
  %189 = vperm.xlu0 %188, %v39
  %v190 = vpop.permute.xlu0 %189
  %193 = vset.pattern.permute.xlu0 0
  %194 = vperm.xlu0 %193, %v40
  %v195 = vpop.permute.xlu0 %194
  %198 = vset.pattern.permute.xlu0 0
  %199 = vperm.xlu0 %198, %v41
  %v200 = vpop.permute.xlu0 %199
  %203 = vset.pattern.permute.xlu0 0
  %204 = vperm.xlu0 %203, %v42
  %v205 = vpop.permute.xlu0 %204
  %208 = vset.pattern.permute.xlu0 0
  %209 = vperm.xlu0 %208, %v43
  %v210 = vpop.permute.xlu0 %209
  %213 = vset.pattern.permute.xlu0 0
  %214 = vperm.xlu0 %213, %v44
  %v215 = vpop.permute.xlu0 %214
  %218 = vset.pattern.permute.xlu0 0
  %219 = vperm.xlu0 %218, %v45
  %v220 = vpop.permute.xlu0 %219
  %223 = vset.pattern.permute.xlu0 0
  %224 = vperm.xlu0 %223, %v46
  %v225 = vpop.permute.xlu0 %224
  %228 = vset.pattern.permute.xlu0 0
  %229 = vperm.xlu0 %228, %v47
  %v230 = vpop.permute.xlu0 %229
  %233 = vset.pattern.permute.xlu0 0
  %234 = vperm.xlu0 %233, %v48
  %v235 = vpop.permute.xlu0 %234
  %238 = vset.pattern.permute.xlu0 0
  %239 = vperm.xlu0 %238, %v49
  %v240 = vpop.permute.xlu0 %239
  %243 = vset.pattern.permute.xlu0 0
  %244 = vperm.xlu0 %243, %v50
  %v245 = vpop.permute.xlu0 %244
  %248 = vset.pattern.permute.xlu0 0
  %249 = vperm.xlu0 %248, %v51
  %v250 = vpop.permute.xlu0 %249
  %253 = vset.pattern.permute.xlu0 0
  %254 = vperm.xlu0 %253, %v52
  %v255 = vpop.permute.xlu0 %254
  %258 = vset.pattern.permute.xlu0 0
  %259 = vperm.xlu0 %258, %v53
  %v260 = vpop.permute.xlu0 %259
  %263 = vset.pattern.permute.xlu0 0
  %264 = vperm.xlu0 %263, %v54
  %v265 = vpop.permute.xlu0 %264
  %268 = vset.pattern.permute.xlu0 0
  %269 = vperm.xlu0 %268, %v55
  %v270 = vpop.permute.xlu0 %269
  %273 = vset.pattern.permute.xlu0 0
  %274 = vperm.xlu0 %273, %v56
  %v275 = vpop.permute.xlu0 %274
  %278 = vset.pattern.permute.xlu0 0
  %279 = vperm.xlu0 %278, %v57
  %v280 = vpop.permute.xlu0 %279
  %283 = vset.pattern.permute.xlu0 0
  %284 = vperm.xlu0 %283, %v58
  %v285 = vpop.permute.xlu0 %284
  %288 = vset.pattern.permute.xlu0 0
  %289 = vperm.xlu0 %288, %v59
  %v290 = vpop.permute.xlu0 %289
  %293 = vset.pattern.permute.xlu0 0
  %294 = vperm.xlu0 %293, %v60
  %v295 = vpop.permute.xlu0 %294
  %298 = vset.pattern.permute.xlu0 0
  %299 = vperm.xlu0 %298, %v61
  %v300 = vpop.permute.xlu0 %299
  %303 = vset.pattern.permute.xlu0 0
  %304 = vperm.xlu0 %303, %v62
  %v305 = vpop.permute.xlu0 %304
  %308 = vset.pattern.permute.xlu0 0
  %309 = vperm.xlu0 %308, %v63
  %v310 = vpop.permute.xlu0 %309
  %313 = vset.pattern.permute.xlu0 0
  %314 = vperm.xlu0 %313, %v64
  %v315 = vpop.permute.xlu0 %314
  %318 = vset.pattern.permute.xlu0 0
  %319 = vperm.xlu0 %318, %v65
  %v320 = vpop.permute.xlu0 %319
  %323 = vset.pattern.permute.xlu0 0
  %324 = vperm.xlu0 %323, %v66
  %v325 = vpop.permute.xlu0 %324
  %328 = vset.pattern.permute.xlu0 0
  %329 = vperm.xlu0 %328, %v67
  %v330 = vpop.permute.xlu0 %329
  %333 = vset.pattern.permute.xlu0 0
  %334 = vperm.xlu0 %333, %v68
  %v335 = vpop.permute.xlu0 %334
  %338 = vset.pattern.permute.xlu0 0
  %339 = vperm.xlu0 %338, %v69
  %v340 = vpop.permute.xlu0 %339
  %343 = vset.pattern.permute.xlu0 0
  %344 = vperm.xlu0 %343, %v70
  %v345 = vpop.permute.xlu0 %344
  %348 = vset.pattern.permute.xlu0 0
  %349 = vperm.xlu0 %348, %v71
  %v350 = vpop.permute.xlu0 %349
  %353 = vset.pattern.permute.xlu0 0
  %354 = vperm.xlu0 %353, %v72
  %v355 = vpop.permute.xlu0 %354
  %358 = vset.pattern.permute.xlu0 0
  %359 = vperm.xlu0 %358, %v73
  %v360 = vpop.permute.xlu0 %359
  %363 = vset.pattern.permute.xlu0 0
  %364 = vperm.xlu0 %363, %v74
  %v365 = vpop.permute.xlu0 %364
  %368 = vset.pattern.permute.xlu0 0
  %369 = vperm.xlu0 %368, %v75
  %v370 = vpop.permute.xlu0 %369
  %373 = vset.pattern.permute.xlu0 0
  %374 = vperm.xlu0 %373, %v76
  %v375 = vpop.permute.xlu0 %374
  %378 = vset.pattern.permute.xlu0 0
  %379 = vperm.xlu0 %378, %v77
  %v380 = vpop.permute.xlu0 %379
  %383 = vset.pattern.permute.xlu0 0
  %384 = vperm.xlu0 %383, %v78
  %v385 = vpop.permute.xlu0 %384
  %388 = vset.pattern.permute.xlu0 0
  %389 = vperm.xlu0 %388, %v79
  %v390 = vpop.permute.xlu0 %389
  %393 = vset.pattern.permute.xlu0 0
  %394 = vperm.xlu0 %393, %v80
  %v395 = vpop.permute.xlu0 %394
  %398 = vset.pattern.permute.xlu0 0
  %399 = vperm.xlu0 %398, %v81
  %v400 = vpop.permute.xlu0 %399
  %403 = vset.pattern.permute.xlu0 0
  %404 = vperm.xlu0 %403, %v82
  %v405 = vpop.permute.xlu0 %404
  %408 = vset.pattern.permute.xlu0 0
  %409 = vperm.xlu0 %408, %v83
  %v410 = vpop.permute.xlu0 %409
  %v412 = vmul.f32 %v95, %v84
  %v413 = vmul.f32 %v100, %v85
  %v414 = vmul.f32 %v105, %v86
  %v415 = vmul.f32 %v110, %v87
  %v416 = vmul.f32 %v115, %v88
  %v417 = vmul.f32 %v120, %v89
  %v418 = vmul.f32 %v125, %v90
  %v419 = vmul.f32 %v130, %v91
  %v420 = vmul.f32 %v135, %v84
  %v421 = vmul.f32 %v140, %v85
  %v422 = vmul.f32 %v145, %v86
  %v423 = vmul.f32 %v150, %v87
  %v424 = vmul.f32 %v155, %v88
  %v425 = vmul.f32 %v160, %v89
  %v426 = vmul.f32 %v165, %v90
  %v427 = vmul.f32 %v170, %v91
  %v428 = vmul.f32 %v175, %v84
  %v429 = vmul.f32 %v180, %v85
  %v430 = vmul.f32 %v185, %v86
  %v431 = vmul.f32 %v190, %v87
  %v432 = vmul.f32 %v195, %v88
  %v433 = vmul.f32 %v200, %v89
  %v434 = vmul.f32 %v205, %v90
  %v435 = vmul.f32 %v210, %v91
  %v436 = vmul.f32 %v215, %v84
  %v437 = vmul.f32 %v220, %v85
  %v438 = vmul.f32 %v225, %v86
  %v439 = vmul.f32 %v230, %v87
  %v440 = vmul.f32 %v235, %v88
  %v441 = vmul.f32 %v240, %v89
  %v442 = vmul.f32 %v245, %v90
  %v443 = vmul.f32 %v250, %v91
  %v444 = vmul.f32 %v255, %v84
  %v445 = vmul.f32 %v260, %v85
  %v446 = vmul.f32 %v265, %v86
  %v447 = vmul.f32 %v270, %v87
  %v448 = vmul.f32 %v275, %v88
  %v449 = vmul.f32 %v280, %v89
  %v450 = vmul.f32 %v285, %v90
  %v451 = vmul.f32 %v290, %v91
  %v452 = vmul.f32 %v295, %v84
  %v453 = vmul.f32 %v300, %v85
  %v454 = vmul.f32 %v305, %v86
  %v455 = vmul.f32 %v310, %v87
  %v456 = vmul.f32 %v315, %v88
  %v457 = vmul.f32 %v320, %v89
  %v458 = vmul.f32 %v325, %v90
  %v459 = vmul.f32 %v330, %v91
  %v460 = vmul.f32 %v335, %v84
  %v461 = vmul.f32 %v340, %v85
  %v462 = vmul.f32 %v345, %v86
  %v463 = vmul.f32 %v350, %v87
  %v464 = vmul.f32 %v355, %v88
  %v465 = vmul.f32 %v360, %v89
  %v466 = vmul.f32 %v365, %v90
  %v467 = vmul.f32 %v370, %v91
  %v468 = vmul.f32 %v375, %v84
  %v469 = vmul.f32 %v380, %v85
  %v470 = vmul.f32 %v385, %v86
  %v471 = vmul.f32 %v390, %v87
  %v472 = vmul.f32 %v395, %v88
  %v473 = vmul.f32 %v400, %v89
  %v474 = vmul.f32 %v405, %v90
  %v475 = vmul.f32 %v410, %v91
  %v476 = vld [vmem:[%s2] sm:$0x1]
  %v478 = vlaneseq
  %v479 = vshrl.u32 %v478, 7
  %v480 = vsub.s32 0, %v479
  %v481 = vrot.slane %v476, %v480
  %v483 = vsub.f32 %v412, %v481
  %v484 = vsub.f32 %v413, %v481
  %v485 = vsub.f32 %v414, %v481
  %v486 = vsub.f32 %v415, %v481
  %v487 = vsub.f32 %v416, %v481
  %v488 = vsub.f32 %v417, %v481
  %v489 = vsub.f32 %v418, %v481
  %v490 = vsub.f32 %v419, %v481
  %v491 = vsub.f32 %v420, %v481
  %v492 = vsub.f32 %v421, %v481
  %v493 = vsub.f32 %v422, %v481
  %v494 = vsub.f32 %v423, %v481
  %v495 = vsub.f32 %v424, %v481
  %v496 = vsub.f32 %v425, %v481
  %v497 = vsub.f32 %v426, %v481
  %v498 = vsub.f32 %v427, %v481
  %v499 = vsub.f32 %v428, %v481
  %v500 = vsub.f32 %v429, %v481
  %v501 = vsub.f32 %v430, %v481
  %v502 = vsub.f32 %v431, %v481
  %v503 = vsub.f32 %v432, %v481
  %v504 = vsub.f32 %v433, %v481
  %v505 = vsub.f32 %v434, %v481
  %v506 = vsub.f32 %v435, %v481
  %v507 = vsub.f32 %v436, %v481
  %v508 = vsub.f32 %v437, %v481
  %v509 = vsub.f32 %v438, %v481
  %v510 = vsub.f32 %v439, %v481
  %v511 = vsub.f32 %v440, %v481
  %v512 = vsub.f32 %v441, %v481
  %v513 = vsub.f32 %v442, %v481
  %v514 = vsub.f32 %v443, %v481
  %v515 = vsub.f32 %v444, %v481
  %v516 = vsub.f32 %v445, %v481
  %v517 = vsub.f32 %v446, %v481
  %v518 = vsub.f32 %v447, %v481
  %v519 = vsub.f32 %v448, %v481
  %v520 = vsub.f32 %v449, %v481
  %v521 = vsub.f32 %v450, %v481
  %v522 = vsub.f32 %v451, %v481
  %v523 = vsub.f32 %v452, %v481
  %v524 = vsub.f32 %v453, %v481
  %v525 = vsub.f32 %v454, %v481
  %v526 = vsub.f32 %v455, %v481
  %v527 = vsub.f32 %v456, %v481
  %v528 = vsub.f32 %v457, %v481
  %v529 = vsub.f32 %v458, %v481
  %v530 = vsub.f32 %v459, %v481
  %v531 = vsub.f32 %v460, %v481
  %v532 = vsub.f32 %v461, %v481
  %v533 = vsub.f32 %v462, %v481
  %v534 = vsub.f32 %v463, %v481
  %v535 = vsub.f32 %v464, %v481
  %v536 = vsub.f32 %v465, %v481
  %v537 = vsub.f32 %v466, %v481
  %v538 = vsub.f32 %v467, %v481
  %v539 = vsub.f32 %v468, %v481
  %v540 = vsub.f32 %v469, %v481
  %v541 = vsub.f32 %v470, %v481
  %v542 = vsub.f32 %v471, %v481
  %v543 = vsub.f32 %v472, %v481
  %v544 = vsub.f32 %v473, %v481
  %v545 = vsub.f32 %v474, %v481
  %v546 = vsub.f32 %v475, %v481
  %v547 = vand.u32 2147483647, %v483
  %vm548 = vcmp.le.f32.partialorder %v547, 0.7853982
  %vm549 = vcmp.lt.s32.totalorder %v483, 0
  %v550 = vand.u32 %v483, 2139095040
  %v551 = vshrl.u32 %v550, 23
  %v552 = vsub.s32 %v551, 127
  %v553 = vand.u32 2147483647, %v483
  %v554 = vand.u32 %v553, 8388607
  %v555 = vor.u32 %v554, 8388608
  %v556 = vsub.s32 0, %v555
  %v557 = vadd.s32 %v552, 1
  %vm558 = vcmp.gt.s32.totalorder %v557, 0
  %v559 = vsel %vm558, %v557, 0
  %v560 = vshrl.u32 %v559, 5
  %v561 = vand.u32 %v559, 31
  %v562 = vsub.s32 32, %v561
  %v563 = vshrl.u32 683565275, %v562
  %v564 = vshll.u32 683565275, %v561
  %v565 = vshrl.u32 2475754826, %v562
  %v566 = vor.u32 %v564, %v565
  %v567 = vshll.u32 2475754826, %v561
  %v568 = vshrl.u32 2131351028, %v562
  %v569 = vor.u32 %v567, %v568
  %v570 = vshll.u32 2131351028, %v561
  %v571 = vshrl.u32 2102212464, %v562
  %v572 = vor.u32 %v570, %v571
  %v573 = vshll.u32 2102212464, %v561
  %v574 = vshrl.u32 920167782, %v562
  %v575 = vor.u32 %v573, %v574
  %v576 = vshll.u32 920167782, %v561
  %v577 = vshrl.u32 1326507024, %v562
  %v578 = vor.u32 %v576, %v577
  %vm579 = vcmp.lt.s32.totalorder %v560, 1
  %vm580 = vcmp.lt.s32.totalorder %v560, 2
  %vm581 = vcmp.lt.s32.totalorder %v560, 3
  %vm582 = vcmp.lt.s32.totalorder %v560, 4
  %v583 = vsel %vm579, %v563, %v566
  %v584 = vsel %vm582, %v572, 2102212464
  %v585 = vsel %vm581, %v569, %v584
  %v586 = vsel %vm580, %v583, %v585
  %v587 = vsel %vm579, %v566, %v569
  %v588 = vsel %vm582, %v575, 920167782
  %v589 = vsel %vm581, %v572, %v588
  %v590 = vsel %vm580, %v587, %v589
  %v591 = vsel %vm579, %v569, %v572
  %v592 = vsel %vm582, %v578, 1326507024
  %v593 = vsel %vm581, %v575, %v592
  %v594 = vsel %vm580, %v591, %v593
  %v595 = vshll.u32 %v555, 8
  %v596 = vmul.u32.u64.compose %v595, %v594
  %v597 = vextract.low.u32 %v596
  %v598 = vextract.high.u32 %v596
  %v599 = vmul.u32.u64.compose %v595, %v590
  %v600 = vextract.low.u32 %v599
  %v601 = vextract.high.u32 %v599
  %v602 = vmul.u32 %v595, %v586
  %v603 = vadd.s32 %v598, %v600
  %vm604 = vc.u32 %v598, %v600
  %v605 = vadd.s32 %v601, 1
  %v606 = vsel %vm604, %v605, %v601
  %v607 = vadd.s32 %v602, %v606
  %v608 = vadd.s32 %v607, 536870912
  %v609 = vshrl.u32 %v608, 30
  %v610 = vshll.u32 %v609, 30
  %v611 = vsub.s32 %v607, %v610
  %vm612 = vcmp.lt.s32.totalorder %v611, 0
  %v613 = vsub.s32 0, %v611
  %v614 = vsel %vm612, %v613, %v611
  %v615 = vclz %v614
  %v616 = vsub.s32 %v615, 2
  %vm617 = vcmp.gt.s32.totalorder 0, %v616
  %v618 = vsel %vm617, 0, %v616
  %v619 = vsub.s32 32, %v618
  %v620 = vshll.u32 %v611, %v618
  %v621 = vshrl.u32 %v603, %v619
  %v622 = vor.u32 %v620, %v621
  %v623 = vsub.s32 4294967266, %v618
  %v624 = vadd.s32 %v623, 127
  %v625 = vshll.u32 %v624, 23
  %v626 = vor.u32 4788187, %v625
  %v627 = vand.u32 2147483647, %v626
  %v629 = vcvt.s32.f32 %v622
  %v630 = vmul.f32 %v629, %v627
  %v631 = vxor.u32 %v630, 2147483648
  %v632 = vsel %vm549, %v631, %v630
  %v633 = vsub.s32 4, %v609
  %v634 = vsel %vm549, %v633, %v609
  %v635 = vsel %vm548, %v483, %v632
  %v636 = vsel %vm548, 0, %v634
  %v637 = vcosq.f32.pop %v635
  %v638 = vsinq.f32.pop %v635
  %vm639 = vweird.f32 %v483
  %v640 = vand.u32 %v636, 3
  %vm641 = vcmp.lt.s32.totalorder %v640, 2
  %vm642 = vcmp.eq.s32.totalorder %v640, 0
  %v643 = vxor.u32 %v638, 2147483648
  %v644 = vsel %vm642, %v637, %v643
  %vm645 = vcmp.eq.s32.totalorder %v640, 2
  %v646 = vxor.u32 %v637, 2147483648
  %v647 = vsel %vm645, %v646, %v638
  %v648 = vsel %vm641, %v644, %v647
  %v649 = vsel %vm639, nan, %v648
  %v650 = vand.u32 2147483647, %v484
  %vm651 = vcmp.le.f32.partialorder %v650, 0.7853982
  %vm652 = vcmp.lt.s32.totalorder %v484, 0
  %v653 = vand.u32 %v484, 2139095040
  %v654 = vshrl.u32 %v653, 23
  %v655 = vsub.s32 %v654, 127
  %v656 = vand.u32 2147483647, %v484
  %v657 = vand.u32 %v656, 8388607
  %v658 = vor.u32 %v657, 8388608
  %v659 = vsub.s32 0, %v658
  %v660 = vadd.s32 %v655, 1
  %vm661 = vcmp.gt.s32.totalorder %v660, 0
  %v662 = vsel %vm661, %v660, 0
  %v663 = vshrl.u32 %v662, 5
  %v664 = vand.u32 %v662, 31
  %v665 = vsub.s32 32, %v664
  %v666 = vshrl.u32 683565275, %v665
  %v667 = vshll.u32 683565275, %v664
  %v668 = vshrl.u32 2475754826, %v665
  %v669 = vor.u32 %v667, %v668
  %v670 = vshll.u32 2475754826, %v664
  %v671 = vshrl.u32 2131351028, %v665
  %v672 = vor.u32 %v670, %v671
  %v673 = vshll.u32 2131351028, %v664
  %v674 = vshrl.u32 2102212464, %v665
  %v675 = vor.u32 %v673, %v674
  %v676 = vshll.u32 2102212464, %v664
  %v677 = vshrl.u32 920167782, %v665
  %v678 = vor.u32 %v676, %v677
  %v679 = vshll.u32 920167782, %v664
  %v680 = vshrl.u32 1326507024, %v665
  %v681 = vor.u32 %v679, %v680
  %vm682 = vcmp.lt.s32.totalorder %v663, 1
  %vm683 = vcmp.lt.s32.totalorder %v663, 2
  %vm684 = vcmp.lt.s32.totalorder %v663, 3
  %vm685 = vcmp.lt.s32.totalorder %v663, 4
  %v686 = vsel %vm682, %v666, %v669
  %v687 = vsel %vm685, %v675, 2102212464
  %v688 = vsel %vm684, %v672, %v687
  %v689 = vsel %vm683, %v686, %v688
  %v690 = vsel %vm682, %v669, %v672
  %v691 = vsel %vm685, %v678, 920167782
  %v692 = vsel %vm684, %v675, %v691
  %v693 = vsel %vm683, %v690, %v692
  %v694 = vsel %vm682, %v672, %v675
  %v695 = vsel %vm685, %v681, 1326507024
  %v696 = vsel %vm684, %v678, %v695
  %v697 = vsel %vm683, %v694, %v696
  %v698 = vshll.u32 %v658, 8
  %v699 = vmul.u32.u64.compose %v698, %v697
  %v700 = vextract.low.u32 %v699
  %v701 = vextract.high.u32 %v699
  %v702 = vmul.u32.u64.compose %v698, %v693
  %v703 = vextract.low.u32 %v702
  %v704 = vextract.high.u32 %v702
  %v705 = vmul.u32 %v698, %v689
  %v706 = vadd.s32 %v701, %v703
  %vm707 = vc.u32 %v701, %v703
  %v708 = vadd.s32 %v704, 1
  %v709 = vsel %vm707, %v708, %v704
  %v710 = vadd.s32 %v705, %v709
  %v711 = vadd.s32 %v710, 536870912
  %v712 = vshrl.u32 %v711, 30
  %v713 = vshll.u32 %v712, 30
  %v714 = vsub.s32 %v710, %v713
  %vm715 = vcmp.lt.s32.totalorder %v714, 0
  %v716 = vsub.s32 0, %v714
  %v717 = vsel %vm715, %v716, %v714
  %v718 = vclz %v717
  %v719 = vsub.s32 %v718, 2
  %vm720 = vcmp.gt.s32.totalorder 0, %v719
  %v721 = vsel %vm720, 0, %v719
  %v722 = vsub.s32 32, %v721
  %v723 = vshll.u32 %v714, %v721
  %v724 = vshrl.u32 %v706, %v722
  %v725 = vor.u32 %v723, %v724
  %v726 = vsub.s32 4294967266, %v721
  %v727 = vadd.s32 %v726, 127
  %v728 = vshll.u32 %v727, 23
  %v729 = vor.u32 4788187, %v728
  %v730 = vand.u32 2147483647, %v729
  %v732 = vcvt.s32.f32 %v725
  %v733 = vmul.f32 %v732, %v730
  %v734 = vxor.u32 %v733, 2147483648
  %v735 = vsel %vm652, %v734, %v733
  %v736 = vsub.s32 4, %v712
  %v737 = vsel %vm652, %v736, %v712
  %v738 = vsel %vm651, %v484, %v735
  %v739 = vsel %vm651, 0, %v737
  %v740 = vcosq.f32.pop %v738
  %v741 = vsinq.f32.pop %v738
  %vm742 = vweird.f32 %v484
  %v743 = vand.u32 %v739, 3
  %vm744 = vcmp.lt.s32.totalorder %v743, 2
  %vm745 = vcmp.eq.s32.totalorder %v743, 0
  %v746 = vxor.u32 %v741, 2147483648
  %v747 = vsel %vm745, %v740, %v746
  %vm748 = vcmp.eq.s32.totalorder %v743, 2
  %v749 = vxor.u32 %v740, 2147483648
  %v750 = vsel %vm748, %v749, %v741
  %v751 = vsel %vm744, %v747, %v750
  %v752 = vsel %vm742, nan, %v751
  %v753 = vand.u32 2147483647, %v485
  %vm754 = vcmp.le.f32.partialorder %v753, 0.7853982
  %vm755 = vcmp.lt.s32.totalorder %v485, 0
  %v756 = vand.u32 %v485, 2139095040
  %v757 = vshrl.u32 %v756, 23
  %v758 = vsub.s32 %v757, 127
  %v759 = vand.u32 2147483647, %v485
  %v760 = vand.u32 %v759, 8388607
  %v761 = vor.u32 %v760, 8388608
  %v762 = vsub.s32 0, %v761
  %v763 = vadd.s32 %v758, 1
  %vm764 = vcmp.gt.s32.totalorder %v763, 0
  %v765 = vsel %vm764, %v763, 0
  %v766 = vshrl.u32 %v765, 5
  %v767 = vand.u32 %v765, 31
  %v768 = vsub.s32 32, %v767
  %v769 = vshrl.u32 683565275, %v768
  %v770 = vshll.u32 683565275, %v767
  %v771 = vshrl.u32 2475754826, %v768
  %v772 = vor.u32 %v770, %v771
  %v773 = vshll.u32 2475754826, %v767
  %v774 = vshrl.u32 2131351028, %v768
  %v775 = vor.u32 %v773, %v774
  %v776 = vshll.u32 2131351028, %v767
  %v777 = vshrl.u32 2102212464, %v768
  %v778 = vor.u32 %v776, %v777
  %v779 = vshll.u32 2102212464, %v767
  %v780 = vshrl.u32 920167782, %v768
  %v781 = vor.u32 %v779, %v780
  %v782 = vshll.u32 920167782, %v767
  %v783 = vshrl.u32 1326507024, %v768
  %v784 = vor.u32 %v782, %v783
  %vm785 = vcmp.lt.s32.totalorder %v766, 1
  %vm786 = vcmp.lt.s32.totalorder %v766, 2
  %vm787 = vcmp.lt.s32.totalorder %v766, 3
  %vm788 = vcmp.lt.s32.totalorder %v766, 4
  %v789 = vsel %vm785, %v769, %v772
  %v790 = vsel %vm788, %v778, 2102212464
  %v791 = vsel %vm787, %v775, %v790
  %v792 = vsel %vm786, %v789, %v791
  %v793 = vsel %vm785, %v772, %v775
  %v794 = vsel %vm788, %v781, 920167782
  %v795 = vsel %vm787, %v778, %v794
  %v796 = vsel %vm786, %v793, %v795
  %v797 = vsel %vm785, %v775, %v778
  %v798 = vsel %vm788, %v784, 1326507024
  %v799 = vsel %vm787, %v781, %v798
  %v800 = vsel %vm786, %v797, %v799
  %v801 = vshll.u32 %v761, 8
  %v802 = vmul.u32.u64.compose %v801, %v800
  %v803 = vextract.low.u32 %v802
  %v804 = vextract.high.u32 %v802
  %v805 = vmul.u32.u64.compose %v801, %v796
  %v806 = vextract.low.u32 %v805
  %v807 = vextract.high.u32 %v805
  %v808 = vmul.u32 %v801, %v792
  %v809 = vadd.s32 %v804, %v806
  %vm810 = vc.u32 %v804, %v806
  %v811 = vadd.s32 %v807, 1
  %v812 = vsel %vm810, %v811, %v807
  %v813 = vadd.s32 %v808, %v812
  %v814 = vadd.s32 %v813, 536870912
  %v815 = vshrl.u32 %v814, 30
  %v816 = vshll.u32 %v815, 30
  %v817 = vsub.s32 %v813, %v816
  %vm818 = vcmp.lt.s32.totalorder %v817, 0
  %v819 = vsub.s32 0, %v817
  %v820 = vsel %vm818, %v819, %v817
  %v821 = vclz %v820
  %v822 = vsub.s32 %v821, 2
  %vm823 = vcmp.gt.s32.totalorder 0, %v822
  %v824 = vsel %vm823, 0, %v822
  %v825 = vsub.s32 32, %v824
  %v826 = vshll.u32 %v817, %v824
  %v827 = vshrl.u32 %v809, %v825
  %v828 = vor.u32 %v826, %v827
  %v829 = vsub.s32 4294967266, %v824
  %v830 = vadd.s32 %v829, 127
  %v831 = vshll.u32 %v830, 23
  %v832 = vor.u32 4788187, %v831
  %v833 = vand.u32 2147483647, %v832
  %v835 = vcvt.s32.f32 %v828
  %v836 = vmul.f32 %v835, %v833
  %v837 = vxor.u32 %v836, 2147483648
  %v838 = vsel %vm755, %v837, %v836
  %v839 = vsub.s32 4, %v815
  %v840 = vsel %vm755, %v839, %v815
  %v841 = vsel %vm754, %v485, %v838
  %v842 = vsel %vm754, 0, %v840
  %v843 = vcosq.f32.pop %v841
  %v844 = vsinq.f32.pop %v841
  %vm845 = vweird.f32 %v485
  %v846 = vand.u32 %v842, 3
  %vm847 = vcmp.lt.s32.totalorder %v846, 2
  %vm848 = vcmp.eq.s32.totalorder %v846, 0
  %v849 = vxor.u32 %v844, 2147483648
  %v850 = vsel %vm848, %v843, %v849
  %vm851 = vcmp.eq.s32.totalorder %v846, 2
  %v852 = vxor.u32 %v843, 2147483648
  %v853 = vsel %vm851, %v852, %v844
  %v854 = vsel %vm847, %v850, %v853
  %v855 = vsel %vm845, nan, %v854
  %v856 = vand.u32 2147483647, %v486
  %vm857 = vcmp.le.f32.partialorder %v856, 0.7853982
  %vm858 = vcmp.lt.s32.totalorder %v486, 0
  %v859 = vand.u32 %v486, 2139095040
  %v860 = vshrl.u32 %v859, 23
  %v861 = vsub.s32 %v860, 127
  %v862 = vand.u32 2147483647, %v486
  %v863 = vand.u32 %v862, 8388607
  %v864 = vor.u32 %v863, 8388608
  %v865 = vsub.s32 0, %v864
  %v866 = vadd.s32 %v861, 1
  %vm867 = vcmp.gt.s32.totalorder %v866, 0
  %v868 = vsel %vm867, %v866, 0
  %v869 = vshrl.u32 %v868, 5
  %v870 = vand.u32 %v868, 31
  %v871 = vsub.s32 32, %v870
  %v872 = vshrl.u32 683565275, %v871
  %v873 = vshll.u32 683565275, %v870
  %v874 = vshrl.u32 2475754826, %v871
  %v875 = vor.u32 %v873, %v874
  %v876 = vshll.u32 2475754826, %v870
  %v877 = vshrl.u32 2131351028, %v871
  %v878 = vor.u32 %v876, %v877
  %v879 = vshll.u32 2131351028, %v870
  %v880 = vshrl.u32 2102212464, %v871
  %v881 = vor.u32 %v879, %v880
  %v882 = vshll.u32 2102212464, %v870
  %v883 = vshrl.u32 920167782, %v871
  %v884 = vor.u32 %v882, %v883
  %v885 = vshll.u32 920167782, %v870
  %v886 = vshrl.u32 1326507024, %v871
  %v887 = vor.u32 %v885, %v886
  %vm888 = vcmp.lt.s32.totalorder %v869, 1
  %vm889 = vcmp.lt.s32.totalorder %v869, 2
  %vm890 = vcmp.lt.s32.totalorder %v869, 3
  %vm891 = vcmp.lt.s32.totalorder %v869, 4
  %v892 = vsel %vm888, %v872, %v875
  %v893 = vsel %vm891, %v881, 2102212464
  %v894 = vsel %vm890, %v878, %v893
  %v895 = vsel %vm889, %v892, %v894
  %v896 = vsel %vm888, %v875, %v878
  %v897 = vsel %vm891, %v884, 920167782
  %v898 = vsel %vm890, %v881, %v897
  %v899 = vsel %vm889, %v896, %v898
  %v900 = vsel %vm888, %v878, %v881
  %v901 = vsel %vm891, %v887, 1326507024
  %v902 = vsel %vm890, %v884, %v901
  %v903 = vsel %vm889, %v900, %v902
  %v904 = vshll.u32 %v864, 8
  %v905 = vmul.u32.u64.compose %v904, %v903
  %v906 = vextract.low.u32 %v905
  %v907 = vextract.high.u32 %v905
  %v908 = vmul.u32.u64.compose %v904, %v899
  %v909 = vextract.low.u32 %v908
  %v910 = vextract.high.u32 %v908
  %v911 = vmul.u32 %v904, %v895
  %v912 = vadd.s32 %v907, %v909
  %vm913 = vc.u32 %v907, %v909
  %v914 = vadd.s32 %v910, 1
  %v915 = vsel %vm913, %v914, %v910
  %v916 = vadd.s32 %v911, %v915
  %v917 = vadd.s32 %v916, 536870912
  %v918 = vshrl.u32 %v917, 30
  %v919 = vshll.u32 %v918, 30
  %v920 = vsub.s32 %v916, %v919
  %vm921 = vcmp.lt.s32.totalorder %v920, 0
  %v922 = vsub.s32 0, %v920
  %v923 = vsel %vm921, %v922, %v920
  %v924 = vclz %v923
  %v925 = vsub.s32 %v924, 2
  %vm926 = vcmp.gt.s32.totalorder 0, %v925
  %v927 = vsel %vm926, 0, %v925
  %v928 = vsub.s32 32, %v927
  %v929 = vshll.u32 %v920, %v927
  %v930 = vshrl.u32 %v912, %v928
  %v931 = vor.u32 %v929, %v930
  %v932 = vsub.s32 4294967266, %v927
  %v933 = vadd.s32 %v932, 127
  %v934 = vshll.u32 %v933, 23
  %v935 = vor.u32 4788187, %v934
  %v936 = vand.u32 2147483647, %v935
  %v938 = vcvt.s32.f32 %v931
  %v939 = vmul.f32 %v938, %v936
  %v940 = vxor.u32 %v939, 2147483648
  %v941 = vsel %vm858, %v940, %v939
  %v942 = vsub.s32 4, %v918
  %v943 = vsel %vm858, %v942, %v918
  %v944 = vsel %vm857, %v486, %v941
  %v945 = vsel %vm857, 0, %v943
  %v946 = vcosq.f32.pop %v944
  %v947 = vsinq.f32.pop %v944
  %vm948 = vweird.f32 %v486
  %v949 = vand.u32 %v945, 3
  %vm950 = vcmp.lt.s32.totalorder %v949, 2
  %vm951 = vcmp.eq.s32.totalorder %v949, 0
  %v952 = vxor.u32 %v947, 2147483648
  %v953 = vsel %vm951, %v946, %v952
  %vm954 = vcmp.eq.s32.totalorder %v949, 2
  %v955 = vxor.u32 %v946, 2147483648
  %v956 = vsel %vm954, %v955, %v947
  %v957 = vsel %vm950, %v953, %v956
  %v958 = vsel %vm948, nan, %v957
  %v959 = vand.u32 2147483647, %v487
  %vm960 = vcmp.le.f32.partialorder %v959, 0.7853982
  %vm961 = vcmp.lt.s32.totalorder %v487, 0
  %v962 = vand.u32 %v487, 2139095040
  %v963 = vshrl.u32 %v962, 23
  %v964 = vsub.s32 %v963, 127
  %v965 = vand.u32 2147483647, %v487
  %v966 = vand.u32 %v965, 8388607
  %v967 = vor.u32 %v966, 8388608
  %v968 = vsub.s32 0, %v967
  %v969 = vadd.s32 %v964, 1
  %vm970 = vcmp.gt.s32.totalorder %v969, 0
  %v971 = vsel %vm970, %v969, 0
  %v972 = vshrl.u32 %v971, 5
  %v973 = vand.u32 %v971, 31
  %v974 = vsub.s32 32, %v973
  %v975 = vshrl.u32 683565275, %v974
  %v976 = vshll.u32 683565275, %v973
  %v977 = vshrl.u32 2475754826, %v974
  %v978 = vor.u32 %v976, %v977
  %v979 = vshll.u32 2475754826, %v973
  %v980 = vshrl.u32 2131351028, %v974
  %v981 = vor.u32 %v979, %v980
  %v982 = vshll.u32 2131351028, %v973
  %v983 = vshrl.u32 2102212464, %v974
  %v984 = vor.u32 %v982, %v983
  %v985 = vshll.u32 2102212464, %v973
  %v986 = vshrl.u32 920167782, %v974
  %v987 = vor.u32 %v985, %v986
  %v988 = vshll.u32 920167782, %v973
  %v989 = vshrl.u32 1326507024, %v974
  %v990 = vor.u32 %v988, %v989
  %vm991 = vcmp.lt.s32.totalorder %v972, 1
  %vm992 = vcmp.lt.s32.totalorder %v972, 2
  %vm993 = vcmp.lt.s32.totalorder %v972, 3
  %vm994 = vcmp.lt.s32.totalorder %v972, 4
  %v995 = vsel %vm991, %v975, %v978
  %v996 = vsel %vm994, %v984, 2102212464
  %v997 = vsel %vm993, %v981, %v996
  %v998 = vsel %vm992, %v995, %v997
  %v999 = vsel %vm991, %v978, %v981
  %v1000 = vsel %vm994, %v987, 920167782
  %v1001 = vsel %vm993, %v984, %v1000
  %v1002 = vsel %vm992, %v999, %v1001
  %v1003 = vsel %vm991, %v981, %v984
  %v1004 = vsel %vm994, %v990, 1326507024
  %v1005 = vsel %vm993, %v987, %v1004
  %v1006 = vsel %vm992, %v1003, %v1005
  %v1007 = vshll.u32 %v967, 8
  %v1008 = vmul.u32.u64.compose %v1007, %v1006
  %v1009 = vextract.low.u32 %v1008
  %v1010 = vextract.high.u32 %v1008
  %v1011 = vmul.u32.u64.compose %v1007, %v1002
  %v1012 = vextract.low.u32 %v1011
  %v1013 = vextract.high.u32 %v1011
  %v1014 = vmul.u32 %v1007, %v998
  %v1015 = vadd.s32 %v1010, %v1012
  %vm1016 = vc.u32 %v1010, %v1012
  %v1017 = vadd.s32 %v1013, 1
  %v1018 = vsel %vm1016, %v1017, %v1013
  %v1019 = vadd.s32 %v1014, %v1018
  %v1020 = vadd.s32 %v1019, 536870912
  %v1021 = vshrl.u32 %v1020, 30
  %v1022 = vshll.u32 %v1021, 30
  %v1023 = vsub.s32 %v1019, %v1022
  %vm1024 = vcmp.lt.s32.totalorder %v1023, 0
  %v1025 = vsub.s32 0, %v1023
  %v1026 = vsel %vm1024, %v1025, %v1023
  %v1027 = vclz %v1026
  %v1028 = vsub.s32 %v1027, 2
  %vm1029 = vcmp.gt.s32.totalorder 0, %v1028
  %v1030 = vsel %vm1029, 0, %v1028
  %v1031 = vsub.s32 32, %v1030
  %v1032 = vshll.u32 %v1023, %v1030
  %v1033 = vshrl.u32 %v1015, %v1031
  %v1034 = vor.u32 %v1032, %v1033
  %v1035 = vsub.s32 4294967266, %v1030
  %v1036 = vadd.s32 %v1035, 127
  %v1037 = vshll.u32 %v1036, 23
  %v1038 = vor.u32 4788187, %v1037
  %v1039 = vand.u32 2147483647, %v1038
  %v1041 = vcvt.s32.f32 %v1034
  %v1042 = vmul.f32 %v1041, %v1039
  %v1043 = vxor.u32 %v1042, 2147483648
  %v1044 = vsel %vm961, %v1043, %v1042
  %v1045 = vsub.s32 4, %v1021
  %v1046 = vsel %vm961, %v1045, %v1021
  %v1047 = vsel %vm960, %v487, %v1044
  %v1048 = vsel %vm960, 0, %v1046
  %v1049 = vcosq.f32.pop %v1047
  %v1050 = vsinq.f32.pop %v1047
  %vm1051 = vweird.f32 %v487
  %v1052 = vand.u32 %v1048, 3
  %vm1053 = vcmp.lt.s32.totalorder %v1052, 2
  %vm1054 = vcmp.eq.s32.totalorder %v1052, 0
  %v1055 = vxor.u32 %v1050, 2147483648
  %v1056 = vsel %vm1054, %v1049, %v1055
  %vm1057 = vcmp.eq.s32.totalorder %v1052, 2
  %v1058 = vxor.u32 %v1049, 2147483648
  %v1059 = vsel %vm1057, %v1058, %v1050
  %v1060 = vsel %vm1053, %v1056, %v1059
  %v1061 = vsel %vm1051, nan, %v1060
  %v1062 = vand.u32 2147483647, %v488
  %vm1063 = vcmp.le.f32.partialorder %v1062, 0.7853982
  %vm1064 = vcmp.lt.s32.totalorder %v488, 0
  %v1065 = vand.u32 %v488, 2139095040
  %v1066 = vshrl.u32 %v1065, 23
  %v1067 = vsub.s32 %v1066, 127
  %v1068 = vand.u32 2147483647, %v488
  %v1069 = vand.u32 %v1068, 8388607
  %v1070 = vor.u32 %v1069, 8388608
  %v1071 = vsub.s32 0, %v1070
  %v1072 = vadd.s32 %v1067, 1
  %vm1073 = vcmp.gt.s32.totalorder %v1072, 0
  %v1074 = vsel %vm1073, %v1072, 0
  %v1075 = vshrl.u32 %v1074, 5
  %v1076 = vand.u32 %v1074, 31
  %v1077 = vsub.s32 32, %v1076
  %v1078 = vshrl.u32 683565275, %v1077
  %v1079 = vshll.u32 683565275, %v1076
  %v1080 = vshrl.u32 2475754826, %v1077
  %v1081 = vor.u32 %v1079, %v1080
  %v1082 = vshll.u32 2475754826, %v1076
  %v1083 = vshrl.u32 2131351028, %v1077
  %v1084 = vor.u32 %v1082, %v1083
  %v1085 = vshll.u32 2131351028, %v1076
  %v1086 = vshrl.u32 2102212464, %v1077
  %v1087 = vor.u32 %v1085, %v1086
  %v1088 = vshll.u32 2102212464, %v1076
  %v1089 = vshrl.u32 920167782, %v1077
  %v1090 = vor.u32 %v1088, %v1089
  %v1091 = vshll.u32 920167782, %v1076
  %v1092 = vshrl.u32 1326507024, %v1077
  %v1093 = vor.u32 %v1091, %v1092
  %vm1094 = vcmp.lt.s32.totalorder %v1075, 1
  %vm1095 = vcmp.lt.s32.totalorder %v1075, 2
  %vm1096 = vcmp.lt.s32.totalorder %v1075, 3
  %vm1097 = vcmp.lt.s32.totalorder %v1075, 4
  %v1098 = vsel %vm1094, %v1078, %v1081
  %v1099 = vsel %vm1097, %v1087, 2102212464
  %v1100 = vsel %vm1096, %v1084, %v1099
  %v1101 = vsel %vm1095, %v1098, %v1100
  %v1102 = vsel %vm1094, %v1081, %v1084
  %v1103 = vsel %vm1097, %v1090, 920167782
  %v1104 = vsel %vm1096, %v1087, %v1103
  %v1105 = vsel %vm1095, %v1102, %v1104
  %v1106 = vsel %vm1094, %v1084, %v1087
  %v1107 = vsel %vm1097, %v1093, 1326507024
  %v1108 = vsel %vm1096, %v1090, %v1107
  %v1109 = vsel %vm1095, %v1106, %v1108
  %v1110 = vshll.u32 %v1070, 8
  %v1111 = vmul.u32.u64.compose %v1110, %v1109
  %v1112 = vextract.low.u32 %v1111
  %v1113 = vextract.high.u32 %v1111
  %v1114 = vmul.u32.u64.compose %v1110, %v1105
  %v1115 = vextract.low.u32 %v1114
  %v1116 = vextract.high.u32 %v1114
  %v1117 = vmul.u32 %v1110, %v1101
  %v1118 = vadd.s32 %v1113, %v1115
  %vm1119 = vc.u32 %v1113, %v1115
  %v1120 = vadd.s32 %v1116, 1
  %v1121 = vsel %vm1119, %v1120, %v1116
  %v1122 = vadd.s32 %v1117, %v1121
  %v1123 = vadd.s32 %v1122, 536870912
  %v1124 = vshrl.u32 %v1123, 30
  %v1125 = vshll.u32 %v1124, 30
  %v1126 = vsub.s32 %v1122, %v1125
  %vm1127 = vcmp.lt.s32.totalorder %v1126, 0
  %v1128 = vsub.s32 0, %v1126
  %v1129 = vsel %vm1127, %v1128, %v1126
  %v1130 = vclz %v1129
  %v1131 = vsub.s32 %v1130, 2
  %vm1132 = vcmp.gt.s32.totalorder 0, %v1131
  %v1133 = vsel %vm1132, 0, %v1131
  %v1134 = vsub.s32 32, %v1133
  %v1135 = vshll.u32 %v1126, %v1133
  %v1136 = vshrl.u32 %v1118, %v1134
  %v1137 = vor.u32 %v1135, %v1136
  %v1138 = vsub.s32 4294967266, %v1133
  %v1139 = vadd.s32 %v1138, 127
  %v1140 = vshll.u32 %v1139, 23
  %v1141 = vor.u32 4788187, %v1140
  %v1142 = vand.u32 2147483647, %v1141
  %v1144 = vcvt.s32.f32 %v1137
  %v1145 = vmul.f32 %v1144, %v1142
  %v1146 = vxor.u32 %v1145, 2147483648
  %v1147 = vsel %vm1064, %v1146, %v1145
  %v1148 = vsub.s32 4, %v1124
  %v1149 = vsel %vm1064, %v1148, %v1124
  %v1150 = vsel %vm1063, %v488, %v1147
  %v1151 = vsel %vm1063, 0, %v1149
  %v1152 = vcosq.f32.pop %v1150
  %v1153 = vsinq.f32.pop %v1150
  %vm1154 = vweird.f32 %v488
  %v1155 = vand.u32 %v1151, 3
  %vm1156 = vcmp.lt.s32.totalorder %v1155, 2
  %vm1157 = vcmp.eq.s32.totalorder %v1155, 0
  %v1158 = vxor.u32 %v1153, 2147483648
  %v1159 = vsel %vm1157, %v1152, %v1158
  %vm1160 = vcmp.eq.s32.totalorder %v1155, 2
  %v1161 = vxor.u32 %v1152, 2147483648
  %v1162 = vsel %vm1160, %v1161, %v1153
  %v1163 = vsel %vm1156, %v1159, %v1162
  %v1164 = vsel %vm1154, nan, %v1163
  %v1165 = vand.u32 2147483647, %v489
  %vm1166 = vcmp.le.f32.partialorder %v1165, 0.7853982
  %vm1167 = vcmp.lt.s32.totalorder %v489, 0
  %v1168 = vand.u32 %v489, 2139095040
  %v1169 = vshrl.u32 %v1168, 23
  %v1170 = vsub.s32 %v1169, 127
  %v1171 = vand.u32 2147483647, %v489
  %v1172 = vand.u32 %v1171, 8388607
  %v1173 = vor.u32 %v1172, 8388608
  %v1174 = vsub.s32 0, %v1173
  %v1175 = vadd.s32 %v1170, 1
  %vm1176 = vcmp.gt.s32.totalorder %v1175, 0
  %v1177 = vsel %vm1176, %v1175, 0
  %v1178 = vshrl.u32 %v1177, 5
  %v1179 = vand.u32 %v1177, 31
  %v1180 = vsub.s32 32, %v1179
  %v1181 = vshrl.u32 683565275, %v1180
  %v1182 = vshll.u32 683565275, %v1179
  %v1183 = vshrl.u32 2475754826, %v1180
  %v1184 = vor.u32 %v1182, %v1183
  %v1185 = vshll.u32 2475754826, %v1179
  %v1186 = vshrl.u32 2131351028, %v1180
  %v1187 = vor.u32 %v1185, %v1186
  %v1188 = vshll.u32 2131351028, %v1179
  %v1189 = vshrl.u32 2102212464, %v1180
  %v1190 = vor.u32 %v1188, %v1189
  %v1191 = vshll.u32 2102212464, %v1179
  %v1192 = vshrl.u32 920167782, %v1180
  %v1193 = vor.u32 %v1191, %v1192
  %v1194 = vshll.u32 920167782, %v1179
  %v1195 = vshrl.u32 1326507024, %v1180
  %v1196 = vor.u32 %v1194, %v1195
  %vm1197 = vcmp.lt.s32.totalorder %v1178, 1
  %vm1198 = vcmp.lt.s32.totalorder %v1178, 2
  %vm1199 = vcmp.lt.s32.totalorder %v1178, 3
  %vm1200 = vcmp.lt.s32.totalorder %v1178, 4
  %v1201 = vsel %vm1197, %v1181, %v1184
  %v1202 = vsel %vm1200, %v1190, 2102212464
  %v1203 = vsel %vm1199, %v1187, %v1202
  %v1204 = vsel %vm1198, %v1201, %v1203
  %v1205 = vsel %vm1197, %v1184, %v1187
  %v1206 = vsel %vm1200, %v1193, 920167782
  %v1207 = vsel %vm1199, %v1190, %v1206
  %v1208 = vsel %vm1198, %v1205, %v1207
  %v1209 = vsel %vm1197, %v1187, %v1190
  %v1210 = vsel %vm1200, %v1196, 1326507024
  %v1211 = vsel %vm1199, %v1193, %v1210
  %v1212 = vsel %vm1198, %v1209, %v1211
  %v1213 = vshll.u32 %v1173, 8
  %v1214 = vmul.u32.u64.compose %v1213, %v1212
  %v1215 = vextract.low.u32 %v1214
  %v1216 = vextract.high.u32 %v1214
  %v1217 = vmul.u32.u64.compose %v1213, %v1208
  %v1218 = vextract.low.u32 %v1217
  %v1219 = vextract.high.u32 %v1217
  %v1220 = vmul.u32 %v1213, %v1204
  %v1221 = vadd.s32 %v1216, %v1218
  %vm1222 = vc.u32 %v1216, %v1218
  %v1223 = vadd.s32 %v1219, 1
  %v1224 = vsel %vm1222, %v1223, %v1219
  %v1225 = vadd.s32 %v1220, %v1224
  %v1226 = vadd.s32 %v1225, 536870912
  %v1227 = vshrl.u32 %v1226, 30
  %v1228 = vshll.u32 %v1227, 30
  %v1229 = vsub.s32 %v1225, %v1228
  %vm1230 = vcmp.lt.s32.totalorder %v1229, 0
  %v1231 = vsub.s32 0, %v1229
  %v1232 = vsel %vm1230, %v1231, %v1229
  %v1233 = vclz %v1232
  %v1234 = vsub.s32 %v1233, 2
  %vm1235 = vcmp.gt.s32.totalorder 0, %v1234
  %v1236 = vsel %vm1235, 0, %v1234
  %v1237 = vsub.s32 32, %v1236
  %v1238 = vshll.u32 %v1229, %v1236
  %v1239 = vshrl.u32 %v1221, %v1237
  %v1240 = vor.u32 %v1238, %v1239
  %v1241 = vsub.s32 4294967266, %v1236
  %v1242 = vadd.s32 %v1241, 127
  %v1243 = vshll.u32 %v1242, 23
  %v1244 = vor.u32 4788187, %v1243
  %v1245 = vand.u32 2147483647, %v1244
  %v1247 = vcvt.s32.f32 %v1240
  %v1248 = vmul.f32 %v1247, %v1245
  %v1249 = vxor.u32 %v1248, 2147483648
  %v1250 = vsel %vm1167, %v1249, %v1248
  %v1251 = vsub.s32 4, %v1227
  %v1252 = vsel %vm1167, %v1251, %v1227
  %v1253 = vsel %vm1166, %v489, %v1250
  %v1254 = vsel %vm1166, 0, %v1252
  %v1255 = vcosq.f32.pop %v1253
  %v1256 = vsinq.f32.pop %v1253
  %vm1257 = vweird.f32 %v489
  %v1258 = vand.u32 %v1254, 3
  %vm1259 = vcmp.lt.s32.totalorder %v1258, 2
  %vm1260 = vcmp.eq.s32.totalorder %v1258, 0
  %v1261 = vxor.u32 %v1256, 2147483648
  %v1262 = vsel %vm1260, %v1255, %v1261
  %vm1263 = vcmp.eq.s32.totalorder %v1258, 2
  %v1264 = vxor.u32 %v1255, 2147483648
  %v1265 = vsel %vm1263, %v1264, %v1256
  %v1266 = vsel %vm1259, %v1262, %v1265
  %v1267 = vsel %vm1257, nan, %v1266
  %v1268 = vand.u32 2147483647, %v490
  %vm1269 = vcmp.le.f32.partialorder %v1268, 0.7853982
  %vm1270 = vcmp.lt.s32.totalorder %v490, 0
  %v1271 = vand.u32 %v490, 2139095040
  %v1272 = vshrl.u32 %v1271, 23
  %v1273 = vsub.s32 %v1272, 127
  %v1274 = vand.u32 2147483647, %v490
  %v1275 = vand.u32 %v1274, 8388607
  %v1276 = vor.u32 %v1275, 8388608
  %v1277 = vsub.s32 0, %v1276
  %v1278 = vadd.s32 %v1273, 1
  %vm1279 = vcmp.gt.s32.totalorder %v1278, 0
  %v1280 = vsel %vm1279, %v1278, 0
  %v1281 = vshrl.u32 %v1280, 5
  %v1282 = vand.u32 %v1280, 31
  %v1283 = vsub.s32 32, %v1282
  %v1284 = vshrl.u32 683565275, %v1283
  %v1285 = vshll.u32 683565275, %v1282
  %v1286 = vshrl.u32 2475754826, %v1283
  %v1287 = vor.u32 %v1285, %v1286
  %v1288 = vshll.u32 2475754826, %v1282
  %v1289 = vshrl.u32 2131351028, %v1283
  %v1290 = vor.u32 %v1288, %v1289
  %v1291 = vshll.u32 2131351028, %v1282
  %v1292 = vshrl.u32 2102212464, %v1283
  %v1293 = vor.u32 %v1291, %v1292
  %v1294 = vshll.u32 2102212464, %v1282
  %v1295 = vshrl.u32 920167782, %v1283
  %v1296 = vor.u32 %v1294, %v1295
  %v1297 = vshll.u32 920167782, %v1282
  %v1298 = vshrl.u32 1326507024, %v1283
  %v1299 = vor.u32 %v1297, %v1298
  %vm1300 = vcmp.lt.s32.totalorder %v1281, 1
  %vm1301 = vcmp.lt.s32.totalorder %v1281, 2
  %vm1302 = vcmp.lt.s32.totalorder %v1281, 3
  %vm1303 = vcmp.lt.s32.totalorder %v1281, 4
  %v1304 = vsel %vm1300, %v1284, %v1287
  %v1305 = vsel %vm1303, %v1293, 2102212464
  %v1306 = vsel %vm1302, %v1290, %v1305
  %v1307 = vsel %vm1301, %v1304, %v1306
  %v1308 = vsel %vm1300, %v1287, %v1290
  %v1309 = vsel %vm1303, %v1296, 920167782
  %v1310 = vsel %vm1302, %v1293, %v1309
  %v1311 = vsel %vm1301, %v1308, %v1310
  %v1312 = vsel %vm1300, %v1290, %v1293
  %v1313 = vsel %vm1303, %v1299, 1326507024
  %v1314 = vsel %vm1302, %v1296, %v1313
  %v1315 = vsel %vm1301, %v1312, %v1314
  %v1316 = vshll.u32 %v1276, 8
  %v1317 = vmul.u32.u64.compose %v1316, %v1315
  %v1318 = vextract.low.u32 %v1317
  %v1319 = vextract.high.u32 %v1317
  %v1320 = vmul.u32.u64.compose %v1316, %v1311
  %v1321 = vextract.low.u32 %v1320
  %v1322 = vextract.high.u32 %v1320
  %v1323 = vmul.u32 %v1316, %v1307
  %v1324 = vadd.s32 %v1319, %v1321
  %vm1325 = vc.u32 %v1319, %v1321
  %v1326 = vadd.s32 %v1322, 1
  %v1327 = vsel %vm1325, %v1326, %v1322
  %v1328 = vadd.s32 %v1323, %v1327
  %v1329 = vadd.s32 %v1328, 536870912
  %v1330 = vshrl.u32 %v1329, 30
  %v1331 = vshll.u32 %v1330, 30
  %v1332 = vsub.s32 %v1328, %v1331
  %vm1333 = vcmp.lt.s32.totalorder %v1332, 0
  %v1334 = vsub.s32 0, %v1332
  %v1335 = vsel %vm1333, %v1334, %v1332
  %v1336 = vclz %v1335
  %v1337 = vsub.s32 %v1336, 2
  %vm1338 = vcmp.gt.s32.totalorder 0, %v1337
  %v1339 = vsel %vm1338, 0, %v1337
  %v1340 = vsub.s32 32, %v1339
  %v1341 = vshll.u32 %v1332, %v1339
  %v1342 = vshrl.u32 %v1324, %v1340
  %v1343 = vor.u32 %v1341, %v1342
  %v1344 = vsub.s32 4294967266, %v1339
  %v1345 = vadd.s32 %v1344, 127
  %v1346 = vshll.u32 %v1345, 23
  %v1347 = vor.u32 4788187, %v1346
  %v1348 = vand.u32 2147483647, %v1347
  %v1350 = vcvt.s32.f32 %v1343
  %v1351 = vmul.f32 %v1350, %v1348
  %v1352 = vxor.u32 %v1351, 2147483648
  %v1353 = vsel %vm1270, %v1352, %v1351
  %v1354 = vsub.s32 4, %v1330
  %v1355 = vsel %vm1270, %v1354, %v1330
  %v1356 = vsel %vm1269, %v490, %v1353
  %v1357 = vsel %vm1269, 0, %v1355
  %v1358 = vcosq.f32.pop %v1356
  %v1359 = vsinq.f32.pop %v1356
  %vm1360 = vweird.f32 %v490
  %v1361 = vand.u32 %v1357, 3
  %vm1362 = vcmp.lt.s32.totalorder %v1361, 2
  %vm1363 = vcmp.eq.s32.totalorder %v1361, 0
  %v1364 = vxor.u32 %v1359, 2147483648
  %v1365 = vsel %vm1363, %v1358, %v1364
  %vm1366 = vcmp.eq.s32.totalorder %v1361, 2
  %v1367 = vxor.u32 %v1358, 2147483648
  %v1368 = vsel %vm1366, %v1367, %v1359
  %v1369 = vsel %vm1362, %v1365, %v1368
  %v1370 = vsel %vm1360, nan, %v1369
  %v1371 = vand.u32 2147483647, %v491
  %vm1372 = vcmp.le.f32.partialorder %v1371, 0.7853982
  %vm1373 = vcmp.lt.s32.totalorder %v491, 0
  %v1374 = vand.u32 %v491, 2139095040
  %v1375 = vshrl.u32 %v1374, 23
  %v1376 = vsub.s32 %v1375, 127
  %v1377 = vand.u32 2147483647, %v491
  %v1378 = vand.u32 %v1377, 8388607
  %v1379 = vor.u32 %v1378, 8388608
  %v1380 = vsub.s32 0, %v1379
  %v1381 = vadd.s32 %v1376, 1
  %vm1382 = vcmp.gt.s32.totalorder %v1381, 0
  %v1383 = vsel %vm1382, %v1381, 0
  %v1384 = vshrl.u32 %v1383, 5
  %v1385 = vand.u32 %v1383, 31
  %v1386 = vsub.s32 32, %v1385
  %v1387 = vshrl.u32 683565275, %v1386
  %v1388 = vshll.u32 683565275, %v1385
  %v1389 = vshrl.u32 2475754826, %v1386
  %v1390 = vor.u32 %v1388, %v1389
  %v1391 = vshll.u32 2475754826, %v1385
  %v1392 = vshrl.u32 2131351028, %v1386
  %v1393 = vor.u32 %v1391, %v1392
  %v1394 = vshll.u32 2131351028, %v1385
  %v1395 = vshrl.u32 2102212464, %v1386
  %v1396 = vor.u32 %v1394, %v1395
  %v1397 = vshll.u32 2102212464, %v1385
  %v1398 = vshrl.u32 920167782, %v1386
  %v1399 = vor.u32 %v1397, %v1398
  %v1400 = vshll.u32 920167782, %v1385
  %v1401 = vshrl.u32 1326507024, %v1386
  %v1402 = vor.u32 %v1400, %v1401
  %vm1403 = vcmp.lt.s32.totalorder %v1384, 1
  %vm1404 = vcmp.lt.s32.totalorder %v1384, 2
  %vm1405 = vcmp.lt.s32.totalorder %v1384, 3
  %vm1406 = vcmp.lt.s32.totalorder %v1384, 4
  %v1407 = vsel %vm1403, %v1387, %v1390
  %v1408 = vsel %vm1406, %v1396, 2102212464
  %v1409 = vsel %vm1405, %v1393, %v1408
  %v1410 = vsel %vm1404, %v1407, %v1409
  %v1411 = vsel %vm1403, %v1390, %v1393
  %v1412 = vsel %vm1406, %v1399, 920167782
  %v1413 = vsel %vm1405, %v1396, %v1412
  %v1414 = vsel %vm1404, %v1411, %v1413
  %v1415 = vsel %vm1403, %v1393, %v1396
  %v1416 = vsel %vm1406, %v1402, 1326507024
  %v1417 = vsel %vm1405, %v1399, %v1416
  %v1418 = vsel %vm1404, %v1415, %v1417
  %v1419 = vshll.u32 %v1379, 8
  %v1420 = vmul.u32.u64.compose %v1419, %v1418
  %v1421 = vextract.low.u32 %v1420
  %v1422 = vextract.high.u32 %v1420
  %v1423 = vmul.u32.u64.compose %v1419, %v1414
  %v1424 = vextract.low.u32 %v1423
  %v1425 = vextract.high.u32 %v1423
  %v1426 = vmul.u32 %v1419, %v1410
  %v1427 = vadd.s32 %v1422, %v1424
  %vm1428 = vc.u32 %v1422, %v1424
  %v1429 = vadd.s32 %v1425, 1
  %v1430 = vsel %vm1428, %v1429, %v1425
  %v1431 = vadd.s32 %v1426, %v1430
  %v1432 = vadd.s32 %v1431, 536870912
  %v1433 = vshrl.u32 %v1432, 30
  %v1434 = vshll.u32 %v1433, 30
  %v1435 = vsub.s32 %v1431, %v1434
  %vm1436 = vcmp.lt.s32.totalorder %v1435, 0
  %v1437 = vsub.s32 0, %v1435
  %v1438 = vsel %vm1436, %v1437, %v1435
  %v1439 = vclz %v1438
  %v1440 = vsub.s32 %v1439, 2
  %vm1441 = vcmp.gt.s32.totalorder 0, %v1440
  %v1442 = vsel %vm1441, 0, %v1440
  %v1443 = vsub.s32 32, %v1442
  %v1444 = vshll.u32 %v1435, %v1442
  %v1445 = vshrl.u32 %v1427, %v1443
  %v1446 = vor.u32 %v1444, %v1445
  %v1447 = vsub.s32 4294967266, %v1442
  %v1448 = vadd.s32 %v1447, 127
  %v1449 = vshll.u32 %v1448, 23
  %v1450 = vor.u32 4788187, %v1449
  %v1451 = vand.u32 2147483647, %v1450
  %v1453 = vcvt.s32.f32 %v1446
  %v1454 = vmul.f32 %v1453, %v1451
  %v1455 = vxor.u32 %v1454, 2147483648
  %v1456 = vsel %vm1373, %v1455, %v1454
  %v1457 = vsub.s32 4, %v1433
  %v1458 = vsel %vm1373, %v1457, %v1433
  %v1459 = vsel %vm1372, %v491, %v1456
  %v1460 = vsel %vm1372, 0, %v1458
  %v1461 = vcosq.f32.pop %v1459
  %v1462 = vsinq.f32.pop %v1459
  %vm1463 = vweird.f32 %v491
  %v1464 = vand.u32 %v1460, 3
  %vm1465 = vcmp.lt.s32.totalorder %v1464, 2
  %vm1466 = vcmp.eq.s32.totalorder %v1464, 0
  %v1467 = vxor.u32 %v1462, 2147483648
  %v1468 = vsel %vm1466, %v1461, %v1467
  %vm1469 = vcmp.eq.s32.totalorder %v1464, 2
  %v1470 = vxor.u32 %v1461, 2147483648
  %v1471 = vsel %vm1469, %v1470, %v1462
  %v1472 = vsel %vm1465, %v1468, %v1471
  %v1473 = vsel %vm1463, nan, %v1472
  %v1474 = vand.u32 2147483647, %v492
  %vm1475 = vcmp.le.f32.partialorder %v1474, 0.7853982
  %vm1476 = vcmp.lt.s32.totalorder %v492, 0
  %v1477 = vand.u32 %v492, 2139095040
  %v1478 = vshrl.u32 %v1477, 23
  %v1479 = vsub.s32 %v1478, 127
  %v1480 = vand.u32 2147483647, %v492
  %v1481 = vand.u32 %v1480, 8388607
  %v1482 = vor.u32 %v1481, 8388608
  %v1483 = vsub.s32 0, %v1482
  %v1484 = vadd.s32 %v1479, 1
  %vm1485 = vcmp.gt.s32.totalorder %v1484, 0
  %v1486 = vsel %vm1485, %v1484, 0
  %v1487 = vshrl.u32 %v1486, 5
  %v1488 = vand.u32 %v1486, 31
  %v1489 = vsub.s32 32, %v1488
  %v1490 = vshrl.u32 683565275, %v1489
  %v1491 = vshll.u32 683565275, %v1488
  %v1492 = vshrl.u32 2475754826, %v1489
  %v1493 = vor.u32 %v1491, %v1492
  %v1494 = vshll.u32 2475754826, %v1488
  %v1495 = vshrl.u32 2131351028, %v1489
  %v1496 = vor.u32 %v1494, %v1495
  %v1497 = vshll.u32 2131351028, %v1488
  %v1498 = vshrl.u32 2102212464, %v1489
  %v1499 = vor.u32 %v1497, %v1498
  %v1500 = vshll.u32 2102212464, %v1488
  %v1501 = vshrl.u32 920167782, %v1489
  %v1502 = vor.u32 %v1500, %v1501
  %v1503 = vshll.u32 920167782, %v1488
  %v1504 = vshrl.u32 1326507024, %v1489
  %v1505 = vor.u32 %v1503, %v1504
  %vm1506 = vcmp.lt.s32.totalorder %v1487, 1
  %vm1507 = vcmp.lt.s32.totalorder %v1487, 2
  %vm1508 = vcmp.lt.s32.totalorder %v1487, 3
  %vm1509 = vcmp.lt.s32.totalorder %v1487, 4
  %v1510 = vsel %vm1506, %v1490, %v1493
  %v1511 = vsel %vm1509, %v1499, 2102212464
  %v1512 = vsel %vm1508, %v1496, %v1511
  %v1513 = vsel %vm1507, %v1510, %v1512
  %v1514 = vsel %vm1506, %v1493, %v1496
  %v1515 = vsel %vm1509, %v1502, 920167782
  %v1516 = vsel %vm1508, %v1499, %v1515
  %v1517 = vsel %vm1507, %v1514, %v1516
  %v1518 = vsel %vm1506, %v1496, %v1499
  %v1519 = vsel %vm1509, %v1505, 1326507024
  %v1520 = vsel %vm1508, %v1502, %v1519
  %v1521 = vsel %vm1507, %v1518, %v1520
  %v1522 = vshll.u32 %v1482, 8
  %v1523 = vmul.u32.u64.compose %v1522, %v1521
  %v1524 = vextract.low.u32 %v1523
  %v1525 = vextract.high.u32 %v1523
  %v1526 = vmul.u32.u64.compose %v1522, %v1517
  %v1527 = vextract.low.u32 %v1526
  %v1528 = vextract.high.u32 %v1526
  %v1529 = vmul.u32 %v1522, %v1513
  %v1530 = vadd.s32 %v1525, %v1527
  %vm1531 = vc.u32 %v1525, %v1527
  %v1532 = vadd.s32 %v1528, 1
  %v1533 = vsel %vm1531, %v1532, %v1528
  %v1534 = vadd.s32 %v1529, %v1533
  %v1535 = vadd.s32 %v1534, 536870912
  %v1536 = vshrl.u32 %v1535, 30
  %v1537 = vshll.u32 %v1536, 30
  %v1538 = vsub.s32 %v1534, %v1537
  %vm1539 = vcmp.lt.s32.totalorder %v1538, 0
  %v1540 = vsub.s32 0, %v1538
  %v1541 = vsel %vm1539, %v1540, %v1538
  %v1542 = vclz %v1541
  %v1543 = vsub.s32 %v1542, 2
  %vm1544 = vcmp.gt.s32.totalorder 0, %v1543
  %v1545 = vsel %vm1544, 0, %v1543
  %v1546 = vsub.s32 32, %v1545
  %v1547 = vshll.u32 %v1538, %v1545
  %v1548 = vshrl.u32 %v1530, %v1546
  %v1549 = vor.u32 %v1547, %v1548
  %v1550 = vsub.s32 4294967266, %v1545
  %v1551 = vadd.s32 %v1550, 127
  %v1552 = vshll.u32 %v1551, 23
  %v1553 = vor.u32 4788187, %v1552
  %v1554 = vand.u32 2147483647, %v1553
  %v1556 = vcvt.s32.f32 %v1549
  %v1557 = vmul.f32 %v1556, %v1554
  %v1558 = vxor.u32 %v1557, 2147483648
  %v1559 = vsel %vm1476, %v1558, %v1557
  %v1560 = vsub.s32 4, %v1536
  %v1561 = vsel %vm1476, %v1560, %v1536
  %v1562 = vsel %vm1475, %v492, %v1559
  %v1563 = vsel %vm1475, 0, %v1561
  %v1564 = vcosq.f32.pop %v1562
  %v1565 = vsinq.f32.pop %v1562
  %vm1566 = vweird.f32 %v492
  %v1567 = vand.u32 %v1563, 3
  %vm1568 = vcmp.lt.s32.totalorder %v1567, 2
  %vm1569 = vcmp.eq.s32.totalorder %v1567, 0
  %v1570 = vxor.u32 %v1565, 2147483648
  %v1571 = vsel %vm1569, %v1564, %v1570
  %vm1572 = vcmp.eq.s32.totalorder %v1567, 2
  %v1573 = vxor.u32 %v1564, 2147483648
  %v1574 = vsel %vm1572, %v1573, %v1565
  %v1575 = vsel %vm1568, %v1571, %v1574
  %v1576 = vsel %vm1566, nan, %v1575
  %v1577 = vand.u32 2147483647, %v493
  %vm1578 = vcmp.le.f32.partialorder %v1577, 0.7853982
  %vm1579 = vcmp.lt.s32.totalorder %v493, 0
  %v1580 = vand.u32 %v493, 2139095040
  %v1581 = vshrl.u32 %v1580, 23
  %v1582 = vsub.s32 %v1581, 127
  %v1583 = vand.u32 2147483647, %v493
  %v1584 = vand.u32 %v1583, 8388607
  %v1585 = vor.u32 %v1584, 8388608
  %v1586 = vsub.s32 0, %v1585
  %v1587 = vadd.s32 %v1582, 1
  %vm1588 = vcmp.gt.s32.totalorder %v1587, 0
  %v1589 = vsel %vm1588, %v1587, 0
  %v1590 = vshrl.u32 %v1589, 5
  %v1591 = vand.u32 %v1589, 31
  %v1592 = vsub.s32 32, %v1591
  %v1593 = vshrl.u32 683565275, %v1592
  %v1594 = vshll.u32 683565275, %v1591
  %v1595 = vshrl.u32 2475754826, %v1592
  %v1596 = vor.u32 %v1594, %v1595
  %v1597 = vshll.u32 2475754826, %v1591
  %v1598 = vshrl.u32 2131351028, %v1592
  %v1599 = vor.u32 %v1597, %v1598
  %v1600 = vshll.u32 2131351028, %v1591
  %v1601 = vshrl.u32 2102212464, %v1592
  %v1602 = vor.u32 %v1600, %v1601
  %v1603 = vshll.u32 2102212464, %v1591
  %v1604 = vshrl.u32 920167782, %v1592
  %v1605 = vor.u32 %v1603, %v1604
  %v1606 = vshll.u32 920167782, %v1591
  %v1607 = vshrl.u32 1326507024, %v1592
  %v1608 = vor.u32 %v1606, %v1607
  %vm1609 = vcmp.lt.s32.totalorder %v1590, 1
  %vm1610 = vcmp.lt.s32.totalorder %v1590, 2
  %vm1611 = vcmp.lt.s32.totalorder %v1590, 3
  %vm1612 = vcmp.lt.s32.totalorder %v1590, 4
  %v1613 = vsel %vm1609, %v1593, %v1596
  %v1614 = vsel %vm1612, %v1602, 2102212464
  %v1615 = vsel %vm1611, %v1599, %v1614
  %v1616 = vsel %vm1610, %v1613, %v1615
  %v1617 = vsel %vm1609, %v1596, %v1599
  %v1618 = vsel %vm1612, %v1605, 920167782
  %v1619 = vsel %vm1611, %v1602, %v1618
  %v1620 = vsel %vm1610, %v1617, %v1619
  %v1621 = vsel %vm1609, %v1599, %v1602
  %v1622 = vsel %vm1612, %v1608, 1326507024
  %v1623 = vsel %vm1611, %v1605, %v1622
  %v1624 = vsel %vm1610, %v1621, %v1623
  %v1625 = vshll.u32 %v1585, 8
  %v1626 = vmul.u32.u64.compose %v1625, %v1624
  %v1627 = vextract.low.u32 %v1626
  %v1628 = vextract.high.u32 %v1626
  %v1629 = vmul.u32.u64.compose %v1625, %v1620
  %v1630 = vextract.low.u32 %v1629
  %v1631 = vextract.high.u32 %v1629
  %v1632 = vmul.u32 %v1625, %v1616
  %v1633 = vadd.s32 %v1628, %v1630
  %vm1634 = vc.u32 %v1628, %v1630
  %v1635 = vadd.s32 %v1631, 1
  %v1636 = vsel %vm1634, %v1635, %v1631
  %v1637 = vadd.s32 %v1632, %v1636
  %v1638 = vadd.s32 %v1637, 536870912
  %v1639 = vshrl.u32 %v1638, 30
  %v1640 = vshll.u32 %v1639, 30
  %v1641 = vsub.s32 %v1637, %v1640
  %vm1642 = vcmp.lt.s32.totalorder %v1641, 0
  %v1643 = vsub.s32 0, %v1641
  %v1644 = vsel %vm1642, %v1643, %v1641
  %v1645 = vclz %v1644
  %v1646 = vsub.s32 %v1645, 2
  %vm1647 = vcmp.gt.s32.totalorder 0, %v1646
  %v1648 = vsel %vm1647, 0, %v1646
  %v1649 = vsub.s32 32, %v1648
  %v1650 = vshll.u32 %v1641, %v1648
  %v1651 = vshrl.u32 %v1633, %v1649
  %v1652 = vor.u32 %v1650, %v1651
  %v1653 = vsub.s32 4294967266, %v1648
  %v1654 = vadd.s32 %v1653, 127
  %v1655 = vshll.u32 %v1654, 23
  %v1656 = vor.u32 4788187, %v1655
  %v1657 = vand.u32 2147483647, %v1656
  %v1659 = vcvt.s32.f32 %v1652
  %v1660 = vmul.f32 %v1659, %v1657
  %v1661 = vxor.u32 %v1660, 2147483648
  %v1662 = vsel %vm1579, %v1661, %v1660
  %v1663 = vsub.s32 4, %v1639
  %v1664 = vsel %vm1579, %v1663, %v1639
  %v1665 = vsel %vm1578, %v493, %v1662
  %v1666 = vsel %vm1578, 0, %v1664
  %v1667 = vcosq.f32.pop %v1665
  %v1668 = vsinq.f32.pop %v1665
  %vm1669 = vweird.f32 %v493
  %v1670 = vand.u32 %v1666, 3
  %vm1671 = vcmp.lt.s32.totalorder %v1670, 2
  %vm1672 = vcmp.eq.s32.totalorder %v1670, 0
  %v1673 = vxor.u32 %v1668, 2147483648
  %v1674 = vsel %vm1672, %v1667, %v1673
  %vm1675 = vcmp.eq.s32.totalorder %v1670, 2
  %v1676 = vxor.u32 %v1667, 2147483648
  %v1677 = vsel %vm1675, %v1676, %v1668
  %v1678 = vsel %vm1671, %v1674, %v1677
  %v1679 = vsel %vm1669, nan, %v1678
  %v1680 = vand.u32 2147483647, %v494
  %vm1681 = vcmp.le.f32.partialorder %v1680, 0.7853982
  %vm1682 = vcmp.lt.s32.totalorder %v494, 0
  %v1683 = vand.u32 %v494, 2139095040
  %v1684 = vshrl.u32 %v1683, 23
  %v1685 = vsub.s32 %v1684, 127
  %v1686 = vand.u32 2147483647, %v494
  %v1687 = vand.u32 %v1686, 8388607
  %v1688 = vor.u32 %v1687, 8388608
  %v1689 = vsub.s32 0, %v1688
  %v1690 = vadd.s32 %v1685, 1
  %vm1691 = vcmp.gt.s32.totalorder %v1690, 0
  %v1692 = vsel %vm1691, %v1690, 0
  %v1693 = vshrl.u32 %v1692, 5
  %v1694 = vand.u32 %v1692, 31
  %v1695 = vsub.s32 32, %v1694
  %v1696 = vshrl.u32 683565275, %v1695
  %v1697 = vshll.u32 683565275, %v1694
  %v1698 = vshrl.u32 2475754826, %v1695
  %v1699 = vor.u32 %v1697, %v1698
  %v1700 = vshll.u32 2475754826, %v1694
  %v1701 = vshrl.u32 2131351028, %v1695
  %v1702 = vor.u32 %v1700, %v1701
  %v1703 = vshll.u32 2131351028, %v1694
  %v1704 = vshrl.u32 2102212464, %v1695
  %v1705 = vor.u32 %v1703, %v1704
  %v1706 = vshll.u32 2102212464, %v1694
  %v1707 = vshrl.u32 920167782, %v1695
  %v1708 = vor.u32 %v1706, %v1707
  %v1709 = vshll.u32 920167782, %v1694
  %v1710 = vshrl.u32 1326507024, %v1695
  %v1711 = vor.u32 %v1709, %v1710
  %vm1712 = vcmp.lt.s32.totalorder %v1693, 1
  %vm1713 = vcmp.lt.s32.totalorder %v1693, 2
  %vm1714 = vcmp.lt.s32.totalorder %v1693, 3
  %vm1715 = vcmp.lt.s32.totalorder %v1693, 4
  %v1716 = vsel %vm1712, %v1696, %v1699
  %v1717 = vsel %vm1715, %v1705, 2102212464
  %v1718 = vsel %vm1714, %v1702, %v1717
  %v1719 = vsel %vm1713, %v1716, %v1718
  %v1720 = vsel %vm1712, %v1699, %v1702
  %v1721 = vsel %vm1715, %v1708, 920167782
  %v1722 = vsel %vm1714, %v1705, %v1721
  %v1723 = vsel %vm1713, %v1720, %v1722
  %v1724 = vsel %vm1712, %v1702, %v1705
  %v1725 = vsel %vm1715, %v1711, 1326507024
  %v1726 = vsel %vm1714, %v1708, %v1725
  %v1727 = vsel %vm1713, %v1724, %v1726
  %v1728 = vshll.u32 %v1688, 8
  %v1729 = vmul.u32.u64.compose %v1728, %v1727
  %v1730 = vextract.low.u32 %v1729
  %v1731 = vextract.high.u32 %v1729
  %v1732 = vmul.u32.u64.compose %v1728, %v1723
  %v1733 = vextract.low.u32 %v1732
  %v1734 = vextract.high.u32 %v1732
  %v1735 = vmul.u32 %v1728, %v1719
  %v1736 = vadd.s32 %v1731, %v1733
  %vm1737 = vc.u32 %v1731, %v1733
  %v1738 = vadd.s32 %v1734, 1
  %v1739 = vsel %vm1737, %v1738, %v1734
  %v1740 = vadd.s32 %v1735, %v1739
  %v1741 = vadd.s32 %v1740, 536870912
  %v1742 = vshrl.u32 %v1741, 30
  %v1743 = vshll.u32 %v1742, 30
  %v1744 = vsub.s32 %v1740, %v1743
  %vm1745 = vcmp.lt.s32.totalorder %v1744, 0
  %v1746 = vsub.s32 0, %v1744
  %v1747 = vsel %vm1745, %v1746, %v1744
  %v1748 = vclz %v1747
  %v1749 = vsub.s32 %v1748, 2
  %vm1750 = vcmp.gt.s32.totalorder 0, %v1749
  %v1751 = vsel %vm1750, 0, %v1749
  %v1752 = vsub.s32 32, %v1751
  %v1753 = vshll.u32 %v1744, %v1751
  %v1754 = vshrl.u32 %v1736, %v1752
  %v1755 = vor.u32 %v1753, %v1754
  %v1756 = vsub.s32 4294967266, %v1751
  %v1757 = vadd.s32 %v1756, 127
  %v1758 = vshll.u32 %v1757, 23
  %v1759 = vor.u32 4788187, %v1758
  %v1760 = vand.u32 2147483647, %v1759
  %v1762 = vcvt.s32.f32 %v1755
  %v1763 = vmul.f32 %v1762, %v1760
  %v1764 = vxor.u32 %v1763, 2147483648
  %v1765 = vsel %vm1682, %v1764, %v1763
  %v1766 = vsub.s32 4, %v1742
  %v1767 = vsel %vm1682, %v1766, %v1742
  %v1768 = vsel %vm1681, %v494, %v1765
  %v1769 = vsel %vm1681, 0, %v1767
  %v1770 = vcosq.f32.pop %v1768
  %v1771 = vsinq.f32.pop %v1768
  %vm1772 = vweird.f32 %v494
  %v1773 = vand.u32 %v1769, 3
  %vm1774 = vcmp.lt.s32.totalorder %v1773, 2
  %vm1775 = vcmp.eq.s32.totalorder %v1773, 0
  %v1776 = vxor.u32 %v1771, 2147483648
  %v1777 = vsel %vm1775, %v1770, %v1776
  %vm1778 = vcmp.eq.s32.totalorder %v1773, 2
  %v1779 = vxor.u32 %v1770, 2147483648
  %v1780 = vsel %vm1778, %v1779, %v1771
  %v1781 = vsel %vm1774, %v1777, %v1780
  %v1782 = vsel %vm1772, nan, %v1781
  %v1783 = vand.u32 2147483647, %v495
  %vm1784 = vcmp.le.f32.partialorder %v1783, 0.7853982
  %vm1785 = vcmp.lt.s32.totalorder %v495, 0
  %v1786 = vand.u32 %v495, 2139095040
  %v1787 = vshrl.u32 %v1786, 23
  %v1788 = vsub.s32 %v1787, 127
  %v1789 = vand.u32 2147483647, %v495
  %v1790 = vand.u32 %v1789, 8388607
  %v1791 = vor.u32 %v1790, 8388608
  %v1792 = vsub.s32 0, %v1791
  %v1793 = vadd.s32 %v1788, 1
  %vm1794 = vcmp.gt.s32.totalorder %v1793, 0
  %v1795 = vsel %vm1794, %v1793, 0
  %v1796 = vshrl.u32 %v1795, 5
  %v1797 = vand.u32 %v1795, 31
  %v1798 = vsub.s32 32, %v1797
  %v1799 = vshrl.u32 683565275, %v1798
  %v1800 = vshll.u32 683565275, %v1797
  %v1801 = vshrl.u32 2475754826, %v1798
  %v1802 = vor.u32 %v1800, %v1801
  %v1803 = vshll.u32 2475754826, %v1797
  %v1804 = vshrl.u32 2131351028, %v1798
  %v1805 = vor.u32 %v1803, %v1804
  %v1806 = vshll.u32 2131351028, %v1797
  %v1807 = vshrl.u32 2102212464, %v1798
  %v1808 = vor.u32 %v1806, %v1807
  %v1809 = vshll.u32 2102212464, %v1797
  %v1810 = vshrl.u32 920167782, %v1798
  %v1811 = vor.u32 %v1809, %v1810
  %v1812 = vshll.u32 920167782, %v1797
  %v1813 = vshrl.u32 1326507024, %v1798
  %v1814 = vor.u32 %v1812, %v1813
  %vm1815 = vcmp.lt.s32.totalorder %v1796, 1
  %vm1816 = vcmp.lt.s32.totalorder %v1796, 2
  %vm1817 = vcmp.lt.s32.totalorder %v1796, 3
  %vm1818 = vcmp.lt.s32.totalorder %v1796, 4
  %v1819 = vsel %vm1815, %v1799, %v1802
  %v1820 = vsel %vm1818, %v1808, 2102212464
  %v1821 = vsel %vm1817, %v1805, %v1820
  %v1822 = vsel %vm1816, %v1819, %v1821
  %v1823 = vsel %vm1815, %v1802, %v1805
  %v1824 = vsel %vm1818, %v1811, 920167782
  %v1825 = vsel %vm1817, %v1808, %v1824
  %v1826 = vsel %vm1816, %v1823, %v1825
  %v1827 = vsel %vm1815, %v1805, %v1808
  %v1828 = vsel %vm1818, %v1814, 1326507024
  %v1829 = vsel %vm1817, %v1811, %v1828
  %v1830 = vsel %vm1816, %v1827, %v1829
  %v1831 = vshll.u32 %v1791, 8
  %v1832 = vmul.u32.u64.compose %v1831, %v1830
  %v1833 = vextract.low.u32 %v1832
  %v1834 = vextract.high.u32 %v1832
  %v1835 = vmul.u32.u64.compose %v1831, %v1826
  %v1836 = vextract.low.u32 %v1835
  %v1837 = vextract.high.u32 %v1835
  %v1838 = vmul.u32 %v1831, %v1822
  %v1839 = vadd.s32 %v1834, %v1836
  %vm1840 = vc.u32 %v1834, %v1836
  %v1841 = vadd.s32 %v1837, 1
  %v1842 = vsel %vm1840, %v1841, %v1837
  %v1843 = vadd.s32 %v1838, %v1842
  %v1844 = vadd.s32 %v1843, 536870912
  %v1845 = vshrl.u32 %v1844, 30
  %v1846 = vshll.u32 %v1845, 30
  %v1847 = vsub.s32 %v1843, %v1846
  %vm1848 = vcmp.lt.s32.totalorder %v1847, 0
  %v1849 = vsub.s32 0, %v1847
  %v1850 = vsel %vm1848, %v1849, %v1847
  %v1851 = vclz %v1850
  %v1852 = vsub.s32 %v1851, 2
  %vm1853 = vcmp.gt.s32.totalorder 0, %v1852
  %v1854 = vsel %vm1853, 0, %v1852
  %v1855 = vsub.s32 32, %v1854
  %v1856 = vshll.u32 %v1847, %v1854
  %v1857 = vshrl.u32 %v1839, %v1855
  %v1858 = vor.u32 %v1856, %v1857
  %v1859 = vsub.s32 4294967266, %v1854
  %v1860 = vadd.s32 %v1859, 127
  %v1861 = vshll.u32 %v1860, 23
  %v1862 = vor.u32 4788187, %v1861
  %v1863 = vand.u32 2147483647, %v1862
  %v1865 = vcvt.s32.f32 %v1858
  %v1866 = vmul.f32 %v1865, %v1863
  %v1867 = vxor.u32 %v1866, 2147483648
  %v1868 = vsel %vm1785, %v1867, %v1866
  %v1869 = vsub.s32 4, %v1845
  %v1870 = vsel %vm1785, %v1869, %v1845
  %v1871 = vsel %vm1784, %v495, %v1868
  %v1872 = vsel %vm1784, 0, %v1870
  %v1873 = vcosq.f32.pop %v1871
  %v1874 = vsinq.f32.pop %v1871
  %vm1875 = vweird.f32 %v495
  %v1876 = vand.u32 %v1872, 3
  %vm1877 = vcmp.lt.s32.totalorder %v1876, 2
  %vm1878 = vcmp.eq.s32.totalorder %v1876, 0
  %v1879 = vxor.u32 %v1874, 2147483648
  %v1880 = vsel %vm1878, %v1873, %v1879
  %vm1881 = vcmp.eq.s32.totalorder %v1876, 2
  %v1882 = vxor.u32 %v1873, 2147483648
  %v1883 = vsel %vm1881, %v1882, %v1874
  %v1884 = vsel %vm1877, %v1880, %v1883
  %v1885 = vsel %vm1875, nan, %v1884
  %v1886 = vand.u32 2147483647, %v496
  %vm1887 = vcmp.le.f32.partialorder %v1886, 0.7853982
  %vm1888 = vcmp.lt.s32.totalorder %v496, 0
  %v1889 = vand.u32 %v496, 2139095040
  %v1890 = vshrl.u32 %v1889, 23
  %v1891 = vsub.s32 %v1890, 127
  %v1892 = vand.u32 2147483647, %v496
  %v1893 = vand.u32 %v1892, 8388607
  %v1894 = vor.u32 %v1893, 8388608
  %v1895 = vsub.s32 0, %v1894
  %v1896 = vadd.s32 %v1891, 1
  %vm1897 = vcmp.gt.s32.totalorder %v1896, 0
  %v1898 = vsel %vm1897, %v1896, 0
  %v1899 = vshrl.u32 %v1898, 5
  %v1900 = vand.u32 %v1898, 31
  %v1901 = vsub.s32 32, %v1900
  %v1902 = vshrl.u32 683565275, %v1901
  %v1903 = vshll.u32 683565275, %v1900
  %v1904 = vshrl.u32 2475754826, %v1901
  %v1905 = vor.u32 %v1903, %v1904
  %v1906 = vshll.u32 2475754826, %v1900
  %v1907 = vshrl.u32 2131351028, %v1901
  %v1908 = vor.u32 %v1906, %v1907
  %v1909 = vshll.u32 2131351028, %v1900
  %v1910 = vshrl.u32 2102212464, %v1901
  %v1911 = vor.u32 %v1909, %v1910
  %v1912 = vshll.u32 2102212464, %v1900
  %v1913 = vshrl.u32 920167782, %v1901
  %v1914 = vor.u32 %v1912, %v1913
  %v1915 = vshll.u32 920167782, %v1900
  %v1916 = vshrl.u32 1326507024, %v1901
  %v1917 = vor.u32 %v1915, %v1916
  %vm1918 = vcmp.lt.s32.totalorder %v1899, 1
  %vm1919 = vcmp.lt.s32.totalorder %v1899, 2
  %vm1920 = vcmp.lt.s32.totalorder %v1899, 3
  %vm1921 = vcmp.lt.s32.totalorder %v1899, 4
  %v1922 = vsel %vm1918, %v1902, %v1905
  %v1923 = vsel %vm1921, %v1911, 2102212464
  %v1924 = vsel %vm1920, %v1908, %v1923
  %v1925 = vsel %vm1919, %v1922, %v1924
  %v1926 = vsel %vm1918, %v1905, %v1908
  %v1927 = vsel %vm1921, %v1914, 920167782
  %v1928 = vsel %vm1920, %v1911, %v1927
  %v1929 = vsel %vm1919, %v1926, %v1928
  %v1930 = vsel %vm1918, %v1908, %v1911
  %v1931 = vsel %vm1921, %v1917, 1326507024
  %v1932 = vsel %vm1920, %v1914, %v1931
  %v1933 = vsel %vm1919, %v1930, %v1932
  %v1934 = vshll.u32 %v1894, 8
  %v1935 = vmul.u32.u64.compose %v1934, %v1933
  %v1936 = vextract.low.u32 %v1935
  %v1937 = vextract.high.u32 %v1935
  %v1938 = vmul.u32.u64.compose %v1934, %v1929
  %v1939 = vextract.low.u32 %v1938
  %v1940 = vextract.high.u32 %v1938
  %v1941 = vmul.u32 %v1934, %v1925
  %v1942 = vadd.s32 %v1937, %v1939
  %vm1943 = vc.u32 %v1937, %v1939
  %v1944 = vadd.s32 %v1940, 1
  %v1945 = vsel %vm1943, %v1944, %v1940
  %v1946 = vadd.s32 %v1941, %v1945
  %v1947 = vadd.s32 %v1946, 536870912
  %v1948 = vshrl.u32 %v1947, 30
  %v1949 = vshll.u32 %v1948, 30
  %v1950 = vsub.s32 %v1946, %v1949
  %vm1951 = vcmp.lt.s32.totalorder %v1950, 0
  %v1952 = vsub.s32 0, %v1950
  %v1953 = vsel %vm1951, %v1952, %v1950
  %v1954 = vclz %v1953
  %v1955 = vsub.s32 %v1954, 2
  %vm1956 = vcmp.gt.s32.totalorder 0, %v1955
  %v1957 = vsel %vm1956, 0, %v1955
  %v1958 = vsub.s32 32, %v1957
  %v1959 = vshll.u32 %v1950, %v1957
  %v1960 = vshrl.u32 %v1942, %v1958
  %v1961 = vor.u32 %v1959, %v1960
  %v1962 = vsub.s32 4294967266, %v1957
  %v1963 = vadd.s32 %v1962, 127
  %v1964 = vshll.u32 %v1963, 23
  %v1965 = vor.u32 4788187, %v1964
  %v1966 = vand.u32 2147483647, %v1965
  %v1968 = vcvt.s32.f32 %v1961
  %v1969 = vmul.f32 %v1968, %v1966
  %v1970 = vxor.u32 %v1969, 2147483648
  %v1971 = vsel %vm1888, %v1970, %v1969
  %v1972 = vsub.s32 4, %v1948
  %v1973 = vsel %vm1888, %v1972, %v1948
  %v1974 = vsel %vm1887, %v496, %v1971
  %v1975 = vsel %vm1887, 0, %v1973
  %v1976 = vcosq.f32.pop %v1974
  %v1977 = vsinq.f32.pop %v1974
  %vm1978 = vweird.f32 %v496
  %v1979 = vand.u32 %v1975, 3
  %vm1980 = vcmp.lt.s32.totalorder %v1979, 2
  %vm1981 = vcmp.eq.s32.totalorder %v1979, 0
  %v1982 = vxor.u32 %v1977, 2147483648
  %v1983 = vsel %vm1981, %v1976, %v1982
  %vm1984 = vcmp.eq.s32.totalorder %v1979, 2
  %v1985 = vxor.u32 %v1976, 2147483648
  %v1986 = vsel %vm1984, %v1985, %v1977
  %v1987 = vsel %vm1980, %v1983, %v1986
  %v1988 = vsel %vm1978, nan, %v1987
  %v1989 = vand.u32 2147483647, %v497
  %vm1990 = vcmp.le.f32.partialorder %v1989, 0.7853982
  %vm1991 = vcmp.lt.s32.totalorder %v497, 0
  %v1992 = vand.u32 %v497, 2139095040
  %v1993 = vshrl.u32 %v1992, 23
  %v1994 = vsub.s32 %v1993, 127
  %v1995 = vand.u32 2147483647, %v497
  %v1996 = vand.u32 %v1995, 8388607
  %v1997 = vor.u32 %v1996, 8388608
  %v1998 = vsub.s32 0, %v1997
  %v1999 = vadd.s32 %v1994, 1
  %vm2000 = vcmp.gt.s32.totalorder %v1999, 0
  %v2001 = vsel %vm2000, %v1999, 0
  %v2002 = vshrl.u32 %v2001, 5
  %v2003 = vand.u32 %v2001, 31
  %v2004 = vsub.s32 32, %v2003
  %v2005 = vshrl.u32 683565275, %v2004
  %v2006 = vshll.u32 683565275, %v2003
  %v2007 = vshrl.u32 2475754826, %v2004
  %v2008 = vor.u32 %v2006, %v2007
  %v2009 = vshll.u32 2475754826, %v2003
  %v2010 = vshrl.u32 2131351028, %v2004
  %v2011 = vor.u32 %v2009, %v2010
  %v2012 = vshll.u32 2131351028, %v2003
  %v2013 = vshrl.u32 2102212464, %v2004
  %v2014 = vor.u32 %v2012, %v2013
  %v2015 = vshll.u32 2102212464, %v2003
  %v2016 = vshrl.u32 920167782, %v2004
  %v2017 = vor.u32 %v2015, %v2016
  %v2018 = vshll.u32 920167782, %v2003
  %v2019 = vshrl.u32 1326507024, %v2004
  %v2020 = vor.u32 %v2018, %v2019
  %vm2021 = vcmp.lt.s32.totalorder %v2002, 1
  %vm2022 = vcmp.lt.s32.totalorder %v2002, 2
  %vm2023 = vcmp.lt.s32.totalorder %v2002, 3
  %vm2024 = vcmp.lt.s32.totalorder %v2002, 4
  %v2025 = vsel %vm2021, %v2005, %v2008
  %v2026 = vsel %vm2024, %v2014, 2102212464
  %v2027 = vsel %vm2023, %v2011, %v2026
  %v2028 = vsel %vm2022, %v2025, %v2027
  %v2029 = vsel %vm2021, %v2008, %v2011
  %v2030 = vsel %vm2024, %v2017, 920167782
  %v2031 = vsel %vm2023, %v2014, %v2030
  %v2032 = vsel %vm2022, %v2029, %v2031
  %v2033 = vsel %vm2021, %v2011, %v2014
  %v2034 = vsel %vm2024, %v2020, 1326507024
  %v2035 = vsel %vm2023, %v2017, %v2034
  %v2036 = vsel %vm2022, %v2033, %v2035
  %v2037 = vshll.u32 %v1997, 8
  %v2038 = vmul.u32.u64.compose %v2037, %v2036
  %v2039 = vextract.low.u32 %v2038
  %v2040 = vextract.high.u32 %v2038
  %v2041 = vmul.u32.u64.compose %v2037, %v2032
  %v2042 = vextract.low.u32 %v2041
  %v2043 = vextract.high.u32 %v2041
  %v2044 = vmul.u32 %v2037, %v2028
  %v2045 = vadd.s32 %v2040, %v2042
  %vm2046 = vc.u32 %v2040, %v2042
  %v2047 = vadd.s32 %v2043, 1
  %v2048 = vsel %vm2046, %v2047, %v2043
  %v2049 = vadd.s32 %v2044, %v2048
  %v2050 = vadd.s32 %v2049, 536870912
  %v2051 = vshrl.u32 %v2050, 30
  %v2052 = vshll.u32 %v2051, 30
  %v2053 = vsub.s32 %v2049, %v2052
  %vm2054 = vcmp.lt.s32.totalorder %v2053, 0
  %v2055 = vsub.s32 0, %v2053
  %v2056 = vsel %vm2054, %v2055, %v2053
  %v2057 = vclz %v2056
  %v2058 = vsub.s32 %v2057, 2
  %vm2059 = vcmp.gt.s32.totalorder 0, %v2058
  %v2060 = vsel %vm2059, 0, %v2058
  %v2061 = vsub.s32 32, %v2060
  %v2062 = vshll.u32 %v2053, %v2060
  %v2063 = vshrl.u32 %v2045, %v2061
  %v2064 = vor.u32 %v2062, %v2063
  %v2065 = vsub.s32 4294967266, %v2060
  %v2066 = vadd.s32 %v2065, 127
  %v2067 = vshll.u32 %v2066, 23
  %v2068 = vor.u32 4788187, %v2067
  %v2069 = vand.u32 2147483647, %v2068
  %v2071 = vcvt.s32.f32 %v2064
  %v2072 = vmul.f32 %v2071, %v2069
  %v2073 = vxor.u32 %v2072, 2147483648
  %v2074 = vsel %vm1991, %v2073, %v2072
  %v2075 = vsub.s32 4, %v2051
  %v2076 = vsel %vm1991, %v2075, %v2051
  %v2077 = vsel %vm1990, %v497, %v2074
  %v2078 = vsel %vm1990, 0, %v2076
  %v2079 = vcosq.f32.pop %v2077
  %v2080 = vsinq.f32.pop %v2077
  %vm2081 = vweird.f32 %v497
  %v2082 = vand.u32 %v2078, 3
  %vm2083 = vcmp.lt.s32.totalorder %v2082, 2
  %vm2084 = vcmp.eq.s32.totalorder %v2082, 0
  %v2085 = vxor.u32 %v2080, 2147483648
  %v2086 = vsel %vm2084, %v2079, %v2085
  %vm2087 = vcmp.eq.s32.totalorder %v2082, 2
  %v2088 = vxor.u32 %v2079, 2147483648
  %v2089 = vsel %vm2087, %v2088, %v2080
  %v2090 = vsel %vm2083, %v2086, %v2089
  %v2091 = vsel %vm2081, nan, %v2090
  %v2092 = vand.u32 2147483647, %v498
  %vm2093 = vcmp.le.f32.partialorder %v2092, 0.7853982
  %vm2094 = vcmp.lt.s32.totalorder %v498, 0
  %v2095 = vand.u32 %v498, 2139095040
  %v2096 = vshrl.u32 %v2095, 23
  %v2097 = vsub.s32 %v2096, 127
  %v2098 = vand.u32 2147483647, %v498
  %v2099 = vand.u32 %v2098, 8388607
  %v2100 = vor.u32 %v2099, 8388608
  %v2101 = vsub.s32 0, %v2100
  %v2102 = vadd.s32 %v2097, 1
  %vm2103 = vcmp.gt.s32.totalorder %v2102, 0
  %v2104 = vsel %vm2103, %v2102, 0
  %v2105 = vshrl.u32 %v2104, 5
  %v2106 = vand.u32 %v2104, 31
  %v2107 = vsub.s32 32, %v2106
  %v2108 = vshrl.u32 683565275, %v2107
  %v2109 = vshll.u32 683565275, %v2106
  %v2110 = vshrl.u32 2475754826, %v2107
  %v2111 = vor.u32 %v2109, %v2110
  %v2112 = vshll.u32 2475754826, %v2106
  %v2113 = vshrl.u32 2131351028, %v2107
  %v2114 = vor.u32 %v2112, %v2113
  %v2115 = vshll.u32 2131351028, %v2106
  %v2116 = vshrl.u32 2102212464, %v2107
  %v2117 = vor.u32 %v2115, %v2116
  %v2118 = vshll.u32 2102212464, %v2106
  %v2119 = vshrl.u32 920167782, %v2107
  %v2120 = vor.u32 %v2118, %v2119
  %v2121 = vshll.u32 920167782, %v2106
  %v2122 = vshrl.u32 1326507024, %v2107
  %v2123 = vor.u32 %v2121, %v2122
  %vm2124 = vcmp.lt.s32.totalorder %v2105, 1
  %vm2125 = vcmp.lt.s32.totalorder %v2105, 2
  %vm2126 = vcmp.lt.s32.totalorder %v2105, 3
  %vm2127 = vcmp.lt.s32.totalorder %v2105, 4
  %v2128 = vsel %vm2124, %v2108, %v2111
  %v2129 = vsel %vm2127, %v2117, 2102212464
  %v2130 = vsel %vm2126, %v2114, %v2129
  %v2131 = vsel %vm2125, %v2128, %v2130
  %v2132 = vsel %vm2124, %v2111, %v2114
  %v2133 = vsel %vm2127, %v2120, 920167782
  %v2134 = vsel %vm2126, %v2117, %v2133
  %v2135 = vsel %vm2125, %v2132, %v2134
  %v2136 = vsel %vm2124, %v2114, %v2117
  %v2137 = vsel %vm2127, %v2123, 1326507024
  %v2138 = vsel %vm2126, %v2120, %v2137
  %v2139 = vsel %vm2125, %v2136, %v2138
  %v2140 = vshll.u32 %v2100, 8
  %v2141 = vmul.u32.u64.compose %v2140, %v2139
  %v2142 = vextract.low.u32 %v2141
  %v2143 = vextract.high.u32 %v2141
  %v2144 = vmul.u32.u64.compose %v2140, %v2135
  %v2145 = vextract.low.u32 %v2144
  %v2146 = vextract.high.u32 %v2144
  %v2147 = vmul.u32 %v2140, %v2131
  %v2148 = vadd.s32 %v2143, %v2145
  %vm2149 = vc.u32 %v2143, %v2145
  %v2150 = vadd.s32 %v2146, 1
  %v2151 = vsel %vm2149, %v2150, %v2146
  %v2152 = vadd.s32 %v2147, %v2151
  %v2153 = vadd.s32 %v2152, 536870912
  %v2154 = vshrl.u32 %v2153, 30
  %v2155 = vshll.u32 %v2154, 30
  %v2156 = vsub.s32 %v2152, %v2155
  %vm2157 = vcmp.lt.s32.totalorder %v2156, 0
  %v2158 = vsub.s32 0, %v2156
  %v2159 = vsel %vm2157, %v2158, %v2156
  %v2160 = vclz %v2159
  %v2161 = vsub.s32 %v2160, 2
  %vm2162 = vcmp.gt.s32.totalorder 0, %v2161
  %v2163 = vsel %vm2162, 0, %v2161
  %v2164 = vsub.s32 32, %v2163
  %v2165 = vshll.u32 %v2156, %v2163
  %v2166 = vshrl.u32 %v2148, %v2164
  %v2167 = vor.u32 %v2165, %v2166
  %v2168 = vsub.s32 4294967266, %v2163
  %v2169 = vadd.s32 %v2168, 127
  %v2170 = vshll.u32 %v2169, 23
  %v2171 = vor.u32 4788187, %v2170
  %v2172 = vand.u32 2147483647, %v2171
  %v2174 = vcvt.s32.f32 %v2167
  %v2175 = vmul.f32 %v2174, %v2172
  %v2176 = vxor.u32 %v2175, 2147483648
  %v2177 = vsel %vm2094, %v2176, %v2175
  %v2178 = vsub.s32 4, %v2154
  %v2179 = vsel %vm2094, %v2178, %v2154
  %v2180 = vsel %vm2093, %v498, %v2177
  %v2181 = vsel %vm2093, 0, %v2179
  %v2182 = vcosq.f32.pop %v2180
  %v2183 = vsinq.f32.pop %v2180
  %vm2184 = vweird.f32 %v498
  %v2185 = vand.u32 %v2181, 3
  %vm2186 = vcmp.lt.s32.totalorder %v2185, 2
  %vm2187 = vcmp.eq.s32.totalorder %v2185, 0
  %v2188 = vxor.u32 %v2183, 2147483648
  %v2189 = vsel %vm2187, %v2182, %v2188
  %vm2190 = vcmp.eq.s32.totalorder %v2185, 2
  %v2191 = vxor.u32 %v2182, 2147483648
  %v2192 = vsel %vm2190, %v2191, %v2183
  %v2193 = vsel %vm2186, %v2189, %v2192
  %v2194 = vsel %vm2184, nan, %v2193
  %v2195 = vand.u32 2147483647, %v499
  %vm2196 = vcmp.le.f32.partialorder %v2195, 0.7853982
  %vm2197 = vcmp.lt.s32.totalorder %v499, 0
  %v2198 = vand.u32 %v499, 2139095040
  %v2199 = vshrl.u32 %v2198, 23
  %v2200 = vsub.s32 %v2199, 127
  %v2201 = vand.u32 2147483647, %v499
  %v2202 = vand.u32 %v2201, 8388607
  %v2203 = vor.u32 %v2202, 8388608
  %v2204 = vsub.s32 0, %v2203
  %v2205 = vadd.s32 %v2200, 1
  %vm2206 = vcmp.gt.s32.totalorder %v2205, 0
  %v2207 = vsel %vm2206, %v2205, 0
  %v2208 = vshrl.u32 %v2207, 5
  %v2209 = vand.u32 %v2207, 31
  %v2210 = vsub.s32 32, %v2209
  %v2211 = vshrl.u32 683565275, %v2210
  %v2212 = vshll.u32 683565275, %v2209
  %v2213 = vshrl.u32 2475754826, %v2210
  %v2214 = vor.u32 %v2212, %v2213
  %v2215 = vshll.u32 2475754826, %v2209
  %v2216 = vshrl.u32 2131351028, %v2210
  %v2217 = vor.u32 %v2215, %v2216
  %v2218 = vshll.u32 2131351028, %v2209
  %v2219 = vshrl.u32 2102212464, %v2210
  %v2220 = vor.u32 %v2218, %v2219
  %v2221 = vshll.u32 2102212464, %v2209
  %v2222 = vshrl.u32 920167782, %v2210
  %v2223 = vor.u32 %v2221, %v2222
  %v2224 = vshll.u32 920167782, %v2209
  %v2225 = vshrl.u32 1326507024, %v2210
  %v2226 = vor.u32 %v2224, %v2225
  %vm2227 = vcmp.lt.s32.totalorder %v2208, 1
  %vm2228 = vcmp.lt.s32.totalorder %v2208, 2
  %vm2229 = vcmp.lt.s32.totalorder %v2208, 3
  %vm2230 = vcmp.lt.s32.totalorder %v2208, 4
  %v2231 = vsel %vm2227, %v2211, %v2214
  %v2232 = vsel %vm2230, %v2220, 2102212464
  %v2233 = vsel %vm2229, %v2217, %v2232
  %v2234 = vsel %vm2228, %v2231, %v2233
  %v2235 = vsel %vm2227, %v2214, %v2217
  %v2236 = vsel %vm2230, %v2223, 920167782
  %v2237 = vsel %vm2229, %v2220, %v2236
  %v2238 = vsel %vm2228, %v2235, %v2237
  %v2239 = vsel %vm2227, %v2217, %v2220
  %v2240 = vsel %vm2230, %v2226, 1326507024
  %v2241 = vsel %vm2229, %v2223, %v2240
  %v2242 = vsel %vm2228, %v2239, %v2241
  %v2243 = vshll.u32 %v2203, 8
  %v2244 = vmul.u32.u64.compose %v2243, %v2242
  %v2245 = vextract.low.u32 %v2244
  %v2246 = vextract.high.u32 %v2244
  %v2247 = vmul.u32.u64.compose %v2243, %v2238
  %v2248 = vextract.low.u32 %v2247
  %v2249 = vextract.high.u32 %v2247
  %v2250 = vmul.u32 %v2243, %v2234
  %v2251 = vadd.s32 %v2246, %v2248
  %vm2252 = vc.u32 %v2246, %v2248
  %v2253 = vadd.s32 %v2249, 1
  %v2254 = vsel %vm2252, %v2253, %v2249
  %v2255 = vadd.s32 %v2250, %v2254
  %v2256 = vadd.s32 %v2255, 536870912
  %v2257 = vshrl.u32 %v2256, 30
  %v2258 = vshll.u32 %v2257, 30
  %v2259 = vsub.s32 %v2255, %v2258
  %vm2260 = vcmp.lt.s32.totalorder %v2259, 0
  %v2261 = vsub.s32 0, %v2259
  %v2262 = vsel %vm2260, %v2261, %v2259
  %v2263 = vclz %v2262
  %v2264 = vsub.s32 %v2263, 2
  %vm2265 = vcmp.gt.s32.totalorder 0, %v2264
  %v2266 = vsel %vm2265, 0, %v2264
  %v2267 = vsub.s32 32, %v2266
  %v2268 = vshll.u32 %v2259, %v2266
  %v2269 = vshrl.u32 %v2251, %v2267
  %v2270 = vor.u32 %v2268, %v2269
  %v2271 = vsub.s32 4294967266, %v2266
  %v2272 = vadd.s32 %v2271, 127
  %v2273 = vshll.u32 %v2272, 23
  %v2274 = vor.u32 4788187, %v2273
  %v2275 = vand.u32 2147483647, %v2274
  %v2277 = vcvt.s32.f32 %v2270
  %v2278 = vmul.f32 %v2277, %v2275
  %v2279 = vxor.u32 %v2278, 2147483648
  %v2280 = vsel %vm2197, %v2279, %v2278
  %v2281 = vsub.s32 4, %v2257
  %v2282 = vsel %vm2197, %v2281, %v2257
  %v2283 = vsel %vm2196, %v499, %v2280
  %v2284 = vsel %vm2196, 0, %v2282
  %v2285 = vcosq.f32.pop %v2283
  %v2286 = vsinq.f32.pop %v2283
  %vm2287 = vweird.f32 %v499
  %v2288 = vand.u32 %v2284, 3
  %vm2289 = vcmp.lt.s32.totalorder %v2288, 2
  %vm2290 = vcmp.eq.s32.totalorder %v2288, 0
  %v2291 = vxor.u32 %v2286, 2147483648
  %v2292 = vsel %vm2290, %v2285, %v2291
  %vm2293 = vcmp.eq.s32.totalorder %v2288, 2
  %v2294 = vxor.u32 %v2285, 2147483648
  %v2295 = vsel %vm2293, %v2294, %v2286
  %v2296 = vsel %vm2289, %v2292, %v2295
  %v2297 = vsel %vm2287, nan, %v2296
  %v2298 = vand.u32 2147483647, %v500
  %vm2299 = vcmp.le.f32.partialorder %v2298, 0.7853982
  %vm2300 = vcmp.lt.s32.totalorder %v500, 0
  %v2301 = vand.u32 %v500, 2139095040
  %v2302 = vshrl.u32 %v2301, 23
  %v2303 = vsub.s32 %v2302, 127
  %v2304 = vand.u32 2147483647, %v500
  %v2305 = vand.u32 %v2304, 8388607
  %v2306 = vor.u32 %v2305, 8388608
  %v2307 = vsub.s32 0, %v2306
  %v2308 = vadd.s32 %v2303, 1
  %vm2309 = vcmp.gt.s32.totalorder %v2308, 0
  %v2310 = vsel %vm2309, %v2308, 0
  %v2311 = vshrl.u32 %v2310, 5
  %v2312 = vand.u32 %v2310, 31
  %v2313 = vsub.s32 32, %v2312
  %v2314 = vshrl.u32 683565275, %v2313
  %v2315 = vshll.u32 683565275, %v2312
  %v2316 = vshrl.u32 2475754826, %v2313
  %v2317 = vor.u32 %v2315, %v2316
  %v2318 = vshll.u32 2475754826, %v2312
  %v2319 = vshrl.u32 2131351028, %v2313
  %v2320 = vor.u32 %v2318, %v2319
  %v2321 = vshll.u32 2131351028, %v2312
  %v2322 = vshrl.u32 2102212464, %v2313
  %v2323 = vor.u32 %v2321, %v2322
  %v2324 = vshll.u32 2102212464, %v2312
  %v2325 = vshrl.u32 920167782, %v2313
  %v2326 = vor.u32 %v2324, %v2325
  %v2327 = vshll.u32 920167782, %v2312
  %v2328 = vshrl.u32 1326507024, %v2313
  %v2329 = vor.u32 %v2327, %v2328
  %vm2330 = vcmp.lt.s32.totalorder %v2311, 1
  %vm2331 = vcmp.lt.s32.totalorder %v2311, 2
  %vm2332 = vcmp.lt.s32.totalorder %v2311, 3
  %vm2333 = vcmp.lt.s32.totalorder %v2311, 4
  %v2334 = vsel %vm2330, %v2314, %v2317
  %v2335 = vsel %vm2333, %v2323, 2102212464
  %v2336 = vsel %vm2332, %v2320, %v2335
  %v2337 = vsel %vm2331, %v2334, %v2336
  %v2338 = vsel %vm2330, %v2317, %v2320
  %v2339 = vsel %vm2333, %v2326, 920167782
  %v2340 = vsel %vm2332, %v2323, %v2339
  %v2341 = vsel %vm2331, %v2338, %v2340
  %v2342 = vsel %vm2330, %v2320, %v2323
  %v2343 = vsel %vm2333, %v2329, 1326507024
  %v2344 = vsel %vm2332, %v2326, %v2343
  %v2345 = vsel %vm2331, %v2342, %v2344
  %v2346 = vshll.u32 %v2306, 8
  %v2347 = vmul.u32.u64.compose %v2346, %v2345
  %v2348 = vextract.low.u32 %v2347
  %v2349 = vextract.high.u32 %v2347
  %v2350 = vmul.u32.u64.compose %v2346, %v2341
  %v2351 = vextract.low.u32 %v2350
  %v2352 = vextract.high.u32 %v2350
  %v2353 = vmul.u32 %v2346, %v2337
  %v2354 = vadd.s32 %v2349, %v2351
  %vm2355 = vc.u32 %v2349, %v2351
  %v2356 = vadd.s32 %v2352, 1
  %v2357 = vsel %vm2355, %v2356, %v2352
  %v2358 = vadd.s32 %v2353, %v2357
  %v2359 = vadd.s32 %v2358, 536870912
  %v2360 = vshrl.u32 %v2359, 30
  %v2361 = vshll.u32 %v2360, 30
  %v2362 = vsub.s32 %v2358, %v2361
  %vm2363 = vcmp.lt.s32.totalorder %v2362, 0
  %v2364 = vsub.s32 0, %v2362
  %v2365 = vsel %vm2363, %v2364, %v2362
  %v2366 = vclz %v2365
  %v2367 = vsub.s32 %v2366, 2
  %vm2368 = vcmp.gt.s32.totalorder 0, %v2367
  %v2369 = vsel %vm2368, 0, %v2367
  %v2370 = vsub.s32 32, %v2369
  %v2371 = vshll.u32 %v2362, %v2369
  %v2372 = vshrl.u32 %v2354, %v2370
  %v2373 = vor.u32 %v2371, %v2372
  %v2374 = vsub.s32 4294967266, %v2369
  %v2375 = vadd.s32 %v2374, 127
  %v2376 = vshll.u32 %v2375, 23
  %v2377 = vor.u32 4788187, %v2376
  %v2378 = vand.u32 2147483647, %v2377
  %v2380 = vcvt.s32.f32 %v2373
  %v2381 = vmul.f32 %v2380, %v2378
  %v2382 = vxor.u32 %v2381, 2147483648
  %v2383 = vsel %vm2300, %v2382, %v2381
  %v2384 = vsub.s32 4, %v2360
  %v2385 = vsel %vm2300, %v2384, %v2360
  %v2386 = vsel %vm2299, %v500, %v2383
  %v2387 = vsel %vm2299, 0, %v2385
  %v2388 = vcosq.f32.pop %v2386
  %v2389 = vsinq.f32.pop %v2386
  %vm2390 = vweird.f32 %v500
  %v2391 = vand.u32 %v2387, 3
  %vm2392 = vcmp.lt.s32.totalorder %v2391, 2
  %vm2393 = vcmp.eq.s32.totalorder %v2391, 0
  %v2394 = vxor.u32 %v2389, 2147483648
  %v2395 = vsel %vm2393, %v2388, %v2394
  %vm2396 = vcmp.eq.s32.totalorder %v2391, 2
  %v2397 = vxor.u32 %v2388, 2147483648
  %v2398 = vsel %vm2396, %v2397, %v2389
  %v2399 = vsel %vm2392, %v2395, %v2398
  %v2400 = vsel %vm2390, nan, %v2399
  %v2401 = vand.u32 2147483647, %v501
  %vm2402 = vcmp.le.f32.partialorder %v2401, 0.7853982
  %vm2403 = vcmp.lt.s32.totalorder %v501, 0
  %v2404 = vand.u32 %v501, 2139095040
  %v2405 = vshrl.u32 %v2404, 23
  %v2406 = vsub.s32 %v2405, 127
  %v2407 = vand.u32 2147483647, %v501
  %v2408 = vand.u32 %v2407, 8388607
  %v2409 = vor.u32 %v2408, 8388608
  %v2410 = vsub.s32 0, %v2409
  %v2411 = vadd.s32 %v2406, 1
  %vm2412 = vcmp.gt.s32.totalorder %v2411, 0
  %v2413 = vsel %vm2412, %v2411, 0
  %v2414 = vshrl.u32 %v2413, 5
  %v2415 = vand.u32 %v2413, 31
  %v2416 = vsub.s32 32, %v2415
  %v2417 = vshrl.u32 683565275, %v2416
  %v2418 = vshll.u32 683565275, %v2415
  %v2419 = vshrl.u32 2475754826, %v2416
  %v2420 = vor.u32 %v2418, %v2419
  %v2421 = vshll.u32 2475754826, %v2415
  %v2422 = vshrl.u32 2131351028, %v2416
  %v2423 = vor.u32 %v2421, %v2422
  %v2424 = vshll.u32 2131351028, %v2415
  %v2425 = vshrl.u32 2102212464, %v2416
  %v2426 = vor.u32 %v2424, %v2425
  %v2427 = vshll.u32 2102212464, %v2415
  %v2428 = vshrl.u32 920167782, %v2416
  %v2429 = vor.u32 %v2427, %v2428
  %v2430 = vshll.u32 920167782, %v2415
  %v2431 = vshrl.u32 1326507024, %v2416
  %v2432 = vor.u32 %v2430, %v2431
  %vm2433 = vcmp.lt.s32.totalorder %v2414, 1
  %vm2434 = vcmp.lt.s32.totalorder %v2414, 2
  %vm2435 = vcmp.lt.s32.totalorder %v2414, 3
  %vm2436 = vcmp.lt.s32.totalorder %v2414, 4
  %v2437 = vsel %vm2433, %v2417, %v2420
  %v2438 = vsel %vm2436, %v2426, 2102212464
  %v2439 = vsel %vm2435, %v2423, %v2438
  %v2440 = vsel %vm2434, %v2437, %v2439
  %v2441 = vsel %vm2433, %v2420, %v2423
  %v2442 = vsel %vm2436, %v2429, 920167782
  %v2443 = vsel %vm2435, %v2426, %v2442
  %v2444 = vsel %vm2434, %v2441, %v2443
  %v2445 = vsel %vm2433, %v2423, %v2426
  %v2446 = vsel %vm2436, %v2432, 1326507024
  %v2447 = vsel %vm2435, %v2429, %v2446
  %v2448 = vsel %vm2434, %v2445, %v2447
  %v2449 = vshll.u32 %v2409, 8
  %v2450 = vmul.u32.u64.compose %v2449, %v2448
  %v2451 = vextract.low.u32 %v2450
  %v2452 = vextract.high.u32 %v2450
  %v2453 = vmul.u32.u64.compose %v2449, %v2444
  %v2454 = vextract.low.u32 %v2453
  %v2455 = vextract.high.u32 %v2453
  %v2456 = vmul.u32 %v2449, %v2440
  %v2457 = vadd.s32 %v2452, %v2454
  %vm2458 = vc.u32 %v2452, %v2454
  %v2459 = vadd.s32 %v2455, 1
  %v2460 = vsel %vm2458, %v2459, %v2455
  %v2461 = vadd.s32 %v2456, %v2460
  %v2462 = vadd.s32 %v2461, 536870912
  %v2463 = vshrl.u32 %v2462, 30
  %v2464 = vshll.u32 %v2463, 30
  %v2465 = vsub.s32 %v2461, %v2464
  %vm2466 = vcmp.lt.s32.totalorder %v2465, 0
  %v2467 = vsub.s32 0, %v2465
  %v2468 = vsel %vm2466, %v2467, %v2465
  %v2469 = vclz %v2468
  %v2470 = vsub.s32 %v2469, 2
  %vm2471 = vcmp.gt.s32.totalorder 0, %v2470
  %v2472 = vsel %vm2471, 0, %v2470
  %v2473 = vsub.s32 32, %v2472
  %v2474 = vshll.u32 %v2465, %v2472
  %v2475 = vshrl.u32 %v2457, %v2473
  %v2476 = vor.u32 %v2474, %v2475
  %v2477 = vsub.s32 4294967266, %v2472
  %v2478 = vadd.s32 %v2477, 127
  %v2479 = vshll.u32 %v2478, 23
  %v2480 = vor.u32 4788187, %v2479
  %v2481 = vand.u32 2147483647, %v2480
  %v2483 = vcvt.s32.f32 %v2476
  %v2484 = vmul.f32 %v2483, %v2481
  %v2485 = vxor.u32 %v2484, 2147483648
  %v2486 = vsel %vm2403, %v2485, %v2484
  %v2487 = vsub.s32 4, %v2463
  %v2488 = vsel %vm2403, %v2487, %v2463
  %v2489 = vsel %vm2402, %v501, %v2486
  %v2490 = vsel %vm2402, 0, %v2488
  %v2491 = vcosq.f32.pop %v2489
  %v2492 = vsinq.f32.pop %v2489
  %vm2493 = vweird.f32 %v501
  %v2494 = vand.u32 %v2490, 3
  %vm2495 = vcmp.lt.s32.totalorder %v2494, 2
  %vm2496 = vcmp.eq.s32.totalorder %v2494, 0
  %v2497 = vxor.u32 %v2492, 2147483648
  %v2498 = vsel %vm2496, %v2491, %v2497
  %vm2499 = vcmp.eq.s32.totalorder %v2494, 2
  %v2500 = vxor.u32 %v2491, 2147483648
  %v2501 = vsel %vm2499, %v2500, %v2492
  %v2502 = vsel %vm2495, %v2498, %v2501
  %v2503 = vsel %vm2493, nan, %v2502
  %v2504 = vand.u32 2147483647, %v502
  %vm2505 = vcmp.le.f32.partialorder %v2504, 0.7853982
  %vm2506 = vcmp.lt.s32.totalorder %v502, 0
  %v2507 = vand.u32 %v502, 2139095040
  %v2508 = vshrl.u32 %v2507, 23
  %v2509 = vsub.s32 %v2508, 127
  %v2510 = vand.u32 2147483647, %v502
  %v2511 = vand.u32 %v2510, 8388607
  %v2512 = vor.u32 %v2511, 8388608
  %v2513 = vsub.s32 0, %v2512
  %v2514 = vadd.s32 %v2509, 1
  %vm2515 = vcmp.gt.s32.totalorder %v2514, 0
  %v2516 = vsel %vm2515, %v2514, 0
  %v2517 = vshrl.u32 %v2516, 5
  %v2518 = vand.u32 %v2516, 31
  %v2519 = vsub.s32 32, %v2518
  %v2520 = vshrl.u32 683565275, %v2519
  %v2521 = vshll.u32 683565275, %v2518
  %v2522 = vshrl.u32 2475754826, %v2519
  %v2523 = vor.u32 %v2521, %v2522
  %v2524 = vshll.u32 2475754826, %v2518
  %v2525 = vshrl.u32 2131351028, %v2519
  %v2526 = vor.u32 %v2524, %v2525
  %v2527 = vshll.u32 2131351028, %v2518
  %v2528 = vshrl.u32 2102212464, %v2519
  %v2529 = vor.u32 %v2527, %v2528
  %v2530 = vshll.u32 2102212464, %v2518
  %v2531 = vshrl.u32 920167782, %v2519
  %v2532 = vor.u32 %v2530, %v2531
  %v2533 = vshll.u32 920167782, %v2518
  %v2534 = vshrl.u32 1326507024, %v2519
  %v2535 = vor.u32 %v2533, %v2534
  %vm2536 = vcmp.lt.s32.totalorder %v2517, 1
  %vm2537 = vcmp.lt.s32.totalorder %v2517, 2
  %vm2538 = vcmp.lt.s32.totalorder %v2517, 3
  %vm2539 = vcmp.lt.s32.totalorder %v2517, 4
  %v2540 = vsel %vm2536, %v2520, %v2523
  %v2541 = vsel %vm2539, %v2529, 2102212464
  %v2542 = vsel %vm2538, %v2526, %v2541
  %v2543 = vsel %vm2537, %v2540, %v2542
  %v2544 = vsel %vm2536, %v2523, %v2526
  %v2545 = vsel %vm2539, %v2532, 920167782
  %v2546 = vsel %vm2538, %v2529, %v2545
  %v2547 = vsel %vm2537, %v2544, %v2546
  %v2548 = vsel %vm2536, %v2526, %v2529
  %v2549 = vsel %vm2539, %v2535, 1326507024
  %v2550 = vsel %vm2538, %v2532, %v2549
  %v2551 = vsel %vm2537, %v2548, %v2550
  %v2552 = vshll.u32 %v2512, 8
  %v2553 = vmul.u32.u64.compose %v2552, %v2551
  %v2554 = vextract.low.u32 %v2553
  %v2555 = vextract.high.u32 %v2553
  %v2556 = vmul.u32.u64.compose %v2552, %v2547
  %v2557 = vextract.low.u32 %v2556
  %v2558 = vextract.high.u32 %v2556
  %v2559 = vmul.u32 %v2552, %v2543
  %v2560 = vadd.s32 %v2555, %v2557
  %vm2561 = vc.u32 %v2555, %v2557
  %v2562 = vadd.s32 %v2558, 1
  %v2563 = vsel %vm2561, %v2562, %v2558
  %v2564 = vadd.s32 %v2559, %v2563
  %v2565 = vadd.s32 %v2564, 536870912
  %v2566 = vshrl.u32 %v2565, 30
  %v2567 = vshll.u32 %v2566, 30
  %v2568 = vsub.s32 %v2564, %v2567
  %vm2569 = vcmp.lt.s32.totalorder %v2568, 0
  %v2570 = vsub.s32 0, %v2568
  %v2571 = vsel %vm2569, %v2570, %v2568
  %v2572 = vclz %v2571
  %v2573 = vsub.s32 %v2572, 2
  %vm2574 = vcmp.gt.s32.totalorder 0, %v2573
  %v2575 = vsel %vm2574, 0, %v2573
  %v2576 = vsub.s32 32, %v2575
  %v2577 = vshll.u32 %v2568, %v2575
  %v2578 = vshrl.u32 %v2560, %v2576
  %v2579 = vor.u32 %v2577, %v2578
  %v2580 = vsub.s32 4294967266, %v2575
  %v2581 = vadd.s32 %v2580, 127
  %v2582 = vshll.u32 %v2581, 23
  %v2583 = vor.u32 4788187, %v2582
  %v2584 = vand.u32 2147483647, %v2583
  %v2586 = vcvt.s32.f32 %v2579
  %v2587 = vmul.f32 %v2586, %v2584
  %v2588 = vxor.u32 %v2587, 2147483648
  %v2589 = vsel %vm2506, %v2588, %v2587
  %v2590 = vsub.s32 4, %v2566
  %v2591 = vsel %vm2506, %v2590, %v2566
  %v2592 = vsel %vm2505, %v502, %v2589
  %v2593 = vsel %vm2505, 0, %v2591
  %v2594 = vcosq.f32.pop %v2592
  %v2595 = vsinq.f32.pop %v2592
  %vm2596 = vweird.f32 %v502
  %v2597 = vand.u32 %v2593, 3
  %vm2598 = vcmp.lt.s32.totalorder %v2597, 2
  %vm2599 = vcmp.eq.s32.totalorder %v2597, 0
  %v2600 = vxor.u32 %v2595, 2147483648
  %v2601 = vsel %vm2599, %v2594, %v2600
  %vm2602 = vcmp.eq.s32.totalorder %v2597, 2
  %v2603 = vxor.u32 %v2594, 2147483648
  %v2604 = vsel %vm2602, %v2603, %v2595
  %v2605 = vsel %vm2598, %v2601, %v2604
  %v2606 = vsel %vm2596, nan, %v2605
  %v2607 = vand.u32 2147483647, %v503
  %vm2608 = vcmp.le.f32.partialorder %v2607, 0.7853982
  %vm2609 = vcmp.lt.s32.totalorder %v503, 0
  %v2610 = vand.u32 %v503, 2139095040
  %v2611 = vshrl.u32 %v2610, 23
  %v2612 = vsub.s32 %v2611, 127
  %v2613 = vand.u32 2147483647, %v503
  %v2614 = vand.u32 %v2613, 8388607
  %v2615 = vor.u32 %v2614, 8388608
  %v2616 = vsub.s32 0, %v2615
  %v2617 = vadd.s32 %v2612, 1
  %vm2618 = vcmp.gt.s32.totalorder %v2617, 0
  %v2619 = vsel %vm2618, %v2617, 0
  %v2620 = vshrl.u32 %v2619, 5
  %v2621 = vand.u32 %v2619, 31
  %v2622 = vsub.s32 32, %v2621
  %v2623 = vshrl.u32 683565275, %v2622
  %v2624 = vshll.u32 683565275, %v2621
  %v2625 = vshrl.u32 2475754826, %v2622
  %v2626 = vor.u32 %v2624, %v2625
  %v2627 = vshll.u32 2475754826, %v2621
  %v2628 = vshrl.u32 2131351028, %v2622
  %v2629 = vor.u32 %v2627, %v2628
  %v2630 = vshll.u32 2131351028, %v2621
  %v2631 = vshrl.u32 2102212464, %v2622
  %v2632 = vor.u32 %v2630, %v2631
  %v2633 = vshll.u32 2102212464, %v2621
  %v2634 = vshrl.u32 920167782, %v2622
  %v2635 = vor.u32 %v2633, %v2634
  %v2636 = vshll.u32 920167782, %v2621
  %v2637 = vshrl.u32 1326507024, %v2622
  %v2638 = vor.u32 %v2636, %v2637
  %vm2639 = vcmp.lt.s32.totalorder %v2620, 1
  %vm2640 = vcmp.lt.s32.totalorder %v2620, 2
  %vm2641 = vcmp.lt.s32.totalorder %v2620, 3
  %vm2642 = vcmp.lt.s32.totalorder %v2620, 4
  %v2643 = vsel %vm2639, %v2623, %v2626
  %v2644 = vsel %vm2642, %v2632, 2102212464
  %v2645 = vsel %vm2641, %v2629, %v2644
  %v2646 = vsel %vm2640, %v2643, %v2645
  %v2647 = vsel %vm2639, %v2626, %v2629
  %v2648 = vsel %vm2642, %v2635, 920167782
  %v2649 = vsel %vm2641, %v2632, %v2648
  %v2650 = vsel %vm2640, %v2647, %v2649
  %v2651 = vsel %vm2639, %v2629, %v2632
  %v2652 = vsel %vm2642, %v2638, 1326507024
  %v2653 = vsel %vm2641, %v2635, %v2652
  %v2654 = vsel %vm2640, %v2651, %v2653
  %v2655 = vshll.u32 %v2615, 8
  %v2656 = vmul.u32.u64.compose %v2655, %v2654
  %v2657 = vextract.low.u32 %v2656
  %v2658 = vextract.high.u32 %v2656
  %v2659 = vmul.u32.u64.compose %v2655, %v2650
  %v2660 = vextract.low.u32 %v2659
  %v2661 = vextract.high.u32 %v2659
  %v2662 = vmul.u32 %v2655, %v2646
  %v2663 = vadd.s32 %v2658, %v2660
  %vm2664 = vc.u32 %v2658, %v2660
  %v2665 = vadd.s32 %v2661, 1
  %v2666 = vsel %vm2664, %v2665, %v2661
  %v2667 = vadd.s32 %v2662, %v2666
  %v2668 = vadd.s32 %v2667, 536870912
  %v2669 = vshrl.u32 %v2668, 30
  %v2670 = vshll.u32 %v2669, 30
  %v2671 = vsub.s32 %v2667, %v2670
  %vm2672 = vcmp.lt.s32.totalorder %v2671, 0
  %v2673 = vsub.s32 0, %v2671
  %v2674 = vsel %vm2672, %v2673, %v2671
  %v2675 = vclz %v2674
  %v2676 = vsub.s32 %v2675, 2
  %vm2677 = vcmp.gt.s32.totalorder 0, %v2676
  %v2678 = vsel %vm2677, 0, %v2676
  %v2679 = vsub.s32 32, %v2678
  %v2680 = vshll.u32 %v2671, %v2678
  %v2681 = vshrl.u32 %v2663, %v2679
  %v2682 = vor.u32 %v2680, %v2681
  %v2683 = vsub.s32 4294967266, %v2678
  %v2684 = vadd.s32 %v2683, 127
  %v2685 = vshll.u32 %v2684, 23
  %v2686 = vor.u32 4788187, %v2685
  %v2687 = vand.u32 2147483647, %v2686
  %v2689 = vcvt.s32.f32 %v2682
  %v2690 = vmul.f32 %v2689, %v2687
  %v2691 = vxor.u32 %v2690, 2147483648
  %v2692 = vsel %vm2609, %v2691, %v2690
  %v2693 = vsub.s32 4, %v2669
  %v2694 = vsel %vm2609, %v2693, %v2669
  %v2695 = vsel %vm2608, %v503, %v2692
  %v2696 = vsel %vm2608, 0, %v2694
  %v2697 = vcosq.f32.pop %v2695
  %v2698 = vsinq.f32.pop %v2695
  %vm2699 = vweird.f32 %v503
  %v2700 = vand.u32 %v2696, 3
  %vm2701 = vcmp.lt.s32.totalorder %v2700, 2
  %vm2702 = vcmp.eq.s32.totalorder %v2700, 0
  %v2703 = vxor.u32 %v2698, 2147483648
  %v2704 = vsel %vm2702, %v2697, %v2703
  %vm2705 = vcmp.eq.s32.totalorder %v2700, 2
  %v2706 = vxor.u32 %v2697, 2147483648
  %v2707 = vsel %vm2705, %v2706, %v2698
  %v2708 = vsel %vm2701, %v2704, %v2707
  %v2709 = vsel %vm2699, nan, %v2708
  %v2710 = vand.u32 2147483647, %v504
  %vm2711 = vcmp.le.f32.partialorder %v2710, 0.7853982
  %vm2712 = vcmp.lt.s32.totalorder %v504, 0
  %v2713 = vand.u32 %v504, 2139095040
  %v2714 = vshrl.u32 %v2713, 23
  %v2715 = vsub.s32 %v2714, 127
  %v2716 = vand.u32 2147483647, %v504
  %v2717 = vand.u32 %v2716, 8388607
  %v2718 = vor.u32 %v2717, 8388608
  %v2719 = vsub.s32 0, %v2718
  %v2720 = vadd.s32 %v2715, 1
  %vm2721 = vcmp.gt.s32.totalorder %v2720, 0
  %v2722 = vsel %vm2721, %v2720, 0
  %v2723 = vshrl.u32 %v2722, 5
  %v2724 = vand.u32 %v2722, 31
  %v2725 = vsub.s32 32, %v2724
  %v2726 = vshrl.u32 683565275, %v2725
  %v2727 = vshll.u32 683565275, %v2724
  %v2728 = vshrl.u32 2475754826, %v2725
  %v2729 = vor.u32 %v2727, %v2728
  %v2730 = vshll.u32 2475754826, %v2724
  %v2731 = vshrl.u32 2131351028, %v2725
  %v2732 = vor.u32 %v2730, %v2731
  %v2733 = vshll.u32 2131351028, %v2724
  %v2734 = vshrl.u32 2102212464, %v2725
  %v2735 = vor.u32 %v2733, %v2734
  %v2736 = vshll.u32 2102212464, %v2724
  %v2737 = vshrl.u32 920167782, %v2725
  %v2738 = vor.u32 %v2736, %v2737
  %v2739 = vshll.u32 920167782, %v2724
  %v2740 = vshrl.u32 1326507024, %v2725
  %v2741 = vor.u32 %v2739, %v2740
  %vm2742 = vcmp.lt.s32.totalorder %v2723, 1
  %vm2743 = vcmp.lt.s32.totalorder %v2723, 2
  %vm2744 = vcmp.lt.s32.totalorder %v2723, 3
  %vm2745 = vcmp.lt.s32.totalorder %v2723, 4
  %v2746 = vsel %vm2742, %v2726, %v2729
  %v2747 = vsel %vm2745, %v2735, 2102212464
  %v2748 = vsel %vm2744, %v2732, %v2747
  %v2749 = vsel %vm2743, %v2746, %v2748
  %v2750 = vsel %vm2742, %v2729, %v2732
  %v2751 = vsel %vm2745, %v2738, 920167782
  %v2752 = vsel %vm2744, %v2735, %v2751
  %v2753 = vsel %vm2743, %v2750, %v2752
  %v2754 = vsel %vm2742, %v2732, %v2735
  %v2755 = vsel %vm2745, %v2741, 1326507024
  %v2756 = vsel %vm2744, %v2738, %v2755
  %v2757 = vsel %vm2743, %v2754, %v2756
  %v2758 = vshll.u32 %v2718, 8
  %v2759 = vmul.u32.u64.compose %v2758, %v2757
  %v2760 = vextract.low.u32 %v2759
  %v2761 = vextract.high.u32 %v2759
  %v2762 = vmul.u32.u64.compose %v2758, %v2753
  %v2763 = vextract.low.u32 %v2762
  %v2764 = vextract.high.u32 %v2762
  %v2765 = vmul.u32 %v2758, %v2749
  %v2766 = vadd.s32 %v2761, %v2763
  %vm2767 = vc.u32 %v2761, %v2763
  %v2768 = vadd.s32 %v2764, 1
  %v2769 = vsel %vm2767, %v2768, %v2764
  %v2770 = vadd.s32 %v2765, %v2769
  %v2771 = vadd.s32 %v2770, 536870912
  %v2772 = vshrl.u32 %v2771, 30
  %v2773 = vshll.u32 %v2772, 30
  %v2774 = vsub.s32 %v2770, %v2773
  %vm2775 = vcmp.lt.s32.totalorder %v2774, 0
  %v2776 = vsub.s32 0, %v2774
  %v2777 = vsel %vm2775, %v2776, %v2774
  %v2778 = vclz %v2777
  %v2779 = vsub.s32 %v2778, 2
  %vm2780 = vcmp.gt.s32.totalorder 0, %v2779
  %v2781 = vsel %vm2780, 0, %v2779
  %v2782 = vsub.s32 32, %v2781
  %v2783 = vshll.u32 %v2774, %v2781
  %v2784 = vshrl.u32 %v2766, %v2782
  %v2785 = vor.u32 %v2783, %v2784
  %v2786 = vsub.s32 4294967266, %v2781
  %v2787 = vadd.s32 %v2786, 127
  %v2788 = vshll.u32 %v2787, 23
  %v2789 = vor.u32 4788187, %v2788
  %v2790 = vand.u32 2147483647, %v2789
  %v2792 = vcvt.s32.f32 %v2785
  %v2793 = vmul.f32 %v2792, %v2790
  %v2794 = vxor.u32 %v2793, 2147483648
  %v2795 = vsel %vm2712, %v2794, %v2793
  %v2796 = vsub.s32 4, %v2772
  %v2797 = vsel %vm2712, %v2796, %v2772
  %v2798 = vsel %vm2711, %v504, %v2795
  %v2799 = vsel %vm2711, 0, %v2797
  %v2800 = vcosq.f32.pop %v2798
  %v2801 = vsinq.f32.pop %v2798
  %vm2802 = vweird.f32 %v504
  %v2803 = vand.u32 %v2799, 3
  %vm2804 = vcmp.lt.s32.totalorder %v2803, 2
  %vm2805 = vcmp.eq.s32.totalorder %v2803, 0
  %v2806 = vxor.u32 %v2801, 2147483648
  %v2807 = vsel %vm2805, %v2800, %v2806
  %vm2808 = vcmp.eq.s32.totalorder %v2803, 2
  %v2809 = vxor.u32 %v2800, 2147483648
  %v2810 = vsel %vm2808, %v2809, %v2801
  %v2811 = vsel %vm2804, %v2807, %v2810
  %v2812 = vsel %vm2802, nan, %v2811
  %v2813 = vand.u32 2147483647, %v505
  %vm2814 = vcmp.le.f32.partialorder %v2813, 0.7853982
  %vm2815 = vcmp.lt.s32.totalorder %v505, 0
  %v2816 = vand.u32 %v505, 2139095040
  %v2817 = vshrl.u32 %v2816, 23
  %v2818 = vsub.s32 %v2817, 127
  %v2819 = vand.u32 2147483647, %v505
  %v2820 = vand.u32 %v2819, 8388607
  %v2821 = vor.u32 %v2820, 8388608
  %v2822 = vsub.s32 0, %v2821
  %v2823 = vadd.s32 %v2818, 1
  %vm2824 = vcmp.gt.s32.totalorder %v2823, 0
  %v2825 = vsel %vm2824, %v2823, 0
  %v2826 = vshrl.u32 %v2825, 5
  %v2827 = vand.u32 %v2825, 31
  %v2828 = vsub.s32 32, %v2827
  %v2829 = vshrl.u32 683565275, %v2828
  %v2830 = vshll.u32 683565275, %v2827
  %v2831 = vshrl.u32 2475754826, %v2828
  %v2832 = vor.u32 %v2830, %v2831
  %v2833 = vshll.u32 2475754826, %v2827
  %v2834 = vshrl.u32 2131351028, %v2828
  %v2835 = vor.u32 %v2833, %v2834
  %v2836 = vshll.u32 2131351028, %v2827
  %v2837 = vshrl.u32 2102212464, %v2828
  %v2838 = vor.u32 %v2836, %v2837
  %v2839 = vshll.u32 2102212464, %v2827
  %v2840 = vshrl.u32 920167782, %v2828
  %v2841 = vor.u32 %v2839, %v2840
  %v2842 = vshll.u32 920167782, %v2827
  %v2843 = vshrl.u32 1326507024, %v2828
  %v2844 = vor.u32 %v2842, %v2843
  %vm2845 = vcmp.lt.s32.totalorder %v2826, 1
  %vm2846 = vcmp.lt.s32.totalorder %v2826, 2
  %vm2847 = vcmp.lt.s32.totalorder %v2826, 3
  %vm2848 = vcmp.lt.s32.totalorder %v2826, 4
  %v2849 = vsel %vm2845, %v2829, %v2832
  %v2850 = vsel %vm2848, %v2838, 2102212464
  %v2851 = vsel %vm2847, %v2835, %v2850
  %v2852 = vsel %vm2846, %v2849, %v2851
  %v2853 = vsel %vm2845, %v2832, %v2835
  %v2854 = vsel %vm2848, %v2841, 920167782
  %v2855 = vsel %vm2847, %v2838, %v2854
  %v2856 = vsel %vm2846, %v2853, %v2855
  %v2857 = vsel %vm2845, %v2835, %v2838
  %v2858 = vsel %vm2848, %v2844, 1326507024
  %v2859 = vsel %vm2847, %v2841, %v2858
  %v2860 = vsel %vm2846, %v2857, %v2859
  %v2861 = vshll.u32 %v2821, 8
  %v2862 = vmul.u32.u64.compose %v2861, %v2860
  %v2863 = vextract.low.u32 %v2862
  %v2864 = vextract.high.u32 %v2862
  %v2865 = vmul.u32.u64.compose %v2861, %v2856
  %v2866 = vextract.low.u32 %v2865
  %v2867 = vextract.high.u32 %v2865
  %v2868 = vmul.u32 %v2861, %v2852
  %v2869 = vadd.s32 %v2864, %v2866
  %vm2870 = vc.u32 %v2864, %v2866
  %v2871 = vadd.s32 %v2867, 1
  %v2872 = vsel %vm2870, %v2871, %v2867
  %v2873 = vadd.s32 %v2868, %v2872
  %v2874 = vadd.s32 %v2873, 536870912
  %v2875 = vshrl.u32 %v2874, 30
  %v2876 = vshll.u32 %v2875, 30
  %v2877 = vsub.s32 %v2873, %v2876
  %vm2878 = vcmp.lt.s32.totalorder %v2877, 0
  %v2879 = vsub.s32 0, %v2877
  %v2880 = vsel %vm2878, %v2879, %v2877
  %v2881 = vclz %v2880
  %v2882 = vsub.s32 %v2881, 2
  %vm2883 = vcmp.gt.s32.totalorder 0, %v2882
  %v2884 = vsel %vm2883, 0, %v2882
  %v2885 = vsub.s32 32, %v2884
  %v2886 = vshll.u32 %v2877, %v2884
  %v2887 = vshrl.u32 %v2869, %v2885
  %v2888 = vor.u32 %v2886, %v2887
  %v2889 = vsub.s32 4294967266, %v2884
  %v2890 = vadd.s32 %v2889, 127
  %v2891 = vshll.u32 %v2890, 23
  %v2892 = vor.u32 4788187, %v2891
  %v2893 = vand.u32 2147483647, %v2892
  %v2895 = vcvt.s32.f32 %v2888
  %v2896 = vmul.f32 %v2895, %v2893
  %v2897 = vxor.u32 %v2896, 2147483648
  %v2898 = vsel %vm2815, %v2897, %v2896
  %v2899 = vsub.s32 4, %v2875
  %v2900 = vsel %vm2815, %v2899, %v2875
  %v2901 = vsel %vm2814, %v505, %v2898
  %v2902 = vsel %vm2814, 0, %v2900
  %v2903 = vcosq.f32.pop %v2901
  %v2904 = vsinq.f32.pop %v2901
  %vm2905 = vweird.f32 %v505
  %v2906 = vand.u32 %v2902, 3
  %vm2907 = vcmp.lt.s32.totalorder %v2906, 2
  %vm2908 = vcmp.eq.s32.totalorder %v2906, 0
  %v2909 = vxor.u32 %v2904, 2147483648
  %v2910 = vsel %vm2908, %v2903, %v2909
  %vm2911 = vcmp.eq.s32.totalorder %v2906, 2
  %v2912 = vxor.u32 %v2903, 2147483648
  %v2913 = vsel %vm2911, %v2912, %v2904
  %v2914 = vsel %vm2907, %v2910, %v2913
  %v2915 = vsel %vm2905, nan, %v2914
  %v2916 = vand.u32 2147483647, %v506
  %vm2917 = vcmp.le.f32.partialorder %v2916, 0.7853982
  %vm2918 = vcmp.lt.s32.totalorder %v506, 0
  %v2919 = vand.u32 %v506, 2139095040
  %v2920 = vshrl.u32 %v2919, 23
  %v2921 = vsub.s32 %v2920, 127
  %v2922 = vand.u32 2147483647, %v506
  %v2923 = vand.u32 %v2922, 8388607
  %v2924 = vor.u32 %v2923, 8388608
  %v2925 = vsub.s32 0, %v2924
  %v2926 = vadd.s32 %v2921, 1
  %vm2927 = vcmp.gt.s32.totalorder %v2926, 0
  %v2928 = vsel %vm2927, %v2926, 0
  %v2929 = vshrl.u32 %v2928, 5
  %v2930 = vand.u32 %v2928, 31
  %v2931 = vsub.s32 32, %v2930
  %v2932 = vshrl.u32 683565275, %v2931
  %v2933 = vshll.u32 683565275, %v2930
  %v2934 = vshrl.u32 2475754826, %v2931
  %v2935 = vor.u32 %v2933, %v2934
  %v2936 = vshll.u32 2475754826, %v2930
  %v2937 = vshrl.u32 2131351028, %v2931
  %v2938 = vor.u32 %v2936, %v2937
  %v2939 = vshll.u32 2131351028, %v2930
  %v2940 = vshrl.u32 2102212464, %v2931
  %v2941 = vor.u32 %v2939, %v2940
  %v2942 = vshll.u32 2102212464, %v2930
  %v2943 = vshrl.u32 920167782, %v2931
  %v2944 = vor.u32 %v2942, %v2943
  %v2945 = vshll.u32 920167782, %v2930
  %v2946 = vshrl.u32 1326507024, %v2931
  %v2947 = vor.u32 %v2945, %v2946
  %vm2948 = vcmp.lt.s32.totalorder %v2929, 1
  %vm2949 = vcmp.lt.s32.totalorder %v2929, 2
  %vm2950 = vcmp.lt.s32.totalorder %v2929, 3
  %vm2951 = vcmp.lt.s32.totalorder %v2929, 4
  %v2952 = vsel %vm2948, %v2932, %v2935
  %v2953 = vsel %vm2951, %v2941, 2102212464
  %v2954 = vsel %vm2950, %v2938, %v2953
  %v2955 = vsel %vm2949, %v2952, %v2954
  %v2956 = vsel %vm2948, %v2935, %v2938
  %v2957 = vsel %vm2951, %v2944, 920167782
  %v2958 = vsel %vm2950, %v2941, %v2957
  %v2959 = vsel %vm2949, %v2956, %v2958
  %v2960 = vsel %vm2948, %v2938, %v2941
  %v2961 = vsel %vm2951, %v2947, 1326507024
  %v2962 = vsel %vm2950, %v2944, %v2961
  %v2963 = vsel %vm2949, %v2960, %v2962
  %v2964 = vshll.u32 %v2924, 8
  %v2965 = vmul.u32.u64.compose %v2964, %v2963
  %v2966 = vextract.low.u32 %v2965
  %v2967 = vextract.high.u32 %v2965
  %v2968 = vmul.u32.u64.compose %v2964, %v2959
  %v2969 = vextract.low.u32 %v2968
  %v2970 = vextract.high.u32 %v2968
  %v2971 = vmul.u32 %v2964, %v2955
  %v2972 = vadd.s32 %v2967, %v2969
  %vm2973 = vc.u32 %v2967, %v2969
  %v2974 = vadd.s32 %v2970, 1
  %v2975 = vsel %vm2973, %v2974, %v2970
  %v2976 = vadd.s32 %v2971, %v2975
  %v2977 = vadd.s32 %v2976, 536870912
  %v2978 = vshrl.u32 %v2977, 30
  %v2979 = vshll.u32 %v2978, 30
  %v2980 = vsub.s32 %v2976, %v2979
  %vm2981 = vcmp.lt.s32.totalorder %v2980, 0
  %v2982 = vsub.s32 0, %v2980
  %v2983 = vsel %vm2981, %v2982, %v2980
  %v2984 = vclz %v2983
  %v2985 = vsub.s32 %v2984, 2
  %vm2986 = vcmp.gt.s32.totalorder 0, %v2985
  %v2987 = vsel %vm2986, 0, %v2985
  %v2988 = vsub.s32 32, %v2987
  %v2989 = vshll.u32 %v2980, %v2987
  %v2990 = vshrl.u32 %v2972, %v2988
  %v2991 = vor.u32 %v2989, %v2990
  %v2992 = vsub.s32 4294967266, %v2987
  %v2993 = vadd.s32 %v2992, 127
  %v2994 = vshll.u32 %v2993, 23
  %v2995 = vor.u32 4788187, %v2994
  %v2996 = vand.u32 2147483647, %v2995
  %v2998 = vcvt.s32.f32 %v2991
  %v2999 = vmul.f32 %v2998, %v2996
  %v3000 = vxor.u32 %v2999, 2147483648
  %v3001 = vsel %vm2918, %v3000, %v2999
  %v3002 = vsub.s32 4, %v2978
  %v3003 = vsel %vm2918, %v3002, %v2978
  %v3004 = vsel %vm2917, %v506, %v3001
  %v3005 = vsel %vm2917, 0, %v3003
  %v3006 = vcosq.f32.pop %v3004
  %v3007 = vsinq.f32.pop %v3004
  %vm3008 = vweird.f32 %v506
  %v3009 = vand.u32 %v3005, 3
  %vm3010 = vcmp.lt.s32.totalorder %v3009, 2
  %vm3011 = vcmp.eq.s32.totalorder %v3009, 0
  %v3012 = vxor.u32 %v3007, 2147483648
  %v3013 = vsel %vm3011, %v3006, %v3012
  %vm3014 = vcmp.eq.s32.totalorder %v3009, 2
  %v3015 = vxor.u32 %v3006, 2147483648
  %v3016 = vsel %vm3014, %v3015, %v3007
  %v3017 = vsel %vm3010, %v3013, %v3016
  %v3018 = vsel %vm3008, nan, %v3017
  %v3019 = vand.u32 2147483647, %v507
  %vm3020 = vcmp.le.f32.partialorder %v3019, 0.7853982
  %vm3021 = vcmp.lt.s32.totalorder %v507, 0
  %v3022 = vand.u32 %v507, 2139095040
  %v3023 = vshrl.u32 %v3022, 23
  %v3024 = vsub.s32 %v3023, 127
  %v3025 = vand.u32 2147483647, %v507
  %v3026 = vand.u32 %v3025, 8388607
  %v3027 = vor.u32 %v3026, 8388608
  %v3028 = vsub.s32 0, %v3027
  %v3029 = vadd.s32 %v3024, 1
  %vm3030 = vcmp.gt.s32.totalorder %v3029, 0
  %v3031 = vsel %vm3030, %v3029, 0
  %v3032 = vshrl.u32 %v3031, 5
  %v3033 = vand.u32 %v3031, 31
  %v3034 = vsub.s32 32, %v3033
  %v3035 = vshrl.u32 683565275, %v3034
  %v3036 = vshll.u32 683565275, %v3033
  %v3037 = vshrl.u32 2475754826, %v3034
  %v3038 = vor.u32 %v3036, %v3037
  %v3039 = vshll.u32 2475754826, %v3033
  %v3040 = vshrl.u32 2131351028, %v3034
  %v3041 = vor.u32 %v3039, %v3040
  %v3042 = vshll.u32 2131351028, %v3033
  %v3043 = vshrl.u32 2102212464, %v3034
  %v3044 = vor.u32 %v3042, %v3043
  %v3045 = vshll.u32 2102212464, %v3033
  %v3046 = vshrl.u32 920167782, %v3034
  %v3047 = vor.u32 %v3045, %v3046
  %v3048 = vshll.u32 920167782, %v3033
  %v3049 = vshrl.u32 1326507024, %v3034
  %v3050 = vor.u32 %v3048, %v3049
  %vm3051 = vcmp.lt.s32.totalorder %v3032, 1
  %vm3052 = vcmp.lt.s32.totalorder %v3032, 2
  %vm3053 = vcmp.lt.s32.totalorder %v3032, 3
  %vm3054 = vcmp.lt.s32.totalorder %v3032, 4
  %v3055 = vsel %vm3051, %v3035, %v3038
  %v3056 = vsel %vm3054, %v3044, 2102212464
  %v3057 = vsel %vm3053, %v3041, %v3056
  %v3058 = vsel %vm3052, %v3055, %v3057
  %v3059 = vsel %vm3051, %v3038, %v3041
  %v3060 = vsel %vm3054, %v3047, 920167782
  %v3061 = vsel %vm3053, %v3044, %v3060
  %v3062 = vsel %vm3052, %v3059, %v3061
  %v3063 = vsel %vm3051, %v3041, %v3044
  %v3064 = vsel %vm3054, %v3050, 1326507024
  %v3065 = vsel %vm3053, %v3047, %v3064
  %v3066 = vsel %vm3052, %v3063, %v3065
  %v3067 = vshll.u32 %v3027, 8
  %v3068 = vmul.u32.u64.compose %v3067, %v3066
  %v3069 = vextract.low.u32 %v3068
  %v3070 = vextract.high.u32 %v3068
  %v3071 = vmul.u32.u64.compose %v3067, %v3062
  %v3072 = vextract.low.u32 %v3071
  %v3073 = vextract.high.u32 %v3071
  %v3074 = vmul.u32 %v3067, %v3058
  %v3075 = vadd.s32 %v3070, %v3072
  %vm3076 = vc.u32 %v3070, %v3072
  %v3077 = vadd.s32 %v3073, 1
  %v3078 = vsel %vm3076, %v3077, %v3073
  %v3079 = vadd.s32 %v3074, %v3078
  %v3080 = vadd.s32 %v3079, 536870912
  %v3081 = vshrl.u32 %v3080, 30
  %v3082 = vshll.u32 %v3081, 30
  %v3083 = vsub.s32 %v3079, %v3082
  %vm3084 = vcmp.lt.s32.totalorder %v3083, 0
  %v3085 = vsub.s32 0, %v3083
  %v3086 = vsel %vm3084, %v3085, %v3083
  %v3087 = vclz %v3086
  %v3088 = vsub.s32 %v3087, 2
  %vm3089 = vcmp.gt.s32.totalorder 0, %v3088
  %v3090 = vsel %vm3089, 0, %v3088
  %v3091 = vsub.s32 32, %v3090
  %v3092 = vshll.u32 %v3083, %v3090
  %v3093 = vshrl.u32 %v3075, %v3091
  %v3094 = vor.u32 %v3092, %v3093
  %v3095 = vsub.s32 4294967266, %v3090
  %v3096 = vadd.s32 %v3095, 127
  %v3097 = vshll.u32 %v3096, 23
  %v3098 = vor.u32 4788187, %v3097
  %v3099 = vand.u32 2147483647, %v3098
  %v3101 = vcvt.s32.f32 %v3094
  %v3102 = vmul.f32 %v3101, %v3099
  %v3103 = vxor.u32 %v3102, 2147483648
  %v3104 = vsel %vm3021, %v3103, %v3102
  %v3105 = vsub.s32 4, %v3081
  %v3106 = vsel %vm3021, %v3105, %v3081
  %v3107 = vsel %vm3020, %v507, %v3104
  %v3108 = vsel %vm3020, 0, %v3106
  %v3109 = vcosq.f32.pop %v3107
  %v3110 = vsinq.f32.pop %v3107
  %vm3111 = vweird.f32 %v507
  %v3112 = vand.u32 %v3108, 3
  %vm3113 = vcmp.lt.s32.totalorder %v3112, 2
  %vm3114 = vcmp.eq.s32.totalorder %v3112, 0
  %v3115 = vxor.u32 %v3110, 2147483648
  %v3116 = vsel %vm3114, %v3109, %v3115
  %vm3117 = vcmp.eq.s32.totalorder %v3112, 2
  %v3118 = vxor.u32 %v3109, 2147483648
  %v3119 = vsel %vm3117, %v3118, %v3110
  %v3120 = vsel %vm3113, %v3116, %v3119
  %v3121 = vsel %vm3111, nan, %v3120
  %v3122 = vand.u32 2147483647, %v508
  %vm3123 = vcmp.le.f32.partialorder %v3122, 0.7853982
  %vm3124 = vcmp.lt.s32.totalorder %v508, 0
  %v3125 = vand.u32 %v508, 2139095040
  %v3126 = vshrl.u32 %v3125, 23
  %v3127 = vsub.s32 %v3126, 127
  %v3128 = vand.u32 2147483647, %v508
  %v3129 = vand.u32 %v3128, 8388607
  %v3130 = vor.u32 %v3129, 8388608
  %v3131 = vsub.s32 0, %v3130
  %v3132 = vadd.s32 %v3127, 1
  %vm3133 = vcmp.gt.s32.totalorder %v3132, 0
  %v3134 = vsel %vm3133, %v3132, 0
  %v3135 = vshrl.u32 %v3134, 5
  %v3136 = vand.u32 %v3134, 31
  %v3137 = vsub.s32 32, %v3136
  %v3138 = vshrl.u32 683565275, %v3137
  %v3139 = vshll.u32 683565275, %v3136
  %v3140 = vshrl.u32 2475754826, %v3137
  %v3141 = vor.u32 %v3139, %v3140
  %v3142 = vshll.u32 2475754826, %v3136
  %v3143 = vshrl.u32 2131351028, %v3137
  %v3144 = vor.u32 %v3142, %v3143
  %v3145 = vshll.u32 2131351028, %v3136
  %v3146 = vshrl.u32 2102212464, %v3137
  %v3147 = vor.u32 %v3145, %v3146
  %v3148 = vshll.u32 2102212464, %v3136
  %v3149 = vshrl.u32 920167782, %v3137
  %v3150 = vor.u32 %v3148, %v3149
  %v3151 = vshll.u32 920167782, %v3136
  %v3152 = vshrl.u32 1326507024, %v3137
  %v3153 = vor.u32 %v3151, %v3152
  %vm3154 = vcmp.lt.s32.totalorder %v3135, 1
  %vm3155 = vcmp.lt.s32.totalorder %v3135, 2
  %vm3156 = vcmp.lt.s32.totalorder %v3135, 3
  %vm3157 = vcmp.lt.s32.totalorder %v3135, 4
  %v3158 = vsel %vm3154, %v3138, %v3141
  %v3159 = vsel %vm3157, %v3147, 2102212464
  %v3160 = vsel %vm3156, %v3144, %v3159
  %v3161 = vsel %vm3155, %v3158, %v3160
  %v3162 = vsel %vm3154, %v3141, %v3144
  %v3163 = vsel %vm3157, %v3150, 920167782
  %v3164 = vsel %vm3156, %v3147, %v3163
  %v3165 = vsel %vm3155, %v3162, %v3164
  %v3166 = vsel %vm3154, %v3144, %v3147
  %v3167 = vsel %vm3157, %v3153, 1326507024
  %v3168 = vsel %vm3156, %v3150, %v3167
  %v3169 = vsel %vm3155, %v3166, %v3168
  %v3170 = vshll.u32 %v3130, 8
  %v3171 = vmul.u32.u64.compose %v3170, %v3169
  %v3172 = vextract.low.u32 %v3171
  %v3173 = vextract.high.u32 %v3171
  %v3174 = vmul.u32.u64.compose %v3170, %v3165
  %v3175 = vextract.low.u32 %v3174
  %v3176 = vextract.high.u32 %v3174
  %v3177 = vmul.u32 %v3170, %v3161
  %v3178 = vadd.s32 %v3173, %v3175
  %vm3179 = vc.u32 %v3173, %v3175
  %v3180 = vadd.s32 %v3176, 1
  %v3181 = vsel %vm3179, %v3180, %v3176
  %v3182 = vadd.s32 %v3177, %v3181
  %v3183 = vadd.s32 %v3182, 536870912
  %v3184 = vshrl.u32 %v3183, 30
  %v3185 = vshll.u32 %v3184, 30
  %v3186 = vsub.s32 %v3182, %v3185
  %vm3187 = vcmp.lt.s32.totalorder %v3186, 0
  %v3188 = vsub.s32 0, %v3186
  %v3189 = vsel %vm3187, %v3188, %v3186
  %v3190 = vclz %v3189
  %v3191 = vsub.s32 %v3190, 2
  %vm3192 = vcmp.gt.s32.totalorder 0, %v3191
  %v3193 = vsel %vm3192, 0, %v3191
  %v3194 = vsub.s32 32, %v3193
  %v3195 = vshll.u32 %v3186, %v3193
  %v3196 = vshrl.u32 %v3178, %v3194
  %v3197 = vor.u32 %v3195, %v3196
  %v3198 = vsub.s32 4294967266, %v3193
  %v3199 = vadd.s32 %v3198, 127
  %v3200 = vshll.u32 %v3199, 23
  %v3201 = vor.u32 4788187, %v3200
  %v3202 = vand.u32 2147483647, %v3201
  %v3204 = vcvt.s32.f32 %v3197
  %v3205 = vmul.f32 %v3204, %v3202
  %v3206 = vxor.u32 %v3205, 2147483648
  %v3207 = vsel %vm3124, %v3206, %v3205
  %v3208 = vsub.s32 4, %v3184
  %v3209 = vsel %vm3124, %v3208, %v3184
  %v3210 = vsel %vm3123, %v508, %v3207
  %v3211 = vsel %vm3123, 0, %v3209
  %v3212 = vcosq.f32.pop %v3210
  %v3213 = vsinq.f32.pop %v3210
  %vm3214 = vweird.f32 %v508
  %v3215 = vand.u32 %v3211, 3
  %vm3216 = vcmp.lt.s32.totalorder %v3215, 2
  %vm3217 = vcmp.eq.s32.totalorder %v3215, 0
  %v3218 = vxor.u32 %v3213, 2147483648
  %v3219 = vsel %vm3217, %v3212, %v3218
  %vm3220 = vcmp.eq.s32.totalorder %v3215, 2
  %v3221 = vxor.u32 %v3212, 2147483648
  %v3222 = vsel %vm3220, %v3221, %v3213
  %v3223 = vsel %vm3216, %v3219, %v3222
  %v3224 = vsel %vm3214, nan, %v3223
  %v3225 = vand.u32 2147483647, %v509
  %vm3226 = vcmp.le.f32.partialorder %v3225, 0.7853982
  %vm3227 = vcmp.lt.s32.totalorder %v509, 0
  %v3228 = vand.u32 %v509, 2139095040
  %v3229 = vshrl.u32 %v3228, 23
  %v3230 = vsub.s32 %v3229, 127
  %v3231 = vand.u32 2147483647, %v509
  %v3232 = vand.u32 %v3231, 8388607
  %v3233 = vor.u32 %v3232, 8388608
  %v3234 = vsub.s32 0, %v3233
  %v3235 = vadd.s32 %v3230, 1
  %vm3236 = vcmp.gt.s32.totalorder %v3235, 0
  %v3237 = vsel %vm3236, %v3235, 0
  %v3238 = vshrl.u32 %v3237, 5
  %v3239 = vand.u32 %v3237, 31
  %v3240 = vsub.s32 32, %v3239
  %v3241 = vshrl.u32 683565275, %v3240
  %v3242 = vshll.u32 683565275, %v3239
  %v3243 = vshrl.u32 2475754826, %v3240
  %v3244 = vor.u32 %v3242, %v3243
  %v3245 = vshll.u32 2475754826, %v3239
  %v3246 = vshrl.u32 2131351028, %v3240
  %v3247 = vor.u32 %v3245, %v3246
  %v3248 = vshll.u32 2131351028, %v3239
  %v3249 = vshrl.u32 2102212464, %v3240
  %v3250 = vor.u32 %v3248, %v3249
  %v3251 = vshll.u32 2102212464, %v3239
  %v3252 = vshrl.u32 920167782, %v3240
  %v3253 = vor.u32 %v3251, %v3252
  %v3254 = vshll.u32 920167782, %v3239
  %v3255 = vshrl.u32 1326507024, %v3240
  %v3256 = vor.u32 %v3254, %v3255
  %vm3257 = vcmp.lt.s32.totalorder %v3238, 1
  %vm3258 = vcmp.lt.s32.totalorder %v3238, 2
  %vm3259 = vcmp.lt.s32.totalorder %v3238, 3
  %vm3260 = vcmp.lt.s32.totalorder %v3238, 4
  %v3261 = vsel %vm3257, %v3241, %v3244
  %v3262 = vsel %vm3260, %v3250, 2102212464
  %v3263 = vsel %vm3259, %v3247, %v3262
  %v3264 = vsel %vm3258, %v3261, %v3263
  %v3265 = vsel %vm3257, %v3244, %v3247
  %v3266 = vsel %vm3260, %v3253, 920167782
  %v3267 = vsel %vm3259, %v3250, %v3266
  %v3268 = vsel %vm3258, %v3265, %v3267
  %v3269 = vsel %vm3257, %v3247, %v3250
  %v3270 = vsel %vm3260, %v3256, 1326507024
  %v3271 = vsel %vm3259, %v3253, %v3270
  %v3272 = vsel %vm3258, %v3269, %v3271
  %v3273 = vshll.u32 %v3233, 8
  %v3274 = vmul.u32.u64.compose %v3273, %v3272
  %v3275 = vextract.low.u32 %v3274
  %v3276 = vextract.high.u32 %v3274
  %v3277 = vmul.u32.u64.compose %v3273, %v3268
  %v3278 = vextract.low.u32 %v3277
  %v3279 = vextract.high.u32 %v3277
  %v3280 = vmul.u32 %v3273, %v3264
  %v3281 = vadd.s32 %v3276, %v3278
  %vm3282 = vc.u32 %v3276, %v3278
  %v3283 = vadd.s32 %v3279, 1
  %v3284 = vsel %vm3282, %v3283, %v3279
  %v3285 = vadd.s32 %v3280, %v3284
  %v3286 = vadd.s32 %v3285, 536870912
  %v3287 = vshrl.u32 %v3286, 30
  %v3288 = vshll.u32 %v3287, 30
  %v3289 = vsub.s32 %v3285, %v3288
  %vm3290 = vcmp.lt.s32.totalorder %v3289, 0
  %v3291 = vsub.s32 0, %v3289
  %v3292 = vsel %vm3290, %v3291, %v3289
  %v3293 = vclz %v3292
  %v3294 = vsub.s32 %v3293, 2
  %vm3295 = vcmp.gt.s32.totalorder 0, %v3294
  %v3296 = vsel %vm3295, 0, %v3294
  %v3297 = vsub.s32 32, %v3296
  %v3298 = vshll.u32 %v3289, %v3296
  %v3299 = vshrl.u32 %v3281, %v3297
  %v3300 = vor.u32 %v3298, %v3299
  %v3301 = vsub.s32 4294967266, %v3296
  %v3302 = vadd.s32 %v3301, 127
  %v3303 = vshll.u32 %v3302, 23
  %v3304 = vor.u32 4788187, %v3303
  %v3305 = vand.u32 2147483647, %v3304
  %v3307 = vcvt.s32.f32 %v3300
  %v3308 = vmul.f32 %v3307, %v3305
  %v3309 = vxor.u32 %v3308, 2147483648
  %v3310 = vsel %vm3227, %v3309, %v3308
  %v3311 = vsub.s32 4, %v3287
  %v3312 = vsel %vm3227, %v3311, %v3287
  %v3313 = vsel %vm3226, %v509, %v3310
  %v3314 = vsel %vm3226, 0, %v3312
  %v3315 = vcosq.f32.pop %v3313
  %v3316 = vsinq.f32.pop %v3313
  %vm3317 = vweird.f32 %v509
  %v3318 = vand.u32 %v3314, 3
  %vm3319 = vcmp.lt.s32.totalorder %v3318, 2
  %vm3320 = vcmp.eq.s32.totalorder %v3318, 0
  %v3321 = vxor.u32 %v3316, 2147483648
  %v3322 = vsel %vm3320, %v3315, %v3321
  %vm3323 = vcmp.eq.s32.totalorder %v3318, 2
  %v3324 = vxor.u32 %v3315, 2147483648
  %v3325 = vsel %vm3323, %v3324, %v3316
  %v3326 = vsel %vm3319, %v3322, %v3325
  %v3327 = vsel %vm3317, nan, %v3326
  %v3328 = vand.u32 2147483647, %v510
  %vm3329 = vcmp.le.f32.partialorder %v3328, 0.7853982
  %vm3330 = vcmp.lt.s32.totalorder %v510, 0
  %v3331 = vand.u32 %v510, 2139095040
  %v3332 = vshrl.u32 %v3331, 23
  %v3333 = vsub.s32 %v3332, 127
  %v3334 = vand.u32 2147483647, %v510
  %v3335 = vand.u32 %v3334, 8388607
  %v3336 = vor.u32 %v3335, 8388608
  %v3337 = vsub.s32 0, %v3336
  %v3338 = vadd.s32 %v3333, 1
  %vm3339 = vcmp.gt.s32.totalorder %v3338, 0
  %v3340 = vsel %vm3339, %v3338, 0
  %v3341 = vshrl.u32 %v3340, 5
  %v3342 = vand.u32 %v3340, 31
  %v3343 = vsub.s32 32, %v3342
  %v3344 = vshrl.u32 683565275, %v3343
  %v3345 = vshll.u32 683565275, %v3342
  %v3346 = vshrl.u32 2475754826, %v3343
  %v3347 = vor.u32 %v3345, %v3346
  %v3348 = vshll.u32 2475754826, %v3342
  %v3349 = vshrl.u32 2131351028, %v3343
  %v3350 = vor.u32 %v3348, %v3349
  %v3351 = vshll.u32 2131351028, %v3342
  %v3352 = vshrl.u32 2102212464, %v3343
  %v3353 = vor.u32 %v3351, %v3352
  %v3354 = vshll.u32 2102212464, %v3342
  %v3355 = vshrl.u32 920167782, %v3343
  %v3356 = vor.u32 %v3354, %v3355
  %v3357 = vshll.u32 920167782, %v3342
  %v3358 = vshrl.u32 1326507024, %v3343
  %v3359 = vor.u32 %v3357, %v3358
  %vm3360 = vcmp.lt.s32.totalorder %v3341, 1
  %vm3361 = vcmp.lt.s32.totalorder %v3341, 2
  %vm3362 = vcmp.lt.s32.totalorder %v3341, 3
  %vm3363 = vcmp.lt.s32.totalorder %v3341, 4
  %v3364 = vsel %vm3360, %v3344, %v3347
  %v3365 = vsel %vm3363, %v3353, 2102212464
  %v3366 = vsel %vm3362, %v3350, %v3365
  %v3367 = vsel %vm3361, %v3364, %v3366
  %v3368 = vsel %vm3360, %v3347, %v3350
  %v3369 = vsel %vm3363, %v3356, 920167782
  %v3370 = vsel %vm3362, %v3353, %v3369
  %v3371 = vsel %vm3361, %v3368, %v3370
  %v3372 = vsel %vm3360, %v3350, %v3353
  %v3373 = vsel %vm3363, %v3359, 1326507024
  %v3374 = vsel %vm3362, %v3356, %v3373
  %v3375 = vsel %vm3361, %v3372, %v3374
  %v3376 = vshll.u32 %v3336, 8
  %v3377 = vmul.u32.u64.compose %v3376, %v3375
  %v3378 = vextract.low.u32 %v3377
  %v3379 = vextract.high.u32 %v3377
  %v3380 = vmul.u32.u64.compose %v3376, %v3371
  %v3381 = vextract.low.u32 %v3380
  %v3382 = vextract.high.u32 %v3380
  %v3383 = vmul.u32 %v3376, %v3367
  %v3384 = vadd.s32 %v3379, %v3381
  %vm3385 = vc.u32 %v3379, %v3381
  %v3386 = vadd.s32 %v3382, 1
  %v3387 = vsel %vm3385, %v3386, %v3382
  %v3388 = vadd.s32 %v3383, %v3387
  %v3389 = vadd.s32 %v3388, 536870912
  %v3390 = vshrl.u32 %v3389, 30
  %v3391 = vshll.u32 %v3390, 30
  %v3392 = vsub.s32 %v3388, %v3391
  %vm3393 = vcmp.lt.s32.totalorder %v3392, 0
  %v3394 = vsub.s32 0, %v3392
  %v3395 = vsel %vm3393, %v3394, %v3392
  %v3396 = vclz %v3395
  %v3397 = vsub.s32 %v3396, 2
  %vm3398 = vcmp.gt.s32.totalorder 0, %v3397
  %v3399 = vsel %vm3398, 0, %v3397
  %v3400 = vsub.s32 32, %v3399
  %v3401 = vshll.u32 %v3392, %v3399
  %v3402 = vshrl.u32 %v3384, %v3400
  %v3403 = vor.u32 %v3401, %v3402
  %v3404 = vsub.s32 4294967266, %v3399
  %v3405 = vadd.s32 %v3404, 127
  %v3406 = vshll.u32 %v3405, 23
  %v3407 = vor.u32 4788187, %v3406
  %v3408 = vand.u32 2147483647, %v3407
  %v3410 = vcvt.s32.f32 %v3403
  %v3411 = vmul.f32 %v3410, %v3408
  %v3412 = vxor.u32 %v3411, 2147483648
  %v3413 = vsel %vm3330, %v3412, %v3411
  %v3414 = vsub.s32 4, %v3390
  %v3415 = vsel %vm3330, %v3414, %v3390
  %v3416 = vsel %vm3329, %v510, %v3413
  %v3417 = vsel %vm3329, 0, %v3415
  %v3418 = vcosq.f32.pop %v3416
  %v3419 = vsinq.f32.pop %v3416
  %vm3420 = vweird.f32 %v510
  %v3421 = vand.u32 %v3417, 3
  %vm3422 = vcmp.lt.s32.totalorder %v3421, 2
  %vm3423 = vcmp.eq.s32.totalorder %v3421, 0
  %v3424 = vxor.u32 %v3419, 2147483648
  %v3425 = vsel %vm3423, %v3418, %v3424
  %vm3426 = vcmp.eq.s32.totalorder %v3421, 2
  %v3427 = vxor.u32 %v3418, 2147483648
  %v3428 = vsel %vm3426, %v3427, %v3419
  %v3429 = vsel %vm3422, %v3425, %v3428
  %v3430 = vsel %vm3420, nan, %v3429
  %v3431 = vand.u32 2147483647, %v511
  %vm3432 = vcmp.le.f32.partialorder %v3431, 0.7853982
  %vm3433 = vcmp.lt.s32.totalorder %v511, 0
  %v3434 = vand.u32 %v511, 2139095040
  %v3435 = vshrl.u32 %v3434, 23
  %v3436 = vsub.s32 %v3435, 127
  %v3437 = vand.u32 2147483647, %v511
  %v3438 = vand.u32 %v3437, 8388607
  %v3439 = vor.u32 %v3438, 8388608
  %v3440 = vsub.s32 0, %v3439
  %v3441 = vadd.s32 %v3436, 1
  %vm3442 = vcmp.gt.s32.totalorder %v3441, 0
  %v3443 = vsel %vm3442, %v3441, 0
  %v3444 = vshrl.u32 %v3443, 5
  %v3445 = vand.u32 %v3443, 31
  %v3446 = vsub.s32 32, %v3445
  %v3447 = vshrl.u32 683565275, %v3446
  %v3448 = vshll.u32 683565275, %v3445
  %v3449 = vshrl.u32 2475754826, %v3446
  %v3450 = vor.u32 %v3448, %v3449
  %v3451 = vshll.u32 2475754826, %v3445
  %v3452 = vshrl.u32 2131351028, %v3446
  %v3453 = vor.u32 %v3451, %v3452
  %v3454 = vshll.u32 2131351028, %v3445
  %v3455 = vshrl.u32 2102212464, %v3446
  %v3456 = vor.u32 %v3454, %v3455
  %v3457 = vshll.u32 2102212464, %v3445
  %v3458 = vshrl.u32 920167782, %v3446
  %v3459 = vor.u32 %v3457, %v3458
  %v3460 = vshll.u32 920167782, %v3445
  %v3461 = vshrl.u32 1326507024, %v3446
  %v3462 = vor.u32 %v3460, %v3461
  %vm3463 = vcmp.lt.s32.totalorder %v3444, 1
  %vm3464 = vcmp.lt.s32.totalorder %v3444, 2
  %vm3465 = vcmp.lt.s32.totalorder %v3444, 3
  %vm3466 = vcmp.lt.s32.totalorder %v3444, 4
  %v3467 = vsel %vm3463, %v3447, %v3450
  %v3468 = vsel %vm3466, %v3456, 2102212464
  %v3469 = vsel %vm3465, %v3453, %v3468
  %v3470 = vsel %vm3464, %v3467, %v3469
  %v3471 = vsel %vm3463, %v3450, %v3453
  %v3472 = vsel %vm3466, %v3459, 920167782
  %v3473 = vsel %vm3465, %v3456, %v3472
  %v3474 = vsel %vm3464, %v3471, %v3473
  %v3475 = vsel %vm3463, %v3453, %v3456
  %v3476 = vsel %vm3466, %v3462, 1326507024
  %v3477 = vsel %vm3465, %v3459, %v3476
  %v3478 = vsel %vm3464, %v3475, %v3477
  %v3479 = vshll.u32 %v3439, 8
  %v3480 = vmul.u32.u64.compose %v3479, %v3478
  %v3481 = vextract.low.u32 %v3480
  %v3482 = vextract.high.u32 %v3480
  %v3483 = vmul.u32.u64.compose %v3479, %v3474
  %v3484 = vextract.low.u32 %v3483
  %v3485 = vextract.high.u32 %v3483
  %v3486 = vmul.u32 %v3479, %v3470
  %v3487 = vadd.s32 %v3482, %v3484
  %vm3488 = vc.u32 %v3482, %v3484
  %v3489 = vadd.s32 %v3485, 1
  %v3490 = vsel %vm3488, %v3489, %v3485
  %v3491 = vadd.s32 %v3486, %v3490
  %v3492 = vadd.s32 %v3491, 536870912
  %v3493 = vshrl.u32 %v3492, 30
  %v3494 = vshll.u32 %v3493, 30
  %v3495 = vsub.s32 %v3491, %v3494
  %vm3496 = vcmp.lt.s32.totalorder %v3495, 0
  %v3497 = vsub.s32 0, %v3495
  %v3498 = vsel %vm3496, %v3497, %v3495
  %v3499 = vclz %v3498
  %v3500 = vsub.s32 %v3499, 2
  %vm3501 = vcmp.gt.s32.totalorder 0, %v3500
  %v3502 = vsel %vm3501, 0, %v3500
  %v3503 = vsub.s32 32, %v3502
  %v3504 = vshll.u32 %v3495, %v3502
  %v3505 = vshrl.u32 %v3487, %v3503
  %v3506 = vor.u32 %v3504, %v3505
  %v3507 = vsub.s32 4294967266, %v3502
  %v3508 = vadd.s32 %v3507, 127
  %v3509 = vshll.u32 %v3508, 23
  %v3510 = vor.u32 4788187, %v3509
  %v3511 = vand.u32 2147483647, %v3510
  %v3513 = vcvt.s32.f32 %v3506
  %v3514 = vmul.f32 %v3513, %v3511
  %v3515 = vxor.u32 %v3514, 2147483648
  %v3516 = vsel %vm3433, %v3515, %v3514
  %v3517 = vsub.s32 4, %v3493
  %v3518 = vsel %vm3433, %v3517, %v3493
  %v3519 = vsel %vm3432, %v511, %v3516
  %v3520 = vsel %vm3432, 0, %v3518
  %v3521 = vcosq.f32.pop %v3519
  %v3522 = vsinq.f32.pop %v3519
  %vm3523 = vweird.f32 %v511
  %v3524 = vand.u32 %v3520, 3
  %vm3525 = vcmp.lt.s32.totalorder %v3524, 2
  %vm3526 = vcmp.eq.s32.totalorder %v3524, 0
  %v3527 = vxor.u32 %v3522, 2147483648
  %v3528 = vsel %vm3526, %v3521, %v3527
  %vm3529 = vcmp.eq.s32.totalorder %v3524, 2
  %v3530 = vxor.u32 %v3521, 2147483648
  %v3531 = vsel %vm3529, %v3530, %v3522
  %v3532 = vsel %vm3525, %v3528, %v3531
  %v3533 = vsel %vm3523, nan, %v3532
  %v3534 = vand.u32 2147483647, %v512
  %vm3535 = vcmp.le.f32.partialorder %v3534, 0.7853982
  %vm3536 = vcmp.lt.s32.totalorder %v512, 0
  %v3537 = vand.u32 %v512, 2139095040
  %v3538 = vshrl.u32 %v3537, 23
  %v3539 = vsub.s32 %v3538, 127
  %v3540 = vand.u32 2147483647, %v512
  %v3541 = vand.u32 %v3540, 8388607
  %v3542 = vor.u32 %v3541, 8388608
  %v3543 = vsub.s32 0, %v3542
  %v3544 = vadd.s32 %v3539, 1
  %vm3545 = vcmp.gt.s32.totalorder %v3544, 0
  %v3546 = vsel %vm3545, %v3544, 0
  %v3547 = vshrl.u32 %v3546, 5
  %v3548 = vand.u32 %v3546, 31
  %v3549 = vsub.s32 32, %v3548
  %v3550 = vshrl.u32 683565275, %v3549
  %v3551 = vshll.u32 683565275, %v3548
  %v3552 = vshrl.u32 2475754826, %v3549
  %v3553 = vor.u32 %v3551, %v3552
  %v3554 = vshll.u32 2475754826, %v3548
  %v3555 = vshrl.u32 2131351028, %v3549
  %v3556 = vor.u32 %v3554, %v3555
  %v3557 = vshll.u32 2131351028, %v3548
  %v3558 = vshrl.u32 2102212464, %v3549
  %v3559 = vor.u32 %v3557, %v3558
  %v3560 = vshll.u32 2102212464, %v3548
  %v3561 = vshrl.u32 920167782, %v3549
  %v3562 = vor.u32 %v3560, %v3561
  %v3563 = vshll.u32 920167782, %v3548
  %v3564 = vshrl.u32 1326507024, %v3549
  %v3565 = vor.u32 %v3563, %v3564
  %vm3566 = vcmp.lt.s32.totalorder %v3547, 1
  %vm3567 = vcmp.lt.s32.totalorder %v3547, 2
  %vm3568 = vcmp.lt.s32.totalorder %v3547, 3
  %vm3569 = vcmp.lt.s32.totalorder %v3547, 4
  %v3570 = vsel %vm3566, %v3550, %v3553
  %v3571 = vsel %vm3569, %v3559, 2102212464
  %v3572 = vsel %vm3568, %v3556, %v3571
  %v3573 = vsel %vm3567, %v3570, %v3572
  %v3574 = vsel %vm3566, %v3553, %v3556
  %v3575 = vsel %vm3569, %v3562, 920167782
  %v3576 = vsel %vm3568, %v3559, %v3575
  %v3577 = vsel %vm3567, %v3574, %v3576
  %v3578 = vsel %vm3566, %v3556, %v3559
  %v3579 = vsel %vm3569, %v3565, 1326507024
  %v3580 = vsel %vm3568, %v3562, %v3579
  %v3581 = vsel %vm3567, %v3578, %v3580
  %v3582 = vshll.u32 %v3542, 8
  %v3583 = vmul.u32.u64.compose %v3582, %v3581
  %v3584 = vextract.low.u32 %v3583
  %v3585 = vextract.high.u32 %v3583
  %v3586 = vmul.u32.u64.compose %v3582, %v3577
  %v3587 = vextract.low.u32 %v3586
  %v3588 = vextract.high.u32 %v3586
  %v3589 = vmul.u32 %v3582, %v3573
  %v3590 = vadd.s32 %v3585, %v3587
  %vm3591 = vc.u32 %v3585, %v3587
  %v3592 = vadd.s32 %v3588, 1
  %v3593 = vsel %vm3591, %v3592, %v3588
  %v3594 = vadd.s32 %v3589, %v3593
  %v3595 = vadd.s32 %v3594, 536870912
  %v3596 = vshrl.u32 %v3595, 30
  %v3597 = vshll.u32 %v3596, 30
  %v3598 = vsub.s32 %v3594, %v3597
  %vm3599 = vcmp.lt.s32.totalorder %v3598, 0
  %v3600 = vsub.s32 0, %v3598
  %v3601 = vsel %vm3599, %v3600, %v3598
  %v3602 = vclz %v3601
  %v3603 = vsub.s32 %v3602, 2
  %vm3604 = vcmp.gt.s32.totalorder 0, %v3603
  %v3605 = vsel %vm3604, 0, %v3603
  %v3606 = vsub.s32 32, %v3605
  %v3607 = vshll.u32 %v3598, %v3605
  %v3608 = vshrl.u32 %v3590, %v3606
  %v3609 = vor.u32 %v3607, %v3608
  %v3610 = vsub.s32 4294967266, %v3605
  %v3611 = vadd.s32 %v3610, 127
  %v3612 = vshll.u32 %v3611, 23
  %v3613 = vor.u32 4788187, %v3612
  %v3614 = vand.u32 2147483647, %v3613
  %v3616 = vcvt.s32.f32 %v3609
  %v3617 = vmul.f32 %v3616, %v3614
  %v3618 = vxor.u32 %v3617, 2147483648
  %v3619 = vsel %vm3536, %v3618, %v3617
  %v3620 = vsub.s32 4, %v3596
  %v3621 = vsel %vm3536, %v3620, %v3596
  %v3622 = vsel %vm3535, %v512, %v3619
  %v3623 = vsel %vm3535, 0, %v3621
  %v3624 = vcosq.f32.pop %v3622
  %v3625 = vsinq.f32.pop %v3622
  %vm3626 = vweird.f32 %v512
  %v3627 = vand.u32 %v3623, 3
  %vm3628 = vcmp.lt.s32.totalorder %v3627, 2
  %vm3629 = vcmp.eq.s32.totalorder %v3627, 0
  %v3630 = vxor.u32 %v3625, 2147483648
  %v3631 = vsel %vm3629, %v3624, %v3630
  %vm3632 = vcmp.eq.s32.totalorder %v3627, 2
  %v3633 = vxor.u32 %v3624, 2147483648
  %v3634 = vsel %vm3632, %v3633, %v3625
  %v3635 = vsel %vm3628, %v3631, %v3634
  %v3636 = vsel %vm3626, nan, %v3635
  %v3637 = vand.u32 2147483647, %v513
  %vm3638 = vcmp.le.f32.partialorder %v3637, 0.7853982
  %vm3639 = vcmp.lt.s32.totalorder %v513, 0
  %v3640 = vand.u32 %v513, 2139095040
  %v3641 = vshrl.u32 %v3640, 23
  %v3642 = vsub.s32 %v3641, 127
  %v3643 = vand.u32 2147483647, %v513
  %v3644 = vand.u32 %v3643, 8388607
  %v3645 = vor.u32 %v3644, 8388608
  %v3646 = vsub.s32 0, %v3645
  %v3647 = vadd.s32 %v3642, 1
  %vm3648 = vcmp.gt.s32.totalorder %v3647, 0
  %v3649 = vsel %vm3648, %v3647, 0
  %v3650 = vshrl.u32 %v3649, 5
  %v3651 = vand.u32 %v3649, 31
  %v3652 = vsub.s32 32, %v3651
  %v3653 = vshrl.u32 683565275, %v3652
  %v3654 = vshll.u32 683565275, %v3651
  %v3655 = vshrl.u32 2475754826, %v3652
  %v3656 = vor.u32 %v3654, %v3655
  %v3657 = vshll.u32 2475754826, %v3651
  %v3658 = vshrl.u32 2131351028, %v3652
  %v3659 = vor.u32 %v3657, %v3658
  %v3660 = vshll.u32 2131351028, %v3651
  %v3661 = vshrl.u32 2102212464, %v3652
  %v3662 = vor.u32 %v3660, %v3661
  %v3663 = vshll.u32 2102212464, %v3651
  %v3664 = vshrl.u32 920167782, %v3652
  %v3665 = vor.u32 %v3663, %v3664
  %v3666 = vshll.u32 920167782, %v3651
  %v3667 = vshrl.u32 1326507024, %v3652
  %v3668 = vor.u32 %v3666, %v3667
  %vm3669 = vcmp.lt.s32.totalorder %v3650, 1
  %vm3670 = vcmp.lt.s32.totalorder %v3650, 2
  %vm3671 = vcmp.lt.s32.totalorder %v3650, 3
  %vm3672 = vcmp.lt.s32.totalorder %v3650, 4
  %v3673 = vsel %vm3669, %v3653, %v3656
  %v3674 = vsel %vm3672, %v3662, 2102212464
  %v3675 = vsel %vm3671, %v3659, %v3674
  %v3676 = vsel %vm3670, %v3673, %v3675
  %v3677 = vsel %vm3669, %v3656, %v3659
  %v3678 = vsel %vm3672, %v3665, 920167782
  %v3679 = vsel %vm3671, %v3662, %v3678
  %v3680 = vsel %vm3670, %v3677, %v3679
  %v3681 = vsel %vm3669, %v3659, %v3662
  %v3682 = vsel %vm3672, %v3668, 1326507024
  %v3683 = vsel %vm3671, %v3665, %v3682
  %v3684 = vsel %vm3670, %v3681, %v3683
  %v3685 = vshll.u32 %v3645, 8
  %v3686 = vmul.u32.u64.compose %v3685, %v3684
  %v3687 = vextract.low.u32 %v3686
  %v3688 = vextract.high.u32 %v3686
  %v3689 = vmul.u32.u64.compose %v3685, %v3680
  %v3690 = vextract.low.u32 %v3689
  %v3691 = vextract.high.u32 %v3689
  %v3692 = vmul.u32 %v3685, %v3676
  %v3693 = vadd.s32 %v3688, %v3690
  %vm3694 = vc.u32 %v3688, %v3690
  %v3695 = vadd.s32 %v3691, 1
  %v3696 = vsel %vm3694, %v3695, %v3691
  %v3697 = vadd.s32 %v3692, %v3696
  %v3698 = vadd.s32 %v3697, 536870912
  %v3699 = vshrl.u32 %v3698, 30
  %v3700 = vshll.u32 %v3699, 30
  %v3701 = vsub.s32 %v3697, %v3700
  %vm3702 = vcmp.lt.s32.totalorder %v3701, 0
  %v3703 = vsub.s32 0, %v3701
  %v3704 = vsel %vm3702, %v3703, %v3701
  %v3705 = vclz %v3704
  %v3706 = vsub.s32 %v3705, 2
  %vm3707 = vcmp.gt.s32.totalorder 0, %v3706
  %v3708 = vsel %vm3707, 0, %v3706
  %v3709 = vsub.s32 32, %v3708
  %v3710 = vshll.u32 %v3701, %v3708
  %v3711 = vshrl.u32 %v3693, %v3709
  %v3712 = vor.u32 %v3710, %v3711
  %v3713 = vsub.s32 4294967266, %v3708
  %v3714 = vadd.s32 %v3713, 127
  %v3715 = vshll.u32 %v3714, 23
  %v3716 = vor.u32 4788187, %v3715
  %v3717 = vand.u32 2147483647, %v3716
  %v3719 = vcvt.s32.f32 %v3712
  %v3720 = vmul.f32 %v3719, %v3717
  %v3721 = vxor.u32 %v3720, 2147483648
  %v3722 = vsel %vm3639, %v3721, %v3720
  %v3723 = vsub.s32 4, %v3699
  %v3724 = vsel %vm3639, %v3723, %v3699
  %v3725 = vsel %vm3638, %v513, %v3722
  %v3726 = vsel %vm3638, 0, %v3724
  %v3727 = vcosq.f32.pop %v3725
  %v3728 = vsinq.f32.pop %v3725
  %vm3729 = vweird.f32 %v513
  %v3730 = vand.u32 %v3726, 3
  %vm3731 = vcmp.lt.s32.totalorder %v3730, 2
  %vm3732 = vcmp.eq.s32.totalorder %v3730, 0
  %v3733 = vxor.u32 %v3728, 2147483648
  %v3734 = vsel %vm3732, %v3727, %v3733
  %vm3735 = vcmp.eq.s32.totalorder %v3730, 2
  %v3736 = vxor.u32 %v3727, 2147483648
  %v3737 = vsel %vm3735, %v3736, %v3728
  %v3738 = vsel %vm3731, %v3734, %v3737
  %v3739 = vsel %vm3729, nan, %v3738
  %v3740 = vand.u32 2147483647, %v514
  %vm3741 = vcmp.le.f32.partialorder %v3740, 0.7853982
  %vm3742 = vcmp.lt.s32.totalorder %v514, 0
  %v3743 = vand.u32 %v514, 2139095040
  %v3744 = vshrl.u32 %v3743, 23
  %v3745 = vsub.s32 %v3744, 127
  %v3746 = vand.u32 2147483647, %v514
  %v3747 = vand.u32 %v3746, 8388607
  %v3748 = vor.u32 %v3747, 8388608
  %v3749 = vsub.s32 0, %v3748
  %v3750 = vadd.s32 %v3745, 1
  %vm3751 = vcmp.gt.s32.totalorder %v3750, 0
  %v3752 = vsel %vm3751, %v3750, 0
  %v3753 = vshrl.u32 %v3752, 5
  %v3754 = vand.u32 %v3752, 31
  %v3755 = vsub.s32 32, %v3754
  %v3756 = vshrl.u32 683565275, %v3755
  %v3757 = vshll.u32 683565275, %v3754
  %v3758 = vshrl.u32 2475754826, %v3755
  %v3759 = vor.u32 %v3757, %v3758
  %v3760 = vshll.u32 2475754826, %v3754
  %v3761 = vshrl.u32 2131351028, %v3755
  %v3762 = vor.u32 %v3760, %v3761
  %v3763 = vshll.u32 2131351028, %v3754
  %v3764 = vshrl.u32 2102212464, %v3755
  %v3765 = vor.u32 %v3763, %v3764
  %v3766 = vshll.u32 2102212464, %v3754
  %v3767 = vshrl.u32 920167782, %v3755
  %v3768 = vor.u32 %v3766, %v3767
  %v3769 = vshll.u32 920167782, %v3754
  %v3770 = vshrl.u32 1326507024, %v3755
  %v3771 = vor.u32 %v3769, %v3770
  %vm3772 = vcmp.lt.s32.totalorder %v3753, 1
  %vm3773 = vcmp.lt.s32.totalorder %v3753, 2
  %vm3774 = vcmp.lt.s32.totalorder %v3753, 3
  %vm3775 = vcmp.lt.s32.totalorder %v3753, 4
  %v3776 = vsel %vm3772, %v3756, %v3759
  %v3777 = vsel %vm3775, %v3765, 2102212464
  %v3778 = vsel %vm3774, %v3762, %v3777
  %v3779 = vsel %vm3773, %v3776, %v3778
  %v3780 = vsel %vm3772, %v3759, %v3762
  %v3781 = vsel %vm3775, %v3768, 920167782
  %v3782 = vsel %vm3774, %v3765, %v3781
  %v3783 = vsel %vm3773, %v3780, %v3782
  %v3784 = vsel %vm3772, %v3762, %v3765
  %v3785 = vsel %vm3775, %v3771, 1326507024
  %v3786 = vsel %vm3774, %v3768, %v3785
  %v3787 = vsel %vm3773, %v3784, %v3786
  %v3788 = vshll.u32 %v3748, 8
  %v3789 = vmul.u32.u64.compose %v3788, %v3787
  %v3790 = vextract.low.u32 %v3789
  %v3791 = vextract.high.u32 %v3789
  %v3792 = vmul.u32.u64.compose %v3788, %v3783
  %v3793 = vextract.low.u32 %v3792
  %v3794 = vextract.high.u32 %v3792
  %v3795 = vmul.u32 %v3788, %v3779
  %v3796 = vadd.s32 %v3791, %v3793
  %vm3797 = vc.u32 %v3791, %v3793
  %v3798 = vadd.s32 %v3794, 1
  %v3799 = vsel %vm3797, %v3798, %v3794
  %v3800 = vadd.s32 %v3795, %v3799
  %v3801 = vadd.s32 %v3800, 536870912
  %v3802 = vshrl.u32 %v3801, 30
  %v3803 = vshll.u32 %v3802, 30
  %v3804 = vsub.s32 %v3800, %v3803
  %vm3805 = vcmp.lt.s32.totalorder %v3804, 0
  %v3806 = vsub.s32 0, %v3804
  %v3807 = vsel %vm3805, %v3806, %v3804
  %v3808 = vclz %v3807
  %v3809 = vsub.s32 %v3808, 2
  %vm3810 = vcmp.gt.s32.totalorder 0, %v3809
  %v3811 = vsel %vm3810, 0, %v3809
  %v3812 = vsub.s32 32, %v3811
  %v3813 = vshll.u32 %v3804, %v3811
  %v3814 = vshrl.u32 %v3796, %v3812
  %v3815 = vor.u32 %v3813, %v3814
  %v3816 = vsub.s32 4294967266, %v3811
  %v3817 = vadd.s32 %v3816, 127
  %v3818 = vshll.u32 %v3817, 23
  %v3819 = vor.u32 4788187, %v3818
  %v3820 = vand.u32 2147483647, %v3819
  %v3822 = vcvt.s32.f32 %v3815
  %v3823 = vmul.f32 %v3822, %v3820
  %v3824 = vxor.u32 %v3823, 2147483648
  %v3825 = vsel %vm3742, %v3824, %v3823
  %v3826 = vsub.s32 4, %v3802
  %v3827 = vsel %vm3742, %v3826, %v3802
  %v3828 = vsel %vm3741, %v514, %v3825
  %v3829 = vsel %vm3741, 0, %v3827
  %v3830 = vcosq.f32.pop %v3828
  %v3831 = vsinq.f32.pop %v3828
  %vm3832 = vweird.f32 %v514
  %v3833 = vand.u32 %v3829, 3
  %vm3834 = vcmp.lt.s32.totalorder %v3833, 2
  %vm3835 = vcmp.eq.s32.totalorder %v3833, 0
  %v3836 = vxor.u32 %v3831, 2147483648
  %v3837 = vsel %vm3835, %v3830, %v3836
  %vm3838 = vcmp.eq.s32.totalorder %v3833, 2
  %v3839 = vxor.u32 %v3830, 2147483648
  %v3840 = vsel %vm3838, %v3839, %v3831
  %v3841 = vsel %vm3834, %v3837, %v3840
  %v3842 = vsel %vm3832, nan, %v3841
  %v3843 = vand.u32 2147483647, %v515
  %vm3844 = vcmp.le.f32.partialorder %v3843, 0.7853982
  %vm3845 = vcmp.lt.s32.totalorder %v515, 0
  %v3846 = vand.u32 %v515, 2139095040
  %v3847 = vshrl.u32 %v3846, 23
  %v3848 = vsub.s32 %v3847, 127
  %v3849 = vand.u32 2147483647, %v515
  %v3850 = vand.u32 %v3849, 8388607
  %v3851 = vor.u32 %v3850, 8388608
  %v3852 = vsub.s32 0, %v3851
  %v3853 = vadd.s32 %v3848, 1
  %vm3854 = vcmp.gt.s32.totalorder %v3853, 0
  %v3855 = vsel %vm3854, %v3853, 0
  %v3856 = vshrl.u32 %v3855, 5
  %v3857 = vand.u32 %v3855, 31
  %v3858 = vsub.s32 32, %v3857
  %v3859 = vshrl.u32 683565275, %v3858
  %v3860 = vshll.u32 683565275, %v3857
  %v3861 = vshrl.u32 2475754826, %v3858
  %v3862 = vor.u32 %v3860, %v3861
  %v3863 = vshll.u32 2475754826, %v3857
  %v3864 = vshrl.u32 2131351028, %v3858
  %v3865 = vor.u32 %v3863, %v3864
  %v3866 = vshll.u32 2131351028, %v3857
  %v3867 = vshrl.u32 2102212464, %v3858
  %v3868 = vor.u32 %v3866, %v3867
  %v3869 = vshll.u32 2102212464, %v3857
  %v3870 = vshrl.u32 920167782, %v3858
  %v3871 = vor.u32 %v3869, %v3870
  %v3872 = vshll.u32 920167782, %v3857
  %v3873 = vshrl.u32 1326507024, %v3858
  %v3874 = vor.u32 %v3872, %v3873
  %vm3875 = vcmp.lt.s32.totalorder %v3856, 1
  %vm3876 = vcmp.lt.s32.totalorder %v3856, 2
  %vm3877 = vcmp.lt.s32.totalorder %v3856, 3
  %vm3878 = vcmp.lt.s32.totalorder %v3856, 4
  %v3879 = vsel %vm3875, %v3859, %v3862
  %v3880 = vsel %vm3878, %v3868, 2102212464
  %v3881 = vsel %vm3877, %v3865, %v3880
  %v3882 = vsel %vm3876, %v3879, %v3881
  %v3883 = vsel %vm3875, %v3862, %v3865
  %v3884 = vsel %vm3878, %v3871, 920167782
  %v3885 = vsel %vm3877, %v3868, %v3884
  %v3886 = vsel %vm3876, %v3883, %v3885
  %v3887 = vsel %vm3875, %v3865, %v3868
  %v3888 = vsel %vm3878, %v3874, 1326507024
  %v3889 = vsel %vm3877, %v3871, %v3888
  %v3890 = vsel %vm3876, %v3887, %v3889
  %v3891 = vshll.u32 %v3851, 8
  %v3892 = vmul.u32.u64.compose %v3891, %v3890
  %v3893 = vextract.low.u32 %v3892
  %v3894 = vextract.high.u32 %v3892
  %v3895 = vmul.u32.u64.compose %v3891, %v3886
  %v3896 = vextract.low.u32 %v3895
  %v3897 = vextract.high.u32 %v3895
  %v3898 = vmul.u32 %v3891, %v3882
  %v3899 = vadd.s32 %v3894, %v3896
  %vm3900 = vc.u32 %v3894, %v3896
  %v3901 = vadd.s32 %v3897, 1
  %v3902 = vsel %vm3900, %v3901, %v3897
  %v3903 = vadd.s32 %v3898, %v3902
  %v3904 = vadd.s32 %v3903, 536870912
  %v3905 = vshrl.u32 %v3904, 30
  %v3906 = vshll.u32 %v3905, 30
  %v3907 = vsub.s32 %v3903, %v3906
  %vm3908 = vcmp.lt.s32.totalorder %v3907, 0
  %v3909 = vsub.s32 0, %v3907
  %v3910 = vsel %vm3908, %v3909, %v3907
  %v3911 = vclz %v3910
  %v3912 = vsub.s32 %v3911, 2
  %vm3913 = vcmp.gt.s32.totalorder 0, %v3912
  %v3914 = vsel %vm3913, 0, %v3912
  %v3915 = vsub.s32 32, %v3914
  %v3916 = vshll.u32 %v3907, %v3914
  %v3917 = vshrl.u32 %v3899, %v3915
  %v3918 = vor.u32 %v3916, %v3917
  %v3919 = vsub.s32 4294967266, %v3914
  %v3920 = vadd.s32 %v3919, 127
  %v3921 = vshll.u32 %v3920, 23
  %v3922 = vor.u32 4788187, %v3921
  %v3923 = vand.u32 2147483647, %v3922
  %v3925 = vcvt.s32.f32 %v3918
  %v3926 = vmul.f32 %v3925, %v3923
  %v3927 = vxor.u32 %v3926, 2147483648
  %v3928 = vsel %vm3845, %v3927, %v3926
  %v3929 = vsub.s32 4, %v3905
  %v3930 = vsel %vm3845, %v3929, %v3905
  %v3931 = vsel %vm3844, %v515, %v3928
  %v3932 = vsel %vm3844, 0, %v3930
  %v3933 = vcosq.f32.pop %v3931
  %v3934 = vsinq.f32.pop %v3931
  %vm3935 = vweird.f32 %v515
  %v3936 = vand.u32 %v3932, 3
  %vm3937 = vcmp.lt.s32.totalorder %v3936, 2
  %vm3938 = vcmp.eq.s32.totalorder %v3936, 0
  %v3939 = vxor.u32 %v3934, 2147483648
  %v3940 = vsel %vm3938, %v3933, %v3939
  %vm3941 = vcmp.eq.s32.totalorder %v3936, 2
  %v3942 = vxor.u32 %v3933, 2147483648
  %v3943 = vsel %vm3941, %v3942, %v3934
  %v3944 = vsel %vm3937, %v3940, %v3943
  %v3945 = vsel %vm3935, nan, %v3944
  %v3946 = vand.u32 2147483647, %v516
  %vm3947 = vcmp.le.f32.partialorder %v3946, 0.7853982
  %vm3948 = vcmp.lt.s32.totalorder %v516, 0
  %v3949 = vand.u32 %v516, 2139095040
  %v3950 = vshrl.u32 %v3949, 23
  %v3951 = vsub.s32 %v3950, 127
  %v3952 = vand.u32 2147483647, %v516
  %v3953 = vand.u32 %v3952, 8388607
  %v3954 = vor.u32 %v3953, 8388608
  %v3955 = vsub.s32 0, %v3954
  %v3956 = vadd.s32 %v3951, 1
  %vm3957 = vcmp.gt.s32.totalorder %v3956, 0
  %v3958 = vsel %vm3957, %v3956, 0
  %v3959 = vshrl.u32 %v3958, 5
  %v3960 = vand.u32 %v3958, 31
  %v3961 = vsub.s32 32, %v3960
  %v3962 = vshrl.u32 683565275, %v3961
  %v3963 = vshll.u32 683565275, %v3960
  %v3964 = vshrl.u32 2475754826, %v3961
  %v3965 = vor.u32 %v3963, %v3964
  %v3966 = vshll.u32 2475754826, %v3960
  %v3967 = vshrl.u32 2131351028, %v3961
  %v3968 = vor.u32 %v3966, %v3967
  %v3969 = vshll.u32 2131351028, %v3960
  %v3970 = vshrl.u32 2102212464, %v3961
  %v3971 = vor.u32 %v3969, %v3970
  %v3972 = vshll.u32 2102212464, %v3960
  %v3973 = vshrl.u32 920167782, %v3961
  %v3974 = vor.u32 %v3972, %v3973
  %v3975 = vshll.u32 920167782, %v3960
  %v3976 = vshrl.u32 1326507024, %v3961
  %v3977 = vor.u32 %v3975, %v3976
  %vm3978 = vcmp.lt.s32.totalorder %v3959, 1
  %vm3979 = vcmp.lt.s32.totalorder %v3959, 2
  %vm3980 = vcmp.lt.s32.totalorder %v3959, 3
  %vm3981 = vcmp.lt.s32.totalorder %v3959, 4
  %v3982 = vsel %vm3978, %v3962, %v3965
  %v3983 = vsel %vm3981, %v3971, 2102212464
  %v3984 = vsel %vm3980, %v3968, %v3983
  %v3985 = vsel %vm3979, %v3982, %v3984
  %v3986 = vsel %vm3978, %v3965, %v3968
  %v3987 = vsel %vm3981, %v3974, 920167782
  %v3988 = vsel %vm3980, %v3971, %v3987
  %v3989 = vsel %vm3979, %v3986, %v3988
  %v3990 = vsel %vm3978, %v3968, %v3971
  %v3991 = vsel %vm3981, %v3977, 1326507024
  %v3992 = vsel %vm3980, %v3974, %v3991
  %v3993 = vsel %vm3979, %v3990, %v3992
  %v3994 = vshll.u32 %v3954, 8
  %v3995 = vmul.u32.u64.compose %v3994, %v3993
  %v3996 = vextract.low.u32 %v3995
  %v3997 = vextract.high.u32 %v3995
  %v3998 = vmul.u32.u64.compose %v3994, %v3989
  %v3999 = vextract.low.u32 %v3998
  %v4000 = vextract.high.u32 %v3998
  %v4001 = vmul.u32 %v3994, %v3985
  %v4002 = vadd.s32 %v3997, %v3999
  %vm4003 = vc.u32 %v3997, %v3999
  %v4004 = vadd.s32 %v4000, 1
  %v4005 = vsel %vm4003, %v4004, %v4000
  %v4006 = vadd.s32 %v4001, %v4005
  %v4007 = vadd.s32 %v4006, 536870912
  %v4008 = vshrl.u32 %v4007, 30
  %v4009 = vshll.u32 %v4008, 30
  %v4010 = vsub.s32 %v4006, %v4009
  %vm4011 = vcmp.lt.s32.totalorder %v4010, 0
  %v4012 = vsub.s32 0, %v4010
  %v4013 = vsel %vm4011, %v4012, %v4010
  %v4014 = vclz %v4013
  %v4015 = vsub.s32 %v4014, 2
  %vm4016 = vcmp.gt.s32.totalorder 0, %v4015
  %v4017 = vsel %vm4016, 0, %v4015
  %v4018 = vsub.s32 32, %v4017
  %v4019 = vshll.u32 %v4010, %v4017
  %v4020 = vshrl.u32 %v4002, %v4018
  %v4021 = vor.u32 %v4019, %v4020
  %v4022 = vsub.s32 4294967266, %v4017
  %v4023 = vadd.s32 %v4022, 127
  %v4024 = vshll.u32 %v4023, 23
  %v4025 = vor.u32 4788187, %v4024
  %v4026 = vand.u32 2147483647, %v4025
  %v4028 = vcvt.s32.f32 %v4021
  %v4029 = vmul.f32 %v4028, %v4026
  %v4030 = vxor.u32 %v4029, 2147483648
  %v4031 = vsel %vm3948, %v4030, %v4029
  %v4032 = vsub.s32 4, %v4008
  %v4033 = vsel %vm3948, %v4032, %v4008
  %v4034 = vsel %vm3947, %v516, %v4031
  %v4035 = vsel %vm3947, 0, %v4033
  %v4036 = vcosq.f32.pop %v4034
  %v4037 = vsinq.f32.pop %v4034
  %vm4038 = vweird.f32 %v516
  %v4039 = vand.u32 %v4035, 3
  %vm4040 = vcmp.lt.s32.totalorder %v4039, 2
  %vm4041 = vcmp.eq.s32.totalorder %v4039, 0
  %v4042 = vxor.u32 %v4037, 2147483648
  %v4043 = vsel %vm4041, %v4036, %v4042
  %vm4044 = vcmp.eq.s32.totalorder %v4039, 2
  %v4045 = vxor.u32 %v4036, 2147483648
  %v4046 = vsel %vm4044, %v4045, %v4037
  %v4047 = vsel %vm4040, %v4043, %v4046
  %v4048 = vsel %vm4038, nan, %v4047
  %v4049 = vand.u32 2147483647, %v517
  %vm4050 = vcmp.le.f32.partialorder %v4049, 0.7853982
  %vm4051 = vcmp.lt.s32.totalorder %v517, 0
  %v4052 = vand.u32 %v517, 2139095040
  %v4053 = vshrl.u32 %v4052, 23
  %v4054 = vsub.s32 %v4053, 127
  %v4055 = vand.u32 2147483647, %v517
  %v4056 = vand.u32 %v4055, 8388607
  %v4057 = vor.u32 %v4056, 8388608
  %v4058 = vsub.s32 0, %v4057
  %v4059 = vadd.s32 %v4054, 1
  %vm4060 = vcmp.gt.s32.totalorder %v4059, 0
  %v4061 = vsel %vm4060, %v4059, 0
  %v4062 = vshrl.u32 %v4061, 5
  %v4063 = vand.u32 %v4061, 31
  %v4064 = vsub.s32 32, %v4063
  %v4065 = vshrl.u32 683565275, %v4064
  %v4066 = vshll.u32 683565275, %v4063
  %v4067 = vshrl.u32 2475754826, %v4064
  %v4068 = vor.u32 %v4066, %v4067
  %v4069 = vshll.u32 2475754826, %v4063
  %v4070 = vshrl.u32 2131351028, %v4064
  %v4071 = vor.u32 %v4069, %v4070
  %v4072 = vshll.u32 2131351028, %v4063
  %v4073 = vshrl.u32 2102212464, %v4064
  %v4074 = vor.u32 %v4072, %v4073
  %v4075 = vshll.u32 2102212464, %v4063
  %v4076 = vshrl.u32 920167782, %v4064
  %v4077 = vor.u32 %v4075, %v4076
  %v4078 = vshll.u32 920167782, %v4063
  %v4079 = vshrl.u32 1326507024, %v4064
  %v4080 = vor.u32 %v4078, %v4079
  %vm4081 = vcmp.lt.s32.totalorder %v4062, 1
  %vm4082 = vcmp.lt.s32.totalorder %v4062, 2
  %vm4083 = vcmp.lt.s32.totalorder %v4062, 3
  %vm4084 = vcmp.lt.s32.totalorder %v4062, 4
  %v4085 = vsel %vm4081, %v4065, %v4068
  %v4086 = vsel %vm4084, %v4074, 2102212464
  %v4087 = vsel %vm4083, %v4071, %v4086
  %v4088 = vsel %vm4082, %v4085, %v4087
  %v4089 = vsel %vm4081, %v4068, %v4071
  %v4090 = vsel %vm4084, %v4077, 920167782
  %v4091 = vsel %vm4083, %v4074, %v4090
  %v4092 = vsel %vm4082, %v4089, %v4091
  %v4093 = vsel %vm4081, %v4071, %v4074
  %v4094 = vsel %vm4084, %v4080, 1326507024
  %v4095 = vsel %vm4083, %v4077, %v4094
  %v4096 = vsel %vm4082, %v4093, %v4095
  %v4097 = vshll.u32 %v4057, 8
  %v4098 = vmul.u32.u64.compose %v4097, %v4096
  %v4099 = vextract.low.u32 %v4098
  %v4100 = vextract.high.u32 %v4098
  %v4101 = vmul.u32.u64.compose %v4097, %v4092
  %v4102 = vextract.low.u32 %v4101
  %v4103 = vextract.high.u32 %v4101
  %v4104 = vmul.u32 %v4097, %v4088
  %v4105 = vadd.s32 %v4100, %v4102
  %vm4106 = vc.u32 %v4100, %v4102
  %v4107 = vadd.s32 %v4103, 1
  %v4108 = vsel %vm4106, %v4107, %v4103
  %v4109 = vadd.s32 %v4104, %v4108
  %v4110 = vadd.s32 %v4109, 536870912
  %v4111 = vshrl.u32 %v4110, 30
  %v4112 = vshll.u32 %v4111, 30
  %v4113 = vsub.s32 %v4109, %v4112
  %vm4114 = vcmp.lt.s32.totalorder %v4113, 0
  %v4115 = vsub.s32 0, %v4113
  %v4116 = vsel %vm4114, %v4115, %v4113
  %v4117 = vclz %v4116
  %v4118 = vsub.s32 %v4117, 2
  %vm4119 = vcmp.gt.s32.totalorder 0, %v4118
  %v4120 = vsel %vm4119, 0, %v4118
  %v4121 = vsub.s32 32, %v4120
  %v4122 = vshll.u32 %v4113, %v4120
  %v4123 = vshrl.u32 %v4105, %v4121
  %v4124 = vor.u32 %v4122, %v4123
  %v4125 = vsub.s32 4294967266, %v4120
  %v4126 = vadd.s32 %v4125, 127
  %v4127 = vshll.u32 %v4126, 23
  %v4128 = vor.u32 4788187, %v4127
  %v4129 = vand.u32 2147483647, %v4128
  %v4131 = vcvt.s32.f32 %v4124
  %v4132 = vmul.f32 %v4131, %v4129
  %v4133 = vxor.u32 %v4132, 2147483648
  %v4134 = vsel %vm4051, %v4133, %v4132
  %v4135 = vsub.s32 4, %v4111
  %v4136 = vsel %vm4051, %v4135, %v4111
  %v4137 = vsel %vm4050, %v517, %v4134
  %v4138 = vsel %vm4050, 0, %v4136
  %v4139 = vcosq.f32.pop %v4137
  %v4140 = vsinq.f32.pop %v4137
  %vm4141 = vweird.f32 %v517
  %v4142 = vand.u32 %v4138, 3
  %vm4143 = vcmp.lt.s32.totalorder %v4142, 2
  %vm4144 = vcmp.eq.s32.totalorder %v4142, 0
  %v4145 = vxor.u32 %v4140, 2147483648
  %v4146 = vsel %vm4144, %v4139, %v4145
  %vm4147 = vcmp.eq.s32.totalorder %v4142, 2
  %v4148 = vxor.u32 %v4139, 2147483648
  %v4149 = vsel %vm4147, %v4148, %v4140
  %v4150 = vsel %vm4143, %v4146, %v4149
  %v4151 = vsel %vm4141, nan, %v4150
  %v4152 = vand.u32 2147483647, %v518
  %vm4153 = vcmp.le.f32.partialorder %v4152, 0.7853982
  %vm4154 = vcmp.lt.s32.totalorder %v518, 0
  %v4155 = vand.u32 %v518, 2139095040
  %v4156 = vshrl.u32 %v4155, 23
  %v4157 = vsub.s32 %v4156, 127
  %v4158 = vand.u32 2147483647, %v518
  %v4159 = vand.u32 %v4158, 8388607
  %v4160 = vor.u32 %v4159, 8388608
  %v4161 = vsub.s32 0, %v4160
  %v4162 = vadd.s32 %v4157, 1
  %vm4163 = vcmp.gt.s32.totalorder %v4162, 0
  %v4164 = vsel %vm4163, %v4162, 0
  %v4165 = vshrl.u32 %v4164, 5
  %v4166 = vand.u32 %v4164, 31
  %v4167 = vsub.s32 32, %v4166
  %v4168 = vshrl.u32 683565275, %v4167
  %v4169 = vshll.u32 683565275, %v4166
  %v4170 = vshrl.u32 2475754826, %v4167
  %v4171 = vor.u32 %v4169, %v4170
  %v4172 = vshll.u32 2475754826, %v4166
  %v4173 = vshrl.u32 2131351028, %v4167
  %v4174 = vor.u32 %v4172, %v4173
  %v4175 = vshll.u32 2131351028, %v4166
  %v4176 = vshrl.u32 2102212464, %v4167
  %v4177 = vor.u32 %v4175, %v4176
  %v4178 = vshll.u32 2102212464, %v4166
  %v4179 = vshrl.u32 920167782, %v4167
  %v4180 = vor.u32 %v4178, %v4179
  %v4181 = vshll.u32 920167782, %v4166
  %v4182 = vshrl.u32 1326507024, %v4167
  %v4183 = vor.u32 %v4181, %v4182
  %vm4184 = vcmp.lt.s32.totalorder %v4165, 1
  %vm4185 = vcmp.lt.s32.totalorder %v4165, 2
  %vm4186 = vcmp.lt.s32.totalorder %v4165, 3
  %vm4187 = vcmp.lt.s32.totalorder %v4165, 4
  %v4188 = vsel %vm4184, %v4168, %v4171
  %v4189 = vsel %vm4187, %v4177, 2102212464
  %v4190 = vsel %vm4186, %v4174, %v4189
  %v4191 = vsel %vm4185, %v4188, %v4190
  %v4192 = vsel %vm4184, %v4171, %v4174
  %v4193 = vsel %vm4187, %v4180, 920167782
  %v4194 = vsel %vm4186, %v4177, %v4193
  %v4195 = vsel %vm4185, %v4192, %v4194
  %v4196 = vsel %vm4184, %v4174, %v4177
  %v4197 = vsel %vm4187, %v4183, 1326507024
  %v4198 = vsel %vm4186, %v4180, %v4197
  %v4199 = vsel %vm4185, %v4196, %v4198
  %v4200 = vshll.u32 %v4160, 8
  %v4201 = vmul.u32.u64.compose %v4200, %v4199
  %v4202 = vextract.low.u32 %v4201
  %v4203 = vextract.high.u32 %v4201
  %v4204 = vmul.u32.u64.compose %v4200, %v4195
  %v4205 = vextract.low.u32 %v4204
  %v4206 = vextract.high.u32 %v4204
  %v4207 = vmul.u32 %v4200, %v4191
  %v4208 = vadd.s32 %v4203, %v4205
  %vm4209 = vc.u32 %v4203, %v4205
  %v4210 = vadd.s32 %v4206, 1
  %v4211 = vsel %vm4209, %v4210, %v4206
  %v4212 = vadd.s32 %v4207, %v4211
  %v4213 = vadd.s32 %v4212, 536870912
  %v4214 = vshrl.u32 %v4213, 30
  %v4215 = vshll.u32 %v4214, 30
  %v4216 = vsub.s32 %v4212, %v4215
  %vm4217 = vcmp.lt.s32.totalorder %v4216, 0
  %v4218 = vsub.s32 0, %v4216
  %v4219 = vsel %vm4217, %v4218, %v4216
  %v4220 = vclz %v4219
  %v4221 = vsub.s32 %v4220, 2
  %vm4222 = vcmp.gt.s32.totalorder 0, %v4221
  %v4223 = vsel %vm4222, 0, %v4221
  %v4224 = vsub.s32 32, %v4223
  %v4225 = vshll.u32 %v4216, %v4223
  %v4226 = vshrl.u32 %v4208, %v4224
  %v4227 = vor.u32 %v4225, %v4226
  %v4228 = vsub.s32 4294967266, %v4223
  %v4229 = vadd.s32 %v4228, 127
  %v4230 = vshll.u32 %v4229, 23
  %v4231 = vor.u32 4788187, %v4230
  %v4232 = vand.u32 2147483647, %v4231
  %v4234 = vcvt.s32.f32 %v4227
  %v4235 = vmul.f32 %v4234, %v4232
  %v4236 = vxor.u32 %v4235, 2147483648
  %v4237 = vsel %vm4154, %v4236, %v4235
  %v4238 = vsub.s32 4, %v4214
  %v4239 = vsel %vm4154, %v4238, %v4214
  %v4240 = vsel %vm4153, %v518, %v4237
  %v4241 = vsel %vm4153, 0, %v4239
  %v4242 = vcosq.f32.pop %v4240
  %v4243 = vsinq.f32.pop %v4240
  %vm4244 = vweird.f32 %v518
  %v4245 = vand.u32 %v4241, 3
  %vm4246 = vcmp.lt.s32.totalorder %v4245, 2
  %vm4247 = vcmp.eq.s32.totalorder %v4245, 0
  %v4248 = vxor.u32 %v4243, 2147483648
  %v4249 = vsel %vm4247, %v4242, %v4248
  %vm4250 = vcmp.eq.s32.totalorder %v4245, 2
  %v4251 = vxor.u32 %v4242, 2147483648
  %v4252 = vsel %vm4250, %v4251, %v4243
  %v4253 = vsel %vm4246, %v4249, %v4252
  %v4254 = vsel %vm4244, nan, %v4253
  %v4255 = vand.u32 2147483647, %v519
  %vm4256 = vcmp.le.f32.partialorder %v4255, 0.7853982
  %vm4257 = vcmp.lt.s32.totalorder %v519, 0
  %v4258 = vand.u32 %v519, 2139095040
  %v4259 = vshrl.u32 %v4258, 23
  %v4260 = vsub.s32 %v4259, 127
  %v4261 = vand.u32 2147483647, %v519
  %v4262 = vand.u32 %v4261, 8388607
  %v4263 = vor.u32 %v4262, 8388608
  %v4264 = vsub.s32 0, %v4263
  %v4265 = vadd.s32 %v4260, 1
  %vm4266 = vcmp.gt.s32.totalorder %v4265, 0
  %v4267 = vsel %vm4266, %v4265, 0
  %v4268 = vshrl.u32 %v4267, 5
  %v4269 = vand.u32 %v4267, 31
  %v4270 = vsub.s32 32, %v4269
  %v4271 = vshrl.u32 683565275, %v4270
  %v4272 = vshll.u32 683565275, %v4269
  %v4273 = vshrl.u32 2475754826, %v4270
  %v4274 = vor.u32 %v4272, %v4273
  %v4275 = vshll.u32 2475754826, %v4269
  %v4276 = vshrl.u32 2131351028, %v4270
  %v4277 = vor.u32 %v4275, %v4276
  %v4278 = vshll.u32 2131351028, %v4269
  %v4279 = vshrl.u32 2102212464, %v4270
  %v4280 = vor.u32 %v4278, %v4279
  %v4281 = vshll.u32 2102212464, %v4269
  %v4282 = vshrl.u32 920167782, %v4270
  %v4283 = vor.u32 %v4281, %v4282
  %v4284 = vshll.u32 920167782, %v4269
  %v4285 = vshrl.u32 1326507024, %v4270
  %v4286 = vor.u32 %v4284, %v4285
  %vm4287 = vcmp.lt.s32.totalorder %v4268, 1
  %vm4288 = vcmp.lt.s32.totalorder %v4268, 2
  %vm4289 = vcmp.lt.s32.totalorder %v4268, 3
  %vm4290 = vcmp.lt.s32.totalorder %v4268, 4
  %v4291 = vsel %vm4287, %v4271, %v4274
  %v4292 = vsel %vm4290, %v4280, 2102212464
  %v4293 = vsel %vm4289, %v4277, %v4292
  %v4294 = vsel %vm4288, %v4291, %v4293
  %v4295 = vsel %vm4287, %v4274, %v4277
  %v4296 = vsel %vm4290, %v4283, 920167782
  %v4297 = vsel %vm4289, %v4280, %v4296
  %v4298 = vsel %vm4288, %v4295, %v4297
  %v4299 = vsel %vm4287, %v4277, %v4280
  %v4300 = vsel %vm4290, %v4286, 1326507024
  %v4301 = vsel %vm4289, %v4283, %v4300
  %v4302 = vsel %vm4288, %v4299, %v4301
  %v4303 = vshll.u32 %v4263, 8
  %v4304 = vmul.u32.u64.compose %v4303, %v4302
  %v4305 = vextract.low.u32 %v4304
  %v4306 = vextract.high.u32 %v4304
  %v4307 = vmul.u32.u64.compose %v4303, %v4298
  %v4308 = vextract.low.u32 %v4307
  %v4309 = vextract.high.u32 %v4307
  %v4310 = vmul.u32 %v4303, %v4294
  %v4311 = vadd.s32 %v4306, %v4308
  %vm4312 = vc.u32 %v4306, %v4308
  %v4313 = vadd.s32 %v4309, 1
  %v4314 = vsel %vm4312, %v4313, %v4309
  %v4315 = vadd.s32 %v4310, %v4314
  %v4316 = vadd.s32 %v4315, 536870912
  %v4317 = vshrl.u32 %v4316, 30
  %v4318 = vshll.u32 %v4317, 30
  %v4319 = vsub.s32 %v4315, %v4318
  %vm4320 = vcmp.lt.s32.totalorder %v4319, 0
  %v4321 = vsub.s32 0, %v4319
  %v4322 = vsel %vm4320, %v4321, %v4319
  %v4323 = vclz %v4322
  %v4324 = vsub.s32 %v4323, 2
  %vm4325 = vcmp.gt.s32.totalorder 0, %v4324
  %v4326 = vsel %vm4325, 0, %v4324
  %v4327 = vsub.s32 32, %v4326
  %v4328 = vshll.u32 %v4319, %v4326
  %v4329 = vshrl.u32 %v4311, %v4327
  %v4330 = vor.u32 %v4328, %v4329
  %v4331 = vsub.s32 4294967266, %v4326
  %v4332 = vadd.s32 %v4331, 127
  %v4333 = vshll.u32 %v4332, 23
  %v4334 = vor.u32 4788187, %v4333
  %v4335 = vand.u32 2147483647, %v4334
  %v4337 = vcvt.s32.f32 %v4330
  %v4338 = vmul.f32 %v4337, %v4335
  %v4339 = vxor.u32 %v4338, 2147483648
  %v4340 = vsel %vm4257, %v4339, %v4338
  %v4341 = vsub.s32 4, %v4317
  %v4342 = vsel %vm4257, %v4341, %v4317
  %v4343 = vsel %vm4256, %v519, %v4340
  %v4344 = vsel %vm4256, 0, %v4342
  %v4345 = vcosq.f32.pop %v4343
  %v4346 = vsinq.f32.pop %v4343
  %vm4347 = vweird.f32 %v519
  %v4348 = vand.u32 %v4344, 3
  %vm4349 = vcmp.lt.s32.totalorder %v4348, 2
  %vm4350 = vcmp.eq.s32.totalorder %v4348, 0
  %v4351 = vxor.u32 %v4346, 2147483648
  %v4352 = vsel %vm4350, %v4345, %v4351
  %vm4353 = vcmp.eq.s32.totalorder %v4348, 2
  %v4354 = vxor.u32 %v4345, 2147483648
  %v4355 = vsel %vm4353, %v4354, %v4346
  %v4356 = vsel %vm4349, %v4352, %v4355
  %v4357 = vsel %vm4347, nan, %v4356
  %v4358 = vand.u32 2147483647, %v520
  %vm4359 = vcmp.le.f32.partialorder %v4358, 0.7853982
  %vm4360 = vcmp.lt.s32.totalorder %v520, 0
  %v4361 = vand.u32 %v520, 2139095040
  %v4362 = vshrl.u32 %v4361, 23
  %v4363 = vsub.s32 %v4362, 127
  %v4364 = vand.u32 2147483647, %v520
  %v4365 = vand.u32 %v4364, 8388607
  %v4366 = vor.u32 %v4365, 8388608
  %v4367 = vsub.s32 0, %v4366
  %v4368 = vadd.s32 %v4363, 1
  %vm4369 = vcmp.gt.s32.totalorder %v4368, 0
  %v4370 = vsel %vm4369, %v4368, 0
  %v4371 = vshrl.u32 %v4370, 5
  %v4372 = vand.u32 %v4370, 31
  %v4373 = vsub.s32 32, %v4372
  %v4374 = vshrl.u32 683565275, %v4373
  %v4375 = vshll.u32 683565275, %v4372
  %v4376 = vshrl.u32 2475754826, %v4373
  %v4377 = vor.u32 %v4375, %v4376
  %v4378 = vshll.u32 2475754826, %v4372
  %v4379 = vshrl.u32 2131351028, %v4373
  %v4380 = vor.u32 %v4378, %v4379
  %v4381 = vshll.u32 2131351028, %v4372
  %v4382 = vshrl.u32 2102212464, %v4373
  %v4383 = vor.u32 %v4381, %v4382
  %v4384 = vshll.u32 2102212464, %v4372
  %v4385 = vshrl.u32 920167782, %v4373
  %v4386 = vor.u32 %v4384, %v4385
  %v4387 = vshll.u32 920167782, %v4372
  %v4388 = vshrl.u32 1326507024, %v4373
  %v4389 = vor.u32 %v4387, %v4388
  %vm4390 = vcmp.lt.s32.totalorder %v4371, 1
  %vm4391 = vcmp.lt.s32.totalorder %v4371, 2
  %vm4392 = vcmp.lt.s32.totalorder %v4371, 3
  %vm4393 = vcmp.lt.s32.totalorder %v4371, 4
  %v4394 = vsel %vm4390, %v4374, %v4377
  %v4395 = vsel %vm4393, %v4383, 2102212464
  %v4396 = vsel %vm4392, %v4380, %v4395
  %v4397 = vsel %vm4391, %v4394, %v4396
  %v4398 = vsel %vm4390, %v4377, %v4380
  %v4399 = vsel %vm4393, %v4386, 920167782
  %v4400 = vsel %vm4392, %v4383, %v4399
  %v4401 = vsel %vm4391, %v4398, %v4400
  %v4402 = vsel %vm4390, %v4380, %v4383
  %v4403 = vsel %vm4393, %v4389, 1326507024
  %v4404 = vsel %vm4392, %v4386, %v4403
  %v4405 = vsel %vm4391, %v4402, %v4404
  %v4406 = vshll.u32 %v4366, 8
  %v4407 = vmul.u32.u64.compose %v4406, %v4405
  %v4408 = vextract.low.u32 %v4407
  %v4409 = vextract.high.u32 %v4407
  %v4410 = vmul.u32.u64.compose %v4406, %v4401
  %v4411 = vextract.low.u32 %v4410
  %v4412 = vextract.high.u32 %v4410
  %v4413 = vmul.u32 %v4406, %v4397
  %v4414 = vadd.s32 %v4409, %v4411
  %vm4415 = vc.u32 %v4409, %v4411
  %v4416 = vadd.s32 %v4412, 1
  %v4417 = vsel %vm4415, %v4416, %v4412
  %v4418 = vadd.s32 %v4413, %v4417
  %v4419 = vadd.s32 %v4418, 536870912
  %v4420 = vshrl.u32 %v4419, 30
  %v4421 = vshll.u32 %v4420, 30
  %v4422 = vsub.s32 %v4418, %v4421
  %vm4423 = vcmp.lt.s32.totalorder %v4422, 0
  %v4424 = vsub.s32 0, %v4422
  %v4425 = vsel %vm4423, %v4424, %v4422
  %v4426 = vclz %v4425
  %v4427 = vsub.s32 %v4426, 2
  %vm4428 = vcmp.gt.s32.totalorder 0, %v4427
  %v4429 = vsel %vm4428, 0, %v4427
  %v4430 = vsub.s32 32, %v4429
  %v4431 = vshll.u32 %v4422, %v4429
  %v4432 = vshrl.u32 %v4414, %v4430
  %v4433 = vor.u32 %v4431, %v4432
  %v4434 = vsub.s32 4294967266, %v4429
  %v4435 = vadd.s32 %v4434, 127
  %v4436 = vshll.u32 %v4435, 23
  %v4437 = vor.u32 4788187, %v4436
  %v4438 = vand.u32 2147483647, %v4437
  %v4440 = vcvt.s32.f32 %v4433
  %v4441 = vmul.f32 %v4440, %v4438
  %v4442 = vxor.u32 %v4441, 2147483648
  %v4443 = vsel %vm4360, %v4442, %v4441
  %v4444 = vsub.s32 4, %v4420
  %v4445 = vsel %vm4360, %v4444, %v4420
  %v4446 = vsel %vm4359, %v520, %v4443
  %v4447 = vsel %vm4359, 0, %v4445
  %v4448 = vcosq.f32.pop %v4446
  %v4449 = vsinq.f32.pop %v4446
  %vm4450 = vweird.f32 %v520
  %v4451 = vand.u32 %v4447, 3
  %vm4452 = vcmp.lt.s32.totalorder %v4451, 2
  %vm4453 = vcmp.eq.s32.totalorder %v4451, 0
  %v4454 = vxor.u32 %v4449, 2147483648
  %v4455 = vsel %vm4453, %v4448, %v4454
  %vm4456 = vcmp.eq.s32.totalorder %v4451, 2
  %v4457 = vxor.u32 %v4448, 2147483648
  %v4458 = vsel %vm4456, %v4457, %v4449
  %v4459 = vsel %vm4452, %v4455, %v4458
  %v4460 = vsel %vm4450, nan, %v4459
  %v4461 = vand.u32 2147483647, %v521
  %vm4462 = vcmp.le.f32.partialorder %v4461, 0.7853982
  %vm4463 = vcmp.lt.s32.totalorder %v521, 0
  %v4464 = vand.u32 %v521, 2139095040
  %v4465 = vshrl.u32 %v4464, 23
  %v4466 = vsub.s32 %v4465, 127
  %v4467 = vand.u32 2147483647, %v521
  %v4468 = vand.u32 %v4467, 8388607
  %v4469 = vor.u32 %v4468, 8388608
  %v4470 = vsub.s32 0, %v4469
  %v4471 = vadd.s32 %v4466, 1
  %vm4472 = vcmp.gt.s32.totalorder %v4471, 0
  %v4473 = vsel %vm4472, %v4471, 0
  %v4474 = vshrl.u32 %v4473, 5
  %v4475 = vand.u32 %v4473, 31
  %v4476 = vsub.s32 32, %v4475
  %v4477 = vshrl.u32 683565275, %v4476
  %v4478 = vshll.u32 683565275, %v4475
  %v4479 = vshrl.u32 2475754826, %v4476
  %v4480 = vor.u32 %v4478, %v4479
  %v4481 = vshll.u32 2475754826, %v4475
  %v4482 = vshrl.u32 2131351028, %v4476
  %v4483 = vor.u32 %v4481, %v4482
  %v4484 = vshll.u32 2131351028, %v4475
  %v4485 = vshrl.u32 2102212464, %v4476
  %v4486 = vor.u32 %v4484, %v4485
  %v4487 = vshll.u32 2102212464, %v4475
  %v4488 = vshrl.u32 920167782, %v4476
  %v4489 = vor.u32 %v4487, %v4488
  %v4490 = vshll.u32 920167782, %v4475
  %v4491 = vshrl.u32 1326507024, %v4476
  %v4492 = vor.u32 %v4490, %v4491
  %vm4493 = vcmp.lt.s32.totalorder %v4474, 1
  %vm4494 = vcmp.lt.s32.totalorder %v4474, 2
  %vm4495 = vcmp.lt.s32.totalorder %v4474, 3
  %vm4496 = vcmp.lt.s32.totalorder %v4474, 4
  %v4497 = vsel %vm4493, %v4477, %v4480
  %v4498 = vsel %vm4496, %v4486, 2102212464
  %v4499 = vsel %vm4495, %v4483, %v4498
  %v4500 = vsel %vm4494, %v4497, %v4499
  %v4501 = vsel %vm4493, %v4480, %v4483
  %v4502 = vsel %vm4496, %v4489, 920167782
  %v4503 = vsel %vm4495, %v4486, %v4502
  %v4504 = vsel %vm4494, %v4501, %v4503
  %v4505 = vsel %vm4493, %v4483, %v4486
  %v4506 = vsel %vm4496, %v4492, 1326507024
  %v4507 = vsel %vm4495, %v4489, %v4506
  %v4508 = vsel %vm4494, %v4505, %v4507
  %v4509 = vshll.u32 %v4469, 8
  %v4510 = vmul.u32.u64.compose %v4509, %v4508
  %v4511 = vextract.low.u32 %v4510
  %v4512 = vextract.high.u32 %v4510
  %v4513 = vmul.u32.u64.compose %v4509, %v4504
  %v4514 = vextract.low.u32 %v4513
  %v4515 = vextract.high.u32 %v4513
  %v4516 = vmul.u32 %v4509, %v4500
  %v4517 = vadd.s32 %v4512, %v4514
  %vm4518 = vc.u32 %v4512, %v4514
  %v4519 = vadd.s32 %v4515, 1
  %v4520 = vsel %vm4518, %v4519, %v4515
  %v4521 = vadd.s32 %v4516, %v4520
  %v4522 = vadd.s32 %v4521, 536870912
  %v4523 = vshrl.u32 %v4522, 30
  %v4524 = vshll.u32 %v4523, 30
  %v4525 = vsub.s32 %v4521, %v4524
  %vm4526 = vcmp.lt.s32.totalorder %v4525, 0
  %v4527 = vsub.s32 0, %v4525
  %v4528 = vsel %vm4526, %v4527, %v4525
  %v4529 = vclz %v4528
  %v4530 = vsub.s32 %v4529, 2
  %vm4531 = vcmp.gt.s32.totalorder 0, %v4530
  %v4532 = vsel %vm4531, 0, %v4530
  %v4533 = vsub.s32 32, %v4532
  %v4534 = vshll.u32 %v4525, %v4532
  %v4535 = vshrl.u32 %v4517, %v4533
  %v4536 = vor.u32 %v4534, %v4535
  %v4537 = vsub.s32 4294967266, %v4532
  %v4538 = vadd.s32 %v4537, 127
  %v4539 = vshll.u32 %v4538, 23
  %v4540 = vor.u32 4788187, %v4539
  %v4541 = vand.u32 2147483647, %v4540
  %v4543 = vcvt.s32.f32 %v4536
  %v4544 = vmul.f32 %v4543, %v4541
  %v4545 = vxor.u32 %v4544, 2147483648
  %v4546 = vsel %vm4463, %v4545, %v4544
  %v4547 = vsub.s32 4, %v4523
  %v4548 = vsel %vm4463, %v4547, %v4523
  %v4549 = vsel %vm4462, %v521, %v4546
  %v4550 = vsel %vm4462, 0, %v4548
  %v4551 = vcosq.f32.pop %v4549
  %v4552 = vsinq.f32.pop %v4549
  %vm4553 = vweird.f32 %v521
  %v4554 = vand.u32 %v4550, 3
  %vm4555 = vcmp.lt.s32.totalorder %v4554, 2
  %vm4556 = vcmp.eq.s32.totalorder %v4554, 0
  %v4557 = vxor.u32 %v4552, 2147483648
  %v4558 = vsel %vm4556, %v4551, %v4557
  %vm4559 = vcmp.eq.s32.totalorder %v4554, 2
  %v4560 = vxor.u32 %v4551, 2147483648
  %v4561 = vsel %vm4559, %v4560, %v4552
  %v4562 = vsel %vm4555, %v4558, %v4561
  %v4563 = vsel %vm4553, nan, %v4562
  %v4564 = vand.u32 2147483647, %v522
  %vm4565 = vcmp.le.f32.partialorder %v4564, 0.7853982
  %vm4566 = vcmp.lt.s32.totalorder %v522, 0
  %v4567 = vand.u32 %v522, 2139095040
  %v4568 = vshrl.u32 %v4567, 23
  %v4569 = vsub.s32 %v4568, 127
  %v4570 = vand.u32 2147483647, %v522
  %v4571 = vand.u32 %v4570, 8388607
  %v4572 = vor.u32 %v4571, 8388608
  %v4573 = vsub.s32 0, %v4572
  %v4574 = vadd.s32 %v4569, 1
  %vm4575 = vcmp.gt.s32.totalorder %v4574, 0
  %v4576 = vsel %vm4575, %v4574, 0
  %v4577 = vshrl.u32 %v4576, 5
  %v4578 = vand.u32 %v4576, 31
  %v4579 = vsub.s32 32, %v4578
  %v4580 = vshrl.u32 683565275, %v4579
  %v4581 = vshll.u32 683565275, %v4578
  %v4582 = vshrl.u32 2475754826, %v4579
  %v4583 = vor.u32 %v4581, %v4582
  %v4584 = vshll.u32 2475754826, %v4578
  %v4585 = vshrl.u32 2131351028, %v4579
  %v4586 = vor.u32 %v4584, %v4585
  %v4587 = vshll.u32 2131351028, %v4578
  %v4588 = vshrl.u32 2102212464, %v4579
  %v4589 = vor.u32 %v4587, %v4588
  %v4590 = vshll.u32 2102212464, %v4578
  %v4591 = vshrl.u32 920167782, %v4579
  %v4592 = vor.u32 %v4590, %v4591
  %v4593 = vshll.u32 920167782, %v4578
  %v4594 = vshrl.u32 1326507024, %v4579
  %v4595 = vor.u32 %v4593, %v4594
  %vm4596 = vcmp.lt.s32.totalorder %v4577, 1
  %vm4597 = vcmp.lt.s32.totalorder %v4577, 2
  %vm4598 = vcmp.lt.s32.totalorder %v4577, 3
  %vm4599 = vcmp.lt.s32.totalorder %v4577, 4
  %v4600 = vsel %vm4596, %v4580, %v4583
  %v4601 = vsel %vm4599, %v4589, 2102212464
  %v4602 = vsel %vm4598, %v4586, %v4601
  %v4603 = vsel %vm4597, %v4600, %v4602
  %v4604 = vsel %vm4596, %v4583, %v4586
  %v4605 = vsel %vm4599, %v4592, 920167782
  %v4606 = vsel %vm4598, %v4589, %v4605
  %v4607 = vsel %vm4597, %v4604, %v4606
  %v4608 = vsel %vm4596, %v4586, %v4589
  %v4609 = vsel %vm4599, %v4595, 1326507024
  %v4610 = vsel %vm4598, %v4592, %v4609
  %v4611 = vsel %vm4597, %v4608, %v4610
  %v4612 = vshll.u32 %v4572, 8
  %v4613 = vmul.u32.u64.compose %v4612, %v4611
  %v4614 = vextract.low.u32 %v4613
  %v4615 = vextract.high.u32 %v4613
  %v4616 = vmul.u32.u64.compose %v4612, %v4607
  %v4617 = vextract.low.u32 %v4616
  %v4618 = vextract.high.u32 %v4616
  %v4619 = vmul.u32 %v4612, %v4603
  %v4620 = vadd.s32 %v4615, %v4617
  %vm4621 = vc.u32 %v4615, %v4617
  %v4622 = vadd.s32 %v4618, 1
  %v4623 = vsel %vm4621, %v4622, %v4618
  %v4624 = vadd.s32 %v4619, %v4623
  %v4625 = vadd.s32 %v4624, 536870912
  %v4626 = vshrl.u32 %v4625, 30
  %v4627 = vshll.u32 %v4626, 30
  %v4628 = vsub.s32 %v4624, %v4627
  %vm4629 = vcmp.lt.s32.totalorder %v4628, 0
  %v4630 = vsub.s32 0, %v4628
  %v4631 = vsel %vm4629, %v4630, %v4628
  %v4632 = vclz %v4631
  %v4633 = vsub.s32 %v4632, 2
  %vm4634 = vcmp.gt.s32.totalorder 0, %v4633
  %v4635 = vsel %vm4634, 0, %v4633
  %v4636 = vsub.s32 32, %v4635
  %v4637 = vshll.u32 %v4628, %v4635
  %v4638 = vshrl.u32 %v4620, %v4636
  %v4639 = vor.u32 %v4637, %v4638
  %v4640 = vsub.s32 4294967266, %v4635
  %v4641 = vadd.s32 %v4640, 127
  %v4642 = vshll.u32 %v4641, 23
  %v4643 = vor.u32 4788187, %v4642
  %v4644 = vand.u32 2147483647, %v4643
  %v4646 = vcvt.s32.f32 %v4639
  %v4647 = vmul.f32 %v4646, %v4644
  %v4648 = vxor.u32 %v4647, 2147483648
  %v4649 = vsel %vm4566, %v4648, %v4647
  %v4650 = vsub.s32 4, %v4626
  %v4651 = vsel %vm4566, %v4650, %v4626
  %v4652 = vsel %vm4565, %v522, %v4649
  %v4653 = vsel %vm4565, 0, %v4651
  %v4654 = vcosq.f32.pop %v4652
  %v4655 = vsinq.f32.pop %v4652
  %vm4656 = vweird.f32 %v522
  %v4657 = vand.u32 %v4653, 3
  %vm4658 = vcmp.lt.s32.totalorder %v4657, 2
  %vm4659 = vcmp.eq.s32.totalorder %v4657, 0
  %v4660 = vxor.u32 %v4655, 2147483648
  %v4661 = vsel %vm4659, %v4654, %v4660
  %vm4662 = vcmp.eq.s32.totalorder %v4657, 2
  %v4663 = vxor.u32 %v4654, 2147483648
  %v4664 = vsel %vm4662, %v4663, %v4655
  %v4665 = vsel %vm4658, %v4661, %v4664
  %v4666 = vsel %vm4656, nan, %v4665
  %v4667 = vand.u32 2147483647, %v523
  %vm4668 = vcmp.le.f32.partialorder %v4667, 0.7853982
  %vm4669 = vcmp.lt.s32.totalorder %v523, 0
  %v4670 = vand.u32 %v523, 2139095040
  %v4671 = vshrl.u32 %v4670, 23
  %v4672 = vsub.s32 %v4671, 127
  %v4673 = vand.u32 2147483647, %v523
  %v4674 = vand.u32 %v4673, 8388607
  %v4675 = vor.u32 %v4674, 8388608
  %v4676 = vsub.s32 0, %v4675
  %v4677 = vadd.s32 %v4672, 1
  %vm4678 = vcmp.gt.s32.totalorder %v4677, 0
  %v4679 = vsel %vm4678, %v4677, 0
  %v4680 = vshrl.u32 %v4679, 5
  %v4681 = vand.u32 %v4679, 31
  %v4682 = vsub.s32 32, %v4681
  %v4683 = vshrl.u32 683565275, %v4682
  %v4684 = vshll.u32 683565275, %v4681
  %v4685 = vshrl.u32 2475754826, %v4682
  %v4686 = vor.u32 %v4684, %v4685
  %v4687 = vshll.u32 2475754826, %v4681
  %v4688 = vshrl.u32 2131351028, %v4682
  %v4689 = vor.u32 %v4687, %v4688
  %v4690 = vshll.u32 2131351028, %v4681
  %v4691 = vshrl.u32 2102212464, %v4682
  %v4692 = vor.u32 %v4690, %v4691
  %v4693 = vshll.u32 2102212464, %v4681
  %v4694 = vshrl.u32 920167782, %v4682
  %v4695 = vor.u32 %v4693, %v4694
  %v4696 = vshll.u32 920167782, %v4681
  %v4697 = vshrl.u32 1326507024, %v4682
  %v4698 = vor.u32 %v4696, %v4697
  %vm4699 = vcmp.lt.s32.totalorder %v4680, 1
  %vm4700 = vcmp.lt.s32.totalorder %v4680, 2
  %vm4701 = vcmp.lt.s32.totalorder %v4680, 3
  %vm4702 = vcmp.lt.s32.totalorder %v4680, 4
  %v4703 = vsel %vm4699, %v4683, %v4686
  %v4704 = vsel %vm4702, %v4692, 2102212464
  %v4705 = vsel %vm4701, %v4689, %v4704
  %v4706 = vsel %vm4700, %v4703, %v4705
  %v4707 = vsel %vm4699, %v4686, %v4689
  %v4708 = vsel %vm4702, %v4695, 920167782
  %v4709 = vsel %vm4701, %v4692, %v4708
  %v4710 = vsel %vm4700, %v4707, %v4709
  %v4711 = vsel %vm4699, %v4689, %v4692
  %v4712 = vsel %vm4702, %v4698, 1326507024
  %v4713 = vsel %vm4701, %v4695, %v4712
  %v4714 = vsel %vm4700, %v4711, %v4713
  %v4715 = vshll.u32 %v4675, 8
  %v4716 = vmul.u32.u64.compose %v4715, %v4714
  %v4717 = vextract.low.u32 %v4716
  %v4718 = vextract.high.u32 %v4716
  %v4719 = vmul.u32.u64.compose %v4715, %v4710
  %v4720 = vextract.low.u32 %v4719
  %v4721 = vextract.high.u32 %v4719
  %v4722 = vmul.u32 %v4715, %v4706
  %v4723 = vadd.s32 %v4718, %v4720
  %vm4724 = vc.u32 %v4718, %v4720
  %v4725 = vadd.s32 %v4721, 1
  %v4726 = vsel %vm4724, %v4725, %v4721
  %v4727 = vadd.s32 %v4722, %v4726
  %v4728 = vadd.s32 %v4727, 536870912
  %v4729 = vshrl.u32 %v4728, 30
  %v4730 = vshll.u32 %v4729, 30
  %v4731 = vsub.s32 %v4727, %v4730
  %vm4732 = vcmp.lt.s32.totalorder %v4731, 0
  %v4733 = vsub.s32 0, %v4731
  %v4734 = vsel %vm4732, %v4733, %v4731
  %v4735 = vclz %v4734
  %v4736 = vsub.s32 %v4735, 2
  %vm4737 = vcmp.gt.s32.totalorder 0, %v4736
  %v4738 = vsel %vm4737, 0, %v4736
  %v4739 = vsub.s32 32, %v4738
  %v4740 = vshll.u32 %v4731, %v4738
  %v4741 = vshrl.u32 %v4723, %v4739
  %v4742 = vor.u32 %v4740, %v4741
  %v4743 = vsub.s32 4294967266, %v4738
  %v4744 = vadd.s32 %v4743, 127
  %v4745 = vshll.u32 %v4744, 23
  %v4746 = vor.u32 4788187, %v4745
  %v4747 = vand.u32 2147483647, %v4746
  %v4749 = vcvt.s32.f32 %v4742
  %v4750 = vmul.f32 %v4749, %v4747
  %v4751 = vxor.u32 %v4750, 2147483648
  %v4752 = vsel %vm4669, %v4751, %v4750
  %v4753 = vsub.s32 4, %v4729
  %v4754 = vsel %vm4669, %v4753, %v4729
  %v4755 = vsel %vm4668, %v523, %v4752
  %v4756 = vsel %vm4668, 0, %v4754
  %v4757 = vcosq.f32.pop %v4755
  %v4758 = vsinq.f32.pop %v4755
  %vm4759 = vweird.f32 %v523
  %v4760 = vand.u32 %v4756, 3
  %vm4761 = vcmp.lt.s32.totalorder %v4760, 2
  %vm4762 = vcmp.eq.s32.totalorder %v4760, 0
  %v4763 = vxor.u32 %v4758, 2147483648
  %v4764 = vsel %vm4762, %v4757, %v4763
  %vm4765 = vcmp.eq.s32.totalorder %v4760, 2
  %v4766 = vxor.u32 %v4757, 2147483648
  %v4767 = vsel %vm4765, %v4766, %v4758
  %v4768 = vsel %vm4761, %v4764, %v4767
  %v4769 = vsel %vm4759, nan, %v4768
  %v4770 = vand.u32 2147483647, %v524
  %vm4771 = vcmp.le.f32.partialorder %v4770, 0.7853982
  %vm4772 = vcmp.lt.s32.totalorder %v524, 0
  %v4773 = vand.u32 %v524, 2139095040
  %v4774 = vshrl.u32 %v4773, 23
  %v4775 = vsub.s32 %v4774, 127
  %v4776 = vand.u32 2147483647, %v524
  %v4777 = vand.u32 %v4776, 8388607
  %v4778 = vor.u32 %v4777, 8388608
  %v4779 = vsub.s32 0, %v4778
  %v4780 = vadd.s32 %v4775, 1
  %vm4781 = vcmp.gt.s32.totalorder %v4780, 0
  %v4782 = vsel %vm4781, %v4780, 0
  %v4783 = vshrl.u32 %v4782, 5
  %v4784 = vand.u32 %v4782, 31
  %v4785 = vsub.s32 32, %v4784
  %v4786 = vshrl.u32 683565275, %v4785
  %v4787 = vshll.u32 683565275, %v4784
  %v4788 = vshrl.u32 2475754826, %v4785
  %v4789 = vor.u32 %v4787, %v4788
  %v4790 = vshll.u32 2475754826, %v4784
  %v4791 = vshrl.u32 2131351028, %v4785
  %v4792 = vor.u32 %v4790, %v4791
  %v4793 = vshll.u32 2131351028, %v4784
  %v4794 = vshrl.u32 2102212464, %v4785
  %v4795 = vor.u32 %v4793, %v4794
  %v4796 = vshll.u32 2102212464, %v4784
  %v4797 = vshrl.u32 920167782, %v4785
  %v4798 = vor.u32 %v4796, %v4797
  %v4799 = vshll.u32 920167782, %v4784
  %v4800 = vshrl.u32 1326507024, %v4785
  %v4801 = vor.u32 %v4799, %v4800
  %vm4802 = vcmp.lt.s32.totalorder %v4783, 1
  %vm4803 = vcmp.lt.s32.totalorder %v4783, 2
  %vm4804 = vcmp.lt.s32.totalorder %v4783, 3
  %vm4805 = vcmp.lt.s32.totalorder %v4783, 4
  %v4806 = vsel %vm4802, %v4786, %v4789
  %v4807 = vsel %vm4805, %v4795, 2102212464
  %v4808 = vsel %vm4804, %v4792, %v4807
  %v4809 = vsel %vm4803, %v4806, %v4808
  %v4810 = vsel %vm4802, %v4789, %v4792
  %v4811 = vsel %vm4805, %v4798, 920167782
  %v4812 = vsel %vm4804, %v4795, %v4811
  %v4813 = vsel %vm4803, %v4810, %v4812
  %v4814 = vsel %vm4802, %v4792, %v4795
  %v4815 = vsel %vm4805, %v4801, 1326507024
  %v4816 = vsel %vm4804, %v4798, %v4815
  %v4817 = vsel %vm4803, %v4814, %v4816
  %v4818 = vshll.u32 %v4778, 8
  %v4819 = vmul.u32.u64.compose %v4818, %v4817
  %v4820 = vextract.low.u32 %v4819
  %v4821 = vextract.high.u32 %v4819
  %v4822 = vmul.u32.u64.compose %v4818, %v4813
  %v4823 = vextract.low.u32 %v4822
  %v4824 = vextract.high.u32 %v4822
  %v4825 = vmul.u32 %v4818, %v4809
  %v4826 = vadd.s32 %v4821, %v4823
  %vm4827 = vc.u32 %v4821, %v4823
  %v4828 = vadd.s32 %v4824, 1
  %v4829 = vsel %vm4827, %v4828, %v4824
  %v4830 = vadd.s32 %v4825, %v4829
  %v4831 = vadd.s32 %v4830, 536870912
  %v4832 = vshrl.u32 %v4831, 30
  %v4833 = vshll.u32 %v4832, 30
  %v4834 = vsub.s32 %v4830, %v4833
  %vm4835 = vcmp.lt.s32.totalorder %v4834, 0
  %v4836 = vsub.s32 0, %v4834
  %v4837 = vsel %vm4835, %v4836, %v4834
  %v4838 = vclz %v4837
  %v4839 = vsub.s32 %v4838, 2
  %vm4840 = vcmp.gt.s32.totalorder 0, %v4839
  %v4841 = vsel %vm4840, 0, %v4839
  %v4842 = vsub.s32 32, %v4841
  %v4843 = vshll.u32 %v4834, %v4841
  %v4844 = vshrl.u32 %v4826, %v4842
  %v4845 = vor.u32 %v4843, %v4844
  %v4846 = vsub.s32 4294967266, %v4841
  %v4847 = vadd.s32 %v4846, 127
  %v4848 = vshll.u32 %v4847, 23
  %v4849 = vor.u32 4788187, %v4848
  %v4850 = vand.u32 2147483647, %v4849
  %v4852 = vcvt.s32.f32 %v4845
  %v4853 = vmul.f32 %v4852, %v4850
  %v4854 = vxor.u32 %v4853, 2147483648
  %v4855 = vsel %vm4772, %v4854, %v4853
  %v4856 = vsub.s32 4, %v4832
  %v4857 = vsel %vm4772, %v4856, %v4832
  %v4858 = vsel %vm4771, %v524, %v4855
  %v4859 = vsel %vm4771, 0, %v4857
  %v4860 = vcosq.f32.pop %v4858
  %v4861 = vsinq.f32.pop %v4858
  %vm4862 = vweird.f32 %v524
  %v4863 = vand.u32 %v4859, 3
  %vm4864 = vcmp.lt.s32.totalorder %v4863, 2
  %vm4865 = vcmp.eq.s32.totalorder %v4863, 0
  %v4866 = vxor.u32 %v4861, 2147483648
  %v4867 = vsel %vm4865, %v4860, %v4866
  %vm4868 = vcmp.eq.s32.totalorder %v4863, 2
  %v4869 = vxor.u32 %v4860, 2147483648
  %v4870 = vsel %vm4868, %v4869, %v4861
  %v4871 = vsel %vm4864, %v4867, %v4870
  %v4872 = vsel %vm4862, nan, %v4871
  %v4873 = vand.u32 2147483647, %v525
  %vm4874 = vcmp.le.f32.partialorder %v4873, 0.7853982
  %vm4875 = vcmp.lt.s32.totalorder %v525, 0
  %v4876 = vand.u32 %v525, 2139095040
  %v4877 = vshrl.u32 %v4876, 23
  %v4878 = vsub.s32 %v4877, 127
  %v4879 = vand.u32 2147483647, %v525
  %v4880 = vand.u32 %v4879, 8388607
  %v4881 = vor.u32 %v4880, 8388608
  %v4882 = vsub.s32 0, %v4881
  %v4883 = vadd.s32 %v4878, 1
  %vm4884 = vcmp.gt.s32.totalorder %v4883, 0
  %v4885 = vsel %vm4884, %v4883, 0
  %v4886 = vshrl.u32 %v4885, 5
  %v4887 = vand.u32 %v4885, 31
  %v4888 = vsub.s32 32, %v4887
  %v4889 = vshrl.u32 683565275, %v4888
  %v4890 = vshll.u32 683565275, %v4887
  %v4891 = vshrl.u32 2475754826, %v4888
  %v4892 = vor.u32 %v4890, %v4891
  %v4893 = vshll.u32 2475754826, %v4887
  %v4894 = vshrl.u32 2131351028, %v4888
  %v4895 = vor.u32 %v4893, %v4894
  %v4896 = vshll.u32 2131351028, %v4887
  %v4897 = vshrl.u32 2102212464, %v4888
  %v4898 = vor.u32 %v4896, %v4897
  %v4899 = vshll.u32 2102212464, %v4887
  %v4900 = vshrl.u32 920167782, %v4888
  %v4901 = vor.u32 %v4899, %v4900
  %v4902 = vshll.u32 920167782, %v4887
  %v4903 = vshrl.u32 1326507024, %v4888
  %v4904 = vor.u32 %v4902, %v4903
  %vm4905 = vcmp.lt.s32.totalorder %v4886, 1
  %vm4906 = vcmp.lt.s32.totalorder %v4886, 2
  %vm4907 = vcmp.lt.s32.totalorder %v4886, 3
  %vm4908 = vcmp.lt.s32.totalorder %v4886, 4
  %v4909 = vsel %vm4905, %v4889, %v4892
  %v4910 = vsel %vm4908, %v4898, 2102212464
  %v4911 = vsel %vm4907, %v4895, %v4910
  %v4912 = vsel %vm4906, %v4909, %v4911
  %v4913 = vsel %vm4905, %v4892, %v4895
  %v4914 = vsel %vm4908, %v4901, 920167782
  %v4915 = vsel %vm4907, %v4898, %v4914
  %v4916 = vsel %vm4906, %v4913, %v4915
  %v4917 = vsel %vm4905, %v4895, %v4898
  %v4918 = vsel %vm4908, %v4904, 1326507024
  %v4919 = vsel %vm4907, %v4901, %v4918
  %v4920 = vsel %vm4906, %v4917, %v4919
  %v4921 = vshll.u32 %v4881, 8
  %v4922 = vmul.u32.u64.compose %v4921, %v4920
  %v4923 = vextract.low.u32 %v4922
  %v4924 = vextract.high.u32 %v4922
  %v4925 = vmul.u32.u64.compose %v4921, %v4916
  %v4926 = vextract.low.u32 %v4925
  %v4927 = vextract.high.u32 %v4925
  %v4928 = vmul.u32 %v4921, %v4912
  %v4929 = vadd.s32 %v4924, %v4926
  %vm4930 = vc.u32 %v4924, %v4926
  %v4931 = vadd.s32 %v4927, 1
  %v4932 = vsel %vm4930, %v4931, %v4927
  %v4933 = vadd.s32 %v4928, %v4932
  %v4934 = vadd.s32 %v4933, 536870912
  %v4935 = vshrl.u32 %v4934, 30
  %v4936 = vshll.u32 %v4935, 30
  %v4937 = vsub.s32 %v4933, %v4936
  %vm4938 = vcmp.lt.s32.totalorder %v4937, 0
  %v4939 = vsub.s32 0, %v4937
  %v4940 = vsel %vm4938, %v4939, %v4937
  %v4941 = vclz %v4940
  %v4942 = vsub.s32 %v4941, 2
  %vm4943 = vcmp.gt.s32.totalorder 0, %v4942
  %v4944 = vsel %vm4943, 0, %v4942
  %v4945 = vsub.s32 32, %v4944
  %v4946 = vshll.u32 %v4937, %v4944
  %v4947 = vshrl.u32 %v4929, %v4945
  %v4948 = vor.u32 %v4946, %v4947
  %v4949 = vsub.s32 4294967266, %v4944
  %v4950 = vadd.s32 %v4949, 127
  %v4951 = vshll.u32 %v4950, 23
  %v4952 = vor.u32 4788187, %v4951
  %v4953 = vand.u32 2147483647, %v4952
  %v4955 = vcvt.s32.f32 %v4948
  %v4956 = vmul.f32 %v4955, %v4953
  %v4957 = vxor.u32 %v4956, 2147483648
  %v4958 = vsel %vm4875, %v4957, %v4956
  %v4959 = vsub.s32 4, %v4935
  %v4960 = vsel %vm4875, %v4959, %v4935
  %v4961 = vsel %vm4874, %v525, %v4958
  %v4962 = vsel %vm4874, 0, %v4960
  %v4963 = vcosq.f32.pop %v4961
  %v4964 = vsinq.f32.pop %v4961
  %vm4965 = vweird.f32 %v525
  %v4966 = vand.u32 %v4962, 3
  %vm4967 = vcmp.lt.s32.totalorder %v4966, 2
  %vm4968 = vcmp.eq.s32.totalorder %v4966, 0
  %v4969 = vxor.u32 %v4964, 2147483648
  %v4970 = vsel %vm4968, %v4963, %v4969
  %vm4971 = vcmp.eq.s32.totalorder %v4966, 2
  %v4972 = vxor.u32 %v4963, 2147483648
  %v4973 = vsel %vm4971, %v4972, %v4964
  %v4974 = vsel %vm4967, %v4970, %v4973
  %v4975 = vsel %vm4965, nan, %v4974
  %v4976 = vand.u32 2147483647, %v526
  %vm4977 = vcmp.le.f32.partialorder %v4976, 0.7853982
  %vm4978 = vcmp.lt.s32.totalorder %v526, 0
  %v4979 = vand.u32 %v526, 2139095040
  %v4980 = vshrl.u32 %v4979, 23
  %v4981 = vsub.s32 %v4980, 127
  %v4982 = vand.u32 2147483647, %v526
  %v4983 = vand.u32 %v4982, 8388607
  %v4984 = vor.u32 %v4983, 8388608
  %v4985 = vsub.s32 0, %v4984
  %v4986 = vadd.s32 %v4981, 1
  %vm4987 = vcmp.gt.s32.totalorder %v4986, 0
  %v4988 = vsel %vm4987, %v4986, 0
  %v4989 = vshrl.u32 %v4988, 5
  %v4990 = vand.u32 %v4988, 31
  %v4991 = vsub.s32 32, %v4990
  %v4992 = vshrl.u32 683565275, %v4991
  %v4993 = vshll.u32 683565275, %v4990
  %v4994 = vshrl.u32 2475754826, %v4991
  %v4995 = vor.u32 %v4993, %v4994
  %v4996 = vshll.u32 2475754826, %v4990
  %v4997 = vshrl.u32 2131351028, %v4991
  %v4998 = vor.u32 %v4996, %v4997
  %v4999 = vshll.u32 2131351028, %v4990
  %v5000 = vshrl.u32 2102212464, %v4991
  %v5001 = vor.u32 %v4999, %v5000
  %v5002 = vshll.u32 2102212464, %v4990
  %v5003 = vshrl.u32 920167782, %v4991
  %v5004 = vor.u32 %v5002, %v5003
  %v5005 = vshll.u32 920167782, %v4990
  %v5006 = vshrl.u32 1326507024, %v4991
  %v5007 = vor.u32 %v5005, %v5006
  %vm5008 = vcmp.lt.s32.totalorder %v4989, 1
  %vm5009 = vcmp.lt.s32.totalorder %v4989, 2
  %vm5010 = vcmp.lt.s32.totalorder %v4989, 3
  %vm5011 = vcmp.lt.s32.totalorder %v4989, 4
  %v5012 = vsel %vm5008, %v4992, %v4995
  %v5013 = vsel %vm5011, %v5001, 2102212464
  %v5014 = vsel %vm5010, %v4998, %v5013
  %v5015 = vsel %vm5009, %v5012, %v5014
  %v5016 = vsel %vm5008, %v4995, %v4998
  %v5017 = vsel %vm5011, %v5004, 920167782
  %v5018 = vsel %vm5010, %v5001, %v5017
  %v5019 = vsel %vm5009, %v5016, %v5018
  %v5020 = vsel %vm5008, %v4998, %v5001
  %v5021 = vsel %vm5011, %v5007, 1326507024
  %v5022 = vsel %vm5010, %v5004, %v5021
  %v5023 = vsel %vm5009, %v5020, %v5022
  %v5024 = vshll.u32 %v4984, 8
  %v5025 = vmul.u32.u64.compose %v5024, %v5023
  %v5026 = vextract.low.u32 %v5025
  %v5027 = vextract.high.u32 %v5025
  %v5028 = vmul.u32.u64.compose %v5024, %v5019
  %v5029 = vextract.low.u32 %v5028
  %v5030 = vextract.high.u32 %v5028
  %v5031 = vmul.u32 %v5024, %v5015
  %v5032 = vadd.s32 %v5027, %v5029
  %vm5033 = vc.u32 %v5027, %v5029
  %v5034 = vadd.s32 %v5030, 1
  %v5035 = vsel %vm5033, %v5034, %v5030
  %v5036 = vadd.s32 %v5031, %v5035
  %v5037 = vadd.s32 %v5036, 536870912
  %v5038 = vshrl.u32 %v5037, 30
  %v5039 = vshll.u32 %v5038, 30
  %v5040 = vsub.s32 %v5036, %v5039
  %vm5041 = vcmp.lt.s32.totalorder %v5040, 0
  %v5042 = vsub.s32 0, %v5040
  %v5043 = vsel %vm5041, %v5042, %v5040
  %v5044 = vclz %v5043
  %v5045 = vsub.s32 %v5044, 2
  %vm5046 = vcmp.gt.s32.totalorder 0, %v5045
  %v5047 = vsel %vm5046, 0, %v5045
  %v5048 = vsub.s32 32, %v5047
  %v5049 = vshll.u32 %v5040, %v5047
  %v5050 = vshrl.u32 %v5032, %v5048
  %v5051 = vor.u32 %v5049, %v5050
  %v5052 = vsub.s32 4294967266, %v5047
  %v5053 = vadd.s32 %v5052, 127
  %v5054 = vshll.u32 %v5053, 23
  %v5055 = vor.u32 4788187, %v5054
  %v5056 = vand.u32 2147483647, %v5055
  %v5058 = vcvt.s32.f32 %v5051
  %v5059 = vmul.f32 %v5058, %v5056
  %v5060 = vxor.u32 %v5059, 2147483648
  %v5061 = vsel %vm4978, %v5060, %v5059
  %v5062 = vsub.s32 4, %v5038
  %v5063 = vsel %vm4978, %v5062, %v5038
  %v5064 = vsel %vm4977, %v526, %v5061
  %v5065 = vsel %vm4977, 0, %v5063
  %v5066 = vcosq.f32.pop %v5064
  %v5067 = vsinq.f32.pop %v5064
  %vm5068 = vweird.f32 %v526
  %v5069 = vand.u32 %v5065, 3
  %vm5070 = vcmp.lt.s32.totalorder %v5069, 2
  %vm5071 = vcmp.eq.s32.totalorder %v5069, 0
  %v5072 = vxor.u32 %v5067, 2147483648
  %v5073 = vsel %vm5071, %v5066, %v5072
  %vm5074 = vcmp.eq.s32.totalorder %v5069, 2
  %v5075 = vxor.u32 %v5066, 2147483648
  %v5076 = vsel %vm5074, %v5075, %v5067
  %v5077 = vsel %vm5070, %v5073, %v5076
  %v5078 = vsel %vm5068, nan, %v5077
  %v5079 = vand.u32 2147483647, %v527
  %vm5080 = vcmp.le.f32.partialorder %v5079, 0.7853982
  %vm5081 = vcmp.lt.s32.totalorder %v527, 0
  %v5082 = vand.u32 %v527, 2139095040
  %v5083 = vshrl.u32 %v5082, 23
  %v5084 = vsub.s32 %v5083, 127
  %v5085 = vand.u32 2147483647, %v527
  %v5086 = vand.u32 %v5085, 8388607
  %v5087 = vor.u32 %v5086, 8388608
  %v5088 = vsub.s32 0, %v5087
  %v5089 = vadd.s32 %v5084, 1
  %vm5090 = vcmp.gt.s32.totalorder %v5089, 0
  %v5091 = vsel %vm5090, %v5089, 0
  %v5092 = vshrl.u32 %v5091, 5
  %v5093 = vand.u32 %v5091, 31
  %v5094 = vsub.s32 32, %v5093
  %v5095 = vshrl.u32 683565275, %v5094
  %v5096 = vshll.u32 683565275, %v5093
  %v5097 = vshrl.u32 2475754826, %v5094
  %v5098 = vor.u32 %v5096, %v5097
  %v5099 = vshll.u32 2475754826, %v5093
  %v5100 = vshrl.u32 2131351028, %v5094
  %v5101 = vor.u32 %v5099, %v5100
  %v5102 = vshll.u32 2131351028, %v5093
  %v5103 = vshrl.u32 2102212464, %v5094
  %v5104 = vor.u32 %v5102, %v5103
  %v5105 = vshll.u32 2102212464, %v5093
  %v5106 = vshrl.u32 920167782, %v5094
  %v5107 = vor.u32 %v5105, %v5106
  %v5108 = vshll.u32 920167782, %v5093
  %v5109 = vshrl.u32 1326507024, %v5094
  %v5110 = vor.u32 %v5108, %v5109
  %vm5111 = vcmp.lt.s32.totalorder %v5092, 1
  %vm5112 = vcmp.lt.s32.totalorder %v5092, 2
  %vm5113 = vcmp.lt.s32.totalorder %v5092, 3
  %vm5114 = vcmp.lt.s32.totalorder %v5092, 4
  %v5115 = vsel %vm5111, %v5095, %v5098
  %v5116 = vsel %vm5114, %v5104, 2102212464
  %v5117 = vsel %vm5113, %v5101, %v5116
  %v5118 = vsel %vm5112, %v5115, %v5117
  %v5119 = vsel %vm5111, %v5098, %v5101
  %v5120 = vsel %vm5114, %v5107, 920167782
  %v5121 = vsel %vm5113, %v5104, %v5120
  %v5122 = vsel %vm5112, %v5119, %v5121
  %v5123 = vsel %vm5111, %v5101, %v5104
  %v5124 = vsel %vm5114, %v5110, 1326507024
  %v5125 = vsel %vm5113, %v5107, %v5124
  %v5126 = vsel %vm5112, %v5123, %v5125
  %v5127 = vshll.u32 %v5087, 8
  %v5128 = vmul.u32.u64.compose %v5127, %v5126
  %v5129 = vextract.low.u32 %v5128
  %v5130 = vextract.high.u32 %v5128
  %v5131 = vmul.u32.u64.compose %v5127, %v5122
  %v5132 = vextract.low.u32 %v5131
  %v5133 = vextract.high.u32 %v5131
  %v5134 = vmul.u32 %v5127, %v5118
  %v5135 = vadd.s32 %v5130, %v5132
  %vm5136 = vc.u32 %v5130, %v5132
  %v5137 = vadd.s32 %v5133, 1
  %v5138 = vsel %vm5136, %v5137, %v5133
  %v5139 = vadd.s32 %v5134, %v5138
  %v5140 = vadd.s32 %v5139, 536870912
  %v5141 = vshrl.u32 %v5140, 30
  %v5142 = vshll.u32 %v5141, 30
  %v5143 = vsub.s32 %v5139, %v5142
  %vm5144 = vcmp.lt.s32.totalorder %v5143, 0
  %v5145 = vsub.s32 0, %v5143
  %v5146 = vsel %vm5144, %v5145, %v5143
  %v5147 = vclz %v5146
  %v5148 = vsub.s32 %v5147, 2
  %vm5149 = vcmp.gt.s32.totalorder 0, %v5148
  %v5150 = vsel %vm5149, 0, %v5148
  %v5151 = vsub.s32 32, %v5150
  %v5152 = vshll.u32 %v5143, %v5150
  %v5153 = vshrl.u32 %v5135, %v5151
  %v5154 = vor.u32 %v5152, %v5153
  %v5155 = vsub.s32 4294967266, %v5150
  %v5156 = vadd.s32 %v5155, 127
  %v5157 = vshll.u32 %v5156, 23
  %v5158 = vor.u32 4788187, %v5157
  %v5159 = vand.u32 2147483647, %v5158
  %v5161 = vcvt.s32.f32 %v5154
  %v5162 = vmul.f32 %v5161, %v5159
  %v5163 = vxor.u32 %v5162, 2147483648
  %v5164 = vsel %vm5081, %v5163, %v5162
  %v5165 = vsub.s32 4, %v5141
  %v5166 = vsel %vm5081, %v5165, %v5141
  %v5167 = vsel %vm5080, %v527, %v5164
  %v5168 = vsel %vm5080, 0, %v5166
  %v5169 = vcosq.f32.pop %v5167
  %v5170 = vsinq.f32.pop %v5167
  %vm5171 = vweird.f32 %v527
  %v5172 = vand.u32 %v5168, 3
  %vm5173 = vcmp.lt.s32.totalorder %v5172, 2
  %vm5174 = vcmp.eq.s32.totalorder %v5172, 0
  %v5175 = vxor.u32 %v5170, 2147483648
  %v5176 = vsel %vm5174, %v5169, %v5175
  %vm5177 = vcmp.eq.s32.totalorder %v5172, 2
  %v5178 = vxor.u32 %v5169, 2147483648
  %v5179 = vsel %vm5177, %v5178, %v5170
  %v5180 = vsel %vm5173, %v5176, %v5179
  %v5181 = vsel %vm5171, nan, %v5180
  %v5182 = vand.u32 2147483647, %v528
  %vm5183 = vcmp.le.f32.partialorder %v5182, 0.7853982
  %vm5184 = vcmp.lt.s32.totalorder %v528, 0
  %v5185 = vand.u32 %v528, 2139095040
  %v5186 = vshrl.u32 %v5185, 23
  %v5187 = vsub.s32 %v5186, 127
  %v5188 = vand.u32 2147483647, %v528
  %v5189 = vand.u32 %v5188, 8388607
  %v5190 = vor.u32 %v5189, 8388608
  %v5191 = vsub.s32 0, %v5190
  %v5192 = vadd.s32 %v5187, 1
  %vm5193 = vcmp.gt.s32.totalorder %v5192, 0
  %v5194 = vsel %vm5193, %v5192, 0
  %v5195 = vshrl.u32 %v5194, 5
  %v5196 = vand.u32 %v5194, 31
  %v5197 = vsub.s32 32, %v5196
  %v5198 = vshrl.u32 683565275, %v5197
  %v5199 = vshll.u32 683565275, %v5196
  %v5200 = vshrl.u32 2475754826, %v5197
  %v5201 = vor.u32 %v5199, %v5200
  %v5202 = vshll.u32 2475754826, %v5196
  %v5203 = vshrl.u32 2131351028, %v5197
  %v5204 = vor.u32 %v5202, %v5203
  %v5205 = vshll.u32 2131351028, %v5196
  %v5206 = vshrl.u32 2102212464, %v5197
  %v5207 = vor.u32 %v5205, %v5206
  %v5208 = vshll.u32 2102212464, %v5196
  %v5209 = vshrl.u32 920167782, %v5197
  %v5210 = vor.u32 %v5208, %v5209
  %v5211 = vshll.u32 920167782, %v5196
  %v5212 = vshrl.u32 1326507024, %v5197
  %v5213 = vor.u32 %v5211, %v5212
  %vm5214 = vcmp.lt.s32.totalorder %v5195, 1
  %vm5215 = vcmp.lt.s32.totalorder %v5195, 2
  %vm5216 = vcmp.lt.s32.totalorder %v5195, 3
  %vm5217 = vcmp.lt.s32.totalorder %v5195, 4
  %v5218 = vsel %vm5214, %v5198, %v5201
  %v5219 = vsel %vm5217, %v5207, 2102212464
  %v5220 = vsel %vm5216, %v5204, %v5219
  %v5221 = vsel %vm5215, %v5218, %v5220
  %v5222 = vsel %vm5214, %v5201, %v5204
  %v5223 = vsel %vm5217, %v5210, 920167782
  %v5224 = vsel %vm5216, %v5207, %v5223
  %v5225 = vsel %vm5215, %v5222, %v5224
  %v5226 = vsel %vm5214, %v5204, %v5207
  %v5227 = vsel %vm5217, %v5213, 1326507024
  %v5228 = vsel %vm5216, %v5210, %v5227
  %v5229 = vsel %vm5215, %v5226, %v5228
  %v5230 = vshll.u32 %v5190, 8
  %v5231 = vmul.u32.u64.compose %v5230, %v5229
  %v5232 = vextract.low.u32 %v5231
  %v5233 = vextract.high.u32 %v5231
  %v5234 = vmul.u32.u64.compose %v5230, %v5225
  %v5235 = vextract.low.u32 %v5234
  %v5236 = vextract.high.u32 %v5234
  %v5237 = vmul.u32 %v5230, %v5221
  %v5238 = vadd.s32 %v5233, %v5235
  %vm5239 = vc.u32 %v5233, %v5235
  %v5240 = vadd.s32 %v5236, 1
  %v5241 = vsel %vm5239, %v5240, %v5236
  %v5242 = vadd.s32 %v5237, %v5241
  %v5243 = vadd.s32 %v5242, 536870912
  %v5244 = vshrl.u32 %v5243, 30
  %v5245 = vshll.u32 %v5244, 30
  %v5246 = vsub.s32 %v5242, %v5245
  %vm5247 = vcmp.lt.s32.totalorder %v5246, 0
  %v5248 = vsub.s32 0, %v5246
  %v5249 = vsel %vm5247, %v5248, %v5246
  %v5250 = vclz %v5249
  %v5251 = vsub.s32 %v5250, 2
  %vm5252 = vcmp.gt.s32.totalorder 0, %v5251
  %v5253 = vsel %vm5252, 0, %v5251
  %v5254 = vsub.s32 32, %v5253
  %v5255 = vshll.u32 %v5246, %v5253
  %v5256 = vshrl.u32 %v5238, %v5254
  %v5257 = vor.u32 %v5255, %v5256
  %v5258 = vsub.s32 4294967266, %v5253
  %v5259 = vadd.s32 %v5258, 127
  %v5260 = vshll.u32 %v5259, 23
  %v5261 = vor.u32 4788187, %v5260
  %v5262 = vand.u32 2147483647, %v5261
  %v5264 = vcvt.s32.f32 %v5257
  %v5265 = vmul.f32 %v5264, %v5262
  %v5266 = vxor.u32 %v5265, 2147483648
  %v5267 = vsel %vm5184, %v5266, %v5265
  %v5268 = vsub.s32 4, %v5244
  %v5269 = vsel %vm5184, %v5268, %v5244
  %v5270 = vsel %vm5183, %v528, %v5267
  %v5271 = vsel %vm5183, 0, %v5269
  %v5272 = vcosq.f32.pop %v5270
  %v5273 = vsinq.f32.pop %v5270
  %vm5274 = vweird.f32 %v528
  %v5275 = vand.u32 %v5271, 3
  %vm5276 = vcmp.lt.s32.totalorder %v5275, 2
  %vm5277 = vcmp.eq.s32.totalorder %v5275, 0
  %v5278 = vxor.u32 %v5273, 2147483648
  %v5279 = vsel %vm5277, %v5272, %v5278
  %vm5280 = vcmp.eq.s32.totalorder %v5275, 2
  %v5281 = vxor.u32 %v5272, 2147483648
  %v5282 = vsel %vm5280, %v5281, %v5273
  %v5283 = vsel %vm5276, %v5279, %v5282
  %v5284 = vsel %vm5274, nan, %v5283
  %v5285 = vand.u32 2147483647, %v529
  %vm5286 = vcmp.le.f32.partialorder %v5285, 0.7853982
  %vm5287 = vcmp.lt.s32.totalorder %v529, 0
  %v5288 = vand.u32 %v529, 2139095040
  %v5289 = vshrl.u32 %v5288, 23
  %v5290 = vsub.s32 %v5289, 127
  %v5291 = vand.u32 2147483647, %v529
  %v5292 = vand.u32 %v5291, 8388607
  %v5293 = vor.u32 %v5292, 8388608
  %v5294 = vsub.s32 0, %v5293
  %v5295 = vadd.s32 %v5290, 1
  %vm5296 = vcmp.gt.s32.totalorder %v5295, 0
  %v5297 = vsel %vm5296, %v5295, 0
  %v5298 = vshrl.u32 %v5297, 5
  %v5299 = vand.u32 %v5297, 31
  %v5300 = vsub.s32 32, %v5299
  %v5301 = vshrl.u32 683565275, %v5300
  %v5302 = vshll.u32 683565275, %v5299
  %v5303 = vshrl.u32 2475754826, %v5300
  %v5304 = vor.u32 %v5302, %v5303
  %v5305 = vshll.u32 2475754826, %v5299
  %v5306 = vshrl.u32 2131351028, %v5300
  %v5307 = vor.u32 %v5305, %v5306
  %v5308 = vshll.u32 2131351028, %v5299
  %v5309 = vshrl.u32 2102212464, %v5300
  %v5310 = vor.u32 %v5308, %v5309
  %v5311 = vshll.u32 2102212464, %v5299
  %v5312 = vshrl.u32 920167782, %v5300
  %v5313 = vor.u32 %v5311, %v5312
  %v5314 = vshll.u32 920167782, %v5299
  %v5315 = vshrl.u32 1326507024, %v5300
  %v5316 = vor.u32 %v5314, %v5315
  %vm5317 = vcmp.lt.s32.totalorder %v5298, 1
  %vm5318 = vcmp.lt.s32.totalorder %v5298, 2
  %vm5319 = vcmp.lt.s32.totalorder %v5298, 3
  %vm5320 = vcmp.lt.s32.totalorder %v5298, 4
  %v5321 = vsel %vm5317, %v5301, %v5304
  %v5322 = vsel %vm5320, %v5310, 2102212464
  %v5323 = vsel %vm5319, %v5307, %v5322
  %v5324 = vsel %vm5318, %v5321, %v5323
  %v5325 = vsel %vm5317, %v5304, %v5307
  %v5326 = vsel %vm5320, %v5313, 920167782
  %v5327 = vsel %vm5319, %v5310, %v5326
  %v5328 = vsel %vm5318, %v5325, %v5327
  %v5329 = vsel %vm5317, %v5307, %v5310
  %v5330 = vsel %vm5320, %v5316, 1326507024
  %v5331 = vsel %vm5319, %v5313, %v5330
  %v5332 = vsel %vm5318, %v5329, %v5331
  %v5333 = vshll.u32 %v5293, 8
  %v5334 = vmul.u32.u64.compose %v5333, %v5332
  %v5335 = vextract.low.u32 %v5334
  %v5336 = vextract.high.u32 %v5334
  %v5337 = vmul.u32.u64.compose %v5333, %v5328
  %v5338 = vextract.low.u32 %v5337
  %v5339 = vextract.high.u32 %v5337
  %v5340 = vmul.u32 %v5333, %v5324
  %v5341 = vadd.s32 %v5336, %v5338
  %vm5342 = vc.u32 %v5336, %v5338
  %v5343 = vadd.s32 %v5339, 1
  %v5344 = vsel %vm5342, %v5343, %v5339
  %v5345 = vadd.s32 %v5340, %v5344
  %v5346 = vadd.s32 %v5345, 536870912
  %v5347 = vshrl.u32 %v5346, 30
  %v5348 = vshll.u32 %v5347, 30
  %v5349 = vsub.s32 %v5345, %v5348
  %vm5350 = vcmp.lt.s32.totalorder %v5349, 0
  %v5351 = vsub.s32 0, %v5349
  %v5352 = vsel %vm5350, %v5351, %v5349
  %v5353 = vclz %v5352
  %v5354 = vsub.s32 %v5353, 2
  %vm5355 = vcmp.gt.s32.totalorder 0, %v5354
  %v5356 = vsel %vm5355, 0, %v5354
  %v5357 = vsub.s32 32, %v5356
  %v5358 = vshll.u32 %v5349, %v5356
  %v5359 = vshrl.u32 %v5341, %v5357
  %v5360 = vor.u32 %v5358, %v5359
  %v5361 = vsub.s32 4294967266, %v5356
  %v5362 = vadd.s32 %v5361, 127
  %v5363 = vshll.u32 %v5362, 23
  %v5364 = vor.u32 4788187, %v5363
  %v5365 = vand.u32 2147483647, %v5364
  %v5367 = vcvt.s32.f32 %v5360
  %v5368 = vmul.f32 %v5367, %v5365
  %v5369 = vxor.u32 %v5368, 2147483648
  %v5370 = vsel %vm5287, %v5369, %v5368
  %v5371 = vsub.s32 4, %v5347
  %v5372 = vsel %vm5287, %v5371, %v5347
  %v5373 = vsel %vm5286, %v529, %v5370
  %v5374 = vsel %vm5286, 0, %v5372
  %v5375 = vcosq.f32.pop %v5373
  %v5376 = vsinq.f32.pop %v5373
  %vm5377 = vweird.f32 %v529
  %v5378 = vand.u32 %v5374, 3
  %vm5379 = vcmp.lt.s32.totalorder %v5378, 2
  %vm5380 = vcmp.eq.s32.totalorder %v5378, 0
  %v5381 = vxor.u32 %v5376, 2147483648
  %v5382 = vsel %vm5380, %v5375, %v5381
  %vm5383 = vcmp.eq.s32.totalorder %v5378, 2
  %v5384 = vxor.u32 %v5375, 2147483648
  %v5385 = vsel %vm5383, %v5384, %v5376
  %v5386 = vsel %vm5379, %v5382, %v5385
  %v5387 = vsel %vm5377, nan, %v5386
  %v5388 = vand.u32 2147483647, %v530
  %vm5389 = vcmp.le.f32.partialorder %v5388, 0.7853982
  %vm5390 = vcmp.lt.s32.totalorder %v530, 0
  %v5391 = vand.u32 %v530, 2139095040
  %v5392 = vshrl.u32 %v5391, 23
  %v5393 = vsub.s32 %v5392, 127
  %v5394 = vand.u32 2147483647, %v530
  %v5395 = vand.u32 %v5394, 8388607
  %v5396 = vor.u32 %v5395, 8388608
  %v5397 = vsub.s32 0, %v5396
  %v5398 = vadd.s32 %v5393, 1
  %vm5399 = vcmp.gt.s32.totalorder %v5398, 0
  %v5400 = vsel %vm5399, %v5398, 0
  %v5401 = vshrl.u32 %v5400, 5
  %v5402 = vand.u32 %v5400, 31
  %v5403 = vsub.s32 32, %v5402
  %v5404 = vshrl.u32 683565275, %v5403
  %v5405 = vshll.u32 683565275, %v5402
  %v5406 = vshrl.u32 2475754826, %v5403
  %v5407 = vor.u32 %v5405, %v5406
  %v5408 = vshll.u32 2475754826, %v5402
  %v5409 = vshrl.u32 2131351028, %v5403
  %v5410 = vor.u32 %v5408, %v5409
  %v5411 = vshll.u32 2131351028, %v5402
  %v5412 = vshrl.u32 2102212464, %v5403
  %v5413 = vor.u32 %v5411, %v5412
  %v5414 = vshll.u32 2102212464, %v5402
  %v5415 = vshrl.u32 920167782, %v5403
  %v5416 = vor.u32 %v5414, %v5415
  %v5417 = vshll.u32 920167782, %v5402
  %v5418 = vshrl.u32 1326507024, %v5403
  %v5419 = vor.u32 %v5417, %v5418
  %vm5420 = vcmp.lt.s32.totalorder %v5401, 1
  %vm5421 = vcmp.lt.s32.totalorder %v5401, 2
  %vm5422 = vcmp.lt.s32.totalorder %v5401, 3
  %vm5423 = vcmp.lt.s32.totalorder %v5401, 4
  %v5424 = vsel %vm5420, %v5404, %v5407
  %v5425 = vsel %vm5423, %v5413, 2102212464
  %v5426 = vsel %vm5422, %v5410, %v5425
  %v5427 = vsel %vm5421, %v5424, %v5426
  %v5428 = vsel %vm5420, %v5407, %v5410
  %v5429 = vsel %vm5423, %v5416, 920167782
  %v5430 = vsel %vm5422, %v5413, %v5429
  %v5431 = vsel %vm5421, %v5428, %v5430
  %v5432 = vsel %vm5420, %v5410, %v5413
  %v5433 = vsel %vm5423, %v5419, 1326507024
  %v5434 = vsel %vm5422, %v5416, %v5433
  %v5435 = vsel %vm5421, %v5432, %v5434
  %v5436 = vshll.u32 %v5396, 8
  %v5437 = vmul.u32.u64.compose %v5436, %v5435
  %v5438 = vextract.low.u32 %v5437
  %v5439 = vextract.high.u32 %v5437
  %v5440 = vmul.u32.u64.compose %v5436, %v5431
  %v5441 = vextract.low.u32 %v5440
  %v5442 = vextract.high.u32 %v5440
  %v5443 = vmul.u32 %v5436, %v5427
  %v5444 = vadd.s32 %v5439, %v5441
  %vm5445 = vc.u32 %v5439, %v5441
  %v5446 = vadd.s32 %v5442, 1
  %v5447 = vsel %vm5445, %v5446, %v5442
  %v5448 = vadd.s32 %v5443, %v5447
  %v5449 = vadd.s32 %v5448, 536870912
  %v5450 = vshrl.u32 %v5449, 30
  %v5451 = vshll.u32 %v5450, 30
  %v5452 = vsub.s32 %v5448, %v5451
  %vm5453 = vcmp.lt.s32.totalorder %v5452, 0
  %v5454 = vsub.s32 0, %v5452
  %v5455 = vsel %vm5453, %v5454, %v5452
  %v5456 = vclz %v5455
  %v5457 = vsub.s32 %v5456, 2
  %vm5458 = vcmp.gt.s32.totalorder 0, %v5457
  %v5459 = vsel %vm5458, 0, %v5457
  %v5460 = vsub.s32 32, %v5459
  %v5461 = vshll.u32 %v5452, %v5459
  %v5462 = vshrl.u32 %v5444, %v5460
  %v5463 = vor.u32 %v5461, %v5462
  %v5464 = vsub.s32 4294967266, %v5459
  %v5465 = vadd.s32 %v5464, 127
  %v5466 = vshll.u32 %v5465, 23
  %v5467 = vor.u32 4788187, %v5466
  %v5468 = vand.u32 2147483647, %v5467
  %v5470 = vcvt.s32.f32 %v5463
  %v5471 = vmul.f32 %v5470, %v5468
  %v5472 = vxor.u32 %v5471, 2147483648
  %v5473 = vsel %vm5390, %v5472, %v5471
  %v5474 = vsub.s32 4, %v5450
  %v5475 = vsel %vm5390, %v5474, %v5450
  %v5476 = vsel %vm5389, %v530, %v5473
  %v5477 = vsel %vm5389, 0, %v5475
  %v5478 = vcosq.f32.pop %v5476
  %v5479 = vsinq.f32.pop %v5476
  %vm5480 = vweird.f32 %v530
  %v5481 = vand.u32 %v5477, 3
  %vm5482 = vcmp.lt.s32.totalorder %v5481, 2
  %vm5483 = vcmp.eq.s32.totalorder %v5481, 0
  %v5484 = vxor.u32 %v5479, 2147483648
  %v5485 = vsel %vm5483, %v5478, %v5484
  %vm5486 = vcmp.eq.s32.totalorder %v5481, 2
  %v5487 = vxor.u32 %v5478, 2147483648
  %v5488 = vsel %vm5486, %v5487, %v5479
  %v5489 = vsel %vm5482, %v5485, %v5488
  %v5490 = vsel %vm5480, nan, %v5489
  %v5491 = vand.u32 2147483647, %v531
  %vm5492 = vcmp.le.f32.partialorder %v5491, 0.7853982
  %vm5493 = vcmp.lt.s32.totalorder %v531, 0
  %v5494 = vand.u32 %v531, 2139095040
  %v5495 = vshrl.u32 %v5494, 23
  %v5496 = vsub.s32 %v5495, 127
  %v5497 = vand.u32 2147483647, %v531
  %v5498 = vand.u32 %v5497, 8388607
  %v5499 = vor.u32 %v5498, 8388608
  %v5500 = vsub.s32 0, %v5499
  %v5501 = vadd.s32 %v5496, 1
  %vm5502 = vcmp.gt.s32.totalorder %v5501, 0
  %v5503 = vsel %vm5502, %v5501, 0
  %v5504 = vshrl.u32 %v5503, 5
  %v5505 = vand.u32 %v5503, 31
  %v5506 = vsub.s32 32, %v5505
  %v5507 = vshrl.u32 683565275, %v5506
  %v5508 = vshll.u32 683565275, %v5505
  %v5509 = vshrl.u32 2475754826, %v5506
  %v5510 = vor.u32 %v5508, %v5509
  %v5511 = vshll.u32 2475754826, %v5505
  %v5512 = vshrl.u32 2131351028, %v5506
  %v5513 = vor.u32 %v5511, %v5512
  %v5514 = vshll.u32 2131351028, %v5505
  %v5515 = vshrl.u32 2102212464, %v5506
  %v5516 = vor.u32 %v5514, %v5515
  %v5517 = vshll.u32 2102212464, %v5505
  %v5518 = vshrl.u32 920167782, %v5506
  %v5519 = vor.u32 %v5517, %v5518
  %v5520 = vshll.u32 920167782, %v5505
  %v5521 = vshrl.u32 1326507024, %v5506
  %v5522 = vor.u32 %v5520, %v5521
  %vm5523 = vcmp.lt.s32.totalorder %v5504, 1
  %vm5524 = vcmp.lt.s32.totalorder %v5504, 2
  %vm5525 = vcmp.lt.s32.totalorder %v5504, 3
  %vm5526 = vcmp.lt.s32.totalorder %v5504, 4
  %v5527 = vsel %vm5523, %v5507, %v5510
  %v5528 = vsel %vm5526, %v5516, 2102212464
  %v5529 = vsel %vm5525, %v5513, %v5528
  %v5530 = vsel %vm5524, %v5527, %v5529
  %v5531 = vsel %vm5523, %v5510, %v5513
  %v5532 = vsel %vm5526, %v5519, 920167782
  %v5533 = vsel %vm5525, %v5516, %v5532
  %v5534 = vsel %vm5524, %v5531, %v5533
  %v5535 = vsel %vm5523, %v5513, %v5516
  %v5536 = vsel %vm5526, %v5522, 1326507024
  %v5537 = vsel %vm5525, %v5519, %v5536
  %v5538 = vsel %vm5524, %v5535, %v5537
  %v5539 = vshll.u32 %v5499, 8
  %v5540 = vmul.u32.u64.compose %v5539, %v5538
  %v5541 = vextract.low.u32 %v5540
  %v5542 = vextract.high.u32 %v5540
  %v5543 = vmul.u32.u64.compose %v5539, %v5534
  %v5544 = vextract.low.u32 %v5543
  %v5545 = vextract.high.u32 %v5543
  %v5546 = vmul.u32 %v5539, %v5530
  %v5547 = vadd.s32 %v5542, %v5544
  %vm5548 = vc.u32 %v5542, %v5544
  %v5549 = vadd.s32 %v5545, 1
  %v5550 = vsel %vm5548, %v5549, %v5545
  %v5551 = vadd.s32 %v5546, %v5550
  %v5552 = vadd.s32 %v5551, 536870912
  %v5553 = vshrl.u32 %v5552, 30
  %v5554 = vshll.u32 %v5553, 30
  %v5555 = vsub.s32 %v5551, %v5554
  %vm5556 = vcmp.lt.s32.totalorder %v5555, 0
  %v5557 = vsub.s32 0, %v5555
  %v5558 = vsel %vm5556, %v5557, %v5555
  %v5559 = vclz %v5558
  %v5560 = vsub.s32 %v5559, 2
  %vm5561 = vcmp.gt.s32.totalorder 0, %v5560
  %v5562 = vsel %vm5561, 0, %v5560
  %v5563 = vsub.s32 32, %v5562
  %v5564 = vshll.u32 %v5555, %v5562
  %v5565 = vshrl.u32 %v5547, %v5563
  %v5566 = vor.u32 %v5564, %v5565
  %v5567 = vsub.s32 4294967266, %v5562
  %v5568 = vadd.s32 %v5567, 127
  %v5569 = vshll.u32 %v5568, 23
  %v5570 = vor.u32 4788187, %v5569
  %v5571 = vand.u32 2147483647, %v5570
  %v5573 = vcvt.s32.f32 %v5566
  %v5574 = vmul.f32 %v5573, %v5571
  %v5575 = vxor.u32 %v5574, 2147483648
  %v5576 = vsel %vm5493, %v5575, %v5574
  %v5577 = vsub.s32 4, %v5553
  %v5578 = vsel %vm5493, %v5577, %v5553
  %v5579 = vsel %vm5492, %v531, %v5576
  %v5580 = vsel %vm5492, 0, %v5578
  %v5581 = vcosq.f32.pop %v5579
  %v5582 = vsinq.f32.pop %v5579
  %vm5583 = vweird.f32 %v531
  %v5584 = vand.u32 %v5580, 3
  %vm5585 = vcmp.lt.s32.totalorder %v5584, 2
  %vm5586 = vcmp.eq.s32.totalorder %v5584, 0
  %v5587 = vxor.u32 %v5582, 2147483648
  %v5588 = vsel %vm5586, %v5581, %v5587
  %vm5589 = vcmp.eq.s32.totalorder %v5584, 2
  %v5590 = vxor.u32 %v5581, 2147483648
  %v5591 = vsel %vm5589, %v5590, %v5582
  %v5592 = vsel %vm5585, %v5588, %v5591
  %v5593 = vsel %vm5583, nan, %v5592
  %v5594 = vand.u32 2147483647, %v532
  %vm5595 = vcmp.le.f32.partialorder %v5594, 0.7853982
  %vm5596 = vcmp.lt.s32.totalorder %v532, 0
  %v5597 = vand.u32 %v532, 2139095040
  %v5598 = vshrl.u32 %v5597, 23
  %v5599 = vsub.s32 %v5598, 127
  %v5600 = vand.u32 2147483647, %v532
  %v5601 = vand.u32 %v5600, 8388607
  %v5602 = vor.u32 %v5601, 8388608
  %v5603 = vsub.s32 0, %v5602
  %v5604 = vadd.s32 %v5599, 1
  %vm5605 = vcmp.gt.s32.totalorder %v5604, 0
  %v5606 = vsel %vm5605, %v5604, 0
  %v5607 = vshrl.u32 %v5606, 5
  %v5608 = vand.u32 %v5606, 31
  %v5609 = vsub.s32 32, %v5608
  %v5610 = vshrl.u32 683565275, %v5609
  %v5611 = vshll.u32 683565275, %v5608
  %v5612 = vshrl.u32 2475754826, %v5609
  %v5613 = vor.u32 %v5611, %v5612
  %v5614 = vshll.u32 2475754826, %v5608
  %v5615 = vshrl.u32 2131351028, %v5609
  %v5616 = vor.u32 %v5614, %v5615
  %v5617 = vshll.u32 2131351028, %v5608
  %v5618 = vshrl.u32 2102212464, %v5609
  %v5619 = vor.u32 %v5617, %v5618
  %v5620 = vshll.u32 2102212464, %v5608
  %v5621 = vshrl.u32 920167782, %v5609
  %v5622 = vor.u32 %v5620, %v5621
  %v5623 = vshll.u32 920167782, %v5608
  %v5624 = vshrl.u32 1326507024, %v5609
  %v5625 = vor.u32 %v5623, %v5624
  %vm5626 = vcmp.lt.s32.totalorder %v5607, 1
  %vm5627 = vcmp.lt.s32.totalorder %v5607, 2
  %vm5628 = vcmp.lt.s32.totalorder %v5607, 3
  %vm5629 = vcmp.lt.s32.totalorder %v5607, 4
  %v5630 = vsel %vm5626, %v5610, %v5613
  %v5631 = vsel %vm5629, %v5619, 2102212464
  %v5632 = vsel %vm5628, %v5616, %v5631
  %v5633 = vsel %vm5627, %v5630, %v5632
  %v5634 = vsel %vm5626, %v5613, %v5616
  %v5635 = vsel %vm5629, %v5622, 920167782
  %v5636 = vsel %vm5628, %v5619, %v5635
  %v5637 = vsel %vm5627, %v5634, %v5636
  %v5638 = vsel %vm5626, %v5616, %v5619
  %v5639 = vsel %vm5629, %v5625, 1326507024
  %v5640 = vsel %vm5628, %v5622, %v5639
  %v5641 = vsel %vm5627, %v5638, %v5640
  %v5642 = vshll.u32 %v5602, 8
  %v5643 = vmul.u32.u64.compose %v5642, %v5641
  %v5644 = vextract.low.u32 %v5643
  %v5645 = vextract.high.u32 %v5643
  %v5646 = vmul.u32.u64.compose %v5642, %v5637
  %v5647 = vextract.low.u32 %v5646
  %v5648 = vextract.high.u32 %v5646
  %v5649 = vmul.u32 %v5642, %v5633
  %v5650 = vadd.s32 %v5645, %v5647
  %vm5651 = vc.u32 %v5645, %v5647
  %v5652 = vadd.s32 %v5648, 1
  %v5653 = vsel %vm5651, %v5652, %v5648
  %v5654 = vadd.s32 %v5649, %v5653
  %v5655 = vadd.s32 %v5654, 536870912
  %v5656 = vshrl.u32 %v5655, 30
  %v5657 = vshll.u32 %v5656, 30
  %v5658 = vsub.s32 %v5654, %v5657
  %vm5659 = vcmp.lt.s32.totalorder %v5658, 0
  %v5660 = vsub.s32 0, %v5658
  %v5661 = vsel %vm5659, %v5660, %v5658
  %v5662 = vclz %v5661
  %v5663 = vsub.s32 %v5662, 2
  %vm5664 = vcmp.gt.s32.totalorder 0, %v5663
  %v5665 = vsel %vm5664, 0, %v5663
  %v5666 = vsub.s32 32, %v5665
  %v5667 = vshll.u32 %v5658, %v5665
  %v5668 = vshrl.u32 %v5650, %v5666
  %v5669 = vor.u32 %v5667, %v5668
  %v5670 = vsub.s32 4294967266, %v5665
  %v5671 = vadd.s32 %v5670, 127
  %v5672 = vshll.u32 %v5671, 23
  %v5673 = vor.u32 4788187, %v5672
  %v5674 = vand.u32 2147483647, %v5673
  %v5676 = vcvt.s32.f32 %v5669
  %v5677 = vmul.f32 %v5676, %v5674
  %v5678 = vxor.u32 %v5677, 2147483648
  %v5679 = vsel %vm5596, %v5678, %v5677
  %v5680 = vsub.s32 4, %v5656
  %v5681 = vsel %vm5596, %v5680, %v5656
  %v5682 = vsel %vm5595, %v532, %v5679
  %v5683 = vsel %vm5595, 0, %v5681
  %v5684 = vcosq.f32.pop %v5682
  %v5685 = vsinq.f32.pop %v5682
  %vm5686 = vweird.f32 %v532
  %v5687 = vand.u32 %v5683, 3
  %vm5688 = vcmp.lt.s32.totalorder %v5687, 2
  %vm5689 = vcmp.eq.s32.totalorder %v5687, 0
  %v5690 = vxor.u32 %v5685, 2147483648
  %v5691 = vsel %vm5689, %v5684, %v5690
  %vm5692 = vcmp.eq.s32.totalorder %v5687, 2
  %v5693 = vxor.u32 %v5684, 2147483648
  %v5694 = vsel %vm5692, %v5693, %v5685
  %v5695 = vsel %vm5688, %v5691, %v5694
  %v5696 = vsel %vm5686, nan, %v5695
  %v5697 = vand.u32 2147483647, %v533
  %vm5698 = vcmp.le.f32.partialorder %v5697, 0.7853982
  %vm5699 = vcmp.lt.s32.totalorder %v533, 0
  %v5700 = vand.u32 %v533, 2139095040
  %v5701 = vshrl.u32 %v5700, 23
  %v5702 = vsub.s32 %v5701, 127
  %v5703 = vand.u32 2147483647, %v533
  %v5704 = vand.u32 %v5703, 8388607
  %v5705 = vor.u32 %v5704, 8388608
  %v5706 = vsub.s32 0, %v5705
  %v5707 = vadd.s32 %v5702, 1
  %vm5708 = vcmp.gt.s32.totalorder %v5707, 0
  %v5709 = vsel %vm5708, %v5707, 0
  %v5710 = vshrl.u32 %v5709, 5
  %v5711 = vand.u32 %v5709, 31
  %v5712 = vsub.s32 32, %v5711
  %v5713 = vshrl.u32 683565275, %v5712
  %v5714 = vshll.u32 683565275, %v5711
  %v5715 = vshrl.u32 2475754826, %v5712
  %v5716 = vor.u32 %v5714, %v5715
  %v5717 = vshll.u32 2475754826, %v5711
  %v5718 = vshrl.u32 2131351028, %v5712
  %v5719 = vor.u32 %v5717, %v5718
  %v5720 = vshll.u32 2131351028, %v5711
  %v5721 = vshrl.u32 2102212464, %v5712
  %v5722 = vor.u32 %v5720, %v5721
  %v5723 = vshll.u32 2102212464, %v5711
  %v5724 = vshrl.u32 920167782, %v5712
  %v5725 = vor.u32 %v5723, %v5724
  %v5726 = vshll.u32 920167782, %v5711
  %v5727 = vshrl.u32 1326507024, %v5712
  %v5728 = vor.u32 %v5726, %v5727
  %vm5729 = vcmp.lt.s32.totalorder %v5710, 1
  %vm5730 = vcmp.lt.s32.totalorder %v5710, 2
  %vm5731 = vcmp.lt.s32.totalorder %v5710, 3
  %vm5732 = vcmp.lt.s32.totalorder %v5710, 4
  %v5733 = vsel %vm5729, %v5713, %v5716
  %v5734 = vsel %vm5732, %v5722, 2102212464
  %v5735 = vsel %vm5731, %v5719, %v5734
  %v5736 = vsel %vm5730, %v5733, %v5735
  %v5737 = vsel %vm5729, %v5716, %v5719
  %v5738 = vsel %vm5732, %v5725, 920167782
  %v5739 = vsel %vm5731, %v5722, %v5738
  %v5740 = vsel %vm5730, %v5737, %v5739
  %v5741 = vsel %vm5729, %v5719, %v5722
  %v5742 = vsel %vm5732, %v5728, 1326507024
  %v5743 = vsel %vm5731, %v5725, %v5742
  %v5744 = vsel %vm5730, %v5741, %v5743
  %v5745 = vshll.u32 %v5705, 8
  %v5746 = vmul.u32.u64.compose %v5745, %v5744
  %v5747 = vextract.low.u32 %v5746
  %v5748 = vextract.high.u32 %v5746
  %v5749 = vmul.u32.u64.compose %v5745, %v5740
  %v5750 = vextract.low.u32 %v5749
  %v5751 = vextract.high.u32 %v5749
  %v5752 = vmul.u32 %v5745, %v5736
  %v5753 = vadd.s32 %v5748, %v5750
  %vm5754 = vc.u32 %v5748, %v5750
  %v5755 = vadd.s32 %v5751, 1
  %v5756 = vsel %vm5754, %v5755, %v5751
  %v5757 = vadd.s32 %v5752, %v5756
  %v5758 = vadd.s32 %v5757, 536870912
  %v5759 = vshrl.u32 %v5758, 30
  %v5760 = vshll.u32 %v5759, 30
  %v5761 = vsub.s32 %v5757, %v5760
  %vm5762 = vcmp.lt.s32.totalorder %v5761, 0
  %v5763 = vsub.s32 0, %v5761
  %v5764 = vsel %vm5762, %v5763, %v5761
  %v5765 = vclz %v5764
  %v5766 = vsub.s32 %v5765, 2
  %vm5767 = vcmp.gt.s32.totalorder 0, %v5766
  %v5768 = vsel %vm5767, 0, %v5766
  %v5769 = vsub.s32 32, %v5768
  %v5770 = vshll.u32 %v5761, %v5768
  %v5771 = vshrl.u32 %v5753, %v5769
  %v5772 = vor.u32 %v5770, %v5771
  %v5773 = vsub.s32 4294967266, %v5768
  %v5774 = vadd.s32 %v5773, 127
  %v5775 = vshll.u32 %v5774, 23
  %v5776 = vor.u32 4788187, %v5775
  %v5777 = vand.u32 2147483647, %v5776
  %v5779 = vcvt.s32.f32 %v5772
  %v5780 = vmul.f32 %v5779, %v5777
  %v5781 = vxor.u32 %v5780, 2147483648
  %v5782 = vsel %vm5699, %v5781, %v5780
  %v5783 = vsub.s32 4, %v5759
  %v5784 = vsel %vm5699, %v5783, %v5759
  %v5785 = vsel %vm5698, %v533, %v5782
  %v5786 = vsel %vm5698, 0, %v5784
  %v5787 = vcosq.f32.pop %v5785
  %v5788 = vsinq.f32.pop %v5785
  %vm5789 = vweird.f32 %v533
  %v5790 = vand.u32 %v5786, 3
  %vm5791 = vcmp.lt.s32.totalorder %v5790, 2
  %vm5792 = vcmp.eq.s32.totalorder %v5790, 0
  %v5793 = vxor.u32 %v5788, 2147483648
  %v5794 = vsel %vm5792, %v5787, %v5793
  %vm5795 = vcmp.eq.s32.totalorder %v5790, 2
  %v5796 = vxor.u32 %v5787, 2147483648
  %v5797 = vsel %vm5795, %v5796, %v5788
  %v5798 = vsel %vm5791, %v5794, %v5797
  %v5799 = vsel %vm5789, nan, %v5798
  %v5800 = vand.u32 2147483647, %v534
  %vm5801 = vcmp.le.f32.partialorder %v5800, 0.7853982
  %vm5802 = vcmp.lt.s32.totalorder %v534, 0
  %v5803 = vand.u32 %v534, 2139095040
  %v5804 = vshrl.u32 %v5803, 23
  %v5805 = vsub.s32 %v5804, 127
  %v5806 = vand.u32 2147483647, %v534
  %v5807 = vand.u32 %v5806, 8388607
  %v5808 = vor.u32 %v5807, 8388608
  %v5809 = vsub.s32 0, %v5808
  %v5810 = vadd.s32 %v5805, 1
  %vm5811 = vcmp.gt.s32.totalorder %v5810, 0
  %v5812 = vsel %vm5811, %v5810, 0
  %v5813 = vshrl.u32 %v5812, 5
  %v5814 = vand.u32 %v5812, 31
  %v5815 = vsub.s32 32, %v5814
  %v5816 = vshrl.u32 683565275, %v5815
  %v5817 = vshll.u32 683565275, %v5814
  %v5818 = vshrl.u32 2475754826, %v5815
  %v5819 = vor.u32 %v5817, %v5818
  %v5820 = vshll.u32 2475754826, %v5814
  %v5821 = vshrl.u32 2131351028, %v5815
  %v5822 = vor.u32 %v5820, %v5821
  %v5823 = vshll.u32 2131351028, %v5814
  %v5824 = vshrl.u32 2102212464, %v5815
  %v5825 = vor.u32 %v5823, %v5824
  %v5826 = vshll.u32 2102212464, %v5814
  %v5827 = vshrl.u32 920167782, %v5815
  %v5828 = vor.u32 %v5826, %v5827
  %v5829 = vshll.u32 920167782, %v5814
  %v5830 = vshrl.u32 1326507024, %v5815
  %v5831 = vor.u32 %v5829, %v5830
  %vm5832 = vcmp.lt.s32.totalorder %v5813, 1
  %vm5833 = vcmp.lt.s32.totalorder %v5813, 2
  %vm5834 = vcmp.lt.s32.totalorder %v5813, 3
  %vm5835 = vcmp.lt.s32.totalorder %v5813, 4
  %v5836 = vsel %vm5832, %v5816, %v5819
  %v5837 = vsel %vm5835, %v5825, 2102212464
  %v5838 = vsel %vm5834, %v5822, %v5837
  %v5839 = vsel %vm5833, %v5836, %v5838
  %v5840 = vsel %vm5832, %v5819, %v5822
  %v5841 = vsel %vm5835, %v5828, 920167782
  %v5842 = vsel %vm5834, %v5825, %v5841
  %v5843 = vsel %vm5833, %v5840, %v5842
  %v5844 = vsel %vm5832, %v5822, %v5825
  %v5845 = vsel %vm5835, %v5831, 1326507024
  %v5846 = vsel %vm5834, %v5828, %v5845
  %v5847 = vsel %vm5833, %v5844, %v5846
  %v5848 = vshll.u32 %v5808, 8
  %v5849 = vmul.u32.u64.compose %v5848, %v5847
  %v5850 = vextract.low.u32 %v5849
  %v5851 = vextract.high.u32 %v5849
  %v5852 = vmul.u32.u64.compose %v5848, %v5843
  %v5853 = vextract.low.u32 %v5852
  %v5854 = vextract.high.u32 %v5852
  %v5855 = vmul.u32 %v5848, %v5839
  %v5856 = vadd.s32 %v5851, %v5853
  %vm5857 = vc.u32 %v5851, %v5853
  %v5858 = vadd.s32 %v5854, 1
  %v5859 = vsel %vm5857, %v5858, %v5854
  %v5860 = vadd.s32 %v5855, %v5859
  %v5861 = vadd.s32 %v5860, 536870912
  %v5862 = vshrl.u32 %v5861, 30
  %v5863 = vshll.u32 %v5862, 30
  %v5864 = vsub.s32 %v5860, %v5863
  %vm5865 = vcmp.lt.s32.totalorder %v5864, 0
  %v5866 = vsub.s32 0, %v5864
  %v5867 = vsel %vm5865, %v5866, %v5864
  %v5868 = vclz %v5867
  %v5869 = vsub.s32 %v5868, 2
  %vm5870 = vcmp.gt.s32.totalorder 0, %v5869
  %v5871 = vsel %vm5870, 0, %v5869
  %v5872 = vsub.s32 32, %v5871
  %v5873 = vshll.u32 %v5864, %v5871
  %v5874 = vshrl.u32 %v5856, %v5872
  %v5875 = vor.u32 %v5873, %v5874
  %v5876 = vsub.s32 4294967266, %v5871
  %v5877 = vadd.s32 %v5876, 127
  %v5878 = vshll.u32 %v5877, 23
  %v5879 = vor.u32 4788187, %v5878
  %v5880 = vand.u32 2147483647, %v5879
  %v5882 = vcvt.s32.f32 %v5875
  %v5883 = vmul.f32 %v5882, %v5880
  %v5884 = vxor.u32 %v5883, 2147483648
  %v5885 = vsel %vm5802, %v5884, %v5883
  %v5886 = vsub.s32 4, %v5862
  %v5887 = vsel %vm5802, %v5886, %v5862
  %v5888 = vsel %vm5801, %v534, %v5885
  %v5889 = vsel %vm5801, 0, %v5887
  %v5890 = vcosq.f32.pop %v5888
  %v5891 = vsinq.f32.pop %v5888
  %vm5892 = vweird.f32 %v534
  %v5893 = vand.u32 %v5889, 3
  %vm5894 = vcmp.lt.s32.totalorder %v5893, 2
  %vm5895 = vcmp.eq.s32.totalorder %v5893, 0
  %v5896 = vxor.u32 %v5891, 2147483648
  %v5897 = vsel %vm5895, %v5890, %v5896
  %vm5898 = vcmp.eq.s32.totalorder %v5893, 2
  %v5899 = vxor.u32 %v5890, 2147483648
  %v5900 = vsel %vm5898, %v5899, %v5891
  %v5901 = vsel %vm5894, %v5897, %v5900
  %v5902 = vsel %vm5892, nan, %v5901
  %v5903 = vand.u32 2147483647, %v535
  %vm5904 = vcmp.le.f32.partialorder %v5903, 0.7853982
  %vm5905 = vcmp.lt.s32.totalorder %v535, 0
  %v5906 = vand.u32 %v535, 2139095040
  %v5907 = vshrl.u32 %v5906, 23
  %v5908 = vsub.s32 %v5907, 127
  %v5909 = vand.u32 2147483647, %v535
  %v5910 = vand.u32 %v5909, 8388607
  %v5911 = vor.u32 %v5910, 8388608
  %v5912 = vsub.s32 0, %v5911
  %v5913 = vadd.s32 %v5908, 1
  %vm5914 = vcmp.gt.s32.totalorder %v5913, 0
  %v5915 = vsel %vm5914, %v5913, 0
  %v5916 = vshrl.u32 %v5915, 5
  %v5917 = vand.u32 %v5915, 31
  %v5918 = vsub.s32 32, %v5917
  %v5919 = vshrl.u32 683565275, %v5918
  %v5920 = vshll.u32 683565275, %v5917
  %v5921 = vshrl.u32 2475754826, %v5918
  %v5922 = vor.u32 %v5920, %v5921
  %v5923 = vshll.u32 2475754826, %v5917
  %v5924 = vshrl.u32 2131351028, %v5918
  %v5925 = vor.u32 %v5923, %v5924
  %v5926 = vshll.u32 2131351028, %v5917
  %v5927 = vshrl.u32 2102212464, %v5918
  %v5928 = vor.u32 %v5926, %v5927
  %v5929 = vshll.u32 2102212464, %v5917
  %v5930 = vshrl.u32 920167782, %v5918
  %v5931 = vor.u32 %v5929, %v5930
  %v5932 = vshll.u32 920167782, %v5917
  %v5933 = vshrl.u32 1326507024, %v5918
  %v5934 = vor.u32 %v5932, %v5933
  %vm5935 = vcmp.lt.s32.totalorder %v5916, 1
  %vm5936 = vcmp.lt.s32.totalorder %v5916, 2
  %vm5937 = vcmp.lt.s32.totalorder %v5916, 3
  %vm5938 = vcmp.lt.s32.totalorder %v5916, 4
  %v5939 = vsel %vm5935, %v5919, %v5922
  %v5940 = vsel %vm5938, %v5928, 2102212464
  %v5941 = vsel %vm5937, %v5925, %v5940
  %v5942 = vsel %vm5936, %v5939, %v5941
  %v5943 = vsel %vm5935, %v5922, %v5925
  %v5944 = vsel %vm5938, %v5931, 920167782
  %v5945 = vsel %vm5937, %v5928, %v5944
  %v5946 = vsel %vm5936, %v5943, %v5945
  %v5947 = vsel %vm5935, %v5925, %v5928
  %v5948 = vsel %vm5938, %v5934, 1326507024
  %v5949 = vsel %vm5937, %v5931, %v5948
  %v5950 = vsel %vm5936, %v5947, %v5949
  %v5951 = vshll.u32 %v5911, 8
  %v5952 = vmul.u32.u64.compose %v5951, %v5950
  %v5953 = vextract.low.u32 %v5952
  %v5954 = vextract.high.u32 %v5952
  %v5955 = vmul.u32.u64.compose %v5951, %v5946
  %v5956 = vextract.low.u32 %v5955
  %v5957 = vextract.high.u32 %v5955
  %v5958 = vmul.u32 %v5951, %v5942
  %v5959 = vadd.s32 %v5954, %v5956
  %vm5960 = vc.u32 %v5954, %v5956
  %v5961 = vadd.s32 %v5957, 1
  %v5962 = vsel %vm5960, %v5961, %v5957
  %v5963 = vadd.s32 %v5958, %v5962
  %v5964 = vadd.s32 %v5963, 536870912
  %v5965 = vshrl.u32 %v5964, 30
  %v5966 = vshll.u32 %v5965, 30
  %v5967 = vsub.s32 %v5963, %v5966
  %vm5968 = vcmp.lt.s32.totalorder %v5967, 0
  %v5969 = vsub.s32 0, %v5967
  %v5970 = vsel %vm5968, %v5969, %v5967
  %v5971 = vclz %v5970
  %v5972 = vsub.s32 %v5971, 2
  %vm5973 = vcmp.gt.s32.totalorder 0, %v5972
  %v5974 = vsel %vm5973, 0, %v5972
  %v5975 = vsub.s32 32, %v5974
  %v5976 = vshll.u32 %v5967, %v5974
  %v5977 = vshrl.u32 %v5959, %v5975
  %v5978 = vor.u32 %v5976, %v5977
  %v5979 = vsub.s32 4294967266, %v5974
  %v5980 = vadd.s32 %v5979, 127
  %v5981 = vshll.u32 %v5980, 23
  %v5982 = vor.u32 4788187, %v5981
  %v5983 = vand.u32 2147483647, %v5982
  %v5985 = vcvt.s32.f32 %v5978
  %v5986 = vmul.f32 %v5985, %v5983
  %v5987 = vxor.u32 %v5986, 2147483648
  %v5988 = vsel %vm5905, %v5987, %v5986
  %v5989 = vsub.s32 4, %v5965
  %v5990 = vsel %vm5905, %v5989, %v5965
  %v5991 = vsel %vm5904, %v535, %v5988
  %v5992 = vsel %vm5904, 0, %v5990
  %v5993 = vcosq.f32.pop %v5991
  %v5994 = vsinq.f32.pop %v5991
  %vm5995 = vweird.f32 %v535
  %v5996 = vand.u32 %v5992, 3
  %vm5997 = vcmp.lt.s32.totalorder %v5996, 2
  %vm5998 = vcmp.eq.s32.totalorder %v5996, 0
  %v5999 = vxor.u32 %v5994, 2147483648
  %v6000 = vsel %vm5998, %v5993, %v5999
  %vm6001 = vcmp.eq.s32.totalorder %v5996, 2
  %v6002 = vxor.u32 %v5993, 2147483648
  %v6003 = vsel %vm6001, %v6002, %v5994
  %v6004 = vsel %vm5997, %v6000, %v6003
  %v6005 = vsel %vm5995, nan, %v6004
  %v6006 = vand.u32 2147483647, %v536
  %vm6007 = vcmp.le.f32.partialorder %v6006, 0.7853982
  %vm6008 = vcmp.lt.s32.totalorder %v536, 0
  %v6009 = vand.u32 %v536, 2139095040
  %v6010 = vshrl.u32 %v6009, 23
  %v6011 = vsub.s32 %v6010, 127
  %v6012 = vand.u32 2147483647, %v536
  %v6013 = vand.u32 %v6012, 8388607
  %v6014 = vor.u32 %v6013, 8388608
  %v6015 = vsub.s32 0, %v6014
  %v6016 = vadd.s32 %v6011, 1
  %vm6017 = vcmp.gt.s32.totalorder %v6016, 0
  %v6018 = vsel %vm6017, %v6016, 0
  %v6019 = vshrl.u32 %v6018, 5
  %v6020 = vand.u32 %v6018, 31
  %v6021 = vsub.s32 32, %v6020
  %v6022 = vshrl.u32 683565275, %v6021
  %v6023 = vshll.u32 683565275, %v6020
  %v6024 = vshrl.u32 2475754826, %v6021
  %v6025 = vor.u32 %v6023, %v6024
  %v6026 = vshll.u32 2475754826, %v6020
  %v6027 = vshrl.u32 2131351028, %v6021
  %v6028 = vor.u32 %v6026, %v6027
  %v6029 = vshll.u32 2131351028, %v6020
  %v6030 = vshrl.u32 2102212464, %v6021
  %v6031 = vor.u32 %v6029, %v6030
  %v6032 = vshll.u32 2102212464, %v6020
  %v6033 = vshrl.u32 920167782, %v6021
  %v6034 = vor.u32 %v6032, %v6033
  %v6035 = vshll.u32 920167782, %v6020
  %v6036 = vshrl.u32 1326507024, %v6021
  %v6037 = vor.u32 %v6035, %v6036
  %vm6038 = vcmp.lt.s32.totalorder %v6019, 1
  %vm6039 = vcmp.lt.s32.totalorder %v6019, 2
  %vm6040 = vcmp.lt.s32.totalorder %v6019, 3
  %vm6041 = vcmp.lt.s32.totalorder %v6019, 4
  %v6042 = vsel %vm6038, %v6022, %v6025
  %v6043 = vsel %vm6041, %v6031, 2102212464
  %v6044 = vsel %vm6040, %v6028, %v6043
  %v6045 = vsel %vm6039, %v6042, %v6044
  %v6046 = vsel %vm6038, %v6025, %v6028
  %v6047 = vsel %vm6041, %v6034, 920167782
  %v6048 = vsel %vm6040, %v6031, %v6047
  %v6049 = vsel %vm6039, %v6046, %v6048
  %v6050 = vsel %vm6038, %v6028, %v6031
  %v6051 = vsel %vm6041, %v6037, 1326507024
  %v6052 = vsel %vm6040, %v6034, %v6051
  %v6053 = vsel %vm6039, %v6050, %v6052
  %v6054 = vshll.u32 %v6014, 8
  %v6055 = vmul.u32.u64.compose %v6054, %v6053
  %v6056 = vextract.low.u32 %v6055
  %v6057 = vextract.high.u32 %v6055
  %v6058 = vmul.u32.u64.compose %v6054, %v6049
  %v6059 = vextract.low.u32 %v6058
  %v6060 = vextract.high.u32 %v6058
  %v6061 = vmul.u32 %v6054, %v6045
  %v6062 = vadd.s32 %v6057, %v6059
  %vm6063 = vc.u32 %v6057, %v6059
  %v6064 = vadd.s32 %v6060, 1
  %v6065 = vsel %vm6063, %v6064, %v6060
  %v6066 = vadd.s32 %v6061, %v6065
  %v6067 = vadd.s32 %v6066, 536870912
  %v6068 = vshrl.u32 %v6067, 30
  %v6069 = vshll.u32 %v6068, 30
  %v6070 = vsub.s32 %v6066, %v6069
  %vm6071 = vcmp.lt.s32.totalorder %v6070, 0
  %v6072 = vsub.s32 0, %v6070
  %v6073 = vsel %vm6071, %v6072, %v6070
  %v6074 = vclz %v6073
  %v6075 = vsub.s32 %v6074, 2
  %vm6076 = vcmp.gt.s32.totalorder 0, %v6075
  %v6077 = vsel %vm6076, 0, %v6075
  %v6078 = vsub.s32 32, %v6077
  %v6079 = vshll.u32 %v6070, %v6077
  %v6080 = vshrl.u32 %v6062, %v6078
  %v6081 = vor.u32 %v6079, %v6080
  %v6082 = vsub.s32 4294967266, %v6077
  %v6083 = vadd.s32 %v6082, 127
  %v6084 = vshll.u32 %v6083, 23
  %v6085 = vor.u32 4788187, %v6084
  %v6086 = vand.u32 2147483647, %v6085
  %v6088 = vcvt.s32.f32 %v6081
  %v6089 = vmul.f32 %v6088, %v6086
  %v6090 = vxor.u32 %v6089, 2147483648
  %v6091 = vsel %vm6008, %v6090, %v6089
  %v6092 = vsub.s32 4, %v6068
  %v6093 = vsel %vm6008, %v6092, %v6068
  %v6094 = vsel %vm6007, %v536, %v6091
  %v6095 = vsel %vm6007, 0, %v6093
  %v6096 = vcosq.f32.pop %v6094
  %v6097 = vsinq.f32.pop %v6094
  %vm6098 = vweird.f32 %v536
  %v6099 = vand.u32 %v6095, 3
  %vm6100 = vcmp.lt.s32.totalorder %v6099, 2
  %vm6101 = vcmp.eq.s32.totalorder %v6099, 0
  %v6102 = vxor.u32 %v6097, 2147483648
  %v6103 = vsel %vm6101, %v6096, %v6102
  %vm6104 = vcmp.eq.s32.totalorder %v6099, 2
  %v6105 = vxor.u32 %v6096, 2147483648
  %v6106 = vsel %vm6104, %v6105, %v6097
  %v6107 = vsel %vm6100, %v6103, %v6106
  %v6108 = vsel %vm6098, nan, %v6107
  %v6109 = vand.u32 2147483647, %v537
  %vm6110 = vcmp.le.f32.partialorder %v6109, 0.7853982
  %vm6111 = vcmp.lt.s32.totalorder %v537, 0
  %v6112 = vand.u32 %v537, 2139095040
  %v6113 = vshrl.u32 %v6112, 23
  %v6114 = vsub.s32 %v6113, 127
  %v6115 = vand.u32 2147483647, %v537
  %v6116 = vand.u32 %v6115, 8388607
  %v6117 = vor.u32 %v6116, 8388608
  %v6118 = vsub.s32 0, %v6117
  %v6119 = vadd.s32 %v6114, 1
  %vm6120 = vcmp.gt.s32.totalorder %v6119, 0
  %v6121 = vsel %vm6120, %v6119, 0
  %v6122 = vshrl.u32 %v6121, 5
  %v6123 = vand.u32 %v6121, 31
  %v6124 = vsub.s32 32, %v6123
  %v6125 = vshrl.u32 683565275, %v6124
  %v6126 = vshll.u32 683565275, %v6123
  %v6127 = vshrl.u32 2475754826, %v6124
  %v6128 = vor.u32 %v6126, %v6127
  %v6129 = vshll.u32 2475754826, %v6123
  %v6130 = vshrl.u32 2131351028, %v6124
  %v6131 = vor.u32 %v6129, %v6130
  %v6132 = vshll.u32 2131351028, %v6123
  %v6133 = vshrl.u32 2102212464, %v6124
  %v6134 = vor.u32 %v6132, %v6133
  %v6135 = vshll.u32 2102212464, %v6123
  %v6136 = vshrl.u32 920167782, %v6124
  %v6137 = vor.u32 %v6135, %v6136
  %v6138 = vshll.u32 920167782, %v6123
  %v6139 = vshrl.u32 1326507024, %v6124
  %v6140 = vor.u32 %v6138, %v6139
  %vm6141 = vcmp.lt.s32.totalorder %v6122, 1
  %vm6142 = vcmp.lt.s32.totalorder %v6122, 2
  %vm6143 = vcmp.lt.s32.totalorder %v6122, 3
  %vm6144 = vcmp.lt.s32.totalorder %v6122, 4
  %v6145 = vsel %vm6141, %v6125, %v6128
  %v6146 = vsel %vm6144, %v6134, 2102212464
  %v6147 = vsel %vm6143, %v6131, %v6146
  %v6148 = vsel %vm6142, %v6145, %v6147
  %v6149 = vsel %vm6141, %v6128, %v6131
  %v6150 = vsel %vm6144, %v6137, 920167782
  %v6151 = vsel %vm6143, %v6134, %v6150
  %v6152 = vsel %vm6142, %v6149, %v6151
  %v6153 = vsel %vm6141, %v6131, %v6134
  %v6154 = vsel %vm6144, %v6140, 1326507024
  %v6155 = vsel %vm6143, %v6137, %v6154
  %v6156 = vsel %vm6142, %v6153, %v6155
  %v6157 = vshll.u32 %v6117, 8
  %v6158 = vmul.u32.u64.compose %v6157, %v6156
  %v6159 = vextract.low.u32 %v6158
  %v6160 = vextract.high.u32 %v6158
  %v6161 = vmul.u32.u64.compose %v6157, %v6152
  %v6162 = vextract.low.u32 %v6161
  %v6163 = vextract.high.u32 %v6161
  %v6164 = vmul.u32 %v6157, %v6148
  %v6165 = vadd.s32 %v6160, %v6162
  %vm6166 = vc.u32 %v6160, %v6162
  %v6167 = vadd.s32 %v6163, 1
  %v6168 = vsel %vm6166, %v6167, %v6163
  %v6169 = vadd.s32 %v6164, %v6168
  %v6170 = vadd.s32 %v6169, 536870912
  %v6171 = vshrl.u32 %v6170, 30
  %v6172 = vshll.u32 %v6171, 30
  %v6173 = vsub.s32 %v6169, %v6172
  %vm6174 = vcmp.lt.s32.totalorder %v6173, 0
  %v6175 = vsub.s32 0, %v6173
  %v6176 = vsel %vm6174, %v6175, %v6173
  %v6177 = vclz %v6176
  %v6178 = vsub.s32 %v6177, 2
  %vm6179 = vcmp.gt.s32.totalorder 0, %v6178
  %v6180 = vsel %vm6179, 0, %v6178
  %v6181 = vsub.s32 32, %v6180
  %v6182 = vshll.u32 %v6173, %v6180
  %v6183 = vshrl.u32 %v6165, %v6181
  %v6184 = vor.u32 %v6182, %v6183
  %v6185 = vsub.s32 4294967266, %v6180
  %v6186 = vadd.s32 %v6185, 127
  %v6187 = vshll.u32 %v6186, 23
  %v6188 = vor.u32 4788187, %v6187
  %v6189 = vand.u32 2147483647, %v6188
  %v6191 = vcvt.s32.f32 %v6184
  %v6192 = vmul.f32 %v6191, %v6189
  %v6193 = vxor.u32 %v6192, 2147483648
  %v6194 = vsel %vm6111, %v6193, %v6192
  %v6195 = vsub.s32 4, %v6171
  %v6196 = vsel %vm6111, %v6195, %v6171
  %v6197 = vsel %vm6110, %v537, %v6194
  %v6198 = vsel %vm6110, 0, %v6196
  %v6199 = vcosq.f32.pop %v6197
  %v6200 = vsinq.f32.pop %v6197
  %vm6201 = vweird.f32 %v537
  %v6202 = vand.u32 %v6198, 3
  %vm6203 = vcmp.lt.s32.totalorder %v6202, 2
  %vm6204 = vcmp.eq.s32.totalorder %v6202, 0
  %v6205 = vxor.u32 %v6200, 2147483648
  %v6206 = vsel %vm6204, %v6199, %v6205
  %vm6207 = vcmp.eq.s32.totalorder %v6202, 2
  %v6208 = vxor.u32 %v6199, 2147483648
  %v6209 = vsel %vm6207, %v6208, %v6200
  %v6210 = vsel %vm6203, %v6206, %v6209
  %v6211 = vsel %vm6201, nan, %v6210
  %v6212 = vand.u32 2147483647, %v538
  %vm6213 = vcmp.le.f32.partialorder %v6212, 0.7853982
  %vm6214 = vcmp.lt.s32.totalorder %v538, 0
  %v6215 = vand.u32 %v538, 2139095040
  %v6216 = vshrl.u32 %v6215, 23
  %v6217 = vsub.s32 %v6216, 127
  %v6218 = vand.u32 2147483647, %v538
  %v6219 = vand.u32 %v6218, 8388607
  %v6220 = vor.u32 %v6219, 8388608
  %v6221 = vsub.s32 0, %v6220
  %v6222 = vadd.s32 %v6217, 1
  %vm6223 = vcmp.gt.s32.totalorder %v6222, 0
  %v6224 = vsel %vm6223, %v6222, 0
  %v6225 = vshrl.u32 %v6224, 5
  %v6226 = vand.u32 %v6224, 31
  %v6227 = vsub.s32 32, %v6226
  %v6228 = vshrl.u32 683565275, %v6227
  %v6229 = vshll.u32 683565275, %v6226
  %v6230 = vshrl.u32 2475754826, %v6227
  %v6231 = vor.u32 %v6229, %v6230
  %v6232 = vshll.u32 2475754826, %v6226
  %v6233 = vshrl.u32 2131351028, %v6227
  %v6234 = vor.u32 %v6232, %v6233
  %v6235 = vshll.u32 2131351028, %v6226
  %v6236 = vshrl.u32 2102212464, %v6227
  %v6237 = vor.u32 %v6235, %v6236
  %v6238 = vshll.u32 2102212464, %v6226
  %v6239 = vshrl.u32 920167782, %v6227
  %v6240 = vor.u32 %v6238, %v6239
  %v6241 = vshll.u32 920167782, %v6226
  %v6242 = vshrl.u32 1326507024, %v6227
  %v6243 = vor.u32 %v6241, %v6242
  %vm6244 = vcmp.lt.s32.totalorder %v6225, 1
  %vm6245 = vcmp.lt.s32.totalorder %v6225, 2
  %vm6246 = vcmp.lt.s32.totalorder %v6225, 3
  %vm6247 = vcmp.lt.s32.totalorder %v6225, 4
  %v6248 = vsel %vm6244, %v6228, %v6231
  %v6249 = vsel %vm6247, %v6237, 2102212464
  %v6250 = vsel %vm6246, %v6234, %v6249
  %v6251 = vsel %vm6245, %v6248, %v6250
  %v6252 = vsel %vm6244, %v6231, %v6234
  %v6253 = vsel %vm6247, %v6240, 920167782
  %v6254 = vsel %vm6246, %v6237, %v6253
  %v6255 = vsel %vm6245, %v6252, %v6254
  %v6256 = vsel %vm6244, %v6234, %v6237
  %v6257 = vsel %vm6247, %v6243, 1326507024
  %v6258 = vsel %vm6246, %v6240, %v6257
  %v6259 = vsel %vm6245, %v6256, %v6258
  %v6260 = vshll.u32 %v6220, 8
  %v6261 = vmul.u32.u64.compose %v6260, %v6259
  %v6262 = vextract.low.u32 %v6261
  %v6263 = vextract.high.u32 %v6261
  %v6264 = vmul.u32.u64.compose %v6260, %v6255
  %v6265 = vextract.low.u32 %v6264
  %v6266 = vextract.high.u32 %v6264
  %v6267 = vmul.u32 %v6260, %v6251
  %v6268 = vadd.s32 %v6263, %v6265
  %vm6269 = vc.u32 %v6263, %v6265
  %v6270 = vadd.s32 %v6266, 1
  %v6271 = vsel %vm6269, %v6270, %v6266
  %v6272 = vadd.s32 %v6267, %v6271
  %v6273 = vadd.s32 %v6272, 536870912
  %v6274 = vshrl.u32 %v6273, 30
  %v6275 = vshll.u32 %v6274, 30
  %v6276 = vsub.s32 %v6272, %v6275
  %vm6277 = vcmp.lt.s32.totalorder %v6276, 0
  %v6278 = vsub.s32 0, %v6276
  %v6279 = vsel %vm6277, %v6278, %v6276
  %v6280 = vclz %v6279
  %v6281 = vsub.s32 %v6280, 2
  %vm6282 = vcmp.gt.s32.totalorder 0, %v6281
  %v6283 = vsel %vm6282, 0, %v6281
  %v6284 = vsub.s32 32, %v6283
  %v6285 = vshll.u32 %v6276, %v6283
  %v6286 = vshrl.u32 %v6268, %v6284
  %v6287 = vor.u32 %v6285, %v6286
  %v6288 = vsub.s32 4294967266, %v6283
  %v6289 = vadd.s32 %v6288, 127
  %v6290 = vshll.u32 %v6289, 23
  %v6291 = vor.u32 4788187, %v6290
  %v6292 = vand.u32 2147483647, %v6291
  %v6294 = vcvt.s32.f32 %v6287
  %v6295 = vmul.f32 %v6294, %v6292
  %v6296 = vxor.u32 %v6295, 2147483648
  %v6297 = vsel %vm6214, %v6296, %v6295
  %v6298 = vsub.s32 4, %v6274
  %v6299 = vsel %vm6214, %v6298, %v6274
  %v6300 = vsel %vm6213, %v538, %v6297
  %v6301 = vsel %vm6213, 0, %v6299
  %v6302 = vcosq.f32.pop %v6300
  %v6303 = vsinq.f32.pop %v6300
  %vm6304 = vweird.f32 %v538
  %v6305 = vand.u32 %v6301, 3
  %vm6306 = vcmp.lt.s32.totalorder %v6305, 2
  %vm6307 = vcmp.eq.s32.totalorder %v6305, 0
  %v6308 = vxor.u32 %v6303, 2147483648
  %v6309 = vsel %vm6307, %v6302, %v6308
  %vm6310 = vcmp.eq.s32.totalorder %v6305, 2
  %v6311 = vxor.u32 %v6302, 2147483648
  %v6312 = vsel %vm6310, %v6311, %v6303
  %v6313 = vsel %vm6306, %v6309, %v6312
  %v6314 = vsel %vm6304, nan, %v6313
  %v6315 = vand.u32 2147483647, %v539
  %vm6316 = vcmp.le.f32.partialorder %v6315, 0.7853982
  %vm6317 = vcmp.lt.s32.totalorder %v539, 0
  %v6318 = vand.u32 %v539, 2139095040
  %v6319 = vshrl.u32 %v6318, 23
  %v6320 = vsub.s32 %v6319, 127
  %v6321 = vand.u32 2147483647, %v539
  %v6322 = vand.u32 %v6321, 8388607
  %v6323 = vor.u32 %v6322, 8388608
  %v6324 = vsub.s32 0, %v6323
  %v6325 = vadd.s32 %v6320, 1
  %vm6326 = vcmp.gt.s32.totalorder %v6325, 0
  %v6327 = vsel %vm6326, %v6325, 0
  %v6328 = vshrl.u32 %v6327, 5
  %v6329 = vand.u32 %v6327, 31
  %v6330 = vsub.s32 32, %v6329
  %v6331 = vshrl.u32 683565275, %v6330
  %v6332 = vshll.u32 683565275, %v6329
  %v6333 = vshrl.u32 2475754826, %v6330
  %v6334 = vor.u32 %v6332, %v6333
  %v6335 = vshll.u32 2475754826, %v6329
  %v6336 = vshrl.u32 2131351028, %v6330
  %v6337 = vor.u32 %v6335, %v6336
  %v6338 = vshll.u32 2131351028, %v6329
  %v6339 = vshrl.u32 2102212464, %v6330
  %v6340 = vor.u32 %v6338, %v6339
  %v6341 = vshll.u32 2102212464, %v6329
  %v6342 = vshrl.u32 920167782, %v6330
  %v6343 = vor.u32 %v6341, %v6342
  %v6344 = vshll.u32 920167782, %v6329
  %v6345 = vshrl.u32 1326507024, %v6330
  %v6346 = vor.u32 %v6344, %v6345
  %vm6347 = vcmp.lt.s32.totalorder %v6328, 1
  %vm6348 = vcmp.lt.s32.totalorder %v6328, 2
  %vm6349 = vcmp.lt.s32.totalorder %v6328, 3
  %vm6350 = vcmp.lt.s32.totalorder %v6328, 4
  %v6351 = vsel %vm6347, %v6331, %v6334
  %v6352 = vsel %vm6350, %v6340, 2102212464
  %v6353 = vsel %vm6349, %v6337, %v6352
  %v6354 = vsel %vm6348, %v6351, %v6353
  %v6355 = vsel %vm6347, %v6334, %v6337
  %v6356 = vsel %vm6350, %v6343, 920167782
  %v6357 = vsel %vm6349, %v6340, %v6356
  %v6358 = vsel %vm6348, %v6355, %v6357
  %v6359 = vsel %vm6347, %v6337, %v6340
  %v6360 = vsel %vm6350, %v6346, 1326507024
  %v6361 = vsel %vm6349, %v6343, %v6360
  %v6362 = vsel %vm6348, %v6359, %v6361
  %v6363 = vshll.u32 %v6323, 8
  %v6364 = vmul.u32.u64.compose %v6363, %v6362
  %v6365 = vextract.low.u32 %v6364
  %v6366 = vextract.high.u32 %v6364
  %v6367 = vmul.u32.u64.compose %v6363, %v6358
  %v6368 = vextract.low.u32 %v6367
  %v6369 = vextract.high.u32 %v6367
  %v6370 = vmul.u32 %v6363, %v6354
  %v6371 = vadd.s32 %v6366, %v6368
  %vm6372 = vc.u32 %v6366, %v6368
  %v6373 = vadd.s32 %v6369, 1
  %v6374 = vsel %vm6372, %v6373, %v6369
  %v6375 = vadd.s32 %v6370, %v6374
  %v6376 = vadd.s32 %v6375, 536870912
  %v6377 = vshrl.u32 %v6376, 30
  %v6378 = vshll.u32 %v6377, 30
  %v6379 = vsub.s32 %v6375, %v6378
  %vm6380 = vcmp.lt.s32.totalorder %v6379, 0
  %v6381 = vsub.s32 0, %v6379
  %v6382 = vsel %vm6380, %v6381, %v6379
  %v6383 = vclz %v6382
  %v6384 = vsub.s32 %v6383, 2
  %vm6385 = vcmp.gt.s32.totalorder 0, %v6384
  %v6386 = vsel %vm6385, 0, %v6384
  %v6387 = vsub.s32 32, %v6386
  %v6388 = vshll.u32 %v6379, %v6386
  %v6389 = vshrl.u32 %v6371, %v6387
  %v6390 = vor.u32 %v6388, %v6389
  %v6391 = vsub.s32 4294967266, %v6386
  %v6392 = vadd.s32 %v6391, 127
  %v6393 = vshll.u32 %v6392, 23
  %v6394 = vor.u32 4788187, %v6393
  %v6395 = vand.u32 2147483647, %v6394
  %v6397 = vcvt.s32.f32 %v6390
  %v6398 = vmul.f32 %v6397, %v6395
  %v6399 = vxor.u32 %v6398, 2147483648
  %v6400 = vsel %vm6317, %v6399, %v6398
  %v6401 = vsub.s32 4, %v6377
  %v6402 = vsel %vm6317, %v6401, %v6377
  %v6403 = vsel %vm6316, %v539, %v6400
  %v6404 = vsel %vm6316, 0, %v6402
  %v6405 = vcosq.f32.pop %v6403
  %v6406 = vsinq.f32.pop %v6403
  %vm6407 = vweird.f32 %v539
  %v6408 = vand.u32 %v6404, 3
  %vm6409 = vcmp.lt.s32.totalorder %v6408, 2
  %vm6410 = vcmp.eq.s32.totalorder %v6408, 0
  %v6411 = vxor.u32 %v6406, 2147483648
  %v6412 = vsel %vm6410, %v6405, %v6411
  %vm6413 = vcmp.eq.s32.totalorder %v6408, 2
  %v6414 = vxor.u32 %v6405, 2147483648
  %v6415 = vsel %vm6413, %v6414, %v6406
  %v6416 = vsel %vm6409, %v6412, %v6415
  %v6417 = vsel %vm6407, nan, %v6416
  %v6418 = vand.u32 2147483647, %v540
  %vm6419 = vcmp.le.f32.partialorder %v6418, 0.7853982
  %vm6420 = vcmp.lt.s32.totalorder %v540, 0
  %v6421 = vand.u32 %v540, 2139095040
  %v6422 = vshrl.u32 %v6421, 23
  %v6423 = vsub.s32 %v6422, 127
  %v6424 = vand.u32 2147483647, %v540
  %v6425 = vand.u32 %v6424, 8388607
  %v6426 = vor.u32 %v6425, 8388608
  %v6427 = vsub.s32 0, %v6426
  %v6428 = vadd.s32 %v6423, 1
  %vm6429 = vcmp.gt.s32.totalorder %v6428, 0
  %v6430 = vsel %vm6429, %v6428, 0
  %v6431 = vshrl.u32 %v6430, 5
  %v6432 = vand.u32 %v6430, 31
  %v6433 = vsub.s32 32, %v6432
  %v6434 = vshrl.u32 683565275, %v6433
  %v6435 = vshll.u32 683565275, %v6432
  %v6436 = vshrl.u32 2475754826, %v6433
  %v6437 = vor.u32 %v6435, %v6436
  %v6438 = vshll.u32 2475754826, %v6432
  %v6439 = vshrl.u32 2131351028, %v6433
  %v6440 = vor.u32 %v6438, %v6439
  %v6441 = vshll.u32 2131351028, %v6432
  %v6442 = vshrl.u32 2102212464, %v6433
  %v6443 = vor.u32 %v6441, %v6442
  %v6444 = vshll.u32 2102212464, %v6432
  %v6445 = vshrl.u32 920167782, %v6433
  %v6446 = vor.u32 %v6444, %v6445
  %v6447 = vshll.u32 920167782, %v6432
  %v6448 = vshrl.u32 1326507024, %v6433
  %v6449 = vor.u32 %v6447, %v6448
  %vm6450 = vcmp.lt.s32.totalorder %v6431, 1
  %vm6451 = vcmp.lt.s32.totalorder %v6431, 2
  %vm6452 = vcmp.lt.s32.totalorder %v6431, 3
  %vm6453 = vcmp.lt.s32.totalorder %v6431, 4
  %v6454 = vsel %vm6450, %v6434, %v6437
  %v6455 = vsel %vm6453, %v6443, 2102212464
  %v6456 = vsel %vm6452, %v6440, %v6455
  %v6457 = vsel %vm6451, %v6454, %v6456
  %v6458 = vsel %vm6450, %v6437, %v6440
  %v6459 = vsel %vm6453, %v6446, 920167782
  %v6460 = vsel %vm6452, %v6443, %v6459
  %v6461 = vsel %vm6451, %v6458, %v6460
  %v6462 = vsel %vm6450, %v6440, %v6443
  %v6463 = vsel %vm6453, %v6449, 1326507024
  %v6464 = vsel %vm6452, %v6446, %v6463
  %v6465 = vsel %vm6451, %v6462, %v6464
  %v6466 = vshll.u32 %v6426, 8
  %v6467 = vmul.u32.u64.compose %v6466, %v6465
  %v6468 = vextract.low.u32 %v6467
  %v6469 = vextract.high.u32 %v6467
  %v6470 = vmul.u32.u64.compose %v6466, %v6461
  %v6471 = vextract.low.u32 %v6470
  %v6472 = vextract.high.u32 %v6470
  %v6473 = vmul.u32 %v6466, %v6457
  %v6474 = vadd.s32 %v6469, %v6471
  %vm6475 = vc.u32 %v6469, %v6471
  %v6476 = vadd.s32 %v6472, 1
  %v6477 = vsel %vm6475, %v6476, %v6472
  %v6478 = vadd.s32 %v6473, %v6477
  %v6479 = vadd.s32 %v6478, 536870912
  %v6480 = vshrl.u32 %v6479, 30
  %v6481 = vshll.u32 %v6480, 30
  %v6482 = vsub.s32 %v6478, %v6481
  %vm6483 = vcmp.lt.s32.totalorder %v6482, 0
  %v6484 = vsub.s32 0, %v6482
  %v6485 = vsel %vm6483, %v6484, %v6482
  %v6486 = vclz %v6485
  %v6487 = vsub.s32 %v6486, 2
  %vm6488 = vcmp.gt.s32.totalorder 0, %v6487
  %v6489 = vsel %vm6488, 0, %v6487
  %v6490 = vsub.s32 32, %v6489
  %v6491 = vshll.u32 %v6482, %v6489
  %v6492 = vshrl.u32 %v6474, %v6490
  %v6493 = vor.u32 %v6491, %v6492
  %v6494 = vsub.s32 4294967266, %v6489
  %v6495 = vadd.s32 %v6494, 127
  %v6496 = vshll.u32 %v6495, 23
  %v6497 = vor.u32 4788187, %v6496
  %v6498 = vand.u32 2147483647, %v6497
  %v6500 = vcvt.s32.f32 %v6493
  %v6501 = vmul.f32 %v6500, %v6498
  %v6502 = vxor.u32 %v6501, 2147483648
  %v6503 = vsel %vm6420, %v6502, %v6501
  %v6504 = vsub.s32 4, %v6480
  %v6505 = vsel %vm6420, %v6504, %v6480
  %v6506 = vsel %vm6419, %v540, %v6503
  %v6507 = vsel %vm6419, 0, %v6505
  %v6508 = vcosq.f32.pop %v6506
  %v6509 = vsinq.f32.pop %v6506
  %vm6510 = vweird.f32 %v540
  %v6511 = vand.u32 %v6507, 3
  %vm6512 = vcmp.lt.s32.totalorder %v6511, 2
  %vm6513 = vcmp.eq.s32.totalorder %v6511, 0
  %v6514 = vxor.u32 %v6509, 2147483648
  %v6515 = vsel %vm6513, %v6508, %v6514
  %vm6516 = vcmp.eq.s32.totalorder %v6511, 2
  %v6517 = vxor.u32 %v6508, 2147483648
  %v6518 = vsel %vm6516, %v6517, %v6509
  %v6519 = vsel %vm6512, %v6515, %v6518
  %v6520 = vsel %vm6510, nan, %v6519
  %v6521 = vand.u32 2147483647, %v541
  %vm6522 = vcmp.le.f32.partialorder %v6521, 0.7853982
  %vm6523 = vcmp.lt.s32.totalorder %v541, 0
  %v6524 = vand.u32 %v541, 2139095040
  %v6525 = vshrl.u32 %v6524, 23
  %v6526 = vsub.s32 %v6525, 127
  %v6527 = vand.u32 2147483647, %v541
  %v6528 = vand.u32 %v6527, 8388607
  %v6529 = vor.u32 %v6528, 8388608
  %v6530 = vsub.s32 0, %v6529
  %v6531 = vadd.s32 %v6526, 1
  %vm6532 = vcmp.gt.s32.totalorder %v6531, 0
  %v6533 = vsel %vm6532, %v6531, 0
  %v6534 = vshrl.u32 %v6533, 5
  %v6535 = vand.u32 %v6533, 31
  %v6536 = vsub.s32 32, %v6535
  %v6537 = vshrl.u32 683565275, %v6536
  %v6538 = vshll.u32 683565275, %v6535
  %v6539 = vshrl.u32 2475754826, %v6536
  %v6540 = vor.u32 %v6538, %v6539
  %v6541 = vshll.u32 2475754826, %v6535
  %v6542 = vshrl.u32 2131351028, %v6536
  %v6543 = vor.u32 %v6541, %v6542
  %v6544 = vshll.u32 2131351028, %v6535
  %v6545 = vshrl.u32 2102212464, %v6536
  %v6546 = vor.u32 %v6544, %v6545
  %v6547 = vshll.u32 2102212464, %v6535
  %v6548 = vshrl.u32 920167782, %v6536
  %v6549 = vor.u32 %v6547, %v6548
  %v6550 = vshll.u32 920167782, %v6535
  %v6551 = vshrl.u32 1326507024, %v6536
  %v6552 = vor.u32 %v6550, %v6551
  %vm6553 = vcmp.lt.s32.totalorder %v6534, 1
  %vm6554 = vcmp.lt.s32.totalorder %v6534, 2
  %vm6555 = vcmp.lt.s32.totalorder %v6534, 3
  %vm6556 = vcmp.lt.s32.totalorder %v6534, 4
  %v6557 = vsel %vm6553, %v6537, %v6540
  %v6558 = vsel %vm6556, %v6546, 2102212464
  %v6559 = vsel %vm6555, %v6543, %v6558
  %v6560 = vsel %vm6554, %v6557, %v6559
  %v6561 = vsel %vm6553, %v6540, %v6543
  %v6562 = vsel %vm6556, %v6549, 920167782
  %v6563 = vsel %vm6555, %v6546, %v6562
  %v6564 = vsel %vm6554, %v6561, %v6563
  %v6565 = vsel %vm6553, %v6543, %v6546
  %v6566 = vsel %vm6556, %v6552, 1326507024
  %v6567 = vsel %vm6555, %v6549, %v6566
  %v6568 = vsel %vm6554, %v6565, %v6567
  %v6569 = vshll.u32 %v6529, 8
  %v6570 = vmul.u32.u64.compose %v6569, %v6568
  %v6571 = vextract.low.u32 %v6570
  %v6572 = vextract.high.u32 %v6570
  %v6573 = vmul.u32.u64.compose %v6569, %v6564
  %v6574 = vextract.low.u32 %v6573
  %v6575 = vextract.high.u32 %v6573
  %v6576 = vmul.u32 %v6569, %v6560
  %v6577 = vadd.s32 %v6572, %v6574
  %vm6578 = vc.u32 %v6572, %v6574
  %v6579 = vadd.s32 %v6575, 1
  %v6580 = vsel %vm6578, %v6579, %v6575
  %v6581 = vadd.s32 %v6576, %v6580
  %v6582 = vadd.s32 %v6581, 536870912
  %v6583 = vshrl.u32 %v6582, 30
  %v6584 = vshll.u32 %v6583, 30
  %v6585 = vsub.s32 %v6581, %v6584
  %vm6586 = vcmp.lt.s32.totalorder %v6585, 0
  %v6587 = vsub.s32 0, %v6585
  %v6588 = vsel %vm6586, %v6587, %v6585
  %v6589 = vclz %v6588
  %v6590 = vsub.s32 %v6589, 2
  %vm6591 = vcmp.gt.s32.totalorder 0, %v6590
  %v6592 = vsel %vm6591, 0, %v6590
  %v6593 = vsub.s32 32, %v6592
  %v6594 = vshll.u32 %v6585, %v6592
  %v6595 = vshrl.u32 %v6577, %v6593
  %v6596 = vor.u32 %v6594, %v6595
  %v6597 = vsub.s32 4294967266, %v6592
  %v6598 = vadd.s32 %v6597, 127
  %v6599 = vshll.u32 %v6598, 23
  %v6600 = vor.u32 4788187, %v6599
  %v6601 = vand.u32 2147483647, %v6600
  %v6603 = vcvt.s32.f32 %v6596
  %v6604 = vmul.f32 %v6603, %v6601
  %v6605 = vxor.u32 %v6604, 2147483648
  %v6606 = vsel %vm6523, %v6605, %v6604
  %v6607 = vsub.s32 4, %v6583
  %v6608 = vsel %vm6523, %v6607, %v6583
  %v6609 = vsel %vm6522, %v541, %v6606
  %v6610 = vsel %vm6522, 0, %v6608
  %v6611 = vcosq.f32.pop %v6609
  %v6612 = vsinq.f32.pop %v6609
  %vm6613 = vweird.f32 %v541
  %v6614 = vand.u32 %v6610, 3
  %vm6615 = vcmp.lt.s32.totalorder %v6614, 2
  %vm6616 = vcmp.eq.s32.totalorder %v6614, 0
  %v6617 = vxor.u32 %v6612, 2147483648
  %v6618 = vsel %vm6616, %v6611, %v6617
  %vm6619 = vcmp.eq.s32.totalorder %v6614, 2
  %v6620 = vxor.u32 %v6611, 2147483648
  %v6621 = vsel %vm6619, %v6620, %v6612
  %v6622 = vsel %vm6615, %v6618, %v6621
  %v6623 = vsel %vm6613, nan, %v6622
  %v6624 = vand.u32 2147483647, %v542
  %vm6625 = vcmp.le.f32.partialorder %v6624, 0.7853982
  %vm6626 = vcmp.lt.s32.totalorder %v542, 0
  %v6627 = vand.u32 %v542, 2139095040
  %v6628 = vshrl.u32 %v6627, 23
  %v6629 = vsub.s32 %v6628, 127
  %v6630 = vand.u32 2147483647, %v542
  %v6631 = vand.u32 %v6630, 8388607
  %v6632 = vor.u32 %v6631, 8388608
  %v6633 = vsub.s32 0, %v6632
  %v6634 = vadd.s32 %v6629, 1
  %vm6635 = vcmp.gt.s32.totalorder %v6634, 0
  %v6636 = vsel %vm6635, %v6634, 0
  %v6637 = vshrl.u32 %v6636, 5
  %v6638 = vand.u32 %v6636, 31
  %v6639 = vsub.s32 32, %v6638
  %v6640 = vshrl.u32 683565275, %v6639
  %v6641 = vshll.u32 683565275, %v6638
  %v6642 = vshrl.u32 2475754826, %v6639
  %v6643 = vor.u32 %v6641, %v6642
  %v6644 = vshll.u32 2475754826, %v6638
  %v6645 = vshrl.u32 2131351028, %v6639
  %v6646 = vor.u32 %v6644, %v6645
  %v6647 = vshll.u32 2131351028, %v6638
  %v6648 = vshrl.u32 2102212464, %v6639
  %v6649 = vor.u32 %v6647, %v6648
  %v6650 = vshll.u32 2102212464, %v6638
  %v6651 = vshrl.u32 920167782, %v6639
  %v6652 = vor.u32 %v6650, %v6651
  %v6653 = vshll.u32 920167782, %v6638
  %v6654 = vshrl.u32 1326507024, %v6639
  %v6655 = vor.u32 %v6653, %v6654
  %vm6656 = vcmp.lt.s32.totalorder %v6637, 1
  %vm6657 = vcmp.lt.s32.totalorder %v6637, 2
  %vm6658 = vcmp.lt.s32.totalorder %v6637, 3
  %vm6659 = vcmp.lt.s32.totalorder %v6637, 4
  %v6660 = vsel %vm6656, %v6640, %v6643
  %v6661 = vsel %vm6659, %v6649, 2102212464
  %v6662 = vsel %vm6658, %v6646, %v6661
  %v6663 = vsel %vm6657, %v6660, %v6662
  %v6664 = vsel %vm6656, %v6643, %v6646
  %v6665 = vsel %vm6659, %v6652, 920167782
  %v6666 = vsel %vm6658, %v6649, %v6665
  %v6667 = vsel %vm6657, %v6664, %v6666
  %v6668 = vsel %vm6656, %v6646, %v6649
  %v6669 = vsel %vm6659, %v6655, 1326507024
  %v6670 = vsel %vm6658, %v6652, %v6669
  %v6671 = vsel %vm6657, %v6668, %v6670
  %v6672 = vshll.u32 %v6632, 8
  %v6673 = vmul.u32.u64.compose %v6672, %v6671
  %v6674 = vextract.low.u32 %v6673
  %v6675 = vextract.high.u32 %v6673
  %v6676 = vmul.u32.u64.compose %v6672, %v6667
  %v6677 = vextract.low.u32 %v6676
  %v6678 = vextract.high.u32 %v6676
  %v6679 = vmul.u32 %v6672, %v6663
  %v6680 = vadd.s32 %v6675, %v6677
  %vm6681 = vc.u32 %v6675, %v6677
  %v6682 = vadd.s32 %v6678, 1
  %v6683 = vsel %vm6681, %v6682, %v6678
  %v6684 = vadd.s32 %v6679, %v6683
  %v6685 = vadd.s32 %v6684, 536870912
  %v6686 = vshrl.u32 %v6685, 30
  %v6687 = vshll.u32 %v6686, 30
  %v6688 = vsub.s32 %v6684, %v6687
  %vm6689 = vcmp.lt.s32.totalorder %v6688, 0
  %v6690 = vsub.s32 0, %v6688
  %v6691 = vsel %vm6689, %v6690, %v6688
  %v6692 = vclz %v6691
  %v6693 = vsub.s32 %v6692, 2
  %vm6694 = vcmp.gt.s32.totalorder 0, %v6693
  %v6695 = vsel %vm6694, 0, %v6693
  %v6696 = vsub.s32 32, %v6695
  %v6697 = vshll.u32 %v6688, %v6695
  %v6698 = vshrl.u32 %v6680, %v6696
  %v6699 = vor.u32 %v6697, %v6698
  %v6700 = vsub.s32 4294967266, %v6695
  %v6701 = vadd.s32 %v6700, 127
  %v6702 = vshll.u32 %v6701, 23
  %v6703 = vor.u32 4788187, %v6702
  %v6704 = vand.u32 2147483647, %v6703
  %v6706 = vcvt.s32.f32 %v6699
  %v6707 = vmul.f32 %v6706, %v6704
  %v6708 = vxor.u32 %v6707, 2147483648
  %v6709 = vsel %vm6626, %v6708, %v6707
  %v6710 = vsub.s32 4, %v6686
  %v6711 = vsel %vm6626, %v6710, %v6686
  %v6712 = vsel %vm6625, %v542, %v6709
  %v6713 = vsel %vm6625, 0, %v6711
  %v6714 = vcosq.f32.pop %v6712
  %v6715 = vsinq.f32.pop %v6712
  %vm6716 = vweird.f32 %v542
  %v6717 = vand.u32 %v6713, 3
  %vm6718 = vcmp.lt.s32.totalorder %v6717, 2
  %vm6719 = vcmp.eq.s32.totalorder %v6717, 0
  %v6720 = vxor.u32 %v6715, 2147483648
  %v6721 = vsel %vm6719, %v6714, %v6720
  %vm6722 = vcmp.eq.s32.totalorder %v6717, 2
  %v6723 = vxor.u32 %v6714, 2147483648
  %v6724 = vsel %vm6722, %v6723, %v6715
  %v6725 = vsel %vm6718, %v6721, %v6724
  %v6726 = vsel %vm6716, nan, %v6725
  %v6727 = vand.u32 2147483647, %v543
  %vm6728 = vcmp.le.f32.partialorder %v6727, 0.7853982
  %vm6729 = vcmp.lt.s32.totalorder %v543, 0
  %v6730 = vand.u32 %v543, 2139095040
  %v6731 = vshrl.u32 %v6730, 23
  %v6732 = vsub.s32 %v6731, 127
  %v6733 = vand.u32 2147483647, %v543
  %v6734 = vand.u32 %v6733, 8388607
  %v6735 = vor.u32 %v6734, 8388608
  %v6736 = vsub.s32 0, %v6735
  %v6737 = vadd.s32 %v6732, 1
  %vm6738 = vcmp.gt.s32.totalorder %v6737, 0
  %v6739 = vsel %vm6738, %v6737, 0
  %v6740 = vshrl.u32 %v6739, 5
  %v6741 = vand.u32 %v6739, 31
  %v6742 = vsub.s32 32, %v6741
  %v6743 = vshrl.u32 683565275, %v6742
  %v6744 = vshll.u32 683565275, %v6741
  %v6745 = vshrl.u32 2475754826, %v6742
  %v6746 = vor.u32 %v6744, %v6745
  %v6747 = vshll.u32 2475754826, %v6741
  %v6748 = vshrl.u32 2131351028, %v6742
  %v6749 = vor.u32 %v6747, %v6748
  %v6750 = vshll.u32 2131351028, %v6741
  %v6751 = vshrl.u32 2102212464, %v6742
  %v6752 = vor.u32 %v6750, %v6751
  %v6753 = vshll.u32 2102212464, %v6741
  %v6754 = vshrl.u32 920167782, %v6742
  %v6755 = vor.u32 %v6753, %v6754
  %v6756 = vshll.u32 920167782, %v6741
  %v6757 = vshrl.u32 1326507024, %v6742
  %v6758 = vor.u32 %v6756, %v6757
  %vm6759 = vcmp.lt.s32.totalorder %v6740, 1
  %vm6760 = vcmp.lt.s32.totalorder %v6740, 2
  %vm6761 = vcmp.lt.s32.totalorder %v6740, 3
  %vm6762 = vcmp.lt.s32.totalorder %v6740, 4
  %v6763 = vsel %vm6759, %v6743, %v6746
  %v6764 = vsel %vm6762, %v6752, 2102212464
  %v6765 = vsel %vm6761, %v6749, %v6764
  %v6766 = vsel %vm6760, %v6763, %v6765
  %v6767 = vsel %vm6759, %v6746, %v6749
  %v6768 = vsel %vm6762, %v6755, 920167782
  %v6769 = vsel %vm6761, %v6752, %v6768
  %v6770 = vsel %vm6760, %v6767, %v6769
  %v6771 = vsel %vm6759, %v6749, %v6752
  %v6772 = vsel %vm6762, %v6758, 1326507024
  %v6773 = vsel %vm6761, %v6755, %v6772
  %v6774 = vsel %vm6760, %v6771, %v6773
  %v6775 = vshll.u32 %v6735, 8
  %v6776 = vmul.u32.u64.compose %v6775, %v6774
  %v6777 = vextract.low.u32 %v6776
  %v6778 = vextract.high.u32 %v6776
  %v6779 = vmul.u32.u64.compose %v6775, %v6770
  %v6780 = vextract.low.u32 %v6779
  %v6781 = vextract.high.u32 %v6779
  %v6782 = vmul.u32 %v6775, %v6766
  %v6783 = vadd.s32 %v6778, %v6780
  %vm6784 = vc.u32 %v6778, %v6780
  %v6785 = vadd.s32 %v6781, 1
  %v6786 = vsel %vm6784, %v6785, %v6781
  %v6787 = vadd.s32 %v6782, %v6786
  %v6788 = vadd.s32 %v6787, 536870912
  %v6789 = vshrl.u32 %v6788, 30
  %v6790 = vshll.u32 %v6789, 30
  %v6791 = vsub.s32 %v6787, %v6790
  %vm6792 = vcmp.lt.s32.totalorder %v6791, 0
  %v6793 = vsub.s32 0, %v6791
  %v6794 = vsel %vm6792, %v6793, %v6791
  %v6795 = vclz %v6794
  %v6796 = vsub.s32 %v6795, 2
  %vm6797 = vcmp.gt.s32.totalorder 0, %v6796
  %v6798 = vsel %vm6797, 0, %v6796
  %v6799 = vsub.s32 32, %v6798
  %v6800 = vshll.u32 %v6791, %v6798
  %v6801 = vshrl.u32 %v6783, %v6799
  %v6802 = vor.u32 %v6800, %v6801
  %v6803 = vsub.s32 4294967266, %v6798
  %v6804 = vadd.s32 %v6803, 127
  %v6805 = vshll.u32 %v6804, 23
  %v6806 = vor.u32 4788187, %v6805
  %v6807 = vand.u32 2147483647, %v6806
  %v6809 = vcvt.s32.f32 %v6802
  %v6810 = vmul.f32 %v6809, %v6807
  %v6811 = vxor.u32 %v6810, 2147483648
  %v6812 = vsel %vm6729, %v6811, %v6810
  %v6813 = vsub.s32 4, %v6789
  %v6814 = vsel %vm6729, %v6813, %v6789
  %v6815 = vsel %vm6728, %v543, %v6812
  %v6816 = vsel %vm6728, 0, %v6814
  %v6817 = vcosq.f32.pop %v6815
  %v6818 = vsinq.f32.pop %v6815
  %vm6819 = vweird.f32 %v543
  %v6820 = vand.u32 %v6816, 3
  %vm6821 = vcmp.lt.s32.totalorder %v6820, 2
  %vm6822 = vcmp.eq.s32.totalorder %v6820, 0
  %v6823 = vxor.u32 %v6818, 2147483648
  %v6824 = vsel %vm6822, %v6817, %v6823
  %vm6825 = vcmp.eq.s32.totalorder %v6820, 2
  %v6826 = vxor.u32 %v6817, 2147483648
  %v6827 = vsel %vm6825, %v6826, %v6818
  %v6828 = vsel %vm6821, %v6824, %v6827
  %v6829 = vsel %vm6819, nan, %v6828
  %v6830 = vand.u32 2147483647, %v544
  %vm6831 = vcmp.le.f32.partialorder %v6830, 0.7853982
  %vm6832 = vcmp.lt.s32.totalorder %v544, 0
  %v6833 = vand.u32 %v544, 2139095040
  %v6834 = vshrl.u32 %v6833, 23
  %v6835 = vsub.s32 %v6834, 127
  %v6836 = vand.u32 2147483647, %v544
  %v6837 = vand.u32 %v6836, 8388607
  %v6838 = vor.u32 %v6837, 8388608
  %v6839 = vsub.s32 0, %v6838
  %v6840 = vadd.s32 %v6835, 1
  %vm6841 = vcmp.gt.s32.totalorder %v6840, 0
  %v6842 = vsel %vm6841, %v6840, 0
  %v6843 = vshrl.u32 %v6842, 5
  %v6844 = vand.u32 %v6842, 31
  %v6845 = vsub.s32 32, %v6844
  %v6846 = vshrl.u32 683565275, %v6845
  %v6847 = vshll.u32 683565275, %v6844
  %v6848 = vshrl.u32 2475754826, %v6845
  %v6849 = vor.u32 %v6847, %v6848
  %v6850 = vshll.u32 2475754826, %v6844
  %v6851 = vshrl.u32 2131351028, %v6845
  %v6852 = vor.u32 %v6850, %v6851
  %v6853 = vshll.u32 2131351028, %v6844
  %v6854 = vshrl.u32 2102212464, %v6845
  %v6855 = vor.u32 %v6853, %v6854
  %v6856 = vshll.u32 2102212464, %v6844
  %v6857 = vshrl.u32 920167782, %v6845
  %v6858 = vor.u32 %v6856, %v6857
  %v6859 = vshll.u32 920167782, %v6844
  %v6860 = vshrl.u32 1326507024, %v6845
  %v6861 = vor.u32 %v6859, %v6860
  %vm6862 = vcmp.lt.s32.totalorder %v6843, 1
  %vm6863 = vcmp.lt.s32.totalorder %v6843, 2
  %vm6864 = vcmp.lt.s32.totalorder %v6843, 3
  %vm6865 = vcmp.lt.s32.totalorder %v6843, 4
  %v6866 = vsel %vm6862, %v6846, %v6849
  %v6867 = vsel %vm6865, %v6855, 2102212464
  %v6868 = vsel %vm6864, %v6852, %v6867
  %v6869 = vsel %vm6863, %v6866, %v6868
  %v6870 = vsel %vm6862, %v6849, %v6852
  %v6871 = vsel %vm6865, %v6858, 920167782
  %v6872 = vsel %vm6864, %v6855, %v6871
  %v6873 = vsel %vm6863, %v6870, %v6872
  %v6874 = vsel %vm6862, %v6852, %v6855
  %v6875 = vsel %vm6865, %v6861, 1326507024
  %v6876 = vsel %vm6864, %v6858, %v6875
  %v6877 = vsel %vm6863, %v6874, %v6876
  %v6878 = vshll.u32 %v6838, 8
  %v6879 = vmul.u32.u64.compose %v6878, %v6877
  %v6880 = vextract.low.u32 %v6879
  %v6881 = vextract.high.u32 %v6879
  %v6882 = vmul.u32.u64.compose %v6878, %v6873
  %v6883 = vextract.low.u32 %v6882
  %v6884 = vextract.high.u32 %v6882
  %v6885 = vmul.u32 %v6878, %v6869
  %v6886 = vadd.s32 %v6881, %v6883
  %vm6887 = vc.u32 %v6881, %v6883
  %v6888 = vadd.s32 %v6884, 1
  %v6889 = vsel %vm6887, %v6888, %v6884
  %v6890 = vadd.s32 %v6885, %v6889
  %v6891 = vadd.s32 %v6890, 536870912
  %v6892 = vshrl.u32 %v6891, 30
  %v6893 = vshll.u32 %v6892, 30
  %v6894 = vsub.s32 %v6890, %v6893
  %vm6895 = vcmp.lt.s32.totalorder %v6894, 0
  %v6896 = vsub.s32 0, %v6894
  %v6897 = vsel %vm6895, %v6896, %v6894
  %v6898 = vclz %v6897
  %v6899 = vsub.s32 %v6898, 2
  %vm6900 = vcmp.gt.s32.totalorder 0, %v6899
  %v6901 = vsel %vm6900, 0, %v6899
  %v6902 = vsub.s32 32, %v6901
  %v6903 = vshll.u32 %v6894, %v6901
  %v6904 = vshrl.u32 %v6886, %v6902
  %v6905 = vor.u32 %v6903, %v6904
  %v6906 = vsub.s32 4294967266, %v6901
  %v6907 = vadd.s32 %v6906, 127
  %v6908 = vshll.u32 %v6907, 23
  %v6909 = vor.u32 4788187, %v6908
  %v6910 = vand.u32 2147483647, %v6909
  %v6912 = vcvt.s32.f32 %v6905
  %v6913 = vmul.f32 %v6912, %v6910
  %v6914 = vxor.u32 %v6913, 2147483648
  %v6915 = vsel %vm6832, %v6914, %v6913
  %v6916 = vsub.s32 4, %v6892
  %v6917 = vsel %vm6832, %v6916, %v6892
  %v6918 = vsel %vm6831, %v544, %v6915
  %v6919 = vsel %vm6831, 0, %v6917
  %v6920 = vcosq.f32.pop %v6918
  %v6921 = vsinq.f32.pop %v6918
  %vm6922 = vweird.f32 %v544
  %v6923 = vand.u32 %v6919, 3
  %vm6924 = vcmp.lt.s32.totalorder %v6923, 2
  %vm6925 = vcmp.eq.s32.totalorder %v6923, 0
  %v6926 = vxor.u32 %v6921, 2147483648
  %v6927 = vsel %vm6925, %v6920, %v6926
  %vm6928 = vcmp.eq.s32.totalorder %v6923, 2
  %v6929 = vxor.u32 %v6920, 2147483648
  %v6930 = vsel %vm6928, %v6929, %v6921
  %v6931 = vsel %vm6924, %v6927, %v6930
  %v6932 = vsel %vm6922, nan, %v6931
  %v6933 = vand.u32 2147483647, %v545
  %vm6934 = vcmp.le.f32.partialorder %v6933, 0.7853982
  %vm6935 = vcmp.lt.s32.totalorder %v545, 0
  %v6936 = vand.u32 %v545, 2139095040
  %v6937 = vshrl.u32 %v6936, 23
  %v6938 = vsub.s32 %v6937, 127
  %v6939 = vand.u32 2147483647, %v545
  %v6940 = vand.u32 %v6939, 8388607
  %v6941 = vor.u32 %v6940, 8388608
  %v6942 = vsub.s32 0, %v6941
  %v6943 = vadd.s32 %v6938, 1
  %vm6944 = vcmp.gt.s32.totalorder %v6943, 0
  %v6945 = vsel %vm6944, %v6943, 0
  %v6946 = vshrl.u32 %v6945, 5
  %v6947 = vand.u32 %v6945, 31
  %v6948 = vsub.s32 32, %v6947
  %v6949 = vshrl.u32 683565275, %v6948
  %v6950 = vshll.u32 683565275, %v6947
  %v6951 = vshrl.u32 2475754826, %v6948
  %v6952 = vor.u32 %v6950, %v6951
  %v6953 = vshll.u32 2475754826, %v6947
  %v6954 = vshrl.u32 2131351028, %v6948
  %v6955 = vor.u32 %v6953, %v6954
  %v6956 = vshll.u32 2131351028, %v6947
  %v6957 = vshrl.u32 2102212464, %v6948
  %v6958 = vor.u32 %v6956, %v6957
  %v6959 = vshll.u32 2102212464, %v6947
  %v6960 = vshrl.u32 920167782, %v6948
  %v6961 = vor.u32 %v6959, %v6960
  %v6962 = vshll.u32 920167782, %v6947
  %v6963 = vshrl.u32 1326507024, %v6948
  %v6964 = vor.u32 %v6962, %v6963
  %vm6965 = vcmp.lt.s32.totalorder %v6946, 1
  %vm6966 = vcmp.lt.s32.totalorder %v6946, 2
  %vm6967 = vcmp.lt.s32.totalorder %v6946, 3
  %vm6968 = vcmp.lt.s32.totalorder %v6946, 4
  %v6969 = vsel %vm6965, %v6949, %v6952
  %v6970 = vsel %vm6968, %v6958, 2102212464
  %v6971 = vsel %vm6967, %v6955, %v6970
  %v6972 = vsel %vm6966, %v6969, %v6971
  %v6973 = vsel %vm6965, %v6952, %v6955
  %v6974 = vsel %vm6968, %v6961, 920167782
  %v6975 = vsel %vm6967, %v6958, %v6974
  %v6976 = vsel %vm6966, %v6973, %v6975
  %v6977 = vsel %vm6965, %v6955, %v6958
  %v6978 = vsel %vm6968, %v6964, 1326507024
  %v6979 = vsel %vm6967, %v6961, %v6978
  %v6980 = vsel %vm6966, %v6977, %v6979
  %v6981 = vshll.u32 %v6941, 8
  %v6982 = vmul.u32.u64.compose %v6981, %v6980
  %v6983 = vextract.low.u32 %v6982
  %v6984 = vextract.high.u32 %v6982
  %v6985 = vmul.u32.u64.compose %v6981, %v6976
  %v6986 = vextract.low.u32 %v6985
  %v6987 = vextract.high.u32 %v6985
  %v6988 = vmul.u32 %v6981, %v6972
  %v6989 = vadd.s32 %v6984, %v6986
  %vm6990 = vc.u32 %v6984, %v6986
  %v6991 = vadd.s32 %v6987, 1
  %v6992 = vsel %vm6990, %v6991, %v6987
  %v6993 = vadd.s32 %v6988, %v6992
  %v6994 = vadd.s32 %v6993, 536870912
  %v6995 = vshrl.u32 %v6994, 30
  %v6996 = vshll.u32 %v6995, 30
  %v6997 = vsub.s32 %v6993, %v6996
  %vm6998 = vcmp.lt.s32.totalorder %v6997, 0
  %v6999 = vsub.s32 0, %v6997
  %v7000 = vsel %vm6998, %v6999, %v6997
  %v7001 = vclz %v7000
  %v7002 = vsub.s32 %v7001, 2
  %vm7003 = vcmp.gt.s32.totalorder 0, %v7002
  %v7004 = vsel %vm7003, 0, %v7002
  %v7005 = vsub.s32 32, %v7004
  %v7006 = vshll.u32 %v6997, %v7004
  %v7007 = vshrl.u32 %v6989, %v7005
  %v7008 = vor.u32 %v7006, %v7007
  %v7009 = vsub.s32 4294967266, %v7004
  %v7010 = vadd.s32 %v7009, 127
  %v7011 = vshll.u32 %v7010, 23
  %v7012 = vor.u32 4788187, %v7011
  %v7013 = vand.u32 2147483647, %v7012
  %v7015 = vcvt.s32.f32 %v7008
  %v7016 = vmul.f32 %v7015, %v7013
  %v7017 = vxor.u32 %v7016, 2147483648
  %v7018 = vsel %vm6935, %v7017, %v7016
  %v7019 = vsub.s32 4, %v6995
  %v7020 = vsel %vm6935, %v7019, %v6995
  %v7021 = vsel %vm6934, %v545, %v7018
  %v7022 = vsel %vm6934, 0, %v7020
  %v7023 = vcosq.f32.pop %v7021
  %v7024 = vsinq.f32.pop %v7021
  %vm7025 = vweird.f32 %v545
  %v7026 = vand.u32 %v7022, 3
  %vm7027 = vcmp.lt.s32.totalorder %v7026, 2
  %vm7028 = vcmp.eq.s32.totalorder %v7026, 0
  %v7029 = vxor.u32 %v7024, 2147483648
  %v7030 = vsel %vm7028, %v7023, %v7029
  %vm7031 = vcmp.eq.s32.totalorder %v7026, 2
  %v7032 = vxor.u32 %v7023, 2147483648
  %v7033 = vsel %vm7031, %v7032, %v7024
  %v7034 = vsel %vm7027, %v7030, %v7033
  %v7035 = vsel %vm7025, nan, %v7034
  %v7036 = vand.u32 2147483647, %v546
  %vm7037 = vcmp.le.f32.partialorder %v7036, 0.7853982
  %vm7038 = vcmp.lt.s32.totalorder %v546, 0
  %v7039 = vand.u32 %v546, 2139095040
  %v7040 = vshrl.u32 %v7039, 23
  %v7041 = vsub.s32 %v7040, 127
  %v7042 = vand.u32 2147483647, %v546
  %v7043 = vand.u32 %v7042, 8388607
  %v7044 = vor.u32 %v7043, 8388608
  %v7045 = vsub.s32 0, %v7044
  %v7046 = vadd.s32 %v7041, 1
  %vm7047 = vcmp.gt.s32.totalorder %v7046, 0
  %v7048 = vsel %vm7047, %v7046, 0
  %v7049 = vshrl.u32 %v7048, 5
  %v7050 = vand.u32 %v7048, 31
  %v7051 = vsub.s32 32, %v7050
  %v7052 = vshrl.u32 683565275, %v7051
  %v7053 = vshll.u32 683565275, %v7050
  %v7054 = vshrl.u32 2475754826, %v7051
  %v7055 = vor.u32 %v7053, %v7054
  %v7056 = vshll.u32 2475754826, %v7050
  %v7057 = vshrl.u32 2131351028, %v7051
  %v7058 = vor.u32 %v7056, %v7057
  %v7059 = vshll.u32 2131351028, %v7050
  %v7060 = vshrl.u32 2102212464, %v7051
  %v7061 = vor.u32 %v7059, %v7060
  %v7062 = vshll.u32 2102212464, %v7050
  %v7063 = vshrl.u32 920167782, %v7051
  %v7064 = vor.u32 %v7062, %v7063
  %v7065 = vshll.u32 920167782, %v7050
  %v7066 = vshrl.u32 1326507024, %v7051
  %v7067 = vor.u32 %v7065, %v7066
  %vm7068 = vcmp.lt.s32.totalorder %v7049, 1
  %vm7069 = vcmp.lt.s32.totalorder %v7049, 2
  %vm7070 = vcmp.lt.s32.totalorder %v7049, 3
  %vm7071 = vcmp.lt.s32.totalorder %v7049, 4
  %v7072 = vsel %vm7068, %v7052, %v7055
  %v7073 = vsel %vm7071, %v7061, 2102212464
  %v7074 = vsel %vm7070, %v7058, %v7073
  %v7075 = vsel %vm7069, %v7072, %v7074
  %v7076 = vsel %vm7068, %v7055, %v7058
  %v7077 = vsel %vm7071, %v7064, 920167782
  %v7078 = vsel %vm7070, %v7061, %v7077
  %v7079 = vsel %vm7069, %v7076, %v7078
  %v7080 = vsel %vm7068, %v7058, %v7061
  %v7081 = vsel %vm7071, %v7067, 1326507024
  %v7082 = vsel %vm7070, %v7064, %v7081
  %v7083 = vsel %vm7069, %v7080, %v7082
  %v7084 = vshll.u32 %v7044, 8
  %v7085 = vmul.u32.u64.compose %v7084, %v7083
  %v7086 = vextract.low.u32 %v7085
  %v7087 = vextract.high.u32 %v7085
  %v7088 = vmul.u32.u64.compose %v7084, %v7079
  %v7089 = vextract.low.u32 %v7088
  %v7090 = vextract.high.u32 %v7088
  %v7091 = vmul.u32 %v7084, %v7075
  %v7092 = vadd.s32 %v7087, %v7089
  %vm7093 = vc.u32 %v7087, %v7089
  %v7094 = vadd.s32 %v7090, 1
  %v7095 = vsel %vm7093, %v7094, %v7090
  %v7096 = vadd.s32 %v7091, %v7095
  %v7097 = vadd.s32 %v7096, 536870912
  %v7098 = vshrl.u32 %v7097, 30
  %v7099 = vshll.u32 %v7098, 30
  %v7100 = vsub.s32 %v7096, %v7099
  %vm7101 = vcmp.lt.s32.totalorder %v7100, 0
  %v7102 = vsub.s32 0, %v7100
  %v7103 = vsel %vm7101, %v7102, %v7100
  %v7104 = vclz %v7103
  %v7105 = vsub.s32 %v7104, 2
  %vm7106 = vcmp.gt.s32.totalorder 0, %v7105
  %v7107 = vsel %vm7106, 0, %v7105
  %v7108 = vsub.s32 32, %v7107
  %v7109 = vshll.u32 %v7100, %v7107
  %v7110 = vshrl.u32 %v7092, %v7108
  %v7111 = vor.u32 %v7109, %v7110
  %v7112 = vsub.s32 4294967266, %v7107
  %v7113 = vadd.s32 %v7112, 127
  %v7114 = vshll.u32 %v7113, 23
  %v7115 = vor.u32 4788187, %v7114
  %v7116 = vand.u32 2147483647, %v7115
  %v7118 = vcvt.s32.f32 %v7111
  %v7119 = vmul.f32 %v7118, %v7116
  %v7120 = vxor.u32 %v7119, 2147483648
  %v7121 = vsel %vm7038, %v7120, %v7119
  %v7122 = vsub.s32 4, %v7098
  %v7123 = vsel %vm7038, %v7122, %v7098
  %v7124 = vsel %vm7037, %v546, %v7121
  %v7125 = vsel %vm7037, 0, %v7123
  %v7126 = vcosq.f32.pop %v7124
  %v7127 = vsinq.f32.pop %v7124
  %vm7128 = vweird.f32 %v546
  %v7129 = vand.u32 %v7125, 3
  %vm7130 = vcmp.lt.s32.totalorder %v7129, 2
  %vm7131 = vcmp.eq.s32.totalorder %v7129, 0
  %v7132 = vxor.u32 %v7127, 2147483648
  %v7133 = vsel %vm7131, %v7126, %v7132
  %vm7134 = vcmp.eq.s32.totalorder %v7129, 2
  %v7135 = vxor.u32 %v7126, 2147483648
  %v7136 = vsel %vm7134, %v7135, %v7127
  %v7137 = vsel %vm7130, %v7133, %v7136
  %v7138 = vsel %vm7128, nan, %v7137
  %v7139 = vld [vmem:[%s3] sm:$0xff]
  %v7140 = vld [vmem:[%s3 + $0x8] sm:$0xff]
  %v7141 = vld [vmem:[%s3 + $0x10] sm:$0xff]
  %v7142 = vld [vmem:[%s3 + $0x18] sm:$0xff]
  %v7143 = vld [vmem:[%s4] sm:$0x1]
  %v7145 = vlaneseq
  %v7146 = vshrl.u32 %v7145, 7
  %v7147 = vsub.s32 0, %v7146
  %v7148 = vrot.slane %v7143, %v7147
  %vm7150 = vcmask 261120
  %v7152 = vsel %vm7150, %v649, 0
  %v7155 = vsel %vm7150, %v752, 0
  %v7158 = vsel %vm7150, %v855, 0
  %v7161 = vsel %vm7150, %v958, 0
  %v7164 = vsel %vm7150, %v1061, 0
  %v7167 = vsel %vm7150, %v1164, 0
  %v7170 = vsel %vm7150, %v1267, 0
  %v7173 = vsel %vm7150, %v1370, 0
  %v7176 = vsel %vm7150, %v1473, 0
  %v7179 = vsel %vm7150, %v1576, 0
  %v7182 = vsel %vm7150, %v1679, 0
  %v7185 = vsel %vm7150, %v1782, 0
  %v7188 = vsel %vm7150, %v1885, 0
  %v7191 = vsel %vm7150, %v1988, 0
  %v7194 = vsel %vm7150, %v2091, 0
  %v7197 = vsel %vm7150, %v2194, 0
  %v7200 = vsel %vm7150, %v2297, 0
  %v7203 = vsel %vm7150, %v2400, 0
  %v7206 = vsel %vm7150, %v2503, 0
  %v7209 = vsel %vm7150, %v2606, 0
  %v7212 = vsel %vm7150, %v2709, 0
  %v7215 = vsel %vm7150, %v2812, 0
  %v7218 = vsel %vm7150, %v2915, 0
  %v7221 = vsel %vm7150, %v3018, 0
  %v7224 = vsel %vm7150, %v3121, 0
  %v7227 = vsel %vm7150, %v3224, 0
  %v7230 = vsel %vm7150, %v3327, 0
  %v7233 = vsel %vm7150, %v3430, 0
  %v7236 = vsel %vm7150, %v3533, 0
  %v7239 = vsel %vm7150, %v3636, 0
  %v7242 = vsel %vm7150, %v3739, 0
  %v7245 = vsel %vm7150, %v3842, 0
  %v7248 = vsel %vm7150, %v3945, 0
  %v7251 = vsel %vm7150, %v4048, 0
  %v7254 = vsel %vm7150, %v4151, 0
  %v7257 = vsel %vm7150, %v4254, 0
  %v7260 = vsel %vm7150, %v4357, 0
  %v7263 = vsel %vm7150, %v4460, 0
  %v7266 = vsel %vm7150, %v4563, 0
  %v7269 = vsel %vm7150, %v4666, 0
  %v7272 = vsel %vm7150, %v4769, 0
  %v7275 = vsel %vm7150, %v4872, 0
  %v7278 = vsel %vm7150, %v4975, 0
  %v7281 = vsel %vm7150, %v5078, 0
  %v7284 = vsel %vm7150, %v5181, 0
  %v7287 = vsel %vm7150, %v5284, 0
  %v7290 = vsel %vm7150, %v5387, 0
  %v7293 = vsel %vm7150, %v5490, 0
  %v7296 = vsel %vm7150, %v5593, 0
  %v7299 = vsel %vm7150, %v5696, 0
  %v7302 = vsel %vm7150, %v5799, 0
  %v7305 = vsel %vm7150, %v5902, 0
  %v7308 = vsel %vm7150, %v6005, 0
  %v7311 = vsel %vm7150, %v6108, 0
  %v7314 = vsel %vm7150, %v6211, 0
  %v7317 = vsel %vm7150, %v6314, 0
  %v7320 = vsel %vm7150, %v6417, 0
  %v7323 = vsel %vm7150, %v6520, 0
  %v7326 = vsel %vm7150, %v6623, 0
  %v7329 = vsel %vm7150, %v6726, 0
  %v7332 = vsel %vm7150, %v6829, 0
  %v7335 = vsel %vm7150, %v6932, 0
  %v7338 = vsel %vm7150, %v7035, 0
  %v7341 = vsel %vm7150, %v7138, 0
  %7343 = vmatprep.subr.mxu0 0.0
  %7344 = vmatpush1.msra.mxu0 %v7139
  %7345 = vmatprep.subr.mxu0 0.0
  %7346 = vmatpush1.msra.mxu0 %v7140
  %7347 = vmatprep.subr.mxu0 0.0
  %7348 = vmatpush1.msra.mxu0 %v7141
  %7349 = vmatprep.subr.mxu0 0.0
  %7350 = vmatpush1.msra.mxu0 %v7142
  %7351 = vmatprep.subr.mxu0 0.0
  %7352 = vmatpush1.msra.mxu0 0.0
  %7353 = vmatprep.subr.mxu0 0.0
  %7354 = vmatpush1.msra.mxu0 0.0
  %7355 = vmatprep.subr.mxu0 0.0
  %7356 = vmatpush1.msra.mxu0 0.0
  %7357 = vmatprep.subr.mxu0 0.0
  %7358 = vmatpush1.msra.mxu0 0.0
  %7359 = vmatprep.subr.mxu0 0.0
  %7360 = vmatpush1.msra.mxu0 0.0
  %7361 = vmatprep.subr.mxu0 0.0
  %7362 = vmatpush1.msra.mxu0 0.0
  %7363 = vmatprep.subr.mxu0 0.0
  %7364 = vmatpush1.msra.mxu0 0.0
  %7365 = vmatprep.subr.mxu0 0.0
  %7366 = vmatpush1.msra.mxu0 0.0
  %7367 = vmatprep.subr.mxu0 0.0
  %7368 = vmatpush1.msra.mxu0 0.0
  %7369 = vmatprep.subr.mxu0 0.0
  %7370 = vmatpush1.msra.mxu0 0.0
  %7371 = vmatprep.subr.mxu0 0.0
  %7372 = vmatpush1.msra.mxu0 0.0
  %7373 = vmatprep.subr.mxu0 0.0
  %7374 = vmatpush1.msra.mxu0 0.0
  %7375 = vmatprep.subr.mxu0 0.0
  %7376 = vmatpush1.msra.mxu0 0.0
  %7377 = vmatprep.subr.mxu0 0.0
  %7378 = vmatpush1.msra.mxu0 0.0
  %7379 = vmatprep.subr.mxu0 0.0
  %7380 = vmatpush1.msra.mxu0 0.0
  %7381 = vmatprep.subr.mxu0 0.0
  %7382 = vmatpush1.msra.mxu0 0.0
  %7383 = vmatprep.subr.mxu0 0.0
  %7384 = vmatpush1.msra.mxu0 0.0
  %7385 = vmatprep.subr.mxu0 0.0
  %7386 = vmatpush1.msra.mxu0 0.0
  %7387 = vmatprep.subr.mxu0 0.0
  %7388 = vmatpush1.msra.mxu0 0.0
  %7389 = vmatprep.subr.mxu0 0.0
  %7390 = vmatpush1.msra.mxu0 0.0
  %7391 = vmatprep.subr.mxu0 0.0
  %7392 = vmatpush1.msra.mxu0 0.0
  %7393 = vmatprep.subr.mxu0 0.0
  %7394 = vmatpush1.msra.mxu0 0.0
  %7395 = vmatprep.subr.mxu0 0.0
  %7396 = vmatpush1.msra.mxu0 0.0
  %7397 = vmatprep.subr.mxu0 0.0
  %7398 = vmatpush1.msra.mxu0 0.0
  %7399 = vmatprep.subr.mxu0 0.0
  %7400 = vmatpush1.msra.mxu0 0.0
  %7401 = vmatprep.subr.mxu0 0.0
  %7402 = vmatpush1.msra.mxu0 0.0
  %7403 = vmatprep.subr.mxu0 0.0
  %7404 = vmatpush1.msra.mxu0 0.0
  %7405 = vmatprep.subr.mxu0 0.0
  %7406 = vmatpush1.msra.mxu0 0.0
  %7407 = vmatprep.mubr.f32.mxu0 0.0
  %7408 = vmatmul.mubr.f32.gmra.mrb[0].mxu0 %v7152
  %v7409 = vpop.f32.mrb[0].mxu0
  %v7410 = vadd.f32 %v7148, %v7409
  %v7411 = vpop.f32.mrb[0].mxu0
  %7412 = vmatprep.mubr.f32.mxu0 0.0
  %7413 = vmatmul.mubr.f32.gmra.mrb[0].mxu0 %v7155
  %v7414 = vpop.f32.mrb[0].mxu0
  %v7415 = vadd.f32 %v7148, %v7414
  %v7416 = vpop.f32.mrb[0].mxu0
  %7417 = vmatprep.mubr.f32.mxu0 0.0
  %7418 = vmatmul.mubr.f32.gmra.mrb[0].mxu0 %v7158
  %v7419 = vpop.f32.mrb[0].mxu0
  %v7420 = vadd.f32 %v7148, %v7419
  %v7421 = vpop.f32.mrb[0].mxu0
  %7422 = vmatprep.mubr.f32.mxu0 0.0
  %7423 = vmatmul.mubr.f32.gmra.mrb[0].mxu0 %v7161
  %v7424 = vpop.f32.mrb[0].mxu0
  %v7425 = vadd.f32 %v7148, %v7424
  %v7426 = vpop.f32.mrb[0].mxu0
  %7427 = vmatprep.mubr.f32.mxu0 0.0
  %7428 = vmatmul.mubr.f32.gmra.mrb[0].mxu0 %v7164
  %v7429 = vpop.f32.mrb[0].mxu0
  %v7430 = vadd.f32 %v7148, %v7429
  %v7431 = vpop.f32.mrb[0].mxu0
  %7432 = vmatprep.mubr.f32.mxu0 0.0
  %7433 = vmatmul.mubr.f32.gmra.mrb[0].mxu0 %v7167
  %v7434 = vpop.f32.mrb[0].mxu0
  %v7435 = vadd.f32 %v7148, %v7434
  %v7436 = vpop.f32.mrb[0].mxu0
  %7437 = vmatprep.mubr.f32.mxu0 0.0
  %7438 = vmatmul.mubr.f32.gmra.mrb[0].mxu0 %v7170
  %v7439 = vpop.f32.mrb[0].mxu0
  %v7440 = vadd.f32 %v7148, %v7439
  %v7441 = vpop.f32.mrb[0].mxu0
  %7442 = vmatprep.mubr.f32.mxu0 0.0
  %7443 = vmatmul.mubr.f32.gmra.mrb[0].mxu0 %v7173
  %v7444 = vpop.f32.mrb[0].mxu0
  %v7445 = vadd.f32 %v7148, %v7444
  %v7446 = vpop.f32.mrb[0].mxu0
  %7447 = vmatprep.mubr.f32.mxu0 0.0
  %7448 = vmatmul.mubr.f32.gmra.mrb[0].mxu0 %v7176
  %v7449 = vpop.f32.mrb[0].mxu0
  %v7450 = vadd.f32 %v7148, %v7449
  %v7451 = vpop.f32.mrb[0].mxu0
  %7452 = vmatprep.mubr.f32.mxu0 0.0
  %7453 = vmatmul.mubr.f32.gmra.mrb[0].mxu0 %v7179
  %v7454 = vpop.f32.mrb[0].mxu0
  %v7455 = vadd.f32 %v7148, %v7454
  %v7456 = vpop.f32.mrb[0].mxu0
  %7457 = vmatprep.mubr.f32.mxu0 0.0
  %7458 = vmatmul.mubr.f32.gmra.mrb[0].mxu0 %v7182
  %v7459 = vpop.f32.mrb[0].mxu0
  %v7460 = vadd.f32 %v7148, %v7459
  %v7461 = vpop.f32.mrb[0].mxu0
  %7462 = vmatprep.mubr.f32.mxu0 0.0
  %7463 = vmatmul.mubr.f32.gmra.mrb[0].mxu0 %v7185
  %v7464 = vpop.f32.mrb[0].mxu0
  %v7465 = vadd.f32 %v7148, %v7464
  %v7466 = vpop.f32.mrb[0].mxu0
  %7467 = vmatprep.mubr.f32.mxu0 0.0
  %7468 = vmatmul.mubr.f32.gmra.mrb[0].mxu0 %v7188
  %v7469 = vpop.f32.mrb[0].mxu0
  %v7470 = vadd.f32 %v7148, %v7469
  %v7471 = vpop.f32.mrb[0].mxu0
  %7472 = vmatprep.mubr.f32.mxu0 0.0
  %7473 = vmatmul.mubr.f32.gmra.mrb[0].mxu0 %v7191
  %v7474 = vpop.f32.mrb[0].mxu0
  %v7475 = vadd.f32 %v7148, %v7474
  %v7476 = vpop.f32.mrb[0].mxu0
  %7477 = vmatprep.mubr.f32.mxu0 0.0
  %7478 = vmatmul.mubr.f32.gmra.mrb[0].mxu0 %v7194
  %v7479 = vpop.f32.mrb[0].mxu0
  %v7480 = vadd.f32 %v7148, %v7479
  %v7481 = vpop.f32.mrb[0].mxu0
  %7482 = vmatprep.mubr.f32.mxu0 0.0
  %7483 = vmatmul.mubr.f32.gmra.mrb[0].mxu0 %v7197
  %v7484 = vpop.f32.mrb[0].mxu0
  %v7485 = vadd.f32 %v7148, %v7484
  %v7486 = vpop.f32.mrb[0].mxu0
  %7487 = vmatprep.mubr.f32.mxu0 0.0
  %7488 = vmatmul.mubr.f32.gmra.mrb[0].mxu0 %v7200
  %v7489 = vpop.f32.mrb[0].mxu0
  %v7490 = vadd.f32 %v7148, %v7489
  %v7491 = vpop.f32.mrb[0].mxu0
  %7492 = vmatprep.mubr.f32.mxu0 0.0
  %7493 = vmatmul.mubr.f32.gmra.mrb[0].mxu0 %v7203
  %v7494 = vpop.f32.mrb[0].mxu0
  %v7495 = vadd.f32 %v7148, %v7494
  %v7496 = vpop.f32.mrb[0].mxu0
  %7497 = vmatprep.mubr.f32.mxu0 0.0
  %7498 = vmatmul.mubr.f32.gmra.mrb[0].mxu0 %v7206
  %v7499 = vpop.f32.mrb[0].mxu0
  %v7500 = vadd.f32 %v7148, %v7499
  %v7501 = vpop.f32.mrb[0].mxu0
  %7502 = vmatprep.mubr.f32.mxu0 0.0
  %7503 = vmatmul.mubr.f32.gmra.mrb[0].mxu0 %v7209
  %v7504 = vpop.f32.mrb[0].mxu0
  %v7505 = vadd.f32 %v7148, %v7504
  %v7506 = vpop.f32.mrb[0].mxu0
  %7507 = vmatprep.mubr.f32.mxu0 0.0
  %7508 = vmatmul.mubr.f32.gmra.mrb[0].mxu0 %v7212
  %v7509 = vpop.f32.mrb[0].mxu0
  %v7510 = vadd.f32 %v7148, %v7509
  %v7511 = vpop.f32.mrb[0].mxu0
  %7512 = vmatprep.mubr.f32.mxu0 0.0
  %7513 = vmatmul.mubr.f32.gmra.mrb[0].mxu0 %v7215
  %v7514 = vpop.f32.mrb[0].mxu0
  %v7515 = vadd.f32 %v7148, %v7514
  %v7516 = vpop.f32.mrb[0].mxu0
  %7517 = vmatprep.mubr.f32.mxu0 0.0
  %7518 = vmatmul.mubr.f32.gmra.mrb[0].mxu0 %v7218
  %v7519 = vpop.f32.mrb[0].mxu0
  %v7520 = vadd.f32 %v7148, %v7519
  %v7521 = vpop.f32.mrb[0].mxu0
  %7522 = vmatprep.mubr.f32.mxu0 0.0
  %7523 = vmatmul.mubr.f32.gmra.mrb[0].mxu0 %v7221
  %v7524 = vpop.f32.mrb[0].mxu0
  %v7525 = vadd.f32 %v7148, %v7524
  %v7526 = vpop.f32.mrb[0].mxu0
  %7527 = vmatprep.mubr.f32.mxu0 0.0
  %7528 = vmatmul.mubr.f32.gmra.mrb[0].mxu0 %v7224
  %v7529 = vpop.f32.mrb[0].mxu0
  %v7530 = vadd.f32 %v7148, %v7529
  %v7531 = vpop.f32.mrb[0].mxu0
  %7532 = vmatprep.mubr.f32.mxu0 0.0
  %7533 = vmatmul.mubr.f32.gmra.mrb[0].mxu0 %v7227
  %v7534 = vpop.f32.mrb[0].mxu0
  %v7535 = vadd.f32 %v7148, %v7534
  %v7536 = vpop.f32.mrb[0].mxu0
  %7537 = vmatprep.mubr.f32.mxu0 0.0
  %7538 = vmatmul.mubr.f32.gmra.mrb[0].mxu0 %v7230
  %v7539 = vpop.f32.mrb[0].mxu0
  %v7540 = vadd.f32 %v7148, %v7539
  %v7541 = vpop.f32.mrb[0].mxu0
  %7542 = vmatprep.mubr.f32.mxu0 0.0
  %7543 = vmatmul.mubr.f32.gmra.mrb[0].mxu0 %v7233
  %v7544 = vpop.f32.mrb[0].mxu0
  %v7545 = vadd.f32 %v7148, %v7544
  %v7546 = vpop.f32.mrb[0].mxu0
  %7547 = vmatprep.mubr.f32.mxu0 0.0
  %7548 = vmatmul.mubr.f32.gmra.mrb[0].mxu0 %v7236
  %v7549 = vpop.f32.mrb[0].mxu0
  %v7550 = vadd.f32 %v7148, %v7549
  %v7551 = vpop.f32.mrb[0].mxu0
  %7552 = vmatprep.mubr.f32.mxu0 0.0
  %7553 = vmatmul.mubr.f32.gmra.mrb[0].mxu0 %v7239
  %v7554 = vpop.f32.mrb[0].mxu0
  %v7555 = vadd.f32 %v7148, %v7554
  %v7556 = vpop.f32.mrb[0].mxu0
  %7557 = vmatprep.mubr.f32.mxu0 0.0
  %7558 = vmatmul.mubr.f32.gmra.mrb[0].mxu0 %v7242
  %v7559 = vpop.f32.mrb[0].mxu0
  %v7560 = vadd.f32 %v7148, %v7559
  %v7561 = vpop.f32.mrb[0].mxu0
  %7562 = vmatprep.mubr.f32.mxu0 0.0
  %7563 = vmatmul.mubr.f32.gmra.mrb[0].mxu0 %v7245
  %v7564 = vpop.f32.mrb[0].mxu0
  %v7565 = vadd.f32 %v7148, %v7564
  %v7566 = vpop.f32.mrb[0].mxu0
  %7567 = vmatprep.mubr.f32.mxu0 0.0
  %7568 = vmatmul.mubr.f32.gmra.mrb[0].mxu0 %v7248
  %v7569 = vpop.f32.mrb[0].mxu0
  %v7570 = vadd.f32 %v7148, %v7569
  %v7571 = vpop.f32.mrb[0].mxu0
  %7572 = vmatprep.mubr.f32.mxu0 0.0
  %7573 = vmatmul.mubr.f32.gmra.mrb[0].mxu0 %v7251
  %v7574 = vpop.f32.mrb[0].mxu0
  %v7575 = vadd.f32 %v7148, %v7574
  %v7576 = vpop.f32.mrb[0].mxu0
  %7577 = vmatprep.mubr.f32.mxu0 0.0
  %7578 = vmatmul.mubr.f32.gmra.mrb[0].mxu0 %v7254
  %v7579 = vpop.f32.mrb[0].mxu0
  %v7580 = vadd.f32 %v7148, %v7579
  %v7581 = vpop.f32.mrb[0].mxu0
  %7582 = vmatprep.mubr.f32.mxu0 0.0
  %7583 = vmatmul.mubr.f32.gmra.mrb[0].mxu0 %v7257
  %v7584 = vpop.f32.mrb[0].mxu0
  %v7585 = vadd.f32 %v7148, %v7584
  %v7586 = vpop.f32.mrb[0].mxu0
  %7587 = vmatprep.mubr.f32.mxu0 0.0
  %7588 = vmatmul.mubr.f32.gmra.mrb[0].mxu0 %v7260
  %v7589 = vpop.f32.mrb[0].mxu0
  %v7590 = vadd.f32 %v7148, %v7589
  %v7591 = vpop.f32.mrb[0].mxu0
  %7592 = vmatprep.mubr.f32.mxu0 0.0
  %7593 = vmatmul.mubr.f32.gmra.mrb[0].mxu0 %v7263
  %v7594 = vpop.f32.mrb[0].mxu0
  %v7595 = vadd.f32 %v7148, %v7594
  %v7596 = vpop.f32.mrb[0].mxu0
  %7597 = vmatprep.mubr.f32.mxu0 0.0
  %7598 = vmatmul.mubr.f32.gmra.mrb[0].mxu0 %v7266
  %v7599 = vpop.f32.mrb[0].mxu0
  %v7600 = vadd.f32 %v7148, %v7599
  %v7601 = vpop.f32.mrb[0].mxu0
  %7602 = vmatprep.mubr.f32.mxu0 0.0
  %7603 = vmatmul.mubr.f32.gmra.mrb[0].mxu0 %v7269
  %v7604 = vpop.f32.mrb[0].mxu0
  %v7605 = vadd.f32 %v7148, %v7604
  %v7606 = vpop.f32.mrb[0].mxu0
  %7607 = vmatprep.mubr.f32.mxu0 0.0
  %7608 = vmatmul.mubr.f32.gmra.mrb[0].mxu0 %v7272
  %v7609 = vpop.f32.mrb[0].mxu0
  %v7610 = vadd.f32 %v7148, %v7609
  %v7611 = vpop.f32.mrb[0].mxu0
  %7612 = vmatprep.mubr.f32.mxu0 0.0
  %7613 = vmatmul.mubr.f32.gmra.mrb[0].mxu0 %v7275
  %v7614 = vpop.f32.mrb[0].mxu0
  %v7615 = vadd.f32 %v7148, %v7614
  %v7616 = vpop.f32.mrb[0].mxu0
  %7617 = vmatprep.mubr.f32.mxu0 0.0
  %7618 = vmatmul.mubr.f32.gmra.mrb[0].mxu0 %v7278
  %v7619 = vpop.f32.mrb[0].mxu0
  %v7620 = vadd.f32 %v7148, %v7619
  %v7621 = vpop.f32.mrb[0].mxu0
  %7622 = vmatprep.mubr.f32.mxu0 0.0
  %7623 = vmatmul.mubr.f32.gmra.mrb[0].mxu0 %v7281
  %v7624 = vpop.f32.mrb[0].mxu0
  %v7625 = vadd.f32 %v7148, %v7624
  %v7626 = vpop.f32.mrb[0].mxu0
  %7627 = vmatprep.mubr.f32.mxu0 0.0
  %7628 = vmatmul.mubr.f32.gmra.mrb[0].mxu0 %v7284
  %v7629 = vpop.f32.mrb[0].mxu0
  %v7630 = vadd.f32 %v7148, %v7629
  %v7631 = vpop.f32.mrb[0].mxu0
  %7632 = vmatprep.mubr.f32.mxu0 0.0
  %7633 = vmatmul.mubr.f32.gmra.mrb[0].mxu0 %v7287
  %v7634 = vpop.f32.mrb[0].mxu0
  %v7635 = vadd.f32 %v7148, %v7634
  %v7636 = vpop.f32.mrb[0].mxu0
  %7637 = vmatprep.mubr.f32.mxu0 0.0
  %7638 = vmatmul.mubr.f32.gmra.mrb[0].mxu0 %v7290
  %v7639 = vpop.f32.mrb[0].mxu0
  %v7640 = vadd.f32 %v7148, %v7639
  %v7641 = vpop.f32.mrb[0].mxu0
  %7642 = vmatprep.mubr.f32.mxu0 0.0
  %7643 = vmatmul.mubr.f32.gmra.mrb[0].mxu0 %v7293
  %v7644 = vpop.f32.mrb[0].mxu0
  %v7645 = vadd.f32 %v7148, %v7644
  %v7646 = vpop.f32.mrb[0].mxu0
  %7647 = vmatprep.mubr.f32.mxu0 0.0
  %7648 = vmatmul.mubr.f32.gmra.mrb[0].mxu0 %v7296
  %v7649 = vpop.f32.mrb[0].mxu0
  %v7650 = vadd.f32 %v7148, %v7649
  %v7651 = vpop.f32.mrb[0].mxu0
  %7652 = vmatprep.mubr.f32.mxu0 0.0
  %7653 = vmatmul.mubr.f32.gmra.mrb[0].mxu0 %v7299
  %v7654 = vpop.f32.mrb[0].mxu0
  %v7655 = vadd.f32 %v7148, %v7654
  %v7656 = vpop.f32.mrb[0].mxu0
  %7657 = vmatprep.mubr.f32.mxu0 0.0
  %7658 = vmatmul.mubr.f32.gmra.mrb[0].mxu0 %v7302
  %v7659 = vpop.f32.mrb[0].mxu0
  %v7660 = vadd.f32 %v7148, %v7659
  %v7661 = vpop.f32.mrb[0].mxu0
  %7662 = vmatprep.mubr.f32.mxu0 0.0
  %7663 = vmatmul.mubr.f32.gmra.mrb[0].mxu0 %v7305
  %v7664 = vpop.f32.mrb[0].mxu0
  %v7665 = vadd.f32 %v7148, %v7664
  %v7666 = vpop.f32.mrb[0].mxu0
  %7667 = vmatprep.mubr.f32.mxu0 0.0
  %7668 = vmatmul.mubr.f32.gmra.mrb[0].mxu0 %v7308
  %v7669 = vpop.f32.mrb[0].mxu0
  %v7670 = vadd.f32 %v7148, %v7669
  %v7671 = vpop.f32.mrb[0].mxu0
  %7672 = vmatprep.mubr.f32.mxu0 0.0
  %7673 = vmatmul.mubr.f32.gmra.mrb[0].mxu0 %v7311
  %v7674 = vpop.f32.mrb[0].mxu0
  %v7675 = vadd.f32 %v7148, %v7674
  %v7676 = vpop.f32.mrb[0].mxu0
  %7677 = vmatprep.mubr.f32.mxu0 0.0
  %7678 = vmatmul.mubr.f32.gmra.mrb[0].mxu0 %v7314
  %v7679 = vpop.f32.mrb[0].mxu0
  %v7680 = vadd.f32 %v7148, %v7679
  %v7681 = vpop.f32.mrb[0].mxu0
  %7682 = vmatprep.mubr.f32.mxu0 0.0
  %7683 = vmatmul.mubr.f32.gmra.mrb[0].mxu0 %v7317
  %v7684 = vpop.f32.mrb[0].mxu0
  %v7685 = vadd.f32 %v7148, %v7684
  %v7686 = vpop.f32.mrb[0].mxu0
  %7687 = vmatprep.mubr.f32.mxu0 0.0
  %7688 = vmatmul.mubr.f32.gmra.mrb[0].mxu0 %v7320
  %v7689 = vpop.f32.mrb[0].mxu0
  %v7690 = vadd.f32 %v7148, %v7689
  %v7691 = vpop.f32.mrb[0].mxu0
  %7692 = vmatprep.mubr.f32.mxu0 0.0
  %7693 = vmatmul.mubr.f32.gmra.mrb[0].mxu0 %v7323
  %v7694 = vpop.f32.mrb[0].mxu0
  %v7695 = vadd.f32 %v7148, %v7694
  %v7696 = vpop.f32.mrb[0].mxu0
  %7697 = vmatprep.mubr.f32.mxu0 0.0
  %7698 = vmatmul.mubr.f32.gmra.mrb[0].mxu0 %v7326
  %v7699 = vpop.f32.mrb[0].mxu0
  %v7700 = vadd.f32 %v7148, %v7699
  %v7701 = vpop.f32.mrb[0].mxu0
  %7702 = vmatprep.mubr.f32.mxu0 0.0
  %7703 = vmatmul.mubr.f32.gmra.mrb[0].mxu0 %v7329
  %v7704 = vpop.f32.mrb[0].mxu0
  %v7705 = vadd.f32 %v7148, %v7704
  %v7706 = vpop.f32.mrb[0].mxu0
  %7707 = vmatprep.mubr.f32.mxu0 0.0
  %7708 = vmatmul.mubr.f32.gmra.mrb[0].mxu0 %v7332
  %v7709 = vpop.f32.mrb[0].mxu0
  %v7710 = vadd.f32 %v7148, %v7709
  %v7711 = vpop.f32.mrb[0].mxu0
  %7712 = vmatprep.mubr.f32.mxu0 0.0
  %7713 = vmatmul.mubr.f32.gmra.mrb[0].mxu0 %v7335
  %v7714 = vpop.f32.mrb[0].mxu0
  %v7715 = vadd.f32 %v7148, %v7714
  %v7716 = vpop.f32.mrb[0].mxu0
  %7717 = vmatprep.mubr.f32.mxu0 0.0
  %7718 = vmatmul.mubr.f32.gmra.mrb[0].mxu0 %v7338
  %v7719 = vpop.f32.mrb[0].mxu0
  %v7720 = vadd.f32 %v7148, %v7719
  %v7721 = vpop.f32.mrb[0].mxu0
  %7722 = vmatprep.mubr.f32.mxu0 0.0
  %7723 = vmatmul.mubr.f32.gmra.mrb[0].mxu0 %v7341
  %v7724 = vpop.f32.mrb[0].mxu0
  %v7725 = vadd.f32 %v7148, %v7724
  %v7726 = vpop.f32.mrb[0].mxu0
  %7727 = vdwg.mxu0
  %v7728 = vmax.f32 %v7410, 0.0
  %v7729 = vmax.f32 %v7415, 0.0
  %v7730 = vmax.f32 %v7420, 0.0
  %v7731 = vmax.f32 %v7425, 0.0
  %v7732 = vmax.f32 %v7430, 0.0
  %v7733 = vmax.f32 %v7435, 0.0
  %v7734 = vmax.f32 %v7440, 0.0
  %v7735 = vmax.f32 %v7445, 0.0
  %v7736 = vmax.f32 %v7450, 0.0
  %v7737 = vmax.f32 %v7455, 0.0
  %v7738 = vmax.f32 %v7460, 0.0
  %v7739 = vmax.f32 %v7465, 0.0
  %v7740 = vmax.f32 %v7470, 0.0
  %v7741 = vmax.f32 %v7475, 0.0
  %v7742 = vmax.f32 %v7480, 0.0
  %v7743 = vmax.f32 %v7485, 0.0
  %v7744 = vmax.f32 %v7490, 0.0
  %v7745 = vmax.f32 %v7495, 0.0
  %v7746 = vmax.f32 %v7500, 0.0
  %v7747 = vmax.f32 %v7505, 0.0
  %v7748 = vmax.f32 %v7510, 0.0
  %v7749 = vmax.f32 %v7515, 0.0
  %v7750 = vmax.f32 %v7520, 0.0
  %v7751 = vmax.f32 %v7525, 0.0
  %v7752 = vmax.f32 %v7530, 0.0
  %v7753 = vmax.f32 %v7535, 0.0
  %v7754 = vmax.f32 %v7540, 0.0
  %v7755 = vmax.f32 %v7545, 0.0
  %v7756 = vmax.f32 %v7550, 0.0
  %v7757 = vmax.f32 %v7555, 0.0
  %v7758 = vmax.f32 %v7560, 0.0
  %v7759 = vmax.f32 %v7565, 0.0
  %v7760 = vmax.f32 %v7570, 0.0
  %v7761 = vmax.f32 %v7575, 0.0
  %v7762 = vmax.f32 %v7580, 0.0
  %v7763 = vmax.f32 %v7585, 0.0
  %v7764 = vmax.f32 %v7590, 0.0
  %v7765 = vmax.f32 %v7595, 0.0
  %v7766 = vmax.f32 %v7600, 0.0
  %v7767 = vmax.f32 %v7605, 0.0
  %v7768 = vmax.f32 %v7610, 0.0
  %v7769 = vmax.f32 %v7615, 0.0
  %v7770 = vmax.f32 %v7620, 0.0
  %v7771 = vmax.f32 %v7625, 0.0
  %v7772 = vmax.f32 %v7630, 0.0
  %v7773 = vmax.f32 %v7635, 0.0
  %v7774 = vmax.f32 %v7640, 0.0
  %v7775 = vmax.f32 %v7645, 0.0
  %v7776 = vmax.f32 %v7650, 0.0
  %v7777 = vmax.f32 %v7655, 0.0
  %v7778 = vmax.f32 %v7660, 0.0
  %v7779 = vmax.f32 %v7665, 0.0
  %v7780 = vmax.f32 %v7670, 0.0
  %v7781 = vmax.f32 %v7675, 0.0
  %v7782 = vmax.f32 %v7680, 0.0
  %v7783 = vmax.f32 %v7685, 0.0
  %v7784 = vmax.f32 %v7690, 0.0
  %v7785 = vmax.f32 %v7695, 0.0
  %v7786 = vmax.f32 %v7700, 0.0
  %v7787 = vmax.f32 %v7705, 0.0
  %v7788 = vmax.f32 %v7710, 0.0
  %v7789 = vmax.f32 %v7715, 0.0
  %v7790 = vmax.f32 %v7720, 0.0
  %v7791 = vmax.f32 %v7725, 0.0
  %7792 = vst.msk [vmem:[%s5] sm:$0xff] %vm7150, %v7728
  %7793 = vst.msk [vmem:[%s5 + $0x8] sm:$0xff] %vm7150, %v7729
  %7794 = vst.msk [vmem:[%s5 + $0x10] sm:$0xff] %vm7150, %v7730
  %7795 = vst.msk [vmem:[%s5 + $0x18] sm:$0xff] %vm7150, %v7731
  %7796 = vst.msk [vmem:[%s5 + $0x20] sm:$0xff] %vm7150, %v7732
  %7797 = vst.msk [vmem:[%s5 + $0x28] sm:$0xff] %vm7150, %v7733
  %7798 = vst.msk [vmem:[%s5 + $0x30] sm:$0xff] %vm7150, %v7734
  %7799 = vst.msk [vmem:[%s5 + $0x38] sm:$0xff] %vm7150, %v7735
  %7800 = vst.msk [vmem:[%s5 + $0x40] sm:$0xff] %vm7150, %v7736
  %7801 = vst.msk [vmem:[%s5 + $0x48] sm:$0xff] %vm7150, %v7737
  %7802 = vst.msk [vmem:[%s5 + $0x50] sm:$0xff] %vm7150, %v7738
  %7803 = vst.msk [vmem:[%s5 + $0x58] sm:$0xff] %vm7150, %v7739
  %7804 = vst.msk [vmem:[%s5 + $0x60] sm:$0xff] %vm7150, %v7740
  %7805 = vst.msk [vmem:[%s5 + $0x68] sm:$0xff] %vm7150, %v7741
  %7806 = vst.msk [vmem:[%s5 + $0x70] sm:$0xff] %vm7150, %v7742
  %7807 = vst.msk [vmem:[%s5 + $0x78] sm:$0xff] %vm7150, %v7743
  %7808 = vst.msk [vmem:[%s5 + $0x80] sm:$0xff] %vm7150, %v7744
  %7809 = vst.msk [vmem:[%s5 + $0x88] sm:$0xff] %vm7150, %v7745
  %7810 = vst.msk [vmem:[%s5 + $0x90] sm:$0xff] %vm7150, %v7746
  %7811 = vst.msk [vmem:[%s5 + $0x98] sm:$0xff] %vm7150, %v7747
  %7812 = vst.msk [vmem:[%s5 + $0xa0] sm:$0xff] %vm7150, %v7748
  %7813 = vst.msk [vmem:[%s5 + $0xa8] sm:$0xff] %vm7150, %v7749
  %7814 = vst.msk [vmem:[%s5 + $0xb0] sm:$0xff] %vm7150, %v7750
  %7815 = vst.msk [vmem:[%s5 + $0xb8] sm:$0xff] %vm7150, %v7751
  %7816 = vst.msk [vmem:[%s5 + $0xc0] sm:$0xff] %vm7150, %v7752
  %7817 = vst.msk [vmem:[%s5 + $0xc8] sm:$0xff] %vm7150, %v7753
  %7818 = vst.msk [vmem:[%s5 + $0xd0] sm:$0xff] %vm7150, %v7754
  %7819 = vst.msk [vmem:[%s5 + $0xd8] sm:$0xff] %vm7150, %v7755
  %7820 = vst.msk [vmem:[%s5 + $0xe0] sm:$0xff] %vm7150, %v7756
  %7821 = vst.msk [vmem:[%s5 + $0xe8] sm:$0xff] %vm7150, %v7757
  %7822 = vst.msk [vmem:[%s5 + $0xf0] sm:$0xff] %vm7150, %v7758
  %7823 = vst.msk [vmem:[%s5 + $0xf8] sm:$0xff] %vm7150, %v7759
  %7824 = vst.msk [vmem:[%s5 + $0x100] sm:$0xff] %vm7150, %v7760
  %7825 = vst.msk [vmem:[%s5 + $0x108] sm:$0xff] %vm7150, %v7761
  %7826 = vst.msk [vmem:[%s5 + $0x110] sm:$0xff] %vm7150, %v7762
  %7827 = vst.msk [vmem:[%s5 + $0x118] sm:$0xff] %vm7150, %v7763
  %7828 = vst.msk [vmem:[%s5 + $0x120] sm:$0xff] %vm7150, %v7764
  %7829 = vst.msk [vmem:[%s5 + $0x128] sm:$0xff] %vm7150, %v7765
  %7830 = vst.msk [vmem:[%s5 + $0x130] sm:$0xff] %vm7150, %v7766
  %7831 = vst.msk [vmem:[%s5 + $0x138] sm:$0xff] %vm7150, %v7767
  %7832 = vst.msk [vmem:[%s5 + $0x140] sm:$0xff] %vm7150, %v7768
  %7833 = vst.msk [vmem:[%s5 + $0x148] sm:$0xff] %vm7150, %v7769
  %7834 = vst.msk [vmem:[%s5 + $0x150] sm:$0xff] %vm7150, %v7770
  %7835 = vst.msk [vmem:[%s5 + $0x158] sm:$0xff] %vm7150, %v7771
  %7836 = vst.msk [vmem:[%s5 + $0x160] sm:$0xff] %vm7150, %v7772
  %7837 = vst.msk [vmem:[%s5 + $0x168] sm:$0xff] %vm7150, %v7773
  %7838 = vst.msk [vmem:[%s5 + $0x170] sm:$0xff] %vm7150, %v7774
  %7839 = vst.msk [vmem:[%s5 + $0x178] sm:$0xff] %vm7150, %v7775
  %7840 = vst.msk [vmem:[%s5 + $0x180] sm:$0xff] %vm7150, %v7776
  %7841 = vst.msk [vmem:[%s5 + $0x188] sm:$0xff] %vm7150, %v7777
  %7842 = vst.msk [vmem:[%s5 + $0x190] sm:$0xff] %vm7150, %v7778
  %7843 = vst.msk [vmem:[%s5 + $0x198] sm:$0xff] %vm7150, %v7779
  %7844 = vst.msk [vmem:[%s5 + $0x1a0] sm:$0xff] %vm7150, %v7780
  %7845 = vst.msk [vmem:[%s5 + $0x1a8] sm:$0xff] %vm7150, %v7781
  %7846 = vst.msk [vmem:[%s5 + $0x1b0] sm:$0xff] %vm7150, %v7782
  %7847 = vst.msk [vmem:[%s5 + $0x1b8] sm:$0xff] %vm7150, %v7783
  %7848 = vst.msk [vmem:[%s5 + $0x1c0] sm:$0xff] %vm7150, %v7784
  %7849 = vst.msk [vmem:[%s5 + $0x1c8] sm:$0xff] %vm7150, %v7785
  %7850 = vst.msk [vmem:[%s5 + $0x1d0] sm:$0xff] %vm7150, %v7786
  %7851 = vst.msk [vmem:[%s5 + $0x1d8] sm:$0xff] %vm7150, %v7787
  %7852 = vst.msk [vmem:[%s5 + $0x1e0] sm:$0xff] %vm7150, %v7788
  %7853 = vst.msk [vmem:[%s5 + $0x1e8] sm:$0xff] %vm7150, %v7789
  %7854 = vst.msk [vmem:[%s5 + $0x1f0] sm:$0xff] %vm7150, %v7790
  %7855 = vst.msk [vmem:[%s5 + $0x1f8] sm:$0xff] %vm7150, %v7791
  // Predicated region
  $region22: #{mlp_plr_forward.2} parent=0 // pred_check
    _
  $region23: #{mlp_plr_forward.2} parent=0 // pred_check_branch
    %7857 = sbr.rel (0) target = $region25
  $region24: #{mlp_plr_forward.2} parent=0 // pred_region
    _
  $region25: #{mlp_plr_forward.2} parent=0 // pred_fallthru
    _
  // Predicated region
  $region26: #{mlp_plr_forward.2} parent=0 // pred_check
    _
  $region27: #{mlp_plr_forward.2} parent=0 // pred_check_branch
    %7859 = sbr.rel (0) target = $region29
  $region28: #{mlp_plr_forward.2} parent=0 // pred_region
    _
  $region29: #{mlp_plr_forward.2} parent=0 // pred_fallthru
    _

// kernel: mlp_plr_forward.3
$region0: #{mlp_plr_forward.3}
  #allocation0 [shape = 'u32[]', space=smem, size = 0x4, offset = 0x4, fixed_abs, tag = 'smem constant byte address 0x4 - core index']
  #allocation1 [shape = 'u32[144,128]{1,0:T(1,128)}', space=vmem, size = 0x12000, scoped, tag = 'internal scratch']
  %s0 = inlined_call_operand.vmem [shape: f32[8,2048], index: 0, kind: input, shape index: {}]
  %s1 = inlined_call_operand.vmem [shape: f32[2048,128], index: 1, kind: input, shape index: {}]
  %s2 = inlined_call_operand.vmem [shape: f32[1,128], index: 2, kind: input, shape index: {}]
  %s3 = inlined_call_operand.vmem [shape: f32[128,128], index: 3, kind: input, shape index: {}]
  %s4 = inlined_call_operand.vmem [shape: f32[1,128], index: 4, kind: input, shape index: {}]
  %s5 = inlined_call_operand.vmem [shape: f32[128,128], index: 5, kind: input, shape index: {}]
  %s6 = inlined_call_operand.vmem [shape: f32[1,128], index: 6, kind: input, shape index: {}]
  %s7 = inlined_call_operand.vmem [shape: f32[128,10], index: 7, kind: input, shape index: {}]
  %s8 = inlined_call_operand.vmem [shape: f32[1,10], index: 8, kind: input, shape index: {}]
  %s9 = inlined_call_operand.hbm [shape: f32[8,10], index: 9, kind: output, shape index: {}]
  %s10 = sld [smem:[#allocation0]]
  $region46: #{mlp_plr_forward.3} parent=0
    _
  %s12 = ssub.s32 1, %s10
  %s13 = scalar_select 0, %s12, %s10
  $region1: #{mlp_plr_forward.3} parent=0
    #allocation2 [shape = 'u8[4096]{0}', space=vmem, size = 0x1000, scoped, tag = 'output window, operand 0, single buffered']
    #allocation3 [shape = 's32[1]{0}', space=sflag, size = 0x4, scoped, tag = 'scoped memory for mlp_plr_forward.3']
    %14 = vsyncpa [#allocation3], 0
    // Predicated region
    $region2: #{mlp_plr_forward.3} parent=1 // pred_check
      _
    $region3: #{mlp_plr_forward.3} parent=1 // pred_check_branch
      %16 = sbr.rel (0) target = $region5
    $region4: #{mlp_plr_forward.3} parent=1 // pred_region
      _
    $region5: #{mlp_plr_forward.3} parent=1 // pred_fallthru
      _
    // Predicated region
    $region6: #{mlp_plr_forward.3} parent=1 // pred_check
      _
    $region7: #{mlp_plr_forward.3} parent=1 // pred_check_branch
      %18 = sbr.rel (0) target = $region9
    $region8: #{mlp_plr_forward.3} parent=1 // pred_region
      _
    $region9: #{mlp_plr_forward.3} parent=1 // pred_fallthru
      _
    // Predicated region
    $region10: #{mlp_plr_forward.3} parent=1 // pred_check
      _
    $region11: #{mlp_plr_forward.3} parent=1 // pred_check_branch
      %20 = sbr.rel (0) target = $region13
    $region12: #{mlp_plr_forward.3} parent=1 // pred_region
      _
    $region13: #{mlp_plr_forward.3} parent=1 // pred_fallthru
      _
    // Predicated region
    $region14: #{mlp_plr_forward.3} parent=1 // pred_check
      _
    $region15: #{mlp_plr_forward.3} parent=1 // pred_check_branch
      %22 = sbr.rel (0) target = $region17
    $region16: #{mlp_plr_forward.3} parent=1 // pred_region
      _
    $region17: #{mlp_plr_forward.3} parent=1 // pred_fallthru
      _
    // Predicated region
    $region18: #{mlp_plr_forward.3} parent=1 // pred_check
      _
    $region19: #{mlp_plr_forward.3} parent=1 // pred_check_branch
      %24 = sbr.rel (0) target = $region21
    $region20: #{mlp_plr_forward.3} parent=1 // pred_region
      _
    $region21: #{mlp_plr_forward.3} parent=1 // pred_fallthru
      _
    // Predicated region
    $region22: #{mlp_plr_forward.3} parent=1 // pred_check
      _
    $region23: #{mlp_plr_forward.3} parent=1 // pred_check_branch
      %26 = sbr.rel (0) target = $region25
    $region24: #{mlp_plr_forward.3} parent=1 // pred_region
      _
    $region25: #{mlp_plr_forward.3} parent=1 // pred_fallthru
      _
    // Predicated region
    $region26: #{mlp_plr_forward.3} parent=1 // pred_check
      _
    $region27: #{mlp_plr_forward.3} parent=1 // pred_check_branch
      %28 = sbr.rel (0) target = $region29
    $region28: #{mlp_plr_forward.3} parent=1 // pred_region
      _
    $region29: #{mlp_plr_forward.3} parent=1 // pred_fallthru
      _
    // Predicated region
    $region30: #{mlp_plr_forward.3} parent=1 // pred_check
      _
    $region31: #{mlp_plr_forward.3} parent=1 // pred_check_branch
      %30 = sbr.rel (0) target = $region33
    $region32: #{mlp_plr_forward.3} parent=1 // pred_region
      _
    $region33: #{mlp_plr_forward.3} parent=1 // pred_fallthru
      _
    // Predicated region
    $region34: #{mlp_plr_forward.3} parent=1 // pred_check
      _
    $region35: #{mlp_plr_forward.3} parent=1 // pred_check_branch
      %32 = sbr.rel (0) target = $region37
    $region36: #{mlp_plr_forward.3} parent=1 // pred_region
      _
    $region37: #{mlp_plr_forward.3} parent=1 // pred_fallthru
      _
    %v33 = vld [vmem:[%s0] sm:$0xff]
    %v34 = vld [vmem:[%s0 + $0x8] sm:$0xff]
    %v35 = vld [vmem:[%s0 + $0x10] sm:$0xff]
    %v36 = vld [vmem:[%s0 + $0x18] sm:$0xff]
    %v37 = vld [vmem:[%s0 + $0x20] sm:$0xff]
    %v38 = vld [vmem:[%s0 + $0x28] sm:$0xff]
    %v39 = vld [vmem:[%s0 + $0x30] sm:$0xff]
    %v40 = vld [vmem:[%s0 + $0x38] sm:$0xff]
    %v41 = vld [vmem:[%s0 + $0x40] sm:$0xff]
    %v42 = vld [vmem:[%s0 + $0x48] sm:$0xff]
    %v43 = vld [vmem:[%s0 + $0x50] sm:$0xff]
    %v44 = vld [vmem:[%s0 + $0x58] sm:$0xff]
    %v45 = vld [vmem:[%s0 + $0x60] sm:$0xff]
    %v46 = vld [vmem:[%s0 + $0x68] sm:$0xff]
    %v47 = vld [vmem:[%s0 + $0x70] sm:$0xff]
    %v48 = vld [vmem:[%s0 + $0x78] sm:$0xff]
    %v49 = vld [vmem:[%s1] sm:$0xff]
    %v50 = vld [vmem:[%s1 + $0x8] sm:$0xff]
    %v51 = vld [vmem:[%s1 + $0x10] sm:$0xff]
    %v52 = vld [vmem:[%s1 + $0x18] sm:$0xff]
    %v53 = vld [vmem:[%s1 + $0x20] sm:$0xff]
    %v54 = vld [vmem:[%s1 + $0x28] sm:$0xff]
    %v55 = vld [vmem:[%s1 + $0x30] sm:$0xff]
    %v56 = vld [vmem:[%s1 + $0x38] sm:$0xff]
    %v57 = vld [vmem:[%s1 + $0x40] sm:$0xff]
    %v58 = vld [vmem:[%s1 + $0x48] sm:$0xff]
    %v59 = vld [vmem:[%s1 + $0x50] sm:$0xff]
    %v60 = vld [vmem:[%s1 + $0x58] sm:$0xff]
    %v61 = vld [vmem:[%s1 + $0x60] sm:$0xff]
    %v62 = vld [vmem:[%s1 + $0x68] sm:$0xff]
    %v63 = vld [vmem:[%s1 + $0x70] sm:$0xff]
    %v64 = vld [vmem:[%s1 + $0x78] sm:$0xff]
    %v65 = vld [vmem:[%s1 + $0x80] sm:$0xff]
    %v66 = vld [vmem:[%s1 + $0x88] sm:$0xff]
    %v67 = vld [vmem:[%s1 + $0x90] sm:$0xff]
    %v68 = vld [vmem:[%s1 + $0x98] sm:$0xff]
    %v69 = vld [vmem:[%s1 + $0xa0] sm:$0xff]
    %v70 = vld [vmem:[%s1 + $0xa8] sm:$0xff]
    %v71 = vld [vmem:[%s1 + $0xb0] sm:$0xff]
    %v72 = vld [vmem:[%s1 + $0xb8] sm:$0xff]
    %v73 = vld [vmem:[%s1 + $0xc0] sm:$0xff]
    %v74 = vld [vmem:[%s1 + $0xc8] sm:$0xff]
    %v75 = vld [vmem:[%s1 + $0xd0] sm:$0xff]
    %v76 = vld [vmem:[%s1 + $0xd8] sm:$0xff]
    %v77 = vld [vmem:[%s1 + $0xe0] sm:$0xff]
    %v78 = vld [vmem:[%s1 + $0xe8] sm:$0xff]
    %v79 = vld [vmem:[%s1 + $0xf0] sm:$0xff]
    %v80 = vld [vmem:[%s1 + $0xf8] sm:$0xff]
    %v81 = vld [vmem:[%s1 + $0x100] sm:$0xff]
    %v82 = vld [vmem:[%s1 + $0x108] sm:$0xff]
    %v83 = vld [vmem:[%s1 + $0x110] sm:$0xff]
    %v84 = vld [vmem:[%s1 + $0x118] sm:$0xff]
    %v85 = vld [vmem:[%s1 + $0x120] sm:$0xff]
    %v86 = vld [vmem:[%s1 + $0x128] sm:$0xff]
    %v87 = vld [vmem:[%s1 + $0x130] sm:$0xff]
    %v88 = vld [vmem:[%s1 + $0x138] sm:$0xff]
    %v89 = vld [vmem:[%s1 + $0x140] sm:$0xff]
    %v90 = vld [vmem:[%s1 + $0x148] sm:$0xff]
    %v91 = vld [vmem:[%s1 + $0x150] sm:$0xff]
    %v92 = vld [vmem:[%s1 + $0x158] sm:$0xff]
    %v93 = vld [vmem:[%s1 + $0x160] sm:$0xff]
    %v94 = vld [vmem:[%s1 + $0x168] sm:$0xff]
    %v95 = vld [vmem:[%s1 + $0x170] sm:$0xff]
    %v96 = vld [vmem:[%s1 + $0x178] sm:$0xff]
    %v97 = vld [vmem:[%s1 + $0x180] sm:$0xff]
    %v98 = vld [vmem:[%s1 + $0x188] sm:$0xff]
    %v99 = vld [vmem:[%s1 + $0x190] sm:$0xff]
    %v100 = vld [vmem:[%s1 + $0x198] sm:$0xff]
    %v101 = vld [vmem:[%s1 + $0x1a0] sm:$0xff]
    %v102 = vld [vmem:[%s1 + $0x1a8] sm:$0xff]
    %v103 = vld [vmem:[%s1 + $0x1b0] sm:$0xff]
    %v104 = vld [vmem:[%s1 + $0x1b8] sm:$0xff]
    %v105 = vld [vmem:[%s1 + $0x1c0] sm:$0xff]
    %v106 = vld [vmem:[%s1 + $0x1c8] sm:$0xff]
    %v107 = vld [vmem:[%s1 + $0x1d0] sm:$0xff]
    %v108 = vld [vmem:[%s1 + $0x1d8] sm:$0xff]
    %v109 = vld [vmem:[%s1 + $0x1e0] sm:$0xff]
    %v110 = vld [vmem:[%s1 + $0x1e8] sm:$0xff]
    %v111 = vld [vmem:[%s1 + $0x1f0] sm:$0xff]
    %v112 = vld [vmem:[%s1 + $0x1f8] sm:$0xff]
    %v113 = vld [vmem:[%s1 + $0x200] sm:$0xff]
    %v114 = vld [vmem:[%s1 + $0x208] sm:$0xff]
    %v115 = vld [vmem:[%s1 + $0x210] sm:$0xff]
    %v116 = vld [vmem:[%s1 + $0x218] sm:$0xff]
    %v117 = vld [vmem:[%s1 + $0x220] sm:$0xff]
    %v118 = vld [vmem:[%s1 + $0x228] sm:$0xff]
    %v119 = vld [vmem:[%s1 + $0x230] sm:$0xff]
    %v120 = vld [vmem:[%s1 + $0x238] sm:$0xff]
    %v121 = vld [vmem:[%s1 + $0x240] sm:$0xff]
    %v122 = vld [vmem:[%s1 + $0x248] sm:$0xff]
    %v123 = vld [vmem:[%s1 + $0x250] sm:$0xff]
    %v124 = vld [vmem:[%s1 + $0x258] sm:$0xff]
    %v125 = vld [vmem:[%s1 + $0x260] sm:$0xff]
    %v126 = vld [vmem:[%s1 + $0x268] sm:$0xff]
    %v127 = vld [vmem:[%s1 + $0x270] sm:$0xff]
    %v128 = vld [vmem:[%s1 + $0x278] sm:$0xff]
    %v129 = vld [vmem:[%s1 + $0x280] sm:$0xff]
    %v130 = vld [vmem:[%s1 + $0x288] sm:$0xff]
    %v131 = vld [vmem:[%s1 + $0x290] sm:$0xff]
    %v132 = vld [vmem:[%s1 + $0x298] sm:$0xff]
    %v133 = vld [vmem:[%s1 + $0x2a0] sm:$0xff]
    %v134 = vld [vmem:[%s1 + $0x2a8] sm:$0xff]
    %v135 = vld [vmem:[%s1 + $0x2b0] sm:$0xff]
    %v136 = vld [vmem:[%s1 + $0x2b8] sm:$0xff]
    %v137 = vld [vmem:[%s1 + $0x2c0] sm:$0xff]
    %v138 = vld [vmem:[%s1 + $0x2c8] sm:$0xff]
    %v139 = vld [vmem:[%s1 + $0x2d0] sm:$0xff]
    %v140 = vld [vmem:[%s1 + $0x2d8] sm:$0xff]
    %v141 = vld [vmem:[%s1 + $0x2e0] sm:$0xff]
    %v142 = vld [vmem:[%s1 + $0x2e8] sm:$0xff]
    %v143 = vld [vmem:[%s1 + $0x2f0] sm:$0xff]
    %v144 = vld [vmem:[%s1 + $0x2f8] sm:$0xff]
    %v145 = vld [vmem:[%s1 + $0x300] sm:$0xff]
    %v146 = vld [vmem:[%s1 + $0x308] sm:$0xff]
    %v147 = vld [vmem:[%s1 + $0x310] sm:$0xff]
    %v148 = vld [vmem:[%s1 + $0x318] sm:$0xff]
    %v149 = vld [vmem:[%s1 + $0x320] sm:$0xff]
    %v150 = vld [vmem:[%s1 + $0x328] sm:$0xff]
    %v151 = vld [vmem:[%s1 + $0x330] sm:$0xff]
    %v152 = vld [vmem:[%s1 + $0x338] sm:$0xff]
    %v153 = vld [vmem:[%s1 + $0x340] sm:$0xff]
    %v154 = vld [vmem:[%s1 + $0x348] sm:$0xff]
    %v155 = vld [vmem:[%s1 + $0x350] sm:$0xff]
    %v156 = vld [vmem:[%s1 + $0x358] sm:$0xff]
    %v157 = vld [vmem:[%s1 + $0x360] sm:$0xff]
    %v158 = vld [vmem:[%s1 + $0x368] sm:$0xff]
    %v159 = vld [vmem:[%s1 + $0x370] sm:$0xff]
    %v160 = vld [vmem:[%s1 + $0x378] sm:$0xff]
    %v161 = vld [vmem:[%s1 + $0x380] sm:$0xff]
    %v162 = vld [vmem:[%s1 + $0x388] sm:$0xff]
    %v163 = vld [vmem:[%s1 + $0x390] sm:$0xff]
    %v164 = vld [vmem:[%s1 + $0x398] sm:$0xff]
    %v165 = vld [vmem:[%s1 + $0x3a0] sm:$0xff]
    %v166 = vld [vmem:[%s1 + $0x3a8] sm:$0xff]
    %v167 = vld [vmem:[%s1 + $0x3b0] sm:$0xff]
    %v168 = vld [vmem:[%s1 + $0x3b8] sm:$0xff]
    %v169 = vld [vmem:[%s1 + $0x3c0] sm:$0xff]
    %v170 = vld [vmem:[%s1 + $0x3c8] sm:$0xff]
    %v171 = vld [vmem:[%s1 + $0x3d0] sm:$0xff]
    %v172 = vld [vmem:[%s1 + $0x3d8] sm:$0xff]
    %v173 = vld [vmem:[%s1 + $0x3e0] sm:$0xff]
    %v174 = vld [vmem:[%s1 + $0x3e8] sm:$0xff]
    %v175 = vld [vmem:[%s1 + $0x3f0] sm:$0xff]
    %v176 = vld [vmem:[%s1 + $0x3f8] sm:$0xff]
    %v177 = vld [vmem:[%s1 + $0x400] sm:$0xff]
    %v178 = vld [vmem:[%s1 + $0x408] sm:$0xff]
    %v179 = vld [vmem:[%s1 + $0x410] sm:$0xff]
    %v180 = vld [vmem:[%s1 + $0x418] sm:$0xff]
    %v181 = vld [vmem:[%s1 + $0x420] sm:$0xff]
    %v182 = vld [vmem:[%s1 + $0x428] sm:$0xff]
    %v183 = vld [vmem:[%s1 + $0x430] sm:$0xff]
    %v184 = vld [vmem:[%s1 + $0x438] sm:$0xff]
    %v185 = vld [vmem:[%s1 + $0x440] sm:$0xff]
    %v186 = vld [vmem:[%s1 + $0x448] sm:$0xff]
    %v187 = vld [vmem:[%s1 + $0x450] sm:$0xff]
    %v188 = vld [vmem:[%s1 + $0x458] sm:$0xff]
    %v189 = vld [vmem:[%s1 + $0x460] sm:$0xff]
    %v190 = vld [vmem:[%s1 + $0x468] sm:$0xff]
    %v191 = vld [vmem:[%s1 + $0x470] sm:$0xff]
    %v192 = vld [vmem:[%s1 + $0x478] sm:$0xff]
    %v193 = vld [vmem:[%s1 + $0x480] sm:$0xff]
    %v194 = vld [vmem:[%s1 + $0x488] sm:$0xff]
    %v195 = vld [vmem:[%s1 + $0x490] sm:$0xff]
    %v196 = vld [vmem:[%s1 + $0x498] sm:$0xff]
    %v197 = vld [vmem:[%s1 + $0x4a0] sm:$0xff]
    %v198 = vld [vmem:[%s1 + $0x4a8] sm:$0xff]
    %v199 = vld [vmem:[%s1 + $0x4b0] sm:$0xff]
    %v200 = vld [vmem:[%s1 + $0x4b8] sm:$0xff]
    %v201 = vld [vmem:[%s1 + $0x4c0] sm:$0xff]
    %v202 = vld [vmem:[%s1 + $0x4c8] sm:$0xff]
    %v203 = vld [vmem:[%s1 + $0x4d0] sm:$0xff]
    %v204 = vld [vmem:[%s1 + $0x4d8] sm:$0xff]
    %v205 = vld [vmem:[%s1 + $0x4e0] sm:$0xff]
    %v206 = vld [vmem:[%s1 + $0x4e8] sm:$0xff]
    %v207 = vld [vmem:[%s1 + $0x4f0] sm:$0xff]
    %v208 = vld [vmem:[%s1 + $0x4f8] sm:$0xff]
    %v209 = vld [vmem:[%s1 + $0x500] sm:$0xff]
    %v210 = vld [vmem:[%s1 + $0x508] sm:$0xff]
    %v211 = vld [vmem:[%s1 + $0x510] sm:$0xff]
    %v212 = vld [vmem:[%s1 + $0x518] sm:$0xff]
    %v213 = vld [vmem:[%s1 + $0x520] sm:$0xff]
    %v214 = vld [vmem:[%s1 + $0x528] sm:$0xff]
    %v215 = vld [vmem:[%s1 + $0x530] sm:$0xff]
    %v216 = vld [vmem:[%s1 + $0x538] sm:$0xff]
    %v217 = vld [vmem:[%s1 + $0x540] sm:$0xff]
    %v218 = vld [vmem:[%s1 + $0x548] sm:$0xff]
    %v219 = vld [vmem:[%s1 + $0x550] sm:$0xff]
    %v220 = vld [vmem:[%s1 + $0x558] sm:$0xff]
    %v221 = vld [vmem:[%s1 + $0x560] sm:$0xff]
    %v222 = vld [vmem:[%s1 + $0x568] sm:$0xff]
    %v223 = vld [vmem:[%s1 + $0x570] sm:$0xff]
    %v224 = vld [vmem:[%s1 + $0x578] sm:$0xff]
    %v225 = vld [vmem:[%s1 + $0x580] sm:$0xff]
    %v226 = vld [vmem:[%s1 + $0x588] sm:$0xff]
    %v227 = vld [vmem:[%s1 + $0x590] sm:$0xff]
    %v228 = vld [vmem:[%s1 + $0x598] sm:$0xff]
    %v229 = vld [vmem:[%s1 + $0x5a0] sm:$0xff]
    %v230 = vld [vmem:[%s1 + $0x5a8] sm:$0xff]
    %v231 = vld [vmem:[%s1 + $0x5b0] sm:$0xff]
    %v232 = vld [vmem:[%s1 + $0x5b8] sm:$0xff]
    %v233 = vld [vmem:[%s1 + $0x5c0] sm:$0xff]
    %v234 = vld [vmem:[%s1 + $0x5c8] sm:$0xff]
    %v235 = vld [vmem:[%s1 + $0x5d0] sm:$0xff]
    %v236 = vld [vmem:[%s1 + $0x5d8] sm:$0xff]
    %v237 = vld [vmem:[%s1 + $0x5e0] sm:$0xff]
    %v238 = vld [vmem:[%s1 + $0x5e8] sm:$0xff]
    %v239 = vld [vmem:[%s1 + $0x5f0] sm:$0xff]
    %v240 = vld [vmem:[%s1 + $0x5f8] sm:$0xff]
    %v241 = vld [vmem:[%s1 + $0x600] sm:$0xff]
    %v242 = vld [vmem:[%s1 + $0x608] sm:$0xff]
    %v243 = vld [vmem:[%s1 + $0x610] sm:$0xff]
    %v244 = vld [vmem:[%s1 + $0x618] sm:$0xff]
    %v245 = vld [vmem:[%s1 + $0x620] sm:$0xff]
    %v246 = vld [vmem:[%s1 + $0x628] sm:$0xff]
    %v247 = vld [vmem:[%s1 + $0x630] sm:$0xff]
    %v248 = vld [vmem:[%s1 + $0x638] sm:$0xff]
    %v249 = vld [vmem:[%s1 + $0x640] sm:$0xff]
    %v250 = vld [vmem:[%s1 + $0x648] sm:$0xff]
    %v251 = vld [vmem:[%s1 + $0x650] sm:$0xff]
    %v252 = vld [vmem:[%s1 + $0x658] sm:$0xff]
    %v253 = vld [vmem:[%s1 + $0x660] sm:$0xff]
    %v254 = vld [vmem:[%s1 + $0x668] sm:$0xff]
    %v255 = vld [vmem:[%s1 + $0x670] sm:$0xff]
    %v256 = vld [vmem:[%s1 + $0x678] sm:$0xff]
    %v257 = vld [vmem:[%s1 + $0x680] sm:$0xff]
    %v258 = vld [vmem:[%s1 + $0x688] sm:$0xff]
    %v259 = vld [vmem:[%s1 + $0x690] sm:$0xff]
    %v260 = vld [vmem:[%s1 + $0x698] sm:$0xff]
    %v261 = vld [vmem:[%s1 + $0x6a0] sm:$0xff]
    %v262 = vld [vmem:[%s1 + $0x6a8] sm:$0xff]
    %v263 = vld [vmem:[%s1 + $0x6b0] sm:$0xff]
    %v264 = vld [vmem:[%s1 + $0x6b8] sm:$0xff]
    %v265 = vld [vmem:[%s1 + $0x6c0] sm:$0xff]
    %v266 = vld [vmem:[%s1 + $0x6c8] sm:$0xff]
    %v267 = vld [vmem:[%s1 + $0x6d0] sm:$0xff]
    %v268 = vld [vmem:[%s1 + $0x6d8] sm:$0xff]
    %v269 = vld [vmem:[%s1 + $0x6e0] sm:$0xff]
    %v270 = vld [vmem:[%s1 + $0x6e8] sm:$0xff]
    %v271 = vld [vmem:[%s1 + $0x6f0] sm:$0xff]
    %v272 = vld [vmem:[%s1 + $0x6f8] sm:$0xff]
    %v273 = vld [vmem:[%s1 + $0x700] sm:$0xff]
    %v274 = vld [vmem:[%s1 + $0x708] sm:$0xff]
    %v275 = vld [vmem:[%s1 + $0x710] sm:$0xff]
    %v276 = vld [vmem:[%s1 + $0x718] sm:$0xff]
    %v277 = vld [vmem:[%s1 + $0x720] sm:$0xff]
    %v278 = vld [vmem:[%s1 + $0x728] sm:$0xff]
    %v279 = vld [vmem:[%s1 + $0x730] sm:$0xff]
    %v280 = vld [vmem:[%s1 + $0x738] sm:$0xff]
    %v281 = vld [vmem:[%s1 + $0x740] sm:$0xff]
    %v282 = vld [vmem:[%s1 + $0x748] sm:$0xff]
    %v283 = vld [vmem:[%s1 + $0x750] sm:$0xff]
    %v284 = vld [vmem:[%s1 + $0x758] sm:$0xff]
    %v285 = vld [vmem:[%s1 + $0x760] sm:$0xff]
    %v286 = vld [vmem:[%s1 + $0x768] sm:$0xff]
    %v287 = vld [vmem:[%s1 + $0x770] sm:$0xff]
    %v288 = vld [vmem:[%s1 + $0x778] sm:$0xff]
    %v289 = vld [vmem:[%s1 + $0x780] sm:$0xff]
    %v290 = vld [vmem:[%s1 + $0x788] sm:$0xff]
    %v291 = vld [vmem:[%s1 + $0x790] sm:$0xff]
    %v292 = vld [vmem:[%s1 + $0x798] sm:$0xff]
    %v293 = vld [vmem:[%s1 + $0x7a0] sm:$0xff]
    %v294 = vld [vmem:[%s1 + $0x7a8] sm:$0xff]
    %v295 = vld [vmem:[%s1 + $0x7b0] sm:$0xff]
    %v296 = vld [vmem:[%s1 + $0x7b8] sm:$0xff]
    %v297 = vld [vmem:[%s1 + $0x7c0] sm:$0xff]
    %v298 = vld [vmem:[%s1 + $0x7c8] sm:$0xff]
    %v299 = vld [vmem:[%s1 + $0x7d0] sm:$0xff]
    %v300 = vld [vmem:[%s1 + $0x7d8] sm:$0xff]
    %v301 = vld [vmem:[%s1 + $0x7e0] sm:$0xff]
    %v302 = vld [vmem:[%s1 + $0x7e8] sm:$0xff]
    %v303 = vld [vmem:[%s1 + $0x7f0] sm:$0xff]
    %v304 = vld [vmem:[%s1 + $0x7f8] sm:$0xff]
    %v305 = vld [vmem:[%s2] sm:$0x1]
    %v307 = vlaneseq
    %v308 = vshrl.u32 %v307, 7
    %v309 = vsub.s32 0, %v308
    %v310 = vrot.slane %v305, %v309
    %312 = vmatprep.subr.mxu0 0.0
    %313 = vmatpush1.msra.mxu0 %v49
    %314 = vmatprep.subr.mxu0 0.0
    %315 = vmatpush1.msra.mxu0 %v50
    %316 = vmatprep.subr.mxu0 0.0
    %317 = vmatpush1.msra.mxu0 %v51
    %318 = vmatprep.subr.mxu0 0.0
    %319 = vmatpush1.msra.mxu0 %v52
    %320 = vmatprep.subr.mxu0 0.0
    %321 = vmatpush1.msra.mxu0 %v53
    %322 = vmatprep.subr.mxu0 0.0
    %323 = vmatpush1.msra.mxu0 %v54
    %324 = vmatprep.subr.mxu0 0.0
    %325 = vmatpush1.msra.mxu0 %v55
    %326 = vmatprep.subr.mxu0 0.0
    %327 = vmatpush1.msra.mxu0 %v56
    %328 = vmatprep.subr.mxu0 0.0
    %329 = vmatpush1.msra.mxu0 %v57
    %330 = vmatprep.subr.mxu0 0.0
    %331 = vmatpush1.msra.mxu0 %v58
    %332 = vmatprep.subr.mxu0 0.0
    %333 = vmatpush1.msra.mxu0 %v59
    %334 = vmatprep.subr.mxu0 0.0
    %335 = vmatpush1.msra.mxu0 %v60
    %336 = vmatprep.subr.mxu0 0.0
    %337 = vmatpush1.msra.mxu0 %v61
    %338 = vmatprep.subr.mxu0 0.0
    %339 = vmatpush1.msra.mxu0 %v62
    %340 = vmatprep.subr.mxu0 0.0
    %341 = vmatpush1.msra.mxu0 %v63
    %342 = vmatprep.subr.mxu0 0.0
    %343 = vmatpush1.msra.mxu0 %v64
    %344 = vmatprep.subr.mxu0 0.0
    %345 = vmatpush1.msra.mxu0 %v65
    %346 = vmatprep.subr.mxu0 0.0
    %347 = vmatpush1.msra.mxu0 %v66
    %348 = vmatprep.subr.mxu0 0.0
    %349 = vmatpush1.msra.mxu0 %v67
    %350 = vmatprep.subr.mxu0 0.0
    %351 = vmatpush1.msra.mxu0 %v68
    %352 = vmatprep.subr.mxu0 0.0
    %353 = vmatpush1.msra.mxu0 %v69
    %354 = vmatprep.subr.mxu0 0.0
    %355 = vmatpush1.msra.mxu0 %v70
    %356 = vmatprep.subr.mxu0 0.0
    %357 = vmatpush1.msra.mxu0 %v71
    %358 = vmatprep.subr.mxu0 0.0
    %359 = vmatpush1.msra.mxu0 %v72
    %360 = vmatprep.subr.mxu0 0.0
    %361 = vmatpush1.msra.mxu0 %v73
    %362 = vmatprep.subr.mxu0 0.0
    %363 = vmatpush1.msra.mxu0 %v74
    %364 = vmatprep.subr.mxu0 0.0
    %365 = vmatpush1.msra.mxu0 %v75
    %366 = vmatprep.subr.mxu0 0.0
    %367 = vmatpush1.msra.mxu0 %v76
    %368 = vmatprep.subr.mxu0 0.0
    %369 = vmatpush1.msra.mxu0 %v77
    %370 = vmatprep.subr.mxu0 0.0
    %371 = vmatpush1.msra.mxu0 %v78
    %372 = vmatprep.subr.mxu0 0.0
    %373 = vmatpush1.msra.mxu0 %v79
    %374 = vmatprep.subr.mxu0 0.0
    %375 = vmatpush1.msra.mxu0 %v80
    %376 = vmatprep.mubr.f32.mxu0 %v34
    %377 = vmatmul.mubr.f32.gmra.mrb[0].mxu0 %v33
    %v378 = vpop.f32.mrb[0].mxu0
    %v379 = vadd.f32 %v310, %v378
    %v380 = vpop.f32.mrb[0].mxu0
    %381 = vdwg.mxu0
    %382 = vmatprep.subr.mxu0 0.0
    %383 = vmatpush1.msra.mxu0 %v81
    %384 = vmatprep.subr.mxu0 0.0
    %385 = vmatpush1.msra.mxu0 %v82
    %386 = vmatprep.subr.mxu0 0.0
    %387 = vmatpush1.msra.mxu0 %v83
    %388 = vmatprep.subr.mxu0 0.0
    %389 = vmatpush1.msra.mxu0 %v84
    %390 = vmatprep.subr.mxu0 0.0
    %391 = vmatpush1.msra.mxu0 %v85
    %392 = vmatprep.subr.mxu0 0.0
    %393 = vmatpush1.msra.mxu0 %v86
    %394 = vmatprep.subr.mxu0 0.0
    %395 = vmatpush1.msra.mxu0 %v87
    %396 = vmatprep.subr.mxu0 0.0
    %397 = vmatpush1.msra.mxu0 %v88
    %398 = vmatprep.subr.mxu0 0.0
    %399 = vmatpush1.msra.mxu0 %v89
    %400 = vmatprep.subr.mxu0 0.0
    %401 = vmatpush1.msra.mxu0 %v90
    %402 = vmatprep.subr.mxu0 0.0
    %403 = vmatpush1.msra.mxu0 %v91
    %404 = vmatprep.subr.mxu0 0.0
    %405 = vmatpush1.msra.mxu0 %v92
    %406 = vmatprep.subr.mxu0 0.0
    %407 = vmatpush1.msra.mxu0 %v93
    %408 = vmatprep.subr.mxu0 0.0
    %409 = vmatpush1.msra.mxu0 %v94
    %410 = vmatprep.subr.mxu0 0.0
    %411 = vmatpush1.msra.mxu0 %v95
    %412 = vmatprep.subr.mxu0 0.0
    %413 = vmatpush1.msra.mxu0 %v96
    %414 = vmatprep.subr.mxu0 0.0
    %415 = vmatpush1.msra.mxu0 %v97
    %416 = vmatprep.subr.mxu0 0.0
    %417 = vmatpush1.msra.mxu0 %v98
    %418 = vmatprep.subr.mxu0 0.0
    %419 = vmatpush1.msra.mxu0 %v99
    %420 = vmatprep.subr.mxu0 0.0
    %421 = vmatpush1.msra.mxu0 %v100
    %422 = vmatprep.subr.mxu0 0.0
    %423 = vmatpush1.msra.mxu0 %v101
    %424 = vmatprep.subr.mxu0 0.0
    %425 = vmatpush1.msra.mxu0 %v102
    %426 = vmatprep.subr.mxu0 0.0
    %427 = vmatpush1.msra.mxu0 %v103
    %428 = vmatprep.subr.mxu0 0.0
    %429 = vmatpush1.msra.mxu0 %v104
    %430 = vmatprep.subr.mxu0 0.0
    %431 = vmatpush1.msra.mxu0 %v105
    %432 = vmatprep.subr.mxu0 0.0
    %433 = vmatpush1.msra.mxu0 %v106
    %434 = vmatprep.subr.mxu0 0.0
    %435 = vmatpush1.msra.mxu0 %v107
    %436 = vmatprep.subr.mxu0 0.0
    %437 = vmatpush1.msra.mxu0 %v108
    %438 = vmatprep.subr.mxu0 0.0
    %439 = vmatpush1.msra.mxu0 %v109
    %440 = vmatprep.subr.mxu0 0.0
    %441 = vmatpush1.msra.mxu0 %v110
    %442 = vmatprep.subr.mxu0 0.0
    %443 = vmatpush1.msra.mxu0 %v111
    %444 = vmatprep.subr.mxu0 0.0
    %445 = vmatpush1.msra.mxu0 %v112
    %446 = vmatprep.mubr.f32.mxu0 %v36
    %447 = vmatmul.mubr.f32.gmra.mrb[0].mxu0 %v35
    %v448 = vpop.f32.mrb[0].mxu0
    %v449 = vadd.f32 %v379, %v448
    %v450 = vpop.f32.mrb[0].mxu0
    %451 = vdwg.mxu0
    %452 = vmatprep.subr.mxu0 0.0
    %453 = vmatpush1.msra.mxu0 %v113
    %454 = vmatprep.subr.mxu0 0.0
    %455 = vmatpush1.msra.mxu0 %v114
    %456 = vmatprep.subr.mxu0 0.0
    %457 = vmatpush1.msra.mxu0 %v115
    %458 = vmatprep.subr.mxu0 0.0
    %459 = vmatpush1.msra.mxu0 %v116
    %460 = vmatprep.subr.mxu0 0.0
    %461 = vmatpush1.msra.mxu0 %v117
    %462 = vmatprep.subr.mxu0 0.0
    %463 = vmatpush1.msra.mxu0 %v118
    %464 = vmatprep.subr.mxu0 0.0
    %465 = vmatpush1.msra.mxu0 %v119
    %466 = vmatprep.subr.mxu0 0.0
    %467 = vmatpush1.msra.mxu0 %v120
    %468 = vmatprep.subr.mxu0 0.0
    %469 = vmatpush1.msra.mxu0 %v121
    %470 = vmatprep.subr.mxu0 0.0
    %471 = vmatpush1.msra.mxu0 %v122
    %472 = vmatprep.subr.mxu0 0.0
    %473 = vmatpush1.msra.mxu0 %v123
    %474 = vmatprep.subr.mxu0 0.0
    %475 = vmatpush1.msra.mxu0 %v124
    %476 = vmatprep.subr.mxu0 0.0
    %477 = vmatpush1.msra.mxu0 %v125
    %478 = vmatprep.subr.mxu0 0.0
    %479 = vmatpush1.msra.mxu0 %v126
    %480 = vmatprep.subr.mxu0 0.0
    %481 = vmatpush1.msra.mxu0 %v127
    %482 = vmatprep.subr.mxu0 0.0
    %483 = vmatpush1.msra.mxu0 %v128
    %484 = vmatprep.subr.mxu0 0.0
    %485 = vmatpush1.msra.mxu0 %v129
    %486 = vmatprep.subr.mxu0 0.0
    %487 = vmatpush1.msra.mxu0 %v130
    %488 = vmatprep.subr.mxu0 0.0
    %489 = vmatpush1.msra.mxu0 %v131
    %490 = vmatprep.subr.mxu0 0.0
    %491 = vmatpush1.msra.mxu0 %v132
    %492 = vmatprep.subr.mxu0 0.0
    %493 = vmatpush1.msra.mxu0 %v133
    %494 = vmatprep.subr.mxu0 0.0
    %495 = vmatpush1.msra.mxu0 %v134
    %496 = vmatprep.subr.mxu0 0.0
    %497 = vmatpush1.msra.mxu0 %v135
    %498 = vmatprep.subr.mxu0 0.0
    %499 = vmatpush1.msra.mxu0 %v136
    %500 = vmatprep.subr.mxu0 0.0
    %501 = vmatpush1.msra.mxu0 %v137
    %502 = vmatprep.subr.mxu0 0.0
    %503 = vmatpush1.msra.mxu0 %v138
    %504 = vmatprep.subr.mxu0 0.0
    %505 = vmatpush1.msra.mxu0 %v139
    %506 = vmatprep.subr.mxu0 0.0
    %507 = vmatpush1.msra.mxu0 %v140
    %508 = vmatprep.subr.mxu0 0.0
    %509 = vmatpush1.msra.mxu0 %v141
    %510 = vmatprep.subr.mxu0 0.0
    %511 = vmatpush1.msra.mxu0 %v142
    %512 = vmatprep.subr.mxu0 0.0
    %513 = vmatpush1.msra.mxu0 %v143
    %514 = vmatprep.subr.mxu0 0.0
    %515 = vmatpush1.msra.mxu0 %v144
    %516 = vmatprep.mubr.f32.mxu0 %v38
    %517 = vmatmul.mubr.f32.gmra.mrb[0].mxu0 %v37
    %v518 = vpop.f32.mrb[0].mxu0
    %v519 = vadd.f32 %v449, %v518
    %v520 = vpop.f32.mrb[0].mxu0
    %521 = vdwg.mxu0
    %522 = vmatprep.subr.mxu0 0.0
    %523 = vmatpush1.msra.mxu0 %v145
    %524 = vmatprep.subr.mxu0 0.0
    %525 = vmatpush1.msra.mxu0 %v146
    %526 = vmatprep.subr.mxu0 0.0
    %527 = vmatpush1.msra.mxu0 %v147
    %528 = vmatprep.subr.mxu0 0.0
    %529 = vmatpush1.msra.mxu0 %v148
    %530 = vmatprep.subr.mxu0 0.0
    %531 = vmatpush1.msra.mxu0 %v149
    %532 = vmatprep.subr.mxu0 0.0
    %533 = vmatpush1.msra.mxu0 %v150
    %534 = vmatprep.subr.mxu0 0.0
    %535 = vmatpush1.msra.mxu0 %v151
    %536 = vmatprep.subr.mxu0 0.0
    %537 = vmatpush1.msra.mxu0 %v152
    %538 = vmatprep.subr.mxu0 0.0
    %539 = vmatpush1.msra.mxu0 %v153
    %540 = vmatprep.subr.mxu0 0.0
    %541 = vmatpush1.msra.mxu0 %v154
    %542 = vmatprep.subr.mxu0 0.0
    %543 = vmatpush1.msra.mxu0 %v155
    %544 = vmatprep.subr.mxu0 0.0
    %545 = vmatpush1.msra.mxu0 %v156
    %546 = vmatprep.subr.mxu0 0.0
    %547 = vmatpush1.msra.mxu0 %v157
    %548 = vmatprep.subr.mxu0 0.0
    %549 = vmatpush1.msra.mxu0 %v158
    %550 = vmatprep.subr.mxu0 0.0
    %551 = vmatpush1.msra.mxu0 %v159
    %552 = vmatprep.subr.mxu0 0.0
    %553 = vmatpush1.msra.mxu0 %v160
    %554 = vmatprep.subr.mxu0 0.0
    %555 = vmatpush1.msra.mxu0 %v161
    %556 = vmatprep.subr.mxu0 0.0
    %557 = vmatpush1.msra.mxu0 %v162
    %558 = vmatprep.subr.mxu0 0.0
    %559 = vmatpush1.msra.mxu0 %v163
    %560 = vmatprep.subr.mxu0 0.0
    %561 = vmatpush1.msra.mxu0 %v164
    %562 = vmatprep.subr.mxu0 0.0
    %563 = vmatpush1.msra.mxu0 %v165
    %564 = vmatprep.subr.mxu0 0.0
    %565 = vmatpush1.msra.mxu0 %v166
    %566 = vmatprep.subr.mxu0 0.0
    %567 = vmatpush1.msra.mxu0 %v167
    %568 = vmatprep.subr.mxu0 0.0
    %569 = vmatpush1.msra.mxu0 %v168
    %570 = vmatprep.subr.mxu0 0.0
    %571 = vmatpush1.msra.mxu0 %v169
    %572 = vmatprep.subr.mxu0 0.0
    %573 = vmatpush1.msra.mxu0 %v170
    %574 = vmatprep.subr.mxu0 0.0
    %575 = vmatpush1.msra.mxu0 %v171
    %576 = vmatprep.subr.mxu0 0.0
    %577 = vmatpush1.msra.mxu0 %v172
    %578 = vmatprep.subr.mxu0 0.0
    %579 = vmatpush1.msra.mxu0 %v173
    %580 = vmatprep.subr.mxu0 0.0
    %581 = vmatpush1.msra.mxu0 %v174
    %582 = vmatprep.subr.mxu0 0.0
    %583 = vmatpush1.msra.mxu0 %v175
    %584 = vmatprep.subr.mxu0 0.0
    %585 = vmatpush1.msra.mxu0 %v176
    %586 = vmatprep.mubr.f32.mxu0 %v40
    %587 = vmatmul.mubr.f32.gmra.mrb[0].mxu0 %v39
    %v588 = vpop.f32.mrb[0].mxu0
    %v589 = vadd.f32 %v519, %v588
    %v590 = vpop.f32.mrb[0].mxu0
    %591 = vdwg.mxu0
    %592 = vmatprep.subr.mxu0 0.0
    %593 = vmatpush1.msra.mxu0 %v177
    %594 = vmatprep.subr.mxu0 0.0
    %595 = vmatpush1.msra.mxu0 %v178
    %596 = vmatprep.subr.mxu0 0.0
    %597 = vmatpush1.msra.mxu0 %v179
    %598 = vmatprep.subr.mxu0 0.0
    %599 = vmatpush1.msra.mxu0 %v180
    %600 = vmatprep.subr.mxu0 0.0
    %601 = vmatpush1.msra.mxu0 %v181
    %602 = vmatprep.subr.mxu0 0.0
    %603 = vmatpush1.msra.mxu0 %v182
    %604 = vmatprep.subr.mxu0 0.0
    %605 = vmatpush1.msra.mxu0 %v183
    %606 = vmatprep.subr.mxu0 0.0
    %607 = vmatpush1.msra.mxu0 %v184
    %608 = vmatprep.subr.mxu0 0.0
    %609 = vmatpush1.msra.mxu0 %v185
    %610 = vmatprep.subr.mxu0 0.0
    %611 = vmatpush1.msra.mxu0 %v186
    %612 = vmatprep.subr.mxu0 0.0
    %613 = vmatpush1.msra.mxu0 %v187
    %614 = vmatprep.subr.mxu0 0.0
    %615 = vmatpush1.msra.mxu0 %v188
    %616 = vmatprep.subr.mxu0 0.0
    %617 = vmatpush1.msra.mxu0 %v189
    %618 = vmatprep.subr.mxu0 0.0
    %619 = vmatpush1.msra.mxu0 %v190
    %620 = vmatprep.subr.mxu0 0.0
    %621 = vmatpush1.msra.mxu0 %v191
    %622 = vmatprep.subr.mxu0 0.0
    %623 = vmatpush1.msra.mxu0 %v192
    %624 = vmatprep.subr.mxu0 0.0
    %625 = vmatpush1.msra.mxu0 %v193
    %626 = vmatprep.subr.mxu0 0.0
    %627 = vmatpush1.msra.mxu0 %v194
    %628 = vmatprep.subr.mxu0 0.0
    %629 = vmatpush1.msra.mxu0 %v195
    %630 = vmatprep.subr.mxu0 0.0
    %631 = vmatpush1.msra.mxu0 %v196
    %632 = vmatprep.subr.mxu0 0.0
    %633 = vmatpush1.msra.mxu0 %v197
    %634 = vmatprep.subr.mxu0 0.0
    %635 = vmatpush1.msra.mxu0 %v198
    %636 = vmatprep.subr.mxu0 0.0
    %637 = vmatpush1.msra.mxu0 %v199
    %638 = vmatprep.subr.mxu0 0.0
    %639 = vmatpush1.msra.mxu0 %v200
    %640 = vmatprep.subr.mxu0 0.0
    %641 = vmatpush1.msra.mxu0 %v201
    %642 = vmatprep.subr.mxu0 0.0
    %643 = vmatpush1.msra.mxu0 %v202
    %644 = vmatprep.subr.mxu0 0.0
    %645 = vmatpush1.msra.mxu0 %v203
    %646 = vmatprep.subr.mxu0 0.0
    %647 = vmatpush1.msra.mxu0 %v204
    %648 = vmatprep.subr.mxu0 0.0
    %649 = vmatpush1.msra.mxu0 %v205
    %650 = vmatprep.subr.mxu0 0.0
    %651 = vmatpush1.msra.mxu0 %v206
    %652 = vmatprep.subr.mxu0 0.0
    %653 = vmatpush1.msra.mxu0 %v207
    %654 = vmatprep.subr.mxu0 0.0
    %655 = vmatpush1.msra.mxu0 %v208
    %656 = vmatprep.mubr.f32.mxu0 %v42
    %657 = vmatmul.mubr.f32.gmra.mrb[0].mxu0 %v41
    %v658 = vpop.f32.mrb[0].mxu0
    %v659 = vadd.f32 %v589, %v658
    %v660 = vpop.f32.mrb[0].mxu0
    %661 = vdwg.mxu0
    %662 = vmatprep.subr.mxu0 0.0
    %663 = vmatpush1.msra.mxu0 %v209
    %664 = vmatprep.subr.mxu0 0.0
    %665 = vmatpush1.msra.mxu0 %v210
    %666 = vmatprep.subr.mxu0 0.0
    %667 = vmatpush1.msra.mxu0 %v211
    %668 = vmatprep.subr.mxu0 0.0
    %669 = vmatpush1.msra.mxu0 %v212
    %670 = vmatprep.subr.mxu0 0.0
    %671 = vmatpush1.msra.mxu0 %v213
    %672 = vmatprep.subr.mxu0 0.0
    %673 = vmatpush1.msra.mxu0 %v214
    %674 = vmatprep.subr.mxu0 0.0
    %675 = vmatpush1.msra.mxu0 %v215
    %676 = vmatprep.subr.mxu0 0.0
    %677 = vmatpush1.msra.mxu0 %v216
    %678 = vmatprep.subr.mxu0 0.0
    %679 = vmatpush1.msra.mxu0 %v217
    %680 = vmatprep.subr.mxu0 0.0
    %681 = vmatpush1.msra.mxu0 %v218
    %682 = vmatprep.subr.mxu0 0.0
    %683 = vmatpush1.msra.mxu0 %v219
    %684 = vmatprep.subr.mxu0 0.0
    %685 = vmatpush1.msra.mxu0 %v220
    %686 = vmatprep.subr.mxu0 0.0
    %687 = vmatpush1.msra.mxu0 %v221
    %688 = vmatprep.subr.mxu0 0.0
    %689 = vmatpush1.msra.mxu0 %v222
    %690 = vmatprep.subr.mxu0 0.0
    %691 = vmatpush1.msra.mxu0 %v223
    %692 = vmatprep.subr.mxu0 0.0
    %693 = vmatpush1.msra.mxu0 %v224
    %694 = vmatprep.subr.mxu0 0.0
    %695 = vmatpush1.msra.mxu0 %v225
    %696 = vmatprep.subr.mxu0 0.0
    %697 = vmatpush1.msra.mxu0 %v226
    %698 = vmatprep.subr.mxu0 0.0
    %699 = vmatpush1.msra.mxu0 %v227
    %700 = vmatprep.subr.mxu0 0.0
    %701 = vmatpush1.msra.mxu0 %v228
    %702 = vmatprep.subr.mxu0 0.0
    %703 = vmatpush1.msra.mxu0 %v229
    %704 = vmatprep.subr.mxu0 0.0
    %705 = vmatpush1.msra.mxu0 %v230
    %706 = vmatprep.subr.mxu0 0.0
    %707 = vmatpush1.msra.mxu0 %v231
    %708 = vmatprep.subr.mxu0 0.0
    %709 = vmatpush1.msra.mxu0 %v232
    %710 = vmatprep.subr.mxu0 0.0
    %711 = vmatpush1.msra.mxu0 %v233
    %712 = vmatprep.subr.mxu0 0.0
    %713 = vmatpush1.msra.mxu0 %v234
    %714 = vmatprep.subr.mxu0 0.0
    %715 = vmatpush1.msra.mxu0 %v235
    %716 = vmatprep.subr.mxu0 0.0
    %717 = vmatpush1.msra.mxu0 %v236
    %718 = vmatprep.subr.mxu0 0.0
    %719 = vmatpush1.msra.mxu0 %v237
    %720 = vmatprep.subr.mxu0 0.0
    %721 = vmatpush1.msra.mxu0 %v238
    %722 = vmatprep.subr.mxu0 0.0
    %723 = vmatpush1.msra.mxu0 %v239
    %724 = vmatprep.subr.mxu0 0.0
    %725 = vmatpush1.msra.mxu0 %v240
    %726 = vmatprep.mubr.f32.mxu0 %v44
    %727 = vmatmul.mubr.f32.gmra.mrb[0].mxu0 %v43
    %v728 = vpop.f32.mrb[0].mxu0
    %v729 = vadd.f32 %v659, %v728
    %v730 = vpop.f32.mrb[0].mxu0
    %731 = vdwg.mxu0
    %732 = vmatprep.subr.mxu0 0.0
    %733 = vmatpush1.msra.mxu0 %v241
    %734 = vmatprep.subr.mxu0 0.0
    %735 = vmatpush1.msra.mxu0 %v242
    %736 = vmatprep.subr.mxu0 0.0
    %737 = vmatpush1.msra.mxu0 %v243
    %738 = vmatprep.subr.mxu0 0.0
    %739 = vmatpush1.msra.mxu0 %v244
    %740 = vmatprep.subr.mxu0 0.0
    %741 = vmatpush1.msra.mxu0 %v245
    %742 = vmatprep.subr.mxu0 0.0
    %743 = vmatpush1.msra.mxu0 %v246
    %744 = vmatprep.subr.mxu0 0.0
    %745 = vmatpush1.msra.mxu0 %v247
    %746 = vmatprep.subr.mxu0 0.0
    %747 = vmatpush1.msra.mxu0 %v248
    %748 = vmatprep.subr.mxu0 0.0
    %749 = vmatpush1.msra.mxu0 %v249
    %750 = vmatprep.subr.mxu0 0.0
    %751 = vmatpush1.msra.mxu0 %v250
    %752 = vmatprep.subr.mxu0 0.0
    %753 = vmatpush1.msra.mxu0 %v251
    %754 = vmatprep.subr.mxu0 0.0
    %755 = vmatpush1.msra.mxu0 %v252
    %756 = vmatprep.subr.mxu0 0.0
    %757 = vmatpush1.msra.mxu0 %v253
    %758 = vmatprep.subr.mxu0 0.0
    %759 = vmatpush1.msra.mxu0 %v254
    %760 = vmatprep.subr.mxu0 0.0
    %761 = vmatpush1.msra.mxu0 %v255
    %762 = vmatprep.subr.mxu0 0.0
    %763 = vmatpush1.msra.mxu0 %v256
    %764 = vmatprep.subr.mxu0 0.0
    %765 = vmatpush1.msra.mxu0 %v257
    %766 = vmatprep.subr.mxu0 0.0
    %767 = vmatpush1.msra.mxu0 %v258
    %768 = vmatprep.subr.mxu0 0.0
    %769 = vmatpush1.msra.mxu0 %v259
    %770 = vmatprep.subr.mxu0 0.0
    %771 = vmatpush1.msra.mxu0 %v260
    %772 = vmatprep.subr.mxu0 0.0
    %773 = vmatpush1.msra.mxu0 %v261
    %774 = vmatprep.subr.mxu0 0.0
    %775 = vmatpush1.msra.mxu0 %v262
    %776 = vmatprep.subr.mxu0 0.0
    %777 = vmatpush1.msra.mxu0 %v263
    %778 = vmatprep.subr.mxu0 0.0
    %779 = vmatpush1.msra.mxu0 %v264
    %780 = vmatprep.subr.mxu0 0.0
    %781 = vmatpush1.msra.mxu0 %v265
    %782 = vmatprep.subr.mxu0 0.0
    %783 = vmatpush1.msra.mxu0 %v266
    %784 = vmatprep.subr.mxu0 0.0
    %785 = vmatpush1.msra.mxu0 %v267
    %786 = vmatprep.subr.mxu0 0.0
    %787 = vmatpush1.msra.mxu0 %v268
    %788 = vmatprep.subr.mxu0 0.0
    %789 = vmatpush1.msra.mxu0 %v269
    %790 = vmatprep.subr.mxu0 0.0
    %791 = vmatpush1.msra.mxu0 %v270
    %792 = vmatprep.subr.mxu0 0.0
    %793 = vmatpush1.msra.mxu0 %v271
    %794 = vmatprep.subr.mxu0 0.0
    %795 = vmatpush1.msra.mxu0 %v272
    %796 = vmatprep.mubr.f32.mxu0 %v46
    %797 = vmatmul.mubr.f32.gmra.mrb[0].mxu0 %v45
    %v798 = vpop.f32.mrb[0].mxu0
    %v799 = vadd.f32 %v729, %v798
    %v800 = vpop.f32.mrb[0].mxu0
    %801 = vdwg.mxu0
    %802 = vmatprep.subr.mxu0 0.0
    %803 = vmatpush1.msra.mxu0 %v273
    %804 = vmatprep.subr.mxu0 0.0
    %805 = vmatpush1.msra.mxu0 %v274
    %806 = vmatprep.subr.mxu0 0.0
    %807 = vmatpush1.msra.mxu0 %v275
    %808 = vmatprep.subr.mxu0 0.0
    %809 = vmatpush1.msra.mxu0 %v276
    %810 = vmatprep.subr.mxu0 0.0
    %811 = vmatpush1.msra.mxu0 %v277
    %812 = vmatprep.subr.mxu0 0.0
    %813 = vmatpush1.msra.mxu0 %v278
    %814 = vmatprep.subr.mxu0 0.0
    %815 = vmatpush1.msra.mxu0 %v279
    %816 = vmatprep.subr.mxu0 0.0
    %817 = vmatpush1.msra.mxu0 %v280
    %818 = vmatprep.subr.mxu0 0.0
    %819 = vmatpush1.msra.mxu0 %v281
    %820 = vmatprep.subr.mxu0 0.0
    %821 = vmatpush1.msra.mxu0 %v282
    %822 = vmatprep.subr.mxu0 0.0
    %823 = vmatpush1.msra.mxu0 %v283
    %824 = vmatprep.subr.mxu0 0.0
    %825 = vmatpush1.msra.mxu0 %v284
    %826 = vmatprep.subr.mxu0 0.0
    %827 = vmatpush1.msra.mxu0 %v285
    %828 = vmatprep.subr.mxu0 0.0
    %829 = vmatpush1.msra.mxu0 %v286
    %830 = vmatprep.subr.mxu0 0.0
    %831 = vmatpush1.msra.mxu0 %v287
    %832 = vmatprep.subr.mxu0 0.0
    %833 = vmatpush1.msra.mxu0 %v288
    %834 = vmatprep.subr.mxu0 0.0
    %835 = vmatpush1.msra.mxu0 %v289
    %836 = vmatprep.subr.mxu0 0.0
    %837 = vmatpush1.msra.mxu0 %v290
    %838 = vmatprep.subr.mxu0 0.0
    %839 = vmatpush1.msra.mxu0 %v291
    %840 = vmatprep.subr.mxu0 0.0
    %841 = vmatpush1.msra.mxu0 %v292
    %842 = vmatprep.subr.mxu0 0.0
    %843 = vmatpush1.msra.mxu0 %v293
    %844 = vmatprep.subr.mxu0 0.0
    %845 = vmatpush1.msra.mxu0 %v294
    %846 = vmatprep.subr.mxu0 0.0
    %847 = vmatpush1.msra.mxu0 %v295
    %848 = vmatprep.subr.mxu0 0.0
    %849 = vmatpush1.msra.mxu0 %v296
    %850 = vmatprep.subr.mxu0 0.0
    %851 = vmatpush1.msra.mxu0 %v297
    %852 = vmatprep.subr.mxu0 0.0
    %853 = vmatpush1.msra.mxu0 %v298
    %854 = vmatprep.subr.mxu0 0.0
    %855 = vmatpush1.msra.mxu0 %v299
    %856 = vmatprep.subr.mxu0 0.0
    %857 = vmatpush1.msra.mxu0 %v300
    %858 = vmatprep.subr.mxu0 0.0
    %859 = vmatpush1.msra.mxu0 %v301
    %860 = vmatprep.subr.mxu0 0.0
    %861 = vmatpush1.msra.mxu0 %v302
    %862 = vmatprep.subr.mxu0 0.0
    %863 = vmatpush1.msra.mxu0 %v303
    %864 = vmatprep.subr.mxu0 0.0
    %865 = vmatpush1.msra.mxu0 %v304
    %866 = vmatprep.mubr.f32.mxu0 %v48
    %867 = vmatmul.mubr.f32.gmra.mrb[0].mxu0 %v47
    %v868 = vpop.f32.mrb[0].mxu0
    %v869 = vadd.f32 %v799, %v868
    %v870 = vpop.f32.mrb[0].mxu0
    %871 = vdwg.mxu0
    %v872 = vmax.f32 %v869, 0.0
    %v873 = vld [vmem:[%s3] sm:$0xff]
    %v874 = vld [vmem:[%s3 + $0x8] sm:$0xff]
    %v875 = vld [vmem:[%s3 + $0x10] sm:$0xff]
    %v876 = vld [vmem:[%s3 + $0x18] sm:$0xff]
    %v877 = vld [vmem:[%s3 + $0x20] sm:$0xff]
    %v878 = vld [vmem:[%s3 + $0x28] sm:$0xff]
    %v879 = vld [vmem:[%s3 + $0x30] sm:$0xff]
    %v880 = vld [vmem:[%s3 + $0x38] sm:$0xff]
    %v881 = vld [vmem:[%s3 + $0x40] sm:$0xff]
    %v882 = vld [vmem:[%s3 + $0x48] sm:$0xff]
    %v883 = vld [vmem:[%s3 + $0x50] sm:$0xff]
    %v884 = vld [vmem:[%s3 + $0x58] sm:$0xff]
    %v885 = vld [vmem:[%s3 + $0x60] sm:$0xff]
    %v886 = vld [vmem:[%s3 + $0x68] sm:$0xff]
    %v887 = vld [vmem:[%s3 + $0x70] sm:$0xff]
    %v888 = vld [vmem:[%s3 + $0x78] sm:$0xff]
    %v889 = vld [vmem:[%s4] sm:$0x1]
    %v891 = vlaneseq
    %v892 = vshrl.u32 %v891, 7
    %v893 = vsub.s32 0, %v892
    %v894 = vrot.slane %v889, %v893
    %896 = vmatprep.subr.mxu0 0.0
    %897 = vmatpush1.msra.mxu0 %v873
    %898 = vmatprep.subr.mxu0 0.0
    %899 = vmatpush1.msra.mxu0 %v874
    %900 = vmatprep.subr.mxu0 0.0
    %901 = vmatpush1.msra.mxu0 %v875
    %902 = vmatprep.subr.mxu0 0.0
    %903 = vmatpush1.msra.mxu0 %v876
    %904 = vmatprep.subr.mxu0 0.0
    %905 = vmatpush1.msra.mxu0 %v877
    %906 = vmatprep.subr.mxu0 0.0
    %907 = vmatpush1.msra.mxu0 %v878
    %908 = vmatprep.subr.mxu0 0.0
    %909 = vmatpush1.msra.mxu0 %v879
    %910 = vmatprep.subr.mxu0 0.0
    %911 = vmatpush1.msra.mxu0 %v880
    %912 = vmatprep.subr.mxu0 0.0
    %913 = vmatpush1.msra.mxu0 %v881
    %914 = vmatprep.subr.mxu0 0.0
    %915 = vmatpush1.msra.mxu0 %v882
    %916 = vmatprep.subr.mxu0 0.0
    %917 = vmatpush1.msra.mxu0 %v883
    %918 = vmatprep.subr.mxu0 0.0
    %919 = vmatpush1.msra.mxu0 %v884
    %920 = vmatprep.subr.mxu0 0.0
    %921 = vmatpush1.msra.mxu0 %v885
    %922 = vmatprep.subr.mxu0 0.0
    %923 = vmatpush1.msra.mxu0 %v886
    %924 = vmatprep.subr.mxu0 0.0
    %925 = vmatpush1.msra.mxu0 %v887
    %926 = vmatprep.subr.mxu0 0.0
    %927 = vmatpush1.msra.mxu0 %v888
    %928 = vmatprep.subr.mxu0 0.0
    %929 = vmatpush1.msra.mxu0 0.0
    %930 = vmatprep.subr.mxu0 0.0
    %931 = vmatpush1.msra.mxu0 0.0
    %932 = vmatprep.subr.mxu0 0.0
    %933 = vmatpush1.msra.mxu0 0.0
    %934 = vmatprep.subr.mxu0 0.0
    %935 = vmatpush1.msra.mxu0 0.0
    %936 = vmatprep.subr.mxu0 0.0
    %937 = vmatpush1.msra.mxu0 0.0
    %938 = vmatprep.subr.mxu0 0.0
    %939 = vmatpush1.msra.mxu0 0.0
    %940 = vmatprep.subr.mxu0 0.0
    %941 = vmatpush1.msra.mxu0 0.0
    %942 = vmatprep.subr.mxu0 0.0
    %943 = vmatpush1.msra.mxu0 0.0
    %944 = vmatprep.subr.mxu0 0.0
    %945 = vmatpush1.msra.mxu0 0.0
    %946 = vmatprep.subr.mxu0 0.0
    %947 = vmatpush1.msra.mxu0 0.0
    %948 = vmatprep.subr.mxu0 0.0
    %949 = vmatpush1.msra.mxu0 0.0
    %950 = vmatprep.subr.mxu0 0.0
    %951 = vmatpush1.msra.mxu0 0.0
    %952 = vmatprep.subr.mxu0 0.0
    %953 = vmatpush1.msra.mxu0 0.0
    %954 = vmatprep.subr.mxu0 0.0
    %955 = vmatpush1.msra.mxu0 0.0
    %956 = vmatprep.subr.mxu0 0.0
    %957 = vmatpush1.msra.mxu0 0.0
    %958 = vmatprep.subr.mxu0 0.0
    %959 = vmatpush1.msra.mxu0 0.0
    %960 = vmatprep.mubr.f32.mxu0 0.0
    %961 = vmatmul.mubr.f32.gmra.mrb[0].mxu0 %v872
    %v962 = vpop.f32.mrb[0].mxu0
    %v963 = vadd.f32 %v894, %v962
    %v964 = vpop.f32.mrb[0].mxu0
    %965 = vdwg.mxu0
    %v966 = vmax.f32 %v963, 0.0
    %v967 = vld [vmem:[%s5] sm:$0xff]
    %v968 = vld [vmem:[%s5 + $0x8] sm:$0xff]
    %v969 = vld [vmem:[%s5 + $0x10] sm:$0xff]
    %v970 = vld [vmem:[%s5 + $0x18] sm:$0xff]
    %v971 = vld [vmem:[%s5 + $0x20] sm:$0xff]
    %v972 = vld [vmem:[%s5 + $0x28] sm:$0xff]
    %v973 = vld [vmem:[%s5 + $0x30] sm:$0xff]
    %v974 = vld [vmem:[%s5 + $0x38] sm:$0xff]
    %v975 = vld [vmem:[%s5 + $0x40] sm:$0xff]
    %v976 = vld [vmem:[%s5 + $0x48] sm:$0xff]
    %v977 = vld [vmem:[%s5 + $0x50] sm:$0xff]
    %v978 = vld [vmem:[%s5 + $0x58] sm:$0xff]
    %v979 = vld [vmem:[%s5 + $0x60] sm:$0xff]
    %v980 = vld [vmem:[%s5 + $0x68] sm:$0xff]
    %v981 = vld [vmem:[%s5 + $0x70] sm:$0xff]
    %v982 = vld [vmem:[%s5 + $0x78] sm:$0xff]
    %v983 = vld [vmem:[%s6] sm:$0x1]
    %v985 = vlaneseq
    %v986 = vshrl.u32 %v985, 7
    %v987 = vsub.s32 0, %v986
    %v988 = vrot.slane %v983, %v987
    %990 = vmatprep.subr.mxu0 0.0
    %991 = vmatpush1.msra.mxu0 %v967
    %992 = vmatprep.subr.mxu0 0.0
    %993 = vmatpush1.msra.mxu0 %v968
    %994 = vmatprep.subr.mxu0 0.0
    %995 = vmatpush1.msra.mxu0 %v969
    %996 = vmatprep.subr.mxu0 0.0
    %997 = vmatpush1.msra.mxu0 %v970
    %998 = vmatprep.subr.mxu0 0.0
    %999 = vmatpush1.msra.mxu0 %v971
    %1000 = vmatprep.subr.mxu0 0.0
    %1001 = vmatpush1.msra.mxu0 %v972
    %1002 = vmatprep.subr.mxu0 0.0
    %1003 = vmatpush1.msra.mxu0 %v973
    %1004 = vmatprep.subr.mxu0 0.0
    %1005 = vmatpush1.msra.mxu0 %v974
    %1006 = vmatprep.subr.mxu0 0.0
    %1007 = vmatpush1.msra.mxu0 %v975
    %1008 = vmatprep.subr.mxu0 0.0
    %1009 = vmatpush1.msra.mxu0 %v976
    %1010 = vmatprep.subr.mxu0 0.0
    %1011 = vmatpush1.msra.mxu0 %v977
    %1012 = vmatprep.subr.mxu0 0.0
    %1013 = vmatpush1.msra.mxu0 %v978
    %1014 = vmatprep.subr.mxu0 0.0
    %1015 = vmatpush1.msra.mxu0 %v979
    %1016 = vmatprep.subr.mxu0 0.0
    %1017 = vmatpush1.msra.mxu0 %v980
    %1018 = vmatprep.subr.mxu0 0.0
    %1019 = vmatpush1.msra.mxu0 %v981
    %1020 = vmatprep.subr.mxu0 0.0
    %1021 = vmatpush1.msra.mxu0 %v982
    %1022 = vmatprep.subr.mxu0 0.0
    %1023 = vmatpush1.msra.mxu0 0.0
    %1024 = vmatprep.subr.mxu0 0.0
    %1025 = vmatpush1.msra.mxu0 0.0
    %1026 = vmatprep.subr.mxu0 0.0
    %1027 = vmatpush1.msra.mxu0 0.0
    %1028 = vmatprep.subr.mxu0 0.0
    %1029 = vmatpush1.msra.mxu0 0.0
    %1030 = vmatprep.subr.mxu0 0.0
    %1031 = vmatpush1.msra.mxu0 0.0
    %1032 = vmatprep.subr.mxu0 0.0
    %1033 = vmatpush1.msra.mxu0 0.0
    %1034 = vmatprep.subr.mxu0 0.0
    %1035 = vmatpush1.msra.mxu0 0.0
    %1036 = vmatprep.subr.mxu0 0.0
    %1037 = vmatpush1.msra.mxu0 0.0
    %1038 = vmatprep.subr.mxu0 0.0
    %1039 = vmatpush1.msra.mxu0 0.0
    %1040 = vmatprep.subr.mxu0 0.0
    %1041 = vmatpush1.msra.mxu0 0.0
    %1042 = vmatprep.subr.mxu0 0.0
    %1043 = vmatpush1.msra.mxu0 0.0
    %1044 = vmatprep.subr.mxu0 0.0
    %1045 = vmatpush1.msra.mxu0 0.0
    %1046 = vmatprep.subr.mxu0 0.0
    %1047 = vmatpush1.msra.mxu0 0.0
    %1048 = vmatprep.subr.mxu0 0.0
    %1049 = vmatpush1.msra.mxu0 0.0
    %1050 = vmatprep.subr.mxu0 0.0
    %1051 = vmatpush1.msra.mxu0 0.0
    %1052 = vmatprep.subr.mxu0 0.0
    %1053 = vmatpush1.msra.mxu0 0.0
    %1054 = vmatprep.mubr.f32.mxu0 0.0
    %1055 = vmatmul.mubr.f32.gmra.mrb[0].mxu0 %v966
    %v1056 = vpop.f32.mrb[0].mxu0
    %v1057 = vadd.f32 %v988, %v1056
    %v1058 = vpop.f32.mrb[0].mxu0
    %1059 = vdwg.mxu0
    %v1060 = vmax.f32 %v1057, 0.0
    %v1061 = vld [vmem:[%s7] sm:$0xff]
    %v1062 = vld [vmem:[%s7 + $0x8] sm:$0xff]
    %v1063 = vld [vmem:[%s7 + $0x10] sm:$0xff]
    %v1064 = vld [vmem:[%s7 + $0x18] sm:$0xff]
    %v1065 = vld [vmem:[%s7 + $0x20] sm:$0xff]
    %v1066 = vld [vmem:[%s7 + $0x28] sm:$0xff]
    %v1067 = vld [vmem:[%s7 + $0x30] sm:$0xff]
    %v1068 = vld [vmem:[%s7 + $0x38] sm:$0xff]
    %v1069 = vld [vmem:[%s7 + $0x40] sm:$0xff]
    %v1070 = vld [vmem:[%s7 + $0x48] sm:$0xff]
    %v1071 = vld [vmem:[%s7 + $0x50] sm:$0xff]
    %v1072 = vld [vmem:[%s7 + $0x58] sm:$0xff]
    %v1073 = vld [vmem:[%s7 + $0x60] sm:$0xff]
    %v1074 = vld [vmem:[%s7 + $0x68] sm:$0xff]
    %v1075 = vld [vmem:[%s7 + $0x70] sm:$0xff]
    %v1076 = vld [vmem:[%s7 + $0x78] sm:$0xff]
    %v1077 = vld [vmem:[%s8] sm:$0x1]
    %v1079 = vlaneseq
    %v1080 = vshrl.u32 %v1079, 7
    %v1081 = vsub.s32 0, %v1080
    %v1082 = vrot.slane %v1077, %v1081
    %1084 = vmatprep.subr.mxu0 0.0
    %1085 = vmatpush1.msra.mxu0 %v1061
    %1086 = vmatprep.subr.mxu0 0.0
    %1087 = vmatpush1.msra.mxu0 %v1062
    %1088 = vmatprep.subr.mxu0 0.0
    %1089 = vmatpush1.msra.mxu0 %v1063
    %1090 = vmatprep.subr.mxu0 0.0
    %1091 = vmatpush1.msra.mxu0 %v1064
    %1092 = vmatprep.subr.mxu0 0.0
    %1093 = vmatpush1.msra.mxu0 %v1065
    %1094 = vmatprep.subr.mxu0 0.0
    %1095 = vmatpush1.msra.mxu0 %v1066
    %1096 = vmatprep.subr.mxu0 0.0
    %1097 = vmatpush1.msra.mxu0 %v1067
    %1098 = vmatprep.subr.mxu0 0.0
    %1099 = vmatpush1.msra.mxu0 %v1068
    %1100 = vmatprep.subr.mxu0 0.0
    %1101 = vmatpush1.msra.mxu0 %v1069
    %1102 = vmatprep.subr.mxu0 0.0
    %1103 = vmatpush1.msra.mxu0 %v1070
    %1104 = vmatprep.subr.mxu0 0.0
    %1105 = vmatpush1.msra.mxu0 %v1071
    %1106 = vmatprep.subr.mxu0 0.0
    %1107 = vmatpush1.msra.mxu0 %v1072
    %1108 = vmatprep.subr.mxu0 0.0
    %1109 = vmatpush1.msra.mxu0 %v1073
    %1110 = vmatprep.subr.mxu0 0.0
    %1111 = vmatpush1.msra.mxu0 %v1074
    %1112 = vmatprep.subr.mxu0 0.0
    %1113 = vmatpush1.msra.mxu0 %v1075
    %1114 = vmatprep.subr.mxu0 0.0
    %1115 = vmatpush1.msra.mxu0 %v1076
    %1116 = vmatprep.subr.mxu0 0.0
    %1117 = vmatpush1.msra.mxu0 0.0
    %1118 = vmatprep.subr.mxu0 0.0
    %1119 = vmatpush1.msra.mxu0 0.0
    %1120 = vmatprep.subr.mxu0 0.0
    %1121 = vmatpush1.msra.mxu0 0.0
    %1122 = vmatprep.subr.mxu0 0.0
    %1123 = vmatpush1.msra.mxu0 0.0
    %1124 = vmatprep.subr.mxu0 0.0
    %1125 = vmatpush1.msra.mxu0 0.0
    %1126 = vmatprep.subr.mxu0 0.0
    %1127 = vmatpush1.msra.mxu0 0.0
    %1128 = vmatprep.subr.mxu0 0.0
    %1129 = vmatpush1.msra.mxu0 0.0
    %1130 = vmatprep.subr.mxu0 0.0
    %1131 = vmatpush1.msra.mxu0 0.0
    %1132 = vmatprep.subr.mxu0 0.0
    %1133 = vmatpush1.msra.mxu0 0.0
    %1134 = vmatprep.subr.mxu0 0.0
    %1135 = vmatpush1.msra.mxu0 0.0
    %1136 = vmatprep.subr.mxu0 0.0
    %1137 = vmatpush1.msra.mxu0 0.0
    %1138 = vmatprep.subr.mxu0 0.0
    %1139 = vmatpush1.msra.mxu0 0.0
    %1140 = vmatprep.subr.mxu0 0.0
    %1141 = vmatpush1.msra.mxu0 0.0
    %1142 = vmatprep.subr.mxu0 0.0
    %1143 = vmatpush1.msra.mxu0 0.0
    %1144 = vmatprep.subr.mxu0 0.0
    %1145 = vmatpush1.msra.mxu0 0.0
    %1146 = vmatprep.subr.mxu0 0.0
    %1147 = vmatpush1.msra.mxu0 0.0
    %1148 = vmatprep.mubr.f32.mxu0 0.0
    %1149 = vmatmul.mubr.f32.gmra.mrb[0].mxu0 %v1060
    %v1150 = vpop.f32.mrb[0].mxu0
    %v1151 = vadd.f32 %v1082, %v1150
    %v1152 = vpop.f32.mrb[0].mxu0
    %1153 = vdwg.mxu0
    %vm1154 = vcmask 80896
    %1155 = vst.msk [vmem:[#allocation2] sm:$0xff] %vm1154, %v1151
    // Predicated region
    $region38: #{mlp_plr_forward.3} parent=1 // pred_check
      _
    $region39: #{mlp_plr_forward.3} parent=1 // pred_check_branch
      %1157 = sbr.rel (0) target = $region41
    $region40: #{mlp_plr_forward.3} parent=1 // pred_region
      %s1159 = ssub.s32 128, 128
      %1160 = vsyncadd [#allocation3], %s1159
      %s1162 = sshll.u32 [#allocation2], 4
      %s1163 = int_to_ptr.vmem [resolvable:$true] %s1162
      %1165 = dma.vmem_to_hbm [thread:$0]  %s1163, 128, %s9, [#allocation3]
    $region41: #{mlp_plr_forward.3} parent=1 // pred_fallthru
      _
    // Predicated region
    $region42: #{mlp_plr_forward.3} parent=1 // pred_check
      _
    $region43: #{mlp_plr_forward.3} parent=1 // pred_check_branch
      %1167 = sbr.rel (0) target = $region45
    $region44: #{mlp_plr_forward.3} parent=1 // pred_region
      %1168 = dma.done [#allocation3], 128
    $region45: #{mlp_plr_forward.3} parent=1 // pred_fallthru
      _
    %1169 = vsyncpa [#allocation3], 1

</llo_original>
